<compile_context>
chip_gen: v7x
topology: tpu7x:2x2x1
jax: 0.10.0
libtpu: 0.0.40
codegen_flags: <defaults>
</compile_context>

<pallas_src>
import numpy as np
import jax
import jax.numpy as jnp
from jax.experimental import pallas as pl
from jax.experimental.pallas import tpu as pltpu

FEATURE_DIM = 16          # per-player feature dim
HIDDEN_DIM = 64           # hidden_dim in HydraNet
NUM_HEADS = 8             # CAAM heads
MEMORY_DIM = 16           # memory_dim
TOKENS_PER_POINT = 8      # 2 players x 4 aspects
TQ_POINTS = 16            # match points per grid step (16*8 = 128 MXU rows; use 32 on v6e/v7x)
TB_TOKENS = TQ_POINTS * TOKENS_PER_POINT

# per-(player, aspect) column segments of the packed [*, 32] input
_SEG_IN = ((0, 6), (6, 8), (8, 15), (15, 16),
           (16, 22), (22, 24), (24, 31), (31, 32))

_CONST_ORDER = ('rep', 'mask32', 'invd', 'g1e', 'b1e',
                'w1', 'b1p', 'w2', 'b2p', 'g2p', 'b2bp', 'ws', 'bsp',
                'wq', 'wk', 'wv', 'bq', 'bk', 'bv', 'wo', 'bo',
                'amask', 'f1', 'f2',
                'wc1a', 'wc1b', 'bc1', 'lng', 'lnb', 'wc2', 'bc2')


# --------------------------------------------------------------------------
# Fused FE + CAAM + classifier kernel (one 16-point / 128-token tile per step)
# --------------------------------------------------------------------------
def _hydranet_fused_kernel(
        x_ref, rep_ref, mask32_ref, invd_ref, g1e_ref, b1e_ref,
        w1_ref, b1p_ref, w2_ref, b2p_ref, g2p_ref, b2bp_ref, ws_ref, bsp_ref,
        wq_ref, wk_ref, wv_ref, bq_ref, bk_ref, bv_ref, wo_ref, bo_ref,
        amask_ref, f1_ref, f2_ref,
        wc1a_ref, wc1b_ref, bc1_ref, lng_ref, lnb_ref, wc2_ref, bc2_ref,
        o_ref):
    f32 = jnp.float32
    bf16 = jnp.bfloat16
    eps = 1e-5

    # ---- FeatureEnhancement, all 8 aspect nets at once in token layout -------
    # token row r = point r//8, aspect r%8; xm holds that aspect's input slice.
    x = x_ref[...]                                                 # [TQ, 32]
    xm = jnp.dot(rep_ref[...], x, preferred_element_type=f32) * mask32_ref[...]  # [TB,32]
    invd = invd_ref[...]                                           # [TB, 1] = 1/segment_len
    mu1 = jnp.sum(xm, axis=-1, keepdims=True) * invd
    ex1 = jnp.sum(xm * xm, axis=-1, keepdims=True) * invd
    var1 = jnp.maximum(ex1 - mu1 * mu1, 0.0)
    # g1e/b1e are zero outside each row's own segment -> xn stays segment-local.
    xn = (xm - mu1) * jax.lax.rsqrt(var1 + eps) * g1e_ref[...] + b1e_ref[...]
    h = jnp.dot(xn.astype(bf16), w1_ref[...], preferred_element_type=f32) + b1p_ref[...]
    h = jnp.maximum(h, 0.0)                                        # ReLU (Dropout = identity)
    h = jnp.dot(h.astype(bf16), w2_ref[...], preferred_element_type=f32) + b2p_ref[...]
    # LayerNorm over each token's own 64-wide block (rest of the row is exactly 0).
    mu2 = jnp.sum(h, axis=-1, keepdims=True) * (1.0 / HIDDEN_DIM)
    ex2 = jnp.sum(h * h, axis=-1, keepdims=True) * (1.0 / HIDDEN_DIM)
    var2 = jnp.maximum(ex2 - mu2 * mu2, 0.0)
    hn = (h - mu2) * jax.lax.rsqrt(var2 + eps) * g2p_ref[...] + b2bp_ref[...]
    sc = jnp.dot(xm.astype(bf16), ws_ref[...], preferred_element_type=f32) + bsp_ref[...]
    tok = (hn + sc).astype(bf16)                                   # [TB,512] block-embedded tokens

    # ---- CAAM: per-point 8-token multi-head attention -----------------------
    # wq/wk/wv are Wq/Wk/Wv stacked 8x along K: the 512->64 collapse is free.
    q = jnp.dot(tok, wq_ref[...], preferred_element_type=f32) + bq_ref[...]   # [TB,64]
    k = jnp.dot(tok, wk_ref[...], preferred_element_type=f32) + bk_ref[...]
    v = jnp.dot(tok, wv_ref[...], preferred_element_type=f32) + bv_ref[...]
    amask = amask_ref[...]                                         # [TB,TB] same-point 0/1 mask
    wo = wo_ref[...]
    hd = HIDDEN_DIM // NUM_HEADS
    scale = 1.0 / (hd ** 0.5)
    att = jnp.zeros((TB_TOKENS, HIDDEN_DIM), f32)
    # TODO(synk): 15/16 of the score/exp work below is on masked-out cross-point
    # pairs; a block-local score layout would cut the EUP work further.
    for hh in range(NUM_HEADS):                                    # unrolled at trace time
        sl = slice(hh * hd, (hh + 1) * hd)
        qh = q[:, sl].astype(bf16)
        kh = k[:, sl].astype(bf16)
        vh = v[:, sl].astype(bf16)
        s = jax.lax.dot_general(qh, kh, (((1,), (1,)), ((), ())),
                                preferred_element_type=f32) * scale
        m = jnp.max(s, axis=-1, keepdims=True)                     # shared row shift (softmax shift-invariant)
        e = jnp.exp(s - m) * amask                                 # multiplicative mask
        den = jnp.maximum(jnp.sum(e, axis=-1, keepdims=True), 1e-30)
        p = e * pl.reciprocal(den, approx=True)
        oh = jnp.dot(p.astype(bf16), vh, preferred_element_type=f32)           # [TB, hd]
        att = att + jnp.dot(oh.astype(bf16), wo[sl, :], preferred_element_type=f32)
    att = att + bo_ref[...]

    # ---- aspect fusion (softmax(attention_weights) baked into f1/f2) --------
    p1f = jnp.dot(f1_ref[...], att, preferred_element_type=f32)   # [TQ,64]
    p2f = jnp.dot(f2_ref[...], att, preferred_element_type=f32)

    # ---- classifier: Linear(128,64) -> LayerNorm -> ReLU -> Linear(64,1) ----
    h1 = (jnp.dot(p1f.astype(bf16), wc1a_ref[...], preferred_element_type=f32)
          + jnp.dot(p2f.astype(bf16), wc1b_ref[...], preferred_element_type=f32)
          + bc1_ref[...])
    mu = jnp.mean(h1, axis=-1, keepdims=True)
    var = jnp.mean((h1 - mu) * (h1 - mu), axis=-1, keepdims=True)
    h1 = (h1 - mu) * jax.lax.rsqrt(var + eps) * lng_ref[...] + lnb_ref[...]
    h1 = jnp.maximum(h1, 0.0)
    # Lane-dense store: logit lives in column 0 of a full 128-lane block.
    o_ref[...] = (jnp.dot(h1.astype(bf16), wc2_ref[...], preferred_element_type=f32)
                  + bc2_ref[...])


def _fused_call(xpad, packed):
    """xpad: [Ppad, 32] f32 (input-norm'ed points) -> [Ppad, 128] f32 (logit in col 0)."""
    ppad = xpad.shape[0]
    nb = ppad // TQ_POINTS
    in_specs = [pl.BlockSpec((TQ_POINTS, 32), lambda i: (i, 0))]
    for name in _CONST_ORDER:
        nd = packed[name].ndim
        in_specs.append(pl.BlockSpec(packed[name].shape, lambda i, _n=nd: (0,) * _n))
    return pl.pallas_call(
        _hydranet_fused_kernel,
        grid=(nb,),
        out_shape=jax.ShapeDtypeStruct((ppad, 128), jnp.float32),
        in_specs=in_specs,
        out_specs=pl.BlockSpec((TQ_POINTS, 128), lambda i: (i, 0)),
        compiler_params=pltpu.CompilerParams(dimension_semantics=("parallel",)),
    )(xpad, *[packed[n] for n in _CONST_ORDER])


# --------------------------------------------------------------------------
# One jitted device call per batch: input LN + versus loss + fused kernel
# --------------------------------------------------------------------------
@jax.jit
def _forward_points(packed, features, b_idx, p_idx):
    rows = features[b_idx, p_idx, :]                               # [P, 32]
    g16 = packed['inorm_g']
    b16 = packed['inorm_b']

    def _ln16(z):
        mu = jnp.mean(z, axis=-1, keepdims=True)
        var = jnp.mean((z - mu) ** 2, axis=-1, keepdims=True)
        return (z - mu) * jax.lax.rsqrt(var + 1e-5) * g16 + b16

    xp1 = _ln16(rows[:, :FEATURE_DIM])
    xp2 = _ln16(rows[:, FEATURE_DIM:])

    # VersusLearning on the (identity-Hydra) per-point features.
    n1 = jnp.sqrt(jnp.sum(xp1 * xp1, axis=-1, keepdims=True))
    n2 = jnp.sqrt(jnp.sum(xp2 * xp2, axis=-1, keepdims=True))
    p1n = xp1 / jnp.maximum(n1, 1e-12)                             # F.normalize eps
    p2n = xp2 / jnp.maximum(n2, 1e-12)
    # nn.CosineSimilarity's re-normalization is a mathematical no-op here.
    vloss = jnp.maximum(1.0 + jnp.sum(p1n * p2n, axis=-1), 0.0)    # margin = 1.0

    xn = jnp.concatenate([xp1, xp2], axis=-1)                      # [P, 32]
    p = xn.shape[0]
    ppad = ((p + TQ_POINTS - 1) // TQ_POINTS) * TQ_POINTS
    xpad = jnp.pad(xn, ((0, ppad - p), (0, 0)))
    out = _fused_call(xpad, packed)                                # [Ppad, 128]
    return out[:p, 0], vloss


# --------------------------------------------------------------------------
# Plain-JAX glue helpers (classifier fallback path)
# --------------------------------------------------------------------------
def _linear(x, p):
    return jnp.dot(x, p['w']) + p['b'][0]


def _layernorm(x, p, eps=1e-5):
    mu = jnp.mean(x, axis=-1, keepdims=True)
    var = jnp.mean((x - mu) ** 2, axis=-1, keepdims=True)
    return (x - mu) / jnp.sqrt(var + eps) * p['g'][0] + p['b'][0]


def _classifier_host(x, cls):
    h = _linear(x, cls['fc1'])
    h = _layernorm(h, cls['ln'])
    h = jnp.maximum(h, 0.0)
    return _linear(h, cls['fc2'])


# --------------------------------------------------------------------------
# Deterministic parameter init (synthetic; shapes per HydraNet.__init__)
# --------------------------------------------------------------------------
def init_params(key):
    keys = iter(jax.random.split(key, 128))

    def dense(d_in, d_out, scale=0.1):
        kw, kb = next(keys), next(keys)
        return {'w': jax.random.normal(kw, (d_in, d_out), jnp.float32) * scale,
                'b': jax.random.normal(kb, (1, d_out), jnp.float32) * 0.01}

    def ln(d):
        return {'g': jnp.ones((1, d), jnp.float32),
                'b': jnp.zeros((1, d), jnp.float32)}

    def fe(d_in):
        return {'ln1': ln(d_in), 'fc1': dense(d_in, HIDDEN_DIM),
                'fc2': dense(HIDDEN_DIM, HIDDEN_DIM), 'ln2': ln(HIDDEN_DIM),
                'sc': dense(d_in, HIDDEN_DIM)}

    params = {
        'input_norm': ln(FEATURE_DIM),
        'set_linear_p1': dense(16, 16), 'set_linear_p2': dense(16, 16),
        'game_linear_p1': dense(16, 16), 'game_linear_p2': dense(16, 16),
        'serve_p1': fe(6), 'return_p1': fe(2), 'action_p1': fe(7), 'pressure_p1': fe(1),
        'serve_p2': fe(6), 'return_p2': fe(2), 'action_p2': fe(7), 'pressure_p2': fe(1),
        'mha': {'q': dense(HIDDEN_DIM, HIDDEN_DIM), 'k': dense(HIDDEN_DIM, HIDDEN_DIM),
                'v': dense(HIDDEN_DIM, HIDDEN_DIM), 'o': dense(HIDDEN_DIM, HIDDEN_DIM)},
        'caam_w': jnp.ones((1, 4), jnp.float32),               # nn.Parameter(torch.ones(4))
        'classifier': {'fc1': dense(2 * HIDDEN_DIM, HIDDEN_DIM), 'ln': ln(HIDDEN_DIM),
                       'fc2': dense(HIDDEN_DIM, 1)},
        'global_memory_p1': jax.random.normal(next(keys), (MEMORY_DIM,), jnp.float32) * 0.01,
        'global_memory_p2': jax.random.normal(next(keys), (MEMORY_DIM,), jnp.float32) * 0.01,
    }
    # TODO(synk): match/set/game embeddings and feature_combiner_p1/p2 are defined
    # in __init__ but never used in forward(); omitted here.
    return params


def pack_params(params):
    """Pack per-aspect FE weights into block matrices, embed per-token constants,
    and precompute all grid-invariant masks / fusion matrices on the host."""
    bf16 = jnp.bfloat16
    aspects = (('serve',), ('return',), ('action',), ('pressure',))

    D8 = 8 * HIDDEN_DIM
    W1 = np.zeros((32, D8), np.float32)
    W2 = np.zeros((D8, D8), np.float32)
    WS = np.zeros((32, D8), np.float32)
    b1t = np.zeros((8, D8), np.float32)
    b2t = np.zeros((8, D8), np.float32)
    bst = np.zeros((8, D8), np.float32)
    g2t = np.zeros((8, D8), np.float32)
    b2bt = np.zeros((8, D8), np.float32)
    g1t = np.zeros((8, 32), np.float32)
    b1gt = np.zeros((8, 32), np.float32)
    mskt = np.zeros((8, 32), np.float32)
    invdt = np.zeros((8, 1), np.float32)

    for p_idx, player in enumerate(('p1', 'p2')):
        for a_idx, (name,) in enumerate(aspects):
            a = 4 * p_idx + a_idx
            lo, hi = _SEG_IN[a]
            c0, c1 = HIDDEN_DIM * a, HIDDEN_DIM * (a + 1)
            fe = params[f'{name}_{player}']
            W1[lo:hi, c0:c1] = np.asarray(fe['fc1']['w'])
            W2[c0:c1, c0:c1] = np.asarray(fe['fc2']['w'])
            WS[lo:hi, c0:c1] = np.asarray(fe['sc']['w'])
            b1t[a, c0:c1] = np.asarray(fe['fc1']['b'][0])
            b2t[a, c0:c1] = np.asarray(fe['fc2']['b'][0])
            bst[a, c0:c1] = np.asarray(fe['sc']['b'][0])
            g2t[a, c0:c1] = np.asarray(fe['ln2']['g'][0])
            b2bt[a, c0:c1] = np.asarray(fe['ln2']['b'][0])
            g1t[a, lo:hi] = np.asarray(fe['ln1']['g'][0])
            b1gt[a, lo:hi] = np.asarray(fe['ln1']['b'][0])
            mskt[a, lo:hi] = 1.0
            invdt[a, 0] = 1.0 / float(hi - lo)

    def tile(m):
        return np.tile(m, (TQ_POINTS, 1))

    rep = np.kron(np.eye(TQ_POINTS, dtype=np.float32),
                  np.ones((TOKENS_PER_POINT, 1), np.float32))                 # [TB, TQ]
    amask = np.kron(np.eye(TQ_POINTS, dtype=np.float32),
                    np.ones((TOKENS_PER_POINT, TOKENS_PER_POINT), np.float32))  # [TB, TB]

    aw = np.asarray(params['caam_w'][0], np.float32)
    awe = np.exp(aw - aw.max())
    awsm = awe / awe.sum()
    row1 = np.zeros((1, 8), np.float32); row1[0, :4] = awsm
    row2 = np.zeros((1, 8), np.float32); row2[0, 4:] = awsm
    F1 = np.kron(np.eye(TQ_POINTS, dtype=np.float32), row1)                   # [TQ, TB]
    F2 = np.kron(np.eye(TQ_POINTS, dtype=np.float32), row2)

    mha = params['mha']
    cls = params['classifier']
    wc2 = np.zeros((HIDDEN_DIM, 128), np.float32)
    wc2[:, 0] = np.asarray(cls['fc2']['w'])[:, 0]
    bc2 = np.zeros((1, 128), np.float32)
    bc2[0, 0] = float(np.asarray(cls['fc2']['b'])[0, 0])

    packed = {
        'rep': jnp.asarray(rep),
        'mask32': jnp.asarray(tile(mskt)),
        'invd': jnp.asarray(tile(invdt)),
        'g1e': jnp.asarray(tile(g1t)),
        'b1e': jnp.asarray(tile(b1gt)),
        'w1': jnp.asarray(W1, bf16),
        'b1p': jnp.asarray(tile(b1t)),
        'w2': jnp.asarray(W2, bf16),
        'b2p': jnp.asarray(tile(b2t)),
        'g2p': jnp.asarray(tile(g2t)),
        'b2bp': jnp.asarray(tile(b2bt)),
        'ws': jnp.asarray(WS, bf16),
        'bsp': jnp.asarray(tile(bst)),
        'wq': jnp.asarray(np.tile(np.asarray(mha['q']['w']), (8, 1)), bf16),
        'wk': jnp.asarray(np.tile(np.asarray(mha['k']['w']), (8, 1)), bf16),
        'wv': jnp.asarray(np.tile(np.asarray(mha['v']['w']), (8, 1)), bf16),
        'bq': jnp.asarray(mha['q']['b']), 'bk': jnp.asarray(mha['k']['b']),
        'bv': jnp.asarray(mha['v']['b']),
        'wo': jnp.asarray(mha['o']['w'], bf16), 'bo': jnp.asarray(mha['o']['b']),
        'amask': jnp.asarray(amask),
        'f1': jnp.asarray(F1), 'f2': jnp.asarray(F2),
        'wc1a': jnp.asarray(np.asarray(cls['fc1']['w'])[:HIDDEN_DIM], bf16),
        'wc1b': jnp.asarray(np.asarray(cls['fc1']['w'])[HIDDEN_DIM:], bf16),
        'bc1': jnp.asarray(cls['fc1']['b']),
        'lng': jnp.asarray(cls['ln']['g']), 'lnb': jnp.asarray(cls['ln']['b']),
        'wc2': jnp.asarray(wc2, bf16), 'bc2': jnp.asarray(bc2),
        'inorm_g': jnp.asarray(params['input_norm']['g']),
        'inorm_b': jnp.asarray(params['input_norm']['b']),
    }
    return packed


# --------------------------------------------------------------------------
# Forward pass (mirrors HydraNet.forward outputs; host loops removed)
# --------------------------------------------------------------------------
def hydranet_forward(params, batch, packed=None):
    if packed is None:
        packed = pack_params(params)

    features = jnp.asarray(batch['features'])                      # [B, N, 32]
    labels = batch.get('label', None)
    set_all = np.asarray(batch['set'])
    game_all = np.asarray(batch['game'])
    B = features.shape[0]

    # One-time host pass over the set/game tables: with the identity-Hydra stub
    # the only values reaching the module outputs are the logit + versus loss of
    # the LAST point of the LAST game of set == half_sets per match, so only
    # those points are dispatched to the device.  The set/game momentum
    # recurrence is dead w.r.t. the returned values and is skipped.
    # TODO(synk): Hydra (Mamba-2 style SSM backbone) is external and not
    # provided; it is replaced by an identity sequence pass-through.  If the
    # real backbone is restored, every point of the processed sets (and the
    # momentum chain) must be recomputed because of the sequence dependence.
    b_idx, p_idx = [], []
    for b in range(B):
        uniq = sorted(np.unique(set_all[b]).tolist())
        if not uniq:
            continue
        half = len(uniq) // 2 + 1
        if half not in uniq:
            continue
        smask = set_all[b] == half
        games = sorted(np.unique(game_all[b][smask]).tolist())
        idx = np.nonzero(smask & (game_all[b] == games[-1]))[0]
        if idx.size:
            b_idx.append(b)
            p_idx.append(int(idx[-1]))

    if b_idx and labels is not None:
        logits, vloss = _forward_points(packed, features,
                                        jnp.asarray(b_idx, jnp.int32),
                                        jnp.asarray(p_idx, jnp.int32))
        final_output = logits[None, :]
        final_labels = jnp.concatenate(labels, axis=0).reshape(-1)[None, :]
        total_ver_loss = jnp.mean(vloss)
    else:
        dummy = jnp.zeros((1, 2 * HIDDEN_DIM), jnp.float32)
        final_output = _classifier_host(dummy, params['classifier'])
        final_labels = jnp.zeros((1,), jnp.float32)
        total_ver_loss = jnp.float32(0.0)

    return final_output, final_labels, total_ver_loss


# --------------------------------------------------------------------------
if __name__ == "__main__":
    key = jax.random.PRNGKey(0)
    k_feat, k_param = jax.random.split(key)

    B, N = 2, 12                                               # 2 matches, 12 points each
    features = jax.random.normal(k_feat, (B, N, 2 * FEATURE_DIM), jnp.float32)
    set_no = np.array([[1] * 6 + [2] * 6] * B, dtype=np.int32)
    game_no = np.array([[1, 1, 1, 2, 2, 2, 1, 1, 1, 2, 2, 2]] * B, dtype=np.int32)
    match_id = np.array([101, 202], dtype=np.int32)
    labels = [jnp.array([1.0], jnp.float32), jnp.array([0.0], jnp.float32)]

    batch = {'features': features, 'label': labels, 'match_id': match_id,
             'set': set_no, 'game': game_no}

    params = init_params(k_param)
    packed = pack_params(params)
    final_output, final_labels, total_ver_loss = hydranet_forward(params, batch, packed)

    jax.block_until_ready((final_output, final_labels, total_ver_loss))
    assert final_output.shape == (1, 2)
    assert final_labels.shape == (1, 2)
    assert total_ver_loss.shape == ()
    assert bool(jnp.all(jnp.isfinite(final_output)))
    print("KERNEL_OK")
</pallas_src>

<mosaic_0001>
module attributes {stable_mosaic.version = 11 : i64} {
  func.func @_hydranet_fused_kernel(%arg0: i32, %arg1: memref<16x32xf32, #tpu.memory_space<vmem>>, %arg2: memref<128x16xf32, #tpu.memory_space<vmem>>, %arg3: memref<128x32xf32, #tpu.memory_space<vmem>>, %arg4: memref<128x1xf32, #tpu.memory_space<vmem>>, %arg5: memref<128x32xf32, #tpu.memory_space<vmem>>, %arg6: memref<128x32xf32, #tpu.memory_space<vmem>>, %arg7: memref<32x512xbf16, #tpu.memory_space<vmem>>, %arg8: memref<128x512xf32, #tpu.memory_space<vmem>>, %arg9: memref<512x512xbf16, #tpu.memory_space<vmem>>, %arg10: memref<128x512xf32, #tpu.memory_space<vmem>>, %arg11: memref<128x512xf32, #tpu.memory_space<vmem>>, %arg12: memref<128x512xf32, #tpu.memory_space<vmem>>, %arg13: memref<32x512xbf16, #tpu.memory_space<vmem>>, %arg14: memref<128x512xf32, #tpu.memory_space<vmem>>, %arg15: memref<512x64xbf16, #tpu.memory_space<vmem>>, %arg16: memref<512x64xbf16, #tpu.memory_space<vmem>>, %arg17: memref<512x64xbf16, #tpu.memory_space<vmem>>, %arg18: memref<1x64xf32, #tpu.memory_space<vmem>>, %arg19: memref<1x64xf32, #tpu.memory_space<vmem>>, %arg20: memref<1x64xf32, #tpu.memory_space<vmem>>, %arg21: memref<64x64xbf16, #tpu.memory_space<vmem>>, %arg22: memref<1x64xf32, #tpu.memory_space<vmem>>, %arg23: memref<128x128xf32, #tpu.memory_space<vmem>>, %arg24: memref<16x128xf32, #tpu.memory_space<vmem>>, %arg25: memref<16x128xf32, #tpu.memory_space<vmem>>, %arg26: memref<64x64xbf16, #tpu.memory_space<vmem>>, %arg27: memref<64x64xbf16, #tpu.memory_space<vmem>>, %arg28: memref<1x64xf32, #tpu.memory_space<vmem>>, %arg29: memref<1x64xf32, #tpu.memory_space<vmem>>, %arg30: memref<1x64xf32, #tpu.memory_space<vmem>>, %arg31: memref<64x128xbf16, #tpu.memory_space<vmem>>, %arg32: memref<1x128xf32, #tpu.memory_space<vmem>>, %arg33: memref<16x128xf32, #tpu.memory_space<vmem>>) attributes {dimension_semantics = [#tpu.dimension_semantics<parallel>], iteration_bounds = array<i64: 1>, scalar_prefetch = 0 : i64, scratch_operands = 0 : i64, tpu.core_type = #tpu.core_type<tc>, window_params = [{transform_indices = @transform_0, window_bounds = array<i64: 16, 32>}, {pipeline_mode = #tpu.pipeline_mode<synchronous>, transform_indices = @transform_1, window_bounds = array<i64: 128, 16>}, {pipeline_mode = #tpu.pipeline_mode<synchronous>, transform_indices = @transform_2, window_bounds = array<i64: 128, 32>}, {pipeline_mode = #tpu.pipeline_mode<synchronous>, transform_indices = @transform_3, window_bounds = array<i64: 128, 1>}, {pipeline_mode = #tpu.pipeline_mode<synchronous>, transform_indices = @transform_4, window_bounds = array<i64: 128, 32>}, {pipeline_mode = #tpu.pipeline_mode<synchronous>, transform_indices = @transform_5, window_bounds = array<i64: 128, 32>}, {pipeline_mode = #tpu.pipeline_mode<synchronous>, transform_indices = @transform_6, window_bounds = array<i64: 32, 512>}, {pipeline_mode = #tpu.pipeline_mode<synchronous>, transform_indices = @transform_7, window_bounds = array<i64: 128, 512>}, {pipeline_mode = #tpu.pipeline_mode<synchronous>, transform_indices = @transform_8, window_bounds = array<i64: 512, 512>}, {pipeline_mode = #tpu.pipeline_mode<synchronous>, transform_indices = @transform_9, window_bounds = array<i64: 128, 512>}, {pipeline_mode = #tpu.pipeline_mode<synchronous>, transform_indices = @transform_10, window_bounds = array<i64: 128, 512>}, {pipeline_mode = #tpu.pipeline_mode<synchronous>, transform_indices = @transform_11, window_bounds = array<i64: 128, 512>}, {pipeline_mode = #tpu.pipeline_mode<synchronous>, transform_indices = @transform_12, window_bounds = array<i64: 32, 512>}, {pipeline_mode = #tpu.pipeline_mode<synchronous>, transform_indices = @transform_13, window_bounds = array<i64: 128, 512>}, {pipeline_mode = #tpu.pipeline_mode<synchronous>, transform_indices = @transform_14, window_bounds = array<i64: 512, 64>}, {pipeline_mode = #tpu.pipeline_mode<synchronous>, transform_indices = @transform_15, window_bounds = array<i64: 512, 64>}, {pipeline_mode = #tpu.pipeline_mode<synchronous>, transform_indices = @transform_16, window_bounds = array<i64: 512, 64>}, {pipeline_mode = #tpu.pipeline_mode<synchronous>, transform_indices = @transform_17, window_bounds = array<i64: 1, 64>}, {pipeline_mode = #tpu.pipeline_mode<synchronous>, transform_indices = @transform_18, window_bounds = array<i64: 1, 64>}, {pipeline_mode = #tpu.pipeline_mode<synchronous>, transform_indices = @transform_19, window_bounds = array<i64: 1, 64>}, {pipeline_mode = #tpu.pipeline_mode<synchronous>, transform_indices = @transform_20, window_bounds = array<i64: 64, 64>}, {pipeline_mode = #tpu.pipeline_mode<synchronous>, transform_indices = @transform_21, window_bounds = array<i64: 1, 64>}, {pipeline_mode = #tpu.pipeline_mode<synchronous>, transform_indices = @transform_22, window_bounds = array<i64: 128, 128>}, {pipeline_mode = #tpu.pipeline_mode<synchronous>, transform_indices = @transform_23, window_bounds = array<i64: 16, 128>}, {pipeline_mode = #tpu.pipeline_mode<synchronous>, transform_indices = @transform_24, window_bounds = array<i64: 16, 128>}, {pipeline_mode = #tpu.pipeline_mode<synchronous>, transform_indices = @transform_25, window_bounds = array<i64: 64, 64>}, {pipeline_mode = #tpu.pipeline_mode<synchronous>, transform_indices = @transform_26, window_bounds = array<i64: 64, 64>}, {pipeline_mode = #tpu.pipeline_mode<synchronous>, transform_indices = @transform_27, window_bounds = array<i64: 1, 64>}, {pipeline_mode = #tpu.pipeline_mode<synchronous>, transform_indices = @transform_28, window_bounds = array<i64: 1, 64>}, {pipeline_mode = #tpu.pipeline_mode<synchronous>, transform_indices = @transform_29, window_bounds = array<i64: 1, 64>}, {pipeline_mode = #tpu.pipeline_mode<synchronous>, transform_indices = @transform_30, window_bounds = array<i64: 64, 128>}, {pipeline_mode = #tpu.pipeline_mode<synchronous>, transform_indices = @transform_31, window_bounds = array<i64: 1, 128>}, {transform_indices = @transform_32, window_bounds = array<i64: 16, 128>}]} {
    %c0 = arith.constant 0 : index
    %c0_0 = arith.constant 0 : index
    %0 = vector.load %arg1[%c0, %c0_0] : memref<16x32xf32, #tpu.memory_space<vmem>>, vector<16x32xf32>
    %c0_1 = arith.constant 0 : index
    %c0_2 = arith.constant 0 : index
    %1 = vector.load %arg2[%c0_1, %c0_2] : memref<128x16xf32, #tpu.memory_space<vmem>>, vector<128x16xf32>
    %cst = arith.constant dense<0.000000e+00> : vector<128x32xf32>
    %2 = tpu.matmul %1, %0, %cst {dimension_numbers = #tpu.dot_dimension_numbers<[1], [0], [0], [1], [0, 0, 1, 1], [], []>} : vector<128x16xf32>, vector<16x32xf32>, vector<128x32xf32> -> vector<128x32xf32>
    %c0_3 = arith.constant 0 : index
    %c0_4 = arith.constant 0 : index
    %3 = vector.load %arg3[%c0_3, %c0_4] : memref<128x32xf32, #tpu.memory_space<vmem>>, vector<128x32xf32>
    %4 = arith.mulf %2, %3 : vector<128x32xf32>
    %c0_5 = arith.constant 0 : index
    %c0_6 = arith.constant 0 : index
    %5 = vector.load %arg4[%c0_5, %c0_6] : memref<128x1xf32, #tpu.memory_space<vmem>>, vector<128x1xf32>
    %cst_7 = arith.constant dense<0.000000e+00> : vector<128xf32>
    %6 = vector.multi_reduction <add>, %4, %cst_7 [1] : vector<128x32xf32> to vector<128xf32>
    %7 = vector.shape_cast %6 : vector<128xf32> to vector<128x1xf32>
    %8 = arith.mulf %7, %5 : vector<128x1xf32>
    %9 = arith.mulf %4, %4 : vector<128x32xf32>
    %cst_8 = arith.constant dense<0.000000e+00> : vector<128xf32>
    %10 = vector.multi_reduction <add>, %9, %cst_8 [1] : vector<128x32xf32> to vector<128xf32>
    %11 = vector.shape_cast %10 : vector<128xf32> to vector<128x1xf32>
    %12 = arith.mulf %11, %5 : vector<128x1xf32>
    %13 = arith.mulf %8, %8 : vector<128x1xf32>
    %14 = arith.subf %12, %13 : vector<128x1xf32>
    %cst_9 = arith.constant 0.000000e+00 : f32
    %15 = vector.broadcast %cst_9 : f32 to vector<128x1xf32>
    %16 = arith.maximumf %14, %15 : vector<128x1xf32>
    %17 = vector.broadcast %8 : vector<128x1xf32> to vector<128x32xf32>
    %18 = arith.subf %4, %17 : vector<128x32xf32>
    %cst_10 = arith.constant 9.99999974E-6 : f32
    %19 = vector.broadcast %cst_10 : f32 to vector<128x1xf32>
    %20 = arith.addf %16, %19 : vector<128x1xf32>
    %21 = math.rsqrt %20 : vector<128x1xf32>
    %22 = vector.broadcast %21 : vector<128x1xf32> to vector<128x32xf32>
    %23 = arith.mulf %18, %22 : vector<128x32xf32>
    %c0_11 = arith.constant 0 : index
    %c0_12 = arith.constant 0 : index
    %24 = vector.load %arg5[%c0_11, %c0_12] : memref<128x32xf32, #tpu.memory_space<vmem>>, vector<128x32xf32>
    %25 = arith.mulf %23, %24 : vector<128x32xf32>
    %c0_13 = arith.constant 0 : index
    %c0_14 = arith.constant 0 : index
    %26 = vector.load %arg6[%c0_13, %c0_14] : memref<128x32xf32, #tpu.memory_space<vmem>>, vector<128x32xf32>
    %27 = arith.addf %25, %26 : vector<128x32xf32>
    %28 = arith.truncf %27 : vector<128x32xf32> to vector<128x32xbf16>
    %c0_15 = arith.constant 0 : index
    %c0_16 = arith.constant 0 : index
    %29 = vector.load %arg7[%c0_15, %c0_16] : memref<32x512xbf16, #tpu.memory_space<vmem>>, vector<32x512xbf16>
    %cst_17 = arith.constant dense<0.000000e+00> : vector<128x512xf32>
    %30 = tpu.matmul %28, %29, %cst_17 {dimension_numbers = #tpu.dot_dimension_numbers<[1], [0], [0], [1], [0, 0, 1, 1], [], []>} : vector<128x32xbf16>, vector<32x512xbf16>, vector<128x512xf32> -> vector<128x512xf32>
    %c0_18 = arith.constant 0 : index
    %c0_19 = arith.constant 0 : index
    %31 = vector.load %arg8[%c0_18, %c0_19] : memref<128x512xf32, #tpu.memory_space<vmem>>, vector<128x512xf32>
    %32 = arith.addf %30, %31 : vector<128x512xf32>
    %cst_20 = arith.constant 0.000000e+00 : f32
    %33 = vector.broadcast %cst_20 : f32 to vector<128x512xf32>
    %34 = arith.maximumf %32, %33 : vector<128x512xf32>
    %35 = arith.truncf %34 : vector<128x512xf32> to vector<128x512xbf16>
    %c0_21 = arith.constant 0 : index
    %c0_22 = arith.constant 0 : index
    %36 = vector.load %arg9[%c0_21, %c0_22] : memref<512x512xbf16, #tpu.memory_space<vmem>>, vector<512x512xbf16>
    %cst_23 = arith.constant dense<0.000000e+00> : vector<128x512xf32>
    %37 = tpu.matmul %35, %36, %cst_23 {dimension_numbers = #tpu.dot_dimension_numbers<[1], [0], [0], [1], [0, 0, 1, 1], [], []>} : vector<128x512xbf16>, vector<512x512xbf16>, vector<128x512xf32> -> vector<128x512xf32>
    %c0_24 = arith.constant 0 : index
    %c0_25 = arith.constant 0 : index
    %38 = vector.load %arg10[%c0_24, %c0_25] : memref<128x512xf32, #tpu.memory_space<vmem>>, vector<128x512xf32>
    %39 = arith.addf %37, %38 : vector<128x512xf32>
    %cst_26 = arith.constant dense<0.000000e+00> : vector<128xf32>
    %40 = vector.multi_reduction <add>, %39, %cst_26 [1] : vector<128x512xf32> to vector<128xf32>
    %41 = vector.shape_cast %40 : vector<128xf32> to vector<128x1xf32>
    %cst_27 = arith.constant 1.562500e-02 : f32
    %42 = vector.broadcast %cst_27 : f32 to vector<128x1xf32>
    %43 = arith.mulf %41, %42 : vector<128x1xf32>
    %44 = arith.mulf %39, %39 : vector<128x512xf32>
    %cst_28 = arith.constant dense<0.000000e+00> : vector<128xf32>
    %45 = vector.multi_reduction <add>, %44, %cst_28 [1] : vector<128x512xf32> to vector<128xf32>
    %46 = vector.shape_cast %45 : vector<128xf32> to vector<128x1xf32>
    %cst_29 = arith.constant 1.562500e-02 : f32
    %47 = vector.broadcast %cst_29 : f32 to vector<128x1xf32>
    %48 = arith.mulf %46, %47 : vector<128x1xf32>
    %49 = arith.mulf %43, %43 : vector<128x1xf32>
    %50 = arith.subf %48, %49 : vector<128x1xf32>
    %cst_30 = arith.constant 0.000000e+00 : f32
    %51 = vector.broadcast %cst_30 : f32 to vector<128x1xf32>
    %52 = arith.maximumf %50, %51 : vector<128x1xf32>
    %53 = vector.broadcast %43 : vector<128x1xf32> to vector<128x512xf32>
    %54 = arith.subf %39, %53 : vector<128x512xf32>
    %cst_31 = arith.constant 9.99999974E-6 : f32
    %55 = vector.broadcast %cst_31 : f32 to vector<128x1xf32>
    %56 = arith.addf %52, %55 : vector<128x1xf32>
    %57 = math.rsqrt %56 : vector<128x1xf32>
    %58 = vector.broadcast %57 : vector<128x1xf32> to vector<128x512xf32>
    %59 = arith.mulf %54, %58 : vector<128x512xf32>
    %c0_32 = arith.constant 0 : index
    %c0_33 = arith.constant 0 : index
    %60 = vector.load %arg11[%c0_32, %c0_33] : memref<128x512xf32, #tpu.memory_space<vmem>>, vector<128x512xf32>
    %61 = arith.mulf %59, %60 : vector<128x512xf32>
    %c0_34 = arith.constant 0 : index
    %c0_35 = arith.constant 0 : index
    %62 = vector.load %arg12[%c0_34, %c0_35] : memref<128x512xf32, #tpu.memory_space<vmem>>, vector<128x512xf32>
    %63 = arith.addf %61, %62 : vector<128x512xf32>
    %64 = arith.truncf %4 : vector<128x32xf32> to vector<128x32xbf16>
    %c0_36 = arith.constant 0 : index
    %c0_37 = arith.constant 0 : index
    %65 = vector.load %arg13[%c0_36, %c0_37] : memref<32x512xbf16, #tpu.memory_space<vmem>>, vector<32x512xbf16>
    %cst_38 = arith.constant dense<0.000000e+00> : vector<128x512xf32>
    %66 = tpu.matmul %64, %65, %cst_38 {dimension_numbers = #tpu.dot_dimension_numbers<[1], [0], [0], [1], [0, 0, 1, 1], [], []>} : vector<128x32xbf16>, vector<32x512xbf16>, vector<128x512xf32> -> vector<128x512xf32>
    %c0_39 = arith.constant 0 : index
    %c0_40 = arith.constant 0 : index
    %67 = vector.load %arg14[%c0_39, %c0_40] : memref<128x512xf32, #tpu.memory_space<vmem>>, vector<128x512xf32>
    %68 = arith.addf %66, %67 : vector<128x512xf32>
    %69 = arith.addf %63, %68 : vector<128x512xf32>
    %70 = arith.truncf %69 : vector<128x512xf32> to vector<128x512xbf16>
    %c0_41 = arith.constant 0 : index
    %c0_42 = arith.constant 0 : index
    %71 = vector.load %arg15[%c0_41, %c0_42] : memref<512x64xbf16, #tpu.memory_space<vmem>>, vector<512x64xbf16>
    %cst_43 = arith.constant dense<0.000000e+00> : vector<128x64xf32>
    %72 = tpu.matmul %70, %71, %cst_43 {dimension_numbers = #tpu.dot_dimension_numbers<[1], [0], [0], [1], [0, 0, 1, 1], [], []>} : vector<128x512xbf16>, vector<512x64xbf16>, vector<128x64xf32> -> vector<128x64xf32>
    %c0_44 = arith.constant 0 : index
    %c0_45 = arith.constant 0 : index
    %73 = vector.load %arg18[%c0_44, %c0_45] : memref<1x64xf32, #tpu.memory_space<vmem>>, vector<1x64xf32>
    %74 = vector.broadcast %73 : vector<1x64xf32> to vector<128x64xf32>
    %75 = arith.addf %72, %74 : vector<128x64xf32>
    %c0_46 = arith.constant 0 : index
    %c0_47 = arith.constant 0 : index
    %76 = vector.load %arg16[%c0_46, %c0_47] : memref<512x64xbf16, #tpu.memory_space<vmem>>, vector<512x64xbf16>
    %cst_48 = arith.constant dense<0.000000e+00> : vector<128x64xf32>
    %77 = tpu.matmul %70, %76, %cst_48 {dimension_numbers = #tpu.dot_dimension_numbers<[1], [0], [0], [1], [0, 0, 1, 1], [], []>} : vector<128x512xbf16>, vector<512x64xbf16>, vector<128x64xf32> -> vector<128x64xf32>
    %c0_49 = arith.constant 0 : index
    %c0_50 = arith.constant 0 : index
    %78 = vector.load %arg19[%c0_49, %c0_50] : memref<1x64xf32, #tpu.memory_space<vmem>>, vector<1x64xf32>
    %79 = vector.broadcast %78 : vector<1x64xf32> to vector<128x64xf32>
    %80 = arith.addf %77, %79 : vector<128x64xf32>
    %c0_51 = arith.constant 0 : index
    %c0_52 = arith.constant 0 : index
    %81 = vector.load %arg17[%c0_51, %c0_52] : memref<512x64xbf16, #tpu.memory_space<vmem>>, vector<512x64xbf16>
    %cst_53 = arith.constant dense<0.000000e+00> : vector<128x64xf32>
    %82 = tpu.matmul %70, %81, %cst_53 {dimension_numbers = #tpu.dot_dimension_numbers<[1], [0], [0], [1], [0, 0, 1, 1], [], []>} : vector<128x512xbf16>, vector<512x64xbf16>, vector<128x64xf32> -> vector<128x64xf32>
    %c0_54 = arith.constant 0 : index
    %c0_55 = arith.constant 0 : index
    %83 = vector.load %arg20[%c0_54, %c0_55] : memref<1x64xf32, #tpu.memory_space<vmem>>, vector<1x64xf32>
    %84 = vector.broadcast %83 : vector<1x64xf32> to vector<128x64xf32>
    %85 = arith.addf %82, %84 : vector<128x64xf32>
    %c0_56 = arith.constant 0 : index
    %c0_57 = arith.constant 0 : index
    %86 = vector.load %arg23[%c0_56, %c0_57] : memref<128x128xf32, #tpu.memory_space<vmem>>, vector<128x128xf32>
    %c0_58 = arith.constant 0 : index
    %c0_59 = arith.constant 0 : index
    %87 = vector.load %arg21[%c0_58, %c0_59] : memref<64x64xbf16, #tpu.memory_space<vmem>>, vector<64x64xbf16>
    %cst_60 = arith.constant 0.000000e+00 : f32
    %88 = vector.broadcast %cst_60 : f32 to vector<128x64xf32>
    %89 = vector.extract_strided_slice %75 {offsets = [0, 0], sizes = [128, 8], strides = [1, 1]} : vector<128x64xf32> to vector<128x8xf32>
    %90 = arith.truncf %89 : vector<128x8xf32> to vector<128x8xbf16>
    %91 = vector.extract_strided_slice %80 {offsets = [0, 0], sizes = [128, 8], strides = [1, 1]} : vector<128x64xf32> to vector<128x8xf32>
    %92 = arith.truncf %91 : vector<128x8xf32> to vector<128x8xbf16>
    %93 = vector.extract_strided_slice %85 {offsets = [0, 0], sizes = [128, 8], strides = [1, 1]} : vector<128x64xf32> to vector<128x8xf32>
    %94 = arith.truncf %93 : vector<128x8xf32> to vector<128x8xbf16>
    %cst_61 = arith.constant dense<0.000000e+00> : vector<128x128xf32>
    %95 = tpu.matmul %90, %92, %cst_61 {dimension_numbers = #tpu.dot_dimension_numbers<[1], [1], [0], [0], [0, 0, 1, 0], [], []>} : vector<128x8xbf16>, vector<128x8xbf16>, vector<128x128xf32> -> vector<128x128xf32>
    %cst_62 = arith.constant 0.353553385 : f32
    %96 = vector.broadcast %cst_62 : f32 to vector<128x128xf32>
    %97 = arith.mulf %95, %96 : vector<128x128xf32>
    %cst_63 = arith.constant dense<0xFF800000> : vector<128xf32>
    %98 = vector.multi_reduction <maximumf>, %97, %cst_63 [1] : vector<128x128xf32> to vector<128xf32>
    %99 = vector.shape_cast %98 : vector<128xf32> to vector<128x1xf32>
    %100 = vector.broadcast %99 : vector<128x1xf32> to vector<128x128xf32>
    %101 = arith.subf %97, %100 : vector<128x128xf32>
    %102 = math.exp %101 : vector<128x128xf32>
    %103 = arith.mulf %102, %86 : vector<128x128xf32>
    %cst_64 = arith.constant dense<0.000000e+00> : vector<128xf32>
    %104 = vector.multi_reduction <add>, %103, %cst_64 [1] : vector<128x128xf32> to vector<128xf32>
    %105 = vector.shape_cast %104 : vector<128xf32> to vector<128x1xf32>
    %cst_65 = arith.constant 1.000000e-30 : f32
    %106 = vector.broadcast %cst_65 : f32 to vector<128x1xf32>
    %107 = arith.maximumf %105, %106 : vector<128x1xf32>
    %108 = tpu.reciprocal %107 {approx = true} : vector<128x1xf32> -> vector<128x1xf32>
    %109 = vector.broadcast %108 : vector<128x1xf32> to vector<128x128xf32>
    %110 = arith.mulf %103, %109 : vector<128x128xf32>
    %111 = arith.truncf %110 : vector<128x128xf32> to vector<128x128xbf16>
    %cst_66 = arith.constant dense<0.000000e+00> : vector<128x8xf32>
    %112 = tpu.matmul %111, %94, %cst_66 {dimension_numbers = #tpu.dot_dimension_numbers<[1], [0], [0], [1], [0, 0, 1, 1], [], []>} : vector<128x128xbf16>, vector<128x8xbf16>, vector<128x8xf32> -> vector<128x8xf32>
    %113 = arith.truncf %112 : vector<128x8xf32> to vector<128x8xbf16>
    %114 = vector.extract_strided_slice %87 {offsets = [0, 0], sizes = [8, 64], strides = [1, 1]} : vector<64x64xbf16> to vector<8x64xbf16>
    %cst_67 = arith.constant dense<0.000000e+00> : vector<128x64xf32>
    %115 = tpu.matmul %113, %114, %cst_67 {dimension_numbers = #tpu.dot_dimension_numbers<[1], [0], [0], [1], [0, 0, 1, 1], [], []>} : vector<128x8xbf16>, vector<8x64xbf16>, vector<128x64xf32> -> vector<128x64xf32>
    %116 = arith.addf %88, %115 : vector<128x64xf32>
    %117 = vector.extract_strided_slice %75 {offsets = [0, 8], sizes = [128, 8], strides = [1, 1]} : vector<128x64xf32> to vector<128x8xf32>
    %118 = arith.truncf %117 : vector<128x8xf32> to vector<128x8xbf16>
    %119 = vector.extract_strided_slice %80 {offsets = [0, 8], sizes = [128, 8], strides = [1, 1]} : vector<128x64xf32> to vector<128x8xf32>
    %120 = arith.truncf %119 : vector<128x8xf32> to vector<128x8xbf16>
    %121 = vector.extract_strided_slice %85 {offsets = [0, 8], sizes = [128, 8], strides = [1, 1]} : vector<128x64xf32> to vector<128x8xf32>
    %122 = arith.truncf %121 : vector<128x8xf32> to vector<128x8xbf16>
    %cst_68 = arith.constant dense<0.000000e+00> : vector<128x128xf32>
    %123 = tpu.matmul %118, %120, %cst_68 {dimension_numbers = #tpu.dot_dimension_numbers<[1], [1], [0], [0], [0, 0, 1, 0], [], []>} : vector<128x8xbf16>, vector<128x8xbf16>, vector<128x128xf32> -> vector<128x128xf32>
    %cst_69 = arith.constant 0.353553385 : f32
    %124 = vector.broadcast %cst_69 : f32 to vector<128x128xf32>
    %125 = arith.mulf %123, %124 : vector<128x128xf32>
    %cst_70 = arith.constant dense<0xFF800000> : vector<128xf32>
    %126 = vector.multi_reduction <maximumf>, %125, %cst_70 [1] : vector<128x128xf32> to vector<128xf32>
    %127 = vector.shape_cast %126 : vector<128xf32> to vector<128x1xf32>
    %128 = vector.broadcast %127 : vector<128x1xf32> to vector<128x128xf32>
    %129 = arith.subf %125, %128 : vector<128x128xf32>
    %130 = math.exp %129 : vector<128x128xf32>
    %131 = arith.mulf %130, %86 : vector<128x128xf32>
    %cst_71 = arith.constant dense<0.000000e+00> : vector<128xf32>
    %132 = vector.multi_reduction <add>, %131, %cst_71 [1] : vector<128x128xf32> to vector<128xf32>
    %133 = vector.shape_cast %132 : vector<128xf32> to vector<128x1xf32>
    %cst_72 = arith.constant 1.000000e-30 : f32
    %134 = vector.broadcast %cst_72 : f32 to vector<128x1xf32>
    %135 = arith.maximumf %133, %134 : vector<128x1xf32>
    %136 = tpu.reciprocal %135 {approx = true} : vector<128x1xf32> -> vector<128x1xf32>
    %137 = vector.broadcast %136 : vector<128x1xf32> to vector<128x128xf32>
    %138 = arith.mulf %131, %137 : vector<128x128xf32>
    %139 = arith.truncf %138 : vector<128x128xf32> to vector<128x128xbf16>
    %cst_73 = arith.constant dense<0.000000e+00> : vector<128x8xf32>
    %140 = tpu.matmul %139, %122, %cst_73 {dimension_numbers = #tpu.dot_dimension_numbers<[1], [0], [0], [1], [0, 0, 1, 1], [], []>} : vector<128x128xbf16>, vector<128x8xbf16>, vector<128x8xf32> -> vector<128x8xf32>
    %141 = arith.truncf %140 : vector<128x8xf32> to vector<128x8xbf16>
    %142 = vector.extract_strided_slice %87 {offsets = [8, 0], sizes = [8, 64], strides = [1, 1]} : vector<64x64xbf16> to vector<8x64xbf16>
    %cst_74 = arith.constant dense<0.000000e+00> : vector<128x64xf32>
    %143 = tpu.matmul %141, %142, %cst_74 {dimension_numbers = #tpu.dot_dimension_numbers<[1], [0], [0], [1], [0, 0, 1, 1], [], []>} : vector<128x8xbf16>, vector<8x64xbf16>, vector<128x64xf32> -> vector<128x64xf32>
    %144 = arith.addf %116, %143 : vector<128x64xf32>
    %145 = vector.extract_strided_slice %75 {offsets = [0, 16], sizes = [128, 8], strides = [1, 1]} : vector<128x64xf32> to vector<128x8xf32>
    %146 = arith.truncf %145 : vector<128x8xf32> to vector<128x8xbf16>
    %147 = vector.extract_strided_slice %80 {offsets = [0, 16], sizes = [128, 8], strides = [1, 1]} : vector<128x64xf32> to vector<128x8xf32>
    %148 = arith.truncf %147 : vector<128x8xf32> to vector<128x8xbf16>
    %149 = vector.extract_strided_slice %85 {offsets = [0, 16], sizes = [128, 8], strides = [1, 1]} : vector<128x64xf32> to vector<128x8xf32>
    %150 = arith.truncf %149 : vector<128x8xf32> to vector<128x8xbf16>
    %cst_75 = arith.constant dense<0.000000e+00> : vector<128x128xf32>
    %151 = tpu.matmul %146, %148, %cst_75 {dimension_numbers = #tpu.dot_dimension_numbers<[1], [1], [0], [0], [0, 0, 1, 0], [], []>} : vector<128x8xbf16>, vector<128x8xbf16>, vector<128x128xf32> -> vector<128x128xf32>
    %cst_76 = arith.constant 0.353553385 : f32
    %152 = vector.broadcast %cst_76 : f32 to vector<128x128xf32>
    %153 = arith.mulf %151, %152 : vector<128x128xf32>
    %cst_77 = arith.constant dense<0xFF800000> : vector<128xf32>
    %154 = vector.multi_reduction <maximumf>, %153, %cst_77 [1] : vector<128x128xf32> to vector<128xf32>
    %155 = vector.shape_cast %154 : vector<128xf32> to vector<128x1xf32>
    %156 = vector.broadcast %155 : vector<128x1xf32> to vector<128x128xf32>
    %157 = arith.subf %153, %156 : vector<128x128xf32>
    %158 = math.exp %157 : vector<128x128xf32>
    %159 = arith.mulf %158, %86 : vector<128x128xf32>
    %cst_78 = arith.constant dense<0.000000e+00> : vector<128xf32>
    %160 = vector.multi_reduction <add>, %159, %cst_78 [1] : vector<128x128xf32> to vector<128xf32>
    %161 = vector.shape_cast %160 : vector<128xf32> to vector<128x1xf32>
    %cst_79 = arith.constant 1.000000e-30 : f32
    %162 = vector.broadcast %cst_79 : f32 to vector<128x1xf32>
    %163 = arith.maximumf %161, %162 : vector<128x1xf32>
    %164 = tpu.reciprocal %163 {approx = true} : vector<128x1xf32> -> vector<128x1xf32>
    %165 = vector.broadcast %164 : vector<128x1xf32> to vector<128x128xf32>
    %166 = arith.mulf %159, %165 : vector<128x128xf32>
    %167 = arith.truncf %166 : vector<128x128xf32> to vector<128x128xbf16>
    %cst_80 = arith.constant dense<0.000000e+00> : vector<128x8xf32>
    %168 = tpu.matmul %167, %150, %cst_80 {dimension_numbers = #tpu.dot_dimension_numbers<[1], [0], [0], [1], [0, 0, 1, 1], [], []>} : vector<128x128xbf16>, vector<128x8xbf16>, vector<128x8xf32> -> vector<128x8xf32>
    %169 = arith.truncf %168 : vector<128x8xf32> to vector<128x8xbf16>
    %170 = vector.extract_strided_slice %87 {offsets = [16, 0], sizes = [8, 64], strides = [1, 1]} : vector<64x64xbf16> to vector<8x64xbf16>
    %cst_81 = arith.constant dense<0.000000e+00> : vector<128x64xf32>
    %171 = tpu.matmul %169, %170, %cst_81 {dimension_numbers = #tpu.dot_dimension_numbers<[1], [0], [0], [1], [0, 0, 1, 1], [], []>} : vector<128x8xbf16>, vector<8x64xbf16>, vector<128x64xf32> -> vector<128x64xf32>
    %172 = arith.addf %144, %171 : vector<128x64xf32>
    %173 = vector.extract_strided_slice %75 {offsets = [0, 24], sizes = [128, 8], strides = [1, 1]} : vector<128x64xf32> to vector<128x8xf32>
    %174 = arith.truncf %173 : vector<128x8xf32> to vector<128x8xbf16>
    %175 = vector.extract_strided_slice %80 {offsets = [0, 24], sizes = [128, 8], strides = [1, 1]} : vector<128x64xf32> to vector<128x8xf32>
    %176 = arith.truncf %175 : vector<128x8xf32> to vector<128x8xbf16>
    %177 = vector.extract_strided_slice %85 {offsets = [0, 24], sizes = [128, 8], strides = [1, 1]} : vector<128x64xf32> to vector<128x8xf32>
    %178 = arith.truncf %177 : vector<128x8xf32> to vector<128x8xbf16>
    %cst_82 = arith.constant dense<0.000000e+00> : vector<128x128xf32>
    %179 = tpu.matmul %174, %176, %cst_82 {dimension_numbers = #tpu.dot_dimension_numbers<[1], [1], [0], [0], [0, 0, 1, 0], [], []>} : vector<128x8xbf16>, vector<128x8xbf16>, vector<128x128xf32> -> vector<128x128xf32>
    %cst_83 = arith.constant 0.353553385 : f32
    %180 = vector.broadcast %cst_83 : f32 to vector<128x128xf32>
    %181 = arith.mulf %179, %180 : vector<128x128xf32>
    %cst_84 = arith.constant dense<0xFF800000> : vector<128xf32>
    %182 = vector.multi_reduction <maximumf>, %181, %cst_84 [1] : vector<128x128xf32> to vector<128xf32>
    %183 = vector.shape_cast %182 : vector<128xf32> to vector<128x1xf32>
    %184 = vector.broadcast %183 : vector<128x1xf32> to vector<128x128xf32>
    %185 = arith.subf %181, %184 : vector<128x128xf32>
    %186 = math.exp %185 : vector<128x128xf32>
    %187 = arith.mulf %186, %86 : vector<128x128xf32>
    %cst_85 = arith.constant dense<0.000000e+00> : vector<128xf32>
    %188 = vector.multi_reduction <add>, %187, %cst_85 [1] : vector<128x128xf32> to vector<128xf32>
    %189 = vector.shape_cast %188 : vector<128xf32> to vector<128x1xf32>
    %cst_86 = arith.constant 1.000000e-30 : f32
    %190 = vector.broadcast %cst_86 : f32 to vector<128x1xf32>
    %191 = arith.maximumf %189, %190 : vector<128x1xf32>
    %192 = tpu.reciprocal %191 {approx = true} : vector<128x1xf32> -> vector<128x1xf32>
    %193 = vector.broadcast %192 : vector<128x1xf32> to vector<128x128xf32>
    %194 = arith.mulf %187, %193 : vector<128x128xf32>
    %195 = arith.truncf %194 : vector<128x128xf32> to vector<128x128xbf16>
    %cst_87 = arith.constant dense<0.000000e+00> : vector<128x8xf32>
    %196 = tpu.matmul %195, %178, %cst_87 {dimension_numbers = #tpu.dot_dimension_numbers<[1], [0], [0], [1], [0, 0, 1, 1], [], []>} : vector<128x128xbf16>, vector<128x8xbf16>, vector<128x8xf32> -> vector<128x8xf32>
    %197 = arith.truncf %196 : vector<128x8xf32> to vector<128x8xbf16>
    %198 = vector.extract_strided_slice %87 {offsets = [24, 0], sizes = [8, 64], strides = [1, 1]} : vector<64x64xbf16> to vector<8x64xbf16>
    %cst_88 = arith.constant dense<0.000000e+00> : vector<128x64xf32>
    %199 = tpu.matmul %197, %198, %cst_88 {dimension_numbers = #tpu.dot_dimension_numbers<[1], [0], [0], [1], [0, 0, 1, 1], [], []>} : vector<128x8xbf16>, vector<8x64xbf16>, vector<128x64xf32> -> vector<128x64xf32>
    %200 = arith.addf %172, %199 : vector<128x64xf32>
    %201 = vector.extract_strided_slice %75 {offsets = [0, 32], sizes = [128, 8], strides = [1, 1]} : vector<128x64xf32> to vector<128x8xf32>
    %202 = arith.truncf %201 : vector<128x8xf32> to vector<128x8xbf16>
    %203 = vector.extract_strided_slice %80 {offsets = [0, 32], sizes = [128, 8], strides = [1, 1]} : vector<128x64xf32> to vector<128x8xf32>
    %204 = arith.truncf %203 : vector<128x8xf32> to vector<128x8xbf16>
    %205 = vector.extract_strided_slice %85 {offsets = [0, 32], sizes = [128, 8], strides = [1, 1]} : vector<128x64xf32> to vector<128x8xf32>
    %206 = arith.truncf %205 : vector<128x8xf32> to vector<128x8xbf16>
    %cst_89 = arith.constant dense<0.000000e+00> : vector<128x128xf32>
    %207 = tpu.matmul %202, %204, %cst_89 {dimension_numbers = #tpu.dot_dimension_numbers<[1], [1], [0], [0], [0, 0, 1, 0], [], []>} : vector<128x8xbf16>, vector<128x8xbf16>, vector<128x128xf32> -> vector<128x128xf32>
    %cst_90 = arith.constant 0.353553385 : f32
    %208 = vector.broadcast %cst_90 : f32 to vector<128x128xf32>
    %209 = arith.mulf %207, %208 : vector<128x128xf32>
    %cst_91 = arith.constant dense<0xFF800000> : vector<128xf32>
    %210 = vector.multi_reduction <maximumf>, %209, %cst_91 [1] : vector<128x128xf32> to vector<128xf32>
    %211 = vector.shape_cast %210 : vector<128xf32> to vector<128x1xf32>
    %212 = vector.broadcast %211 : vector<128x1xf32> to vector<128x128xf32>
    %213 = arith.subf %209, %212 : vector<128x128xf32>
    %214 = math.exp %213 : vector<128x128xf32>
    %215 = arith.mulf %214, %86 : vector<128x128xf32>
    %cst_92 = arith.constant dense<0.000000e+00> : vector<128xf32>
    %216 = vector.multi_reduction <add>, %215, %cst_92 [1] : vector<128x128xf32> to vector<128xf32>
    %217 = vector.shape_cast %216 : vector<128xf32> to vector<128x1xf32>
    %cst_93 = arith.constant 1.000000e-30 : f32
    %218 = vector.broadcast %cst_93 : f32 to vector<128x1xf32>
    %219 = arith.maximumf %217, %218 : vector<128x1xf32>
    %220 = tpu.reciprocal %219 {approx = true} : vector<128x1xf32> -> vector<128x1xf32>
    %221 = vector.broadcast %220 : vector<128x1xf32> to vector<128x128xf32>
    %222 = arith.mulf %215, %221 : vector<128x128xf32>
    %223 = arith.truncf %222 : vector<128x128xf32> to vector<128x128xbf16>
    %cst_94 = arith.constant dense<0.000000e+00> : vector<128x8xf32>
    %224 = tpu.matmul %223, %206, %cst_94 {dimension_numbers = #tpu.dot_dimension_numbers<[1], [0], [0], [1], [0, 0, 1, 1], [], []>} : vector<128x128xbf16>, vector<128x8xbf16>, vector<128x8xf32> -> vector<128x8xf32>
    %225 = arith.truncf %224 : vector<128x8xf32> to vector<128x8xbf16>
    %226 = vector.extract_strided_slice %87 {offsets = [32, 0], sizes = [8, 64], strides = [1, 1]} : vector<64x64xbf16> to vector<8x64xbf16>
    %cst_95 = arith.constant dense<0.000000e+00> : vector<128x64xf32>
    %227 = tpu.matmul %225, %226, %cst_95 {dimension_numbers = #tpu.dot_dimension_numbers<[1], [0], [0], [1], [0, 0, 1, 1], [], []>} : vector<128x8xbf16>, vector<8x64xbf16>, vector<128x64xf32> -> vector<128x64xf32>
    %228 = arith.addf %200, %227 : vector<128x64xf32>
    %229 = vector.extract_strided_slice %75 {offsets = [0, 40], sizes = [128, 8], strides = [1, 1]} : vector<128x64xf32> to vector<128x8xf32>
    %230 = arith.truncf %229 : vector<128x8xf32> to vector<128x8xbf16>
    %231 = vector.extract_strided_slice %80 {offsets = [0, 40], sizes = [128, 8], strides = [1, 1]} : vector<128x64xf32> to vector<128x8xf32>
    %232 = arith.truncf %231 : vector<128x8xf32> to vector<128x8xbf16>
    %233 = vector.extract_strided_slice %85 {offsets = [0, 40], sizes = [128, 8], strides = [1, 1]} : vector<128x64xf32> to vector<128x8xf32>
    %234 = arith.truncf %233 : vector<128x8xf32> to vector<128x8xbf16>
    %cst_96 = arith.constant dense<0.000000e+00> : vector<128x128xf32>
    %235 = tpu.matmul %230, %232, %cst_96 {dimension_numbers = #tpu.dot_dimension_numbers<[1], [1], [0], [0], [0, 0, 1, 0], [], []>} : vector<128x8xbf16>, vector<128x8xbf16>, vector<128x128xf32> -> vector<128x128xf32>
    %cst_97 = arith.constant 0.353553385 : f32
    %236 = vector.broadcast %cst_97 : f32 to vector<128x128xf32>
    %237 = arith.mulf %235, %236 : vector<128x128xf32>
    %cst_98 = arith.constant dense<0xFF800000> : vector<128xf32>
    %238 = vector.multi_reduction <maximumf>, %237, %cst_98 [1] : vector<128x128xf32> to vector<128xf32>
    %239 = vector.shape_cast %238 : vector<128xf32> to vector<128x1xf32>
    %240 = vector.broadcast %239 : vector<128x1xf32> to vector<128x128xf32>
    %241 = arith.subf %237, %240 : vector<128x128xf32>
    %242 = math.exp %241 : vector<128x128xf32>
    %243 = arith.mulf %242, %86 : vector<128x128xf32>
    %cst_99 = arith.constant dense<0.000000e+00> : vector<128xf32>
    %244 = vector.multi_reduction <add>, %243, %cst_99 [1] : vector<128x128xf32> to vector<128xf32>
    %245 = vector.shape_cast %244 : vector<128xf32> to vector<128x1xf32>
    %cst_100 = arith.constant 1.000000e-30 : f32
    %246 = vector.broadcast %cst_100 : f32 to vector<128x1xf32>
    %247 = arith.maximumf %245, %246 : vector<128x1xf32>
    %248 = tpu.reciprocal %247 {approx = true} : vector<128x1xf32> -> vector<128x1xf32>
    %249 = vector.broadcast %248 : vector<128x1xf32> to vector<128x128xf32>
    %250 = arith.mulf %243, %249 : vector<128x128xf32>
    %251 = arith.truncf %250 : vector<128x128xf32> to vector<128x128xbf16>
    %cst_101 = arith.constant dense<0.000000e+00> : vector<128x8xf32>
    %252 = tpu.matmul %251, %234, %cst_101 {dimension_numbers = #tpu.dot_dimension_numbers<[1], [0], [0], [1], [0, 0, 1, 1], [], []>} : vector<128x128xbf16>, vector<128x8xbf16>, vector<128x8xf32> -> vector<128x8xf32>
    %253 = arith.truncf %252 : vector<128x8xf32> to vector<128x8xbf16>
    %254 = vector.extract_strided_slice %87 {offsets = [40, 0], sizes = [8, 64], strides = [1, 1]} : vector<64x64xbf16> to vector<8x64xbf16>
    %cst_102 = arith.constant dense<0.000000e+00> : vector<128x64xf32>
    %255 = tpu.matmul %253, %254, %cst_102 {dimension_numbers = #tpu.dot_dimension_numbers<[1], [0], [0], [1], [0, 0, 1, 1], [], []>} : vector<128x8xbf16>, vector<8x64xbf16>, vector<128x64xf32> -> vector<128x64xf32>
    %256 = arith.addf %228, %255 : vector<128x64xf32>
    %257 = vector.extract_strided_slice %75 {offsets = [0, 48], sizes = [128, 8], strides = [1, 1]} : vector<128x64xf32> to vector<128x8xf32>
    %258 = arith.truncf %257 : vector<128x8xf32> to vector<128x8xbf16>
    %259 = vector.extract_strided_slice %80 {offsets = [0, 48], sizes = [128, 8], strides = [1, 1]} : vector<128x64xf32> to vector<128x8xf32>
    %260 = arith.truncf %259 : vector<128x8xf32> to vector<128x8xbf16>
    %261 = vector.extract_strided_slice %85 {offsets = [0, 48], sizes = [128, 8], strides = [1, 1]} : vector<128x64xf32> to vector<128x8xf32>
    %262 = arith.truncf %261 : vector<128x8xf32> to vector<128x8xbf16>
    %cst_103 = arith.constant dense<0.000000e+00> : vector<128x128xf32>
    %263 = tpu.matmul %258, %260, %cst_103 {dimension_numbers = #tpu.dot_dimension_numbers<[1], [1], [0], [0], [0, 0, 1, 0], [], []>} : vector<128x8xbf16>, vector<128x8xbf16>, vector<128x128xf32> -> vector<128x128xf32>
    %cst_104 = arith.constant 0.353553385 : f32
    %264 = vector.broadcast %cst_104 : f32 to vector<128x128xf32>
    %265 = arith.mulf %263, %264 : vector<128x128xf32>
    %cst_105 = arith.constant dense<0xFF800000> : vector<128xf32>
    %266 = vector.multi_reduction <maximumf>, %265, %cst_105 [1] : vector<128x128xf32> to vector<128xf32>
    %267 = vector.shape_cast %266 : vector<128xf32> to vector<128x1xf32>
    %268 = vector.broadcast %267 : vector<128x1xf32> to vector<128x128xf32>
    %269 = arith.subf %265, %268 : vector<128x128xf32>
    %270 = math.exp %269 : vector<128x128xf32>
    %271 = arith.mulf %270, %86 : vector<128x128xf32>
    %cst_106 = arith.constant dense<0.000000e+00> : vector<128xf32>
    %272 = vector.multi_reduction <add>, %271, %cst_106 [1] : vector<128x128xf32> to vector<128xf32>
    %273 = vector.shape_cast %272 : vector<128xf32> to vector<128x1xf32>
    %cst_107 = arith.constant 1.000000e-30 : f32
    %274 = vector.broadcast %cst_107 : f32 to vector<128x1xf32>
    %275 = arith.maximumf %273, %274 : vector<128x1xf32>
    %276 = tpu.reciprocal %275 {approx = true} : vector<128x1xf32> -> vector<128x1xf32>
    %277 = vector.broadcast %276 : vector<128x1xf32> to vector<128x128xf32>
    %278 = arith.mulf %271, %277 : vector<128x128xf32>
    %279 = arith.truncf %278 : vector<128x128xf32> to vector<128x128xbf16>
    %cst_108 = arith.constant dense<0.000000e+00> : vector<128x8xf32>
    %280 = tpu.matmul %279, %262, %cst_108 {dimension_numbers = #tpu.dot_dimension_numbers<[1], [0], [0], [1], [0, 0, 1, 1], [], []>} : vector<128x128xbf16>, vector<128x8xbf16>, vector<128x8xf32> -> vector<128x8xf32>
    %281 = arith.truncf %280 : vector<128x8xf32> to vector<128x8xbf16>
    %282 = vector.extract_strided_slice %87 {offsets = [48, 0], sizes = [8, 64], strides = [1, 1]} : vector<64x64xbf16> to vector<8x64xbf16>
    %cst_109 = arith.constant dense<0.000000e+00> : vector<128x64xf32>
    %283 = tpu.matmul %281, %282, %cst_109 {dimension_numbers = #tpu.dot_dimension_numbers<[1], [0], [0], [1], [0, 0, 1, 1], [], []>} : vector<128x8xbf16>, vector<8x64xbf16>, vector<128x64xf32> -> vector<128x64xf32>
    %284 = arith.addf %256, %283 : vector<128x64xf32>
    %285 = vector.extract_strided_slice %75 {offsets = [0, 56], sizes = [128, 8], strides = [1, 1]} : vector<128x64xf32> to vector<128x8xf32>
    %286 = arith.truncf %285 : vector<128x8xf32> to vector<128x8xbf16>
    %287 = vector.extract_strided_slice %80 {offsets = [0, 56], sizes = [128, 8], strides = [1, 1]} : vector<128x64xf32> to vector<128x8xf32>
    %288 = arith.truncf %287 : vector<128x8xf32> to vector<128x8xbf16>
    %289 = vector.extract_strided_slice %85 {offsets = [0, 56], sizes = [128, 8], strides = [1, 1]} : vector<128x64xf32> to vector<128x8xf32>
    %290 = arith.truncf %289 : vector<128x8xf32> to vector<128x8xbf16>
    %cst_110 = arith.constant dense<0.000000e+00> : vector<128x128xf32>
    %291 = tpu.matmul %286, %288, %cst_110 {dimension_numbers = #tpu.dot_dimension_numbers<[1], [1], [0], [0], [0, 0, 1, 0], [], []>} : vector<128x8xbf16>, vector<128x8xbf16>, vector<128x128xf32> -> vector<128x128xf32>
    %cst_111 = arith.constant 0.353553385 : f32
    %292 = vector.broadcast %cst_111 : f32 to vector<128x128xf32>
    %293 = arith.mulf %291, %292 : vector<128x128xf32>
    %cst_112 = arith.constant dense<0xFF800000> : vector<128xf32>
    %294 = vector.multi_reduction <maximumf>, %293, %cst_112 [1] : vector<128x128xf32> to vector<128xf32>
    %295 = vector.shape_cast %294 : vector<128xf32> to vector<128x1xf32>
    %296 = vector.broadcast %295 : vector<128x1xf32> to vector<128x128xf32>
    %297 = arith.subf %293, %296 : vector<128x128xf32>
    %298 = math.exp %297 : vector<128x128xf32>
    %299 = arith.mulf %298, %86 : vector<128x128xf32>
    %cst_113 = arith.constant dense<0.000000e+00> : vector<128xf32>
    %300 = vector.multi_reduction <add>, %299, %cst_113 [1] : vector<128x128xf32> to vector<128xf32>
    %301 = vector.shape_cast %300 : vector<128xf32> to vector<128x1xf32>
    %cst_114 = arith.constant 1.000000e-30 : f32
    %302 = vector.broadcast %cst_114 : f32 to vector<128x1xf32>
    %303 = arith.maximumf %301, %302 : vector<128x1xf32>
    %304 = tpu.reciprocal %303 {approx = true} : vector<128x1xf32> -> vector<128x1xf32>
    %305 = vector.broadcast %304 : vector<128x1xf32> to vector<128x128xf32>
    %306 = arith.mulf %299, %305 : vector<128x128xf32>
    %307 = arith.truncf %306 : vector<128x128xf32> to vector<128x128xbf16>
    %cst_115 = arith.constant dense<0.000000e+00> : vector<128x8xf32>
    %308 = tpu.matmul %307, %290, %cst_115 {dimension_numbers = #tpu.dot_dimension_numbers<[1], [0], [0], [1], [0, 0, 1, 1], [], []>} : vector<128x128xbf16>, vector<128x8xbf16>, vector<128x8xf32> -> vector<128x8xf32>
    %309 = arith.truncf %308 : vector<128x8xf32> to vector<128x8xbf16>
    %310 = vector.extract_strided_slice %87 {offsets = [56, 0], sizes = [8, 64], strides = [1, 1]} : vector<64x64xbf16> to vector<8x64xbf16>
    %cst_116 = arith.constant dense<0.000000e+00> : vector<128x64xf32>
    %311 = tpu.matmul %309, %310, %cst_116 {dimension_numbers = #tpu.dot_dimension_numbers<[1], [0], [0], [1], [0, 0, 1, 1], [], []>} : vector<128x8xbf16>, vector<8x64xbf16>, vector<128x64xf32> -> vector<128x64xf32>
    %312 = arith.addf %284, %311 : vector<128x64xf32>
    %c0_117 = arith.constant 0 : index
    %c0_118 = arith.constant 0 : index
    %313 = vector.load %arg22[%c0_117, %c0_118] : memref<1x64xf32, #tpu.memory_space<vmem>>, vector<1x64xf32>
    %314 = vector.broadcast %313 : vector<1x64xf32> to vector<128x64xf32>
    %315 = arith.addf %312, %314 : vector<128x64xf32>
    %c0_119 = arith.constant 0 : index
    %c0_120 = arith.constant 0 : index
    %316 = vector.load %arg24[%c0_119, %c0_120] : memref<16x128xf32, #tpu.memory_space<vmem>>, vector<16x128xf32>
    %cst_121 = arith.constant dense<0.000000e+00> : vector<16x64xf32>
    %317 = tpu.matmul %316, %315, %cst_121 {dimension_numbers = #tpu.dot_dimension_numbers<[1], [0], [0], [1], [0, 0, 1, 1], [], []>} : vector<16x128xf32>, vector<128x64xf32>, vector<16x64xf32> -> vector<16x64xf32>
    %c0_122 = arith.constant 0 : index
    %c0_123 = arith.constant 0 : index
    %318 = vector.load %arg25[%c0_122, %c0_123] : memref<16x128xf32, #tpu.memory_space<vmem>>, vector<16x128xf32>
    %cst_124 = arith.constant dense<0.000000e+00> : vector<16x64xf32>
    %319 = tpu.matmul %318, %315, %cst_124 {dimension_numbers = #tpu.dot_dimension_numbers<[1], [0], [0], [1], [0, 0, 1, 1], [], []>} : vector<16x128xf32>, vector<128x64xf32>, vector<16x64xf32> -> vector<16x64xf32>
    %320 = arith.truncf %317 : vector<16x64xf32> to vector<16x64xbf16>
    %c0_125 = arith.constant 0 : index
    %c0_126 = arith.constant 0 : index
    %321 = vector.load %arg26[%c0_125, %c0_126] : memref<64x64xbf16, #tpu.memory_space<vmem>>, vector<64x64xbf16>
    %cst_127 = arith.constant dense<0.000000e+00> : vector<16x64xf32>
    %322 = tpu.matmul %320, %321, %cst_127 {dimension_numbers = #tpu.dot_dimension_numbers<[1], [0], [0], [1], [0, 0, 1, 1], [], []>} : vector<16x64xbf16>, vector<64x64xbf16>, vector<16x64xf32> -> vector<16x64xf32>
    %323 = arith.truncf %319 : vector<16x64xf32> to vector<16x64xbf16>
    %c0_128 = arith.constant 0 : index
    %c0_129 = arith.constant 0 : index
    %324 = vector.load %arg27[%c0_128, %c0_129] : memref<64x64xbf16, #tpu.memory_space<vmem>>, vector<64x64xbf16>
    %cst_130 = arith.constant dense<0.000000e+00> : vector<16x64xf32>
    %325 = tpu.matmul %323, %324, %cst_130 {dimension_numbers = #tpu.dot_dimension_numbers<[1], [0], [0], [1], [0, 0, 1, 1], [], []>} : vector<16x64xbf16>, vector<64x64xbf16>, vector<16x64xf32> -> vector<16x64xf32>
    %326 = arith.addf %322, %325 : vector<16x64xf32>
    %c0_131 = arith.constant 0 : index
    %c0_132 = arith.constant 0 : index
    %327 = vector.load %arg28[%c0_131, %c0_132] : memref<1x64xf32, #tpu.memory_space<vmem>>, vector<1x64xf32>
    %328 = vector.broadcast %327 : vector<1x64xf32> to vector<16x64xf32>
    %329 = arith.addf %326, %328 : vector<16x64xf32>
    %cst_133 = arith.constant dense<0.000000e+00> : vector<16xf32>
    %330 = vector.multi_reduction <add>, %329, %cst_133 [1] : vector<16x64xf32> to vector<16xf32>
    %331 = vector.shape_cast %330 : vector<16xf32> to vector<16x1xf32>
    %cst_134 = arith.constant 6.400000e+01 : f32
    %332 = vector.broadcast %cst_134 : f32 to vector<16x1xf32>
    %333 = arith.divf %331, %332 : vector<16x1xf32>
    %334 = vector.broadcast %333 : vector<16x1xf32> to vector<16x64xf32>
    %335 = arith.subf %329, %334 : vector<16x64xf32>
    %336 = vector.broadcast %333 : vector<16x1xf32> to vector<16x64xf32>
    %337 = arith.subf %329, %336 : vector<16x64xf32>
    %338 = arith.mulf %335, %337 : vector<16x64xf32>
    %cst_135 = arith.constant dense<0.000000e+00> : vector<16xf32>
    %339 = vector.multi_reduction <add>, %338, %cst_135 [1] : vector<16x64xf32> to vector<16xf32>
    %340 = vector.shape_cast %339 : vector<16xf32> to vector<16x1xf32>
    %cst_136 = arith.constant 6.400000e+01 : f32
    %341 = vector.broadcast %cst_136 : f32 to vector<16x1xf32>
    %342 = arith.divf %340, %341 : vector<16x1xf32>
    %343 = vector.broadcast %333 : vector<16x1xf32> to vector<16x64xf32>
    %344 = arith.subf %329, %343 : vector<16x64xf32>
    %cst_137 = arith.constant 9.99999974E-6 : f32
    %345 = vector.broadcast %cst_137 : f32 to vector<16x1xf32>
    %346 = arith.addf %342, %345 : vector<16x1xf32>
    %347 = math.rsqrt %346 : vector<16x1xf32>
    %348 = vector.broadcast %347 : vector<16x1xf32> to vector<16x64xf32>
    %349 = arith.mulf %344, %348 : vector<16x64xf32>
    %c0_138 = arith.constant 0 : index
    %c0_139 = arith.constant 0 : index
    %350 = vector.load %arg29[%c0_138, %c0_139] : memref<1x64xf32, #tpu.memory_space<vmem>>, vector<1x64xf32>
    %351 = vector.broadcast %350 : vector<1x64xf32> to vector<16x64xf32>
    %352 = arith.mulf %349, %351 : vector<16x64xf32>
    %c0_140 = arith.constant 0 : index
    %c0_141 = arith.constant 0 : index
    %353 = vector.load %arg30[%c0_140, %c0_141] : memref<1x64xf32, #tpu.memory_space<vmem>>, vector<1x64xf32>
    %354 = vector.broadcast %353 : vector<1x64xf32> to vector<16x64xf32>
    %355 = arith.addf %352, %354 : vector<16x64xf32>
    %cst_142 = arith.constant 0.000000e+00 : f32
    %356 = vector.broadcast %cst_142 : f32 to vector<16x64xf32>
    %357 = arith.maximumf %355, %356 : vector<16x64xf32>
    %358 = arith.truncf %357 : vector<16x64xf32> to vector<16x64xbf16>
    %c0_143 = arith.constant 0 : index
    %c0_144 = arith.constant 0 : index
    %359 = vector.load %arg31[%c0_143, %c0_144] : memref<64x128xbf16, #tpu.memory_space<vmem>>, vector<64x128xbf16>
    %cst_145 = arith.constant dense<0.000000e+00> : vector<16x128xf32>
    %360 = tpu.matmul %358, %359, %cst_145 {dimension_numbers = #tpu.dot_dimension_numbers<[1], [0], [0], [1], [0, 0, 1, 1], [], []>} : vector<16x64xbf16>, vector<64x128xbf16>, vector<16x128xf32> -> vector<16x128xf32>
    %c0_146 = arith.constant 0 : index
    %c0_147 = arith.constant 0 : index
    %361 = vector.load %arg32[%c0_146, %c0_147] : memref<1x128xf32, #tpu.memory_space<vmem>>, vector<1x128xf32>
    %362 = vector.broadcast %361 : vector<1x128xf32> to vector<16x128xf32>
    %363 = arith.addf %360, %362 : vector<16x128xf32>
    %c0_148 = arith.constant 0 : index
    %c0_149 = arith.constant 0 : index
    %364 = vector.load %arg33[%c0_148, %c0_149] : memref<16x128xf32, #tpu.memory_space<vmem>>, vector<16x128xf32>
    tpu.vector_store %arg33[%c0_148, %c0_149], %363 {strides = array<i32>} : memref<16x128xf32, #tpu.memory_space<vmem>>, vector<16x128xf32>,
    return
  }
  func.func @transform_0(%arg0: i32) -> (i32, i32) {
    %c0_i32 = arith.constant 0 : i32
    %c0_i32_0 = arith.constant 0 : i32
    return %arg0, %c0_i32 : i32, i32
  }
  func.func @transform_1(%arg0: i32) -> (i32, i32) {
    %c0_i32 = arith.constant 0 : i32
    %c0_i32_0 = arith.constant 0 : i32
    %c0_i32_1 = arith.constant 0 : i32
    return %c0_i32, %c0_i32_0 : i32, i32
  }
  func.func @transform_2(%arg0: i32) -> (i32, i32) {
    %c0_i32 = arith.constant 0 : i32
    %c0_i32_0 = arith.constant 0 : i32
    %c0_i32_1 = arith.constant 0 : i32
    return %c0_i32, %c0_i32_0 : i32, i32
  }
  func.func @transform_3(%arg0: i32) -> (i32, i32) {
    %c0_i32 = arith.constant 0 : i32
    %c0_i32_0 = arith.constant 0 : i32
    %c0_i32_1 = arith.constant 0 : i32
    return %c0_i32, %c0_i32_0 : i32, i32
  }
  func.func @transform_4(%arg0: i32) -> (i32, i32) {
    %c0_i32 = arith.constant 0 : i32
    %c0_i32_0 = arith.constant 0 : i32
    %c0_i32_1 = arith.constant 0 : i32
    return %c0_i32, %c0_i32_0 : i32, i32
  }
  func.func @transform_5(%arg0: i32) -> (i32, i32) {
    %c0_i32 = arith.constant 0 : i32
    %c0_i32_0 = arith.constant 0 : i32
    %c0_i32_1 = arith.constant 0 : i32
    return %c0_i32, %c0_i32_0 : i32, i32
  }
  func.func @transform_6(%arg0: i32) -> (i32, i32) {
    %c0_i32 = arith.constant 0 : i32
    %c0_i32_0 = arith.constant 0 : i32
    %c0_i32_1 = arith.constant 0 : i32
    return %c0_i32, %c0_i32_0 : i32, i32
  }
  func.func @transform_7(%arg0: i32) -> (i32, i32) {
    %c0_i32 = arith.constant 0 : i32
    %c0_i32_0 = arith.constant 0 : i32
    %c0_i32_1 = arith.constant 0 : i32
    return %c0_i32, %c0_i32_0 : i32, i32
  }
  func.func @transform_8(%arg0: i32) -> (i32, i32) {
    %c0_i32 = arith.constant 0 : i32
    %c0_i32_0 = arith.constant 0 : i32
    %c0_i32_1 = arith.constant 0 : i32
    return %c0_i32, %c0_i32_0 : i32, i32
  }
  func.func @transform_9(%arg0: i32) -> (i32, i32) {
    %c0_i32 = arith.constant 0 : i32
    %c0_i32_0 = arith.constant 0 : i32
    %c0_i32_1 = arith.constant 0 : i32
    return %c0_i32, %c0_i32_0 : i32, i32
  }
  func.func @transform_10(%arg0: i32) -> (i32, i32) {
    %c0_i32 = arith.constant 0 : i32
    %c0_i32_0 = arith.constant 0 : i32
    %c0_i32_1 = arith.constant 0 : i32
    return %c0_i32, %c0_i32_0 : i32, i32
  }
  func.func @transform_11(%arg0: i32) -> (i32, i32) {
    %c0_i32 = arith.constant 0 : i32
    %c0_i32_0 = arith.constant 0 : i32
    %c0_i32_1 = arith.constant 0 : i32
    return %c0_i32, %c0_i32_0 : i32, i32
  }
  func.func @transform_12(%arg0: i32) -> (i32, i32) {
    %c0_i32 = arith.constant 0 : i32
    %c0_i32_0 = arith.constant 0 : i32
    %c0_i32_1 = arith.constant 0 : i32
    return %c0_i32, %c0_i32_0 : i32, i32
  }
  func.func @transform_13(%arg0: i32) -> (i32, i32) {
    %c0_i32 = arith.constant 0 : i32
    %c0_i32_0 = arith.constant 0 : i32
    %c0_i32_1 = arith.constant 0 : i32
    return %c0_i32, %c0_i32_0 : i32, i32
  }
  func.func @transform_14(%arg0: i32) -> (i32, i32) {
    %c0_i32 = arith.constant 0 : i32
    %c0_i32_0 = arith.constant 0 : i32
    %c0_i32_1 = arith.constant 0 : i32
    return %c0_i32, %c0_i32_0 : i32, i32
  }
  func.func @transform_15(%arg0: i32) -> (i32, i32) {
    %c0_i32 = arith.constant 0 : i32
    %c0_i32_0 = arith.constant 0 : i32
    %c0_i32_1 = arith.constant 0 : i32
    return %c0_i32, %c0_i32_0 : i32, i32
  }
  func.func @transform_16(%arg0: i32) -> (i32, i32) {
    %c0_i32 = arith.constant 0 : i32
    %c0_i32_0 = arith.constant 0 : i32
    %c0_i32_1 = arith.constant 0 : i32
    return %c0_i32, %c0_i32_0 : i32, i32
  }
  func.func @transform_17(%arg0: i32) -> (i32, i32) {
    %c0_i32 = arith.constant 0 : i32
    %c0_i32_0 = arith.constant 0 : i32
    %c0_i32_1 = arith.constant 0 : i32
    return %c0_i32, %c0_i32_0 : i32, i32
  }
  func.func @transform_18(%arg0: i32) -> (i32, i32) {
    %c0_i32 = arith.constant 0 : i32
    %c0_i32_0 = arith.constant 0 : i32
    %c0_i32_1 = arith.constant 0 : i32
    return %c0_i32, %c0_i32_0 : i32, i32
  }
  func.func @transform_19(%arg0: i32) -> (i32, i32) {
    %c0_i32 = arith.constant 0 : i32
    %c0_i32_0 = arith.constant 0 : i32
    %c0_i32_1 = arith.constant 0 : i32
    return %c0_i32, %c0_i32_0 : i32, i32
  }
  func.func @transform_20(%arg0: i32) -> (i32, i32) {
    %c0_i32 = arith.constant 0 : i32
    %c0_i32_0 = arith.constant 0 : i32
    %c0_i32_1 = arith.constant 0 : i32
    return %c0_i32, %c0_i32_0 : i32, i32
  }
  func.func @transform_21(%arg0: i32) -> (i32, i32) {
    %c0_i32 = arith.constant 0 : i32
    %c0_i32_0 = arith.constant 0 : i32
    %c0_i32_1 = arith.constant 0 : i32
    return %c0_i32, %c0_i32_0 : i32, i32
  }
  func.func @transform_22(%arg0: i32) -> (i32, i32) {
    %c0_i32 = arith.constant 0 : i32
    %c0_i32_0 = arith.constant 0 : i32
    %c0_i32_1 = arith.constant 0 : i32
    return %c0_i32, %c0_i32_0 : i32, i32
  }
  func.func @transform_23(%arg0: i32) -> (i32, i32) {
    %c0_i32 = arith.constant 0 : i32
    %c0_i32_0 = arith.constant 0 : i32
    %c0_i32_1 = arith.constant 0 : i32
    return %c0_i32, %c0_i32_0 : i32, i32
  }
  func.func @transform_24(%arg0: i32) -> (i32, i32) {
    %c0_i32 = arith.constant 0 : i32
    %c0_i32_0 = arith.constant 0 : i32
    %c0_i32_1 = arith.constant 0 : i32
    return %c0_i32, %c0_i32_0 : i32, i32
  }
  func.func @transform_25(%arg0: i32) -> (i32, i32) {
    %c0_i32 = arith.constant 0 : i32
    %c0_i32_0 = arith.constant 0 : i32
    %c0_i32_1 = arith.constant 0 : i32
    return %c0_i32, %c0_i32_0 : i32, i32
  }
  func.func @transform_26(%arg0: i32) -> (i32, i32) {
    %c0_i32 = arith.constant 0 : i32
    %c0_i32_0 = arith.constant 0 : i32
    %c0_i32_1 = arith.constant 0 : i32
    return %c0_i32, %c0_i32_0 : i32, i32
  }
  func.func @transform_27(%arg0: i32) -> (i32, i32) {
    %c0_i32 = arith.constant 0 : i32
    %c0_i32_0 = arith.constant 0 : i32
    %c0_i32_1 = arith.constant 0 : i32
    return %c0_i32, %c0_i32_0 : i32, i32
  }
  func.func @transform_28(%arg0: i32) -> (i32, i32) {
    %c0_i32 = arith.constant 0 : i32
    %c0_i32_0 = arith.constant 0 : i32
    %c0_i32_1 = arith.constant 0 : i32
    return %c0_i32, %c0_i32_0 : i32, i32
  }
  func.func @transform_29(%arg0: i32) -> (i32, i32) {
    %c0_i32 = arith.constant 0 : i32
    %c0_i32_0 = arith.constant 0 : i32
    %c0_i32_1 = arith.constant 0 : i32
    return %c0_i32, %c0_i32_0 : i32, i32
  }
  func.func @transform_30(%arg0: i32) -> (i32, i32) {
    %c0_i32 = arith.constant 0 : i32
    %c0_i32_0 = arith.constant 0 : i32
    %c0_i32_1 = arith.constant 0 : i32
    return %c0_i32, %c0_i32_0 : i32, i32
  }
  func.func @transform_31(%arg0: i32) -> (i32, i32) {
    %c0_i32 = arith.constant 0 : i32
    %c0_i32_0 = arith.constant 0 : i32
    %c0_i32_1 = arith.constant 0 : i32
    return %c0_i32, %c0_i32_0 : i32, i32
  }
  func.func @transform_32(%arg0: i32) -> (i32, i32) {
    %c0_i32 = arith.constant 0 : i32
    %c0_i32_0 = arith.constant 0 : i32
    return %arg0, %c0_i32 : i32, i32
  }
}

</mosaic_0001>

<llo_original>
// kernel: _forward_points.1
$region0: #{_forward_points.1}
  #allocation0 [shape = 'u32[]', space=smem, size = 0x4, offset = 0x4, fixed_abs, tag = 'smem constant byte address 0x4 - core index']
  #allocation1 [shape = 'u32[144,128]{1,0:T(1,128)}', space=vmem, size = 0x12000, scoped, tag = 'internal scratch']
  %s0 = inlined_call_operand.smem [shape: u32[33], index: -1, kind: input, shape index: {}]
  %s1 = sld [smem:[%s0]]
  %s2 = scalar_lea.smem %s0, 1
  %s3 = sld [smem:[%s2]]
  %s4 = scalar_lea.smem %s0, 2
  %s5 = sld [smem:[%s4]]
  %s6 = scalar_lea.smem %s0, 3
  %s7 = sld [smem:[%s6]]
  %s8 = scalar_lea.smem %s0, 4
  %s9 = sld [smem:[%s8]]
  %s10 = scalar_lea.smem %s0, 5
  %s11 = sld [smem:[%s10]]
  %s12 = scalar_lea.smem %s0, 6
  %s13 = sld [smem:[%s12]]
  %s14 = scalar_lea.smem %s0, 7
  %s15 = sld [smem:[%s14]]
  %s16 = scalar_lea.smem %s0, 8
  %s17 = sld [smem:[%s16]]
  %s18 = scalar_lea.smem %s0, 9
  %s19 = sld [smem:[%s18]]
  %s20 = scalar_lea.smem %s0, 10
  %s21 = sld [smem:[%s20]]
  %s22 = scalar_lea.smem %s0, 11
  %s23 = sld [smem:[%s22]]
  %s24 = scalar_lea.smem %s0, 12
  %s25 = sld [smem:[%s24]]
  %s26 = scalar_lea.smem %s0, 13
  %s27 = sld [smem:[%s26]]
  %s28 = scalar_lea.smem %s0, 14
  %s29 = sld [smem:[%s28]]
  %s30 = scalar_lea.smem %s0, 15
  %s31 = sld [smem:[%s30]]
  %s32 = scalar_lea.smem %s0, 16
  %s33 = sld [smem:[%s32]]
  %s34 = scalar_lea.smem %s0, 17
  %s35 = sld [smem:[%s34]]
  %s36 = scalar_lea.smem %s0, 18
  %s37 = sld [smem:[%s36]]
  %s38 = scalar_lea.smem %s0, 19
  %s39 = sld [smem:[%s38]]
  %s40 = scalar_lea.smem %s0, 20
  %s41 = sld [smem:[%s40]]
  %s42 = scalar_lea.smem %s0, 21
  %s43 = sld [smem:[%s42]]
  %s44 = scalar_lea.smem %s0, 22
  %s45 = sld [smem:[%s44]]
  %s46 = scalar_lea.smem %s0, 23
  %s47 = sld [smem:[%s46]]
  %s48 = scalar_lea.smem %s0, 24
  %s49 = sld [smem:[%s48]]
  %s50 = scalar_lea.smem %s0, 25
  %s51 = sld [smem:[%s50]]
  %s52 = scalar_lea.smem %s0, 26
  %s53 = sld [smem:[%s52]]
  %s54 = scalar_lea.smem %s0, 27
  %s55 = sld [smem:[%s54]]
  %s56 = scalar_lea.smem %s0, 28
  %s57 = sld [smem:[%s56]]
  %s58 = scalar_lea.smem %s0, 29
  %s59 = sld [smem:[%s58]]
  %s60 = scalar_lea.smem %s0, 30
  %s61 = sld [smem:[%s60]]
  %s62 = scalar_lea.smem %s0, 31
  %s63 = sld [smem:[%s62]]
  %s64 = scalar_lea.smem %s0, 32
  %s65 = sld [smem:[%s64]]
  %s66 = sld [smem:[#allocation0]]
  $region210: #{_forward_points.1} parent=0
    _
  %s68 = ssub.s32 1, %s66
  %s69 = scalar_select 0, %s68, %s66
  $region1: #{_forward_points.1} parent=0
    #allocation2 [shape = 'u8[262144]{0}', space=vmem, size = 0x40000, scoped, tag = 'input window, operand 10, single buffered']
    #allocation3 [shape = 's32[1]{0}', space=sflag, size = 0x4, scoped, tag = 'scoped memory for _forward_points.1']
    #allocation4 [shape = 'u8[262144]{0}', space=vmem, size = 0x40000, scoped, tag = 'input window, operand 11, single buffered']
    #allocation5 [shape = 's32[1]{0}', space=sflag, size = 0x4, scoped, tag = 'scoped memory for _forward_points.1']
    #allocation6 [shape = 'u8[32768]{0}', space=vmem, size = 0x8000, scoped, tag = 'input window, operand 12, single buffered']
    #allocation7 [shape = 'u8[262144]{0}', space=vmem, size = 0x40000, scoped, tag = 'input window, operand 13, single buffered']
    #allocation8 [shape = 's32[1]{0}', space=sflag, size = 0x4, scoped, tag = 'scoped memory for _forward_points.1']
    #allocation9 [shape = 'u8[512]{0}', space=vmem, size = 0x400, scoped, tag = 'input window, operand 17, single buffered']
    #allocation10 [shape = 'u8[512]{0}', space=vmem, size = 0x400, scoped, tag = 'input window, operand 18, single buffered']
    #allocation11 [shape = 's32[1]{0}', space=sflag, size = 0x4, scoped, tag = 'scoped memory for _forward_points.1']
    #allocation12 [shape = 'u8[512]{0}', space=vmem, size = 0x400, scoped, tag = 'input window, operand 19, single buffered']
    #allocation13 [shape = 'u8[512]{0}', space=vmem, size = 0x400, scoped, tag = 'input window, operand 21, single buffered']
    #allocation14 [shape = 's32[1]{0}', space=sflag, size = 0x4, scoped, tag = 'scoped memory for _forward_points.1']
    #allocation15 [shape = 'u8[65536]{0}', space=vmem, size = 0x10000, scoped, tag = 'input window, operand 22, single buffered']
    #allocation16 [shape = 'u8[8192]{0}', space=vmem, size = 0x2000, scoped, tag = 'input window, operand 23, single buffered']
    #allocation17 [shape = 's32[1]{0}', space=sflag, size = 0x4, scoped, tag = 'scoped memory for _forward_points.1']
    #allocation18 [shape = 'u8[8192]{0}', space=vmem, size = 0x2000, scoped, tag = 'input window, operand 24, single buffered']
    #allocation19 [shape = 'u8[16384]{0}', space=vmem, size = 0x4000, scoped, tag = 'input window, operand 25, single buffered']
    #allocation20 [shape = 's32[1]{0}', space=sflag, size = 0x4, scoped, tag = 'scoped memory for _forward_points.1']
    #allocation21 [shape = 'u8[16384]{0}', space=vmem, size = 0x4000, scoped, tag = 'input window, operand 26, single buffered']
    #allocation22 [shape = 'u8[512]{0}', space=vmem, size = 0x400, scoped, tag = 'input window, operand 27, single buffered']
    #allocation23 [shape = 's32[1]{0}', space=sflag, size = 0x4, scoped, tag = 'scoped memory for _forward_points.1']
    #allocation24 [shape = 'u8[512]{0}', space=vmem, size = 0x400, scoped, tag = 'input window, operand 28, single buffered']
    #allocation25 [shape = 'u8[512]{0}', space=vmem, size = 0x400, scoped, tag = 'input window, operand 29, single buffered']
    #allocation26 [shape = 's32[1]{0}', space=sflag, size = 0x4, scoped, tag = 'scoped memory for _forward_points.1']
    #allocation27 [shape = 'u8[16384]{0}', space=vmem, size = 0x4000, scoped, tag = 'input window, operand 30, single buffered']
    #allocation28 [shape = 'u8[512]{0}', space=vmem, size = 0x400, scoped, tag = 'input window, operand 31, single buffered']
    #allocation29 [shape = 's32[1]{0}', space=sflag, size = 0x4, scoped, tag = 'scoped memory for _forward_points.1']
    %70 = vsyncpa [#allocation3], 0
    %71 = vsyncpa [#allocation5], 0
    %72 = vsyncpa [#allocation8], 0
    %73 = vsyncpa [#allocation11], 0
    %74 = vsyncpa [#allocation14], 0
    %75 = vsyncpa [#allocation17], 0
    %76 = vsyncpa [#allocation20], 0
    %77 = vsyncpa [#allocation23], 0
    %78 = vsyncpa [#allocation26], 0
    %79 = vsyncpa [#allocation29], 0
    // Predicated region
    $region2: #{_forward_points.1} parent=1 // pred_check
      _
    $region3: #{_forward_points.1} parent=1 // pred_check_branch
      %81 = sbr.rel (0) target = $region5
    $region4: #{_forward_points.1} parent=1 // pred_region
      _
    $region5: #{_forward_points.1} parent=1 // pred_fallthru
      _
    // Predicated region
    $region6: #{_forward_points.1} parent=1 // pred_check
      _
    $region7: #{_forward_points.1} parent=1 // pred_check_branch
      %83 = sbr.rel (0) target = $region9
    $region8: #{_forward_points.1} parent=1 // pred_region
      _
    $region9: #{_forward_points.1} parent=1 // pred_fallthru
      _
    // Predicated region
    $region10: #{_forward_points.1} parent=1 // pred_check
      _
    $region11: #{_forward_points.1} parent=1 // pred_check_branch
      %85 = sbr.rel (0) target = $region13
    $region12: #{_forward_points.1} parent=1 // pred_region
      _
    $region13: #{_forward_points.1} parent=1 // pred_fallthru
      _
    // Predicated region
    $region14: #{_forward_points.1} parent=1 // pred_check
      _
    $region15: #{_forward_points.1} parent=1 // pred_check_branch
      %87 = sbr.rel (0) target = $region17
    $region16: #{_forward_points.1} parent=1 // pred_region
      _
    $region17: #{_forward_points.1} parent=1 // pred_fallthru
      _
    // Predicated region
    $region18: #{_forward_points.1} parent=1 // pred_check
      _
    $region19: #{_forward_points.1} parent=1 // pred_check_branch
      %89 = sbr.rel (0) target = $region21
    $region20: #{_forward_points.1} parent=1 // pred_region
      _
    $region21: #{_forward_points.1} parent=1 // pred_fallthru
      _
    // Predicated region
    $region22: #{_forward_points.1} parent=1 // pred_check
      _
    $region23: #{_forward_points.1} parent=1 // pred_check_branch
      %91 = sbr.rel (0) target = $region25
    $region24: #{_forward_points.1} parent=1 // pred_region
      _
    $region25: #{_forward_points.1} parent=1 // pred_fallthru
      _
    // Predicated region
    $region26: #{_forward_points.1} parent=1 // pred_check
      _
    $region27: #{_forward_points.1} parent=1 // pred_check_branch
      %93 = sbr.rel (0) target = $region29
    $region28: #{_forward_points.1} parent=1 // pred_region
      _
    $region29: #{_forward_points.1} parent=1 // pred_fallthru
      _
    // Predicated region
    $region30: #{_forward_points.1} parent=1 // pred_check
      _
    $region31: #{_forward_points.1} parent=1 // pred_check_branch
      %95 = sbr.rel (0) target = $region33
    $region32: #{_forward_points.1} parent=1 // pred_region
      _
    $region33: #{_forward_points.1} parent=1 // pred_fallthru
      _
    // Predicated region
    $region34: #{_forward_points.1} parent=1 // pred_check
      _
    $region35: #{_forward_points.1} parent=1 // pred_check_branch
      %97 = sbr.rel (0) target = $region37
    $region36: #{_forward_points.1} parent=1 // pred_region
      _
    $region37: #{_forward_points.1} parent=1 // pred_fallthru
      _
    // Predicated region
    $region38: #{_forward_points.1} parent=1 // pred_check
      _
    $region39: #{_forward_points.1} parent=1 // pred_check_branch
      %99 = sbr.rel (0) target = $region41
    $region40: #{_forward_points.1} parent=1 // pred_region
      _
    $region41: #{_forward_points.1} parent=1 // pred_fallthru
      _
    // Predicated region
    $region42: #{_forward_points.1} parent=1 // pred_check
      _
    $region43: #{_forward_points.1} parent=1 // pred_check_branch
      %101 = sbr.rel (0) target = $region45
    $region44: #{_forward_points.1} parent=1 // pred_region
      %s103 = ssub.s32 8192, 8192
      %104 = vsyncadd [#allocation3], %s103
      %s105 = sshll.u32 [#allocation2], 4
      %s106 = int_to_ptr.vmem [resolvable:$true] %s105
      %111 = dma.hbm_to_vmem [thread:$0]  %s21, 8192, %s106, [#allocation3], 512, 512, 32
    $region45: #{_forward_points.1} parent=1 // pred_fallthru
      _
    // Predicated region
    $region46: #{_forward_points.1} parent=1 // pred_check
      _
    $region47: #{_forward_points.1} parent=1 // pred_check_branch
      %113 = sbr.rel (0) target = $region49
    $region48: #{_forward_points.1} parent=1 // pred_region
      %s115 = ssub.s32 8192, 8192
      %116 = vsyncadd [#allocation5], %s115
      %s117 = sshll.u32 [#allocation4], 4
      %s118 = int_to_ptr.vmem [resolvable:$true] %s117
      %123 = dma.hbm_to_vmem [thread:$0]  %s23, 8192, %s118, [#allocation5], 512, 512, 32
    $region49: #{_forward_points.1} parent=1 // pred_fallthru
      _
    // Predicated region
    $region50: #{_forward_points.1} parent=1 // pred_check
      _
    $region51: #{_forward_points.1} parent=1 // pred_check_branch
      %125 = sbr.rel (0) target = $region53
    $region52: #{_forward_points.1} parent=1 // pred_region
      %s127 = ssub.s32 1024, 1024
      %128 = vsyncadd [#allocation5], %s127
      %s129 = sshll.u32 [#allocation6], 4
      %s130 = int_to_ptr.vmem [resolvable:$true] %s129
      %135 = dma.hbm_to_vmem [thread:$0]  %s25, 1024, %s130, [#allocation5], 256, 256, 16
    $region53: #{_forward_points.1} parent=1 // pred_fallthru
      _
    // Predicated region
    $region54: #{_forward_points.1} parent=1 // pred_check
      _
    $region55: #{_forward_points.1} parent=1 // pred_check_branch
      %137 = sbr.rel (0) target = $region57
    $region56: #{_forward_points.1} parent=1 // pred_region
      %s139 = ssub.s32 8192, 8192
      %140 = vsyncadd [#allocation8], %s139
      %s141 = sshll.u32 [#allocation7], 4
      %s142 = int_to_ptr.vmem [resolvable:$true] %s141
      %147 = dma.hbm_to_vmem [thread:$0]  %s27, 8192, %s142, [#allocation8], 512, 512, 32
    $region57: #{_forward_points.1} parent=1 // pred_fallthru
      _
    // Predicated region
    $region58: #{_forward_points.1} parent=1 // pred_check
      _
    $region59: #{_forward_points.1} parent=1 // pred_check_branch
      %149 = sbr.rel (0) target = $region61
    $region60: #{_forward_points.1} parent=1 // pred_region
      _
    $region61: #{_forward_points.1} parent=1 // pred_fallthru
      _
    // Predicated region
    $region62: #{_forward_points.1} parent=1 // pred_check
      _
    $region63: #{_forward_points.1} parent=1 // pred_check_branch
      %151 = sbr.rel (0) target = $region65
    $region64: #{_forward_points.1} parent=1 // pred_region
      _
    $region65: #{_forward_points.1} parent=1 // pred_fallthru
      _
    // Predicated region
    $region66: #{_forward_points.1} parent=1 // pred_check
      _
    $region67: #{_forward_points.1} parent=1 // pred_check_branch
      %153 = sbr.rel (0) target = $region69
    $region68: #{_forward_points.1} parent=1 // pred_region
      _
    $region69: #{_forward_points.1} parent=1 // pred_fallthru
      _
    // Predicated region
    $region70: #{_forward_points.1} parent=1 // pred_check
      _
    $region71: #{_forward_points.1} parent=1 // pred_check_branch
      %155 = sbr.rel (0) target = $region73
    $region72: #{_forward_points.1} parent=1 // pred_region
      %s157 = ssub.s32 16, 16
      %158 = vsyncadd [#allocation8], %s157
      %s160 = sshll.u32 [#allocation9], 4
      %s161 = int_to_ptr.vmem [resolvable:$true] %s160
      %163 = dma.hbm_to_vmem [thread:$0]  %s35, 16, %s161, [#allocation8]
    $region73: #{_forward_points.1} parent=1 // pred_fallthru
      _
    // Predicated region
    $region74: #{_forward_points.1} parent=1 // pred_check
      _
    $region75: #{_forward_points.1} parent=1 // pred_check_branch
      %165 = sbr.rel (0) target = $region77
    $region76: #{_forward_points.1} parent=1 // pred_region
      %s167 = ssub.s32 16, 16
      %168 = vsyncadd [#allocation11], %s167
      %s170 = sshll.u32 [#allocation10], 4
      %s171 = int_to_ptr.vmem [resolvable:$true] %s170
      %173 = dma.hbm_to_vmem [thread:$0]  %s37, 16, %s171, [#allocation11]
    $region77: #{_forward_points.1} parent=1 // pred_fallthru
      _
    // Predicated region
    $region78: #{_forward_points.1} parent=1 // pred_check
      _
    $region79: #{_forward_points.1} parent=1 // pred_check_branch
      %175 = sbr.rel (0) target = $region81
    $region80: #{_forward_points.1} parent=1 // pred_region
      %s177 = ssub.s32 16, 16
      %178 = vsyncadd [#allocation11], %s177
      %s180 = sshll.u32 [#allocation12], 4
      %s181 = int_to_ptr.vmem [resolvable:$true] %s180
      %183 = dma.hbm_to_vmem [thread:$0]  %s39, 16, %s181, [#allocation11]
    $region81: #{_forward_points.1} parent=1 // pred_fallthru
      _
    // Predicated region
    $region82: #{_forward_points.1} parent=1 // pred_check
      _
    $region83: #{_forward_points.1} parent=1 // pred_check_branch
      %185 = sbr.rel (0) target = $region85
    $region84: #{_forward_points.1} parent=1 // pred_region
      _
    $region85: #{_forward_points.1} parent=1 // pred_fallthru
      _
    // Predicated region
    $region86: #{_forward_points.1} parent=1 // pred_check
      _
    $region87: #{_forward_points.1} parent=1 // pred_check_branch
      %187 = sbr.rel (0) target = $region89
    $region88: #{_forward_points.1} parent=1 // pred_region
      %s189 = ssub.s32 16, 16
      %190 = vsyncadd [#allocation14], %s189
      %s192 = sshll.u32 [#allocation13], 4
      %s193 = int_to_ptr.vmem [resolvable:$true] %s192
      %195 = dma.hbm_to_vmem [thread:$0]  %s43, 16, %s193, [#allocation14]
    $region89: #{_forward_points.1} parent=1 // pred_fallthru
      _
    // Predicated region
    $region90: #{_forward_points.1} parent=1 // pred_check
      _
    $region91: #{_forward_points.1} parent=1 // pred_check_branch
      %197 = sbr.rel (0) target = $region93
    $region92: #{_forward_points.1} parent=1 // pred_region
      %s199 = ssub.s32 2048, 2048
      %200 = vsyncadd [#allocation14], %s199
      %s201 = sshll.u32 [#allocation15], 4
      %s202 = int_to_ptr.vmem [resolvable:$true] %s201
      %207 = dma.hbm_to_vmem [thread:$0]  %s45, 2048, %s202, [#allocation14], 128, 128, 8
    $region93: #{_forward_points.1} parent=1 // pred_fallthru
      _
    // Predicated region
    $region94: #{_forward_points.1} parent=1 // pred_check
      _
    $region95: #{_forward_points.1} parent=1 // pred_check_branch
      %209 = sbr.rel (0) target = $region97
    $region96: #{_forward_points.1} parent=1 // pred_region
      %s211 = ssub.s32 256, 256
      %212 = vsyncadd [#allocation17], %s211
      %s213 = sshll.u32 [#allocation16], 4
      %s214 = int_to_ptr.vmem [resolvable:$true] %s213
      %219 = dma.hbm_to_vmem [thread:$0]  %s47, 256, %s214, [#allocation17], 128, 128, 8
    $region97: #{_forward_points.1} parent=1 // pred_fallthru
      _
    // Predicated region
    $region98: #{_forward_points.1} parent=1 // pred_check
      _
    $region99: #{_forward_points.1} parent=1 // pred_check_branch
      %221 = sbr.rel (0) target = $region101
    $region100: #{_forward_points.1} parent=1 // pred_region
      %s223 = ssub.s32 256, 256
      %224 = vsyncadd [#allocation17], %s223
      %s225 = sshll.u32 [#allocation18], 4
      %s226 = int_to_ptr.vmem [resolvable:$true] %s225
      %231 = dma.hbm_to_vmem [thread:$0]  %s49, 256, %s226, [#allocation17], 128, 128, 8
    $region101: #{_forward_points.1} parent=1 // pred_fallthru
      _
    // Predicated region
    $region102: #{_forward_points.1} parent=1 // pred_check
      _
    $region103: #{_forward_points.1} parent=1 // pred_check_branch
      %233 = sbr.rel (0) target = $region105
    $region104: #{_forward_points.1} parent=1 // pred_region
      %s235 = ssub.s32 512, 512
      %236 = vsyncadd [#allocation20], %s235
      %s237 = sshll.u32 [#allocation19], 4
      %s238 = int_to_ptr.vmem [resolvable:$true] %s237
      %243 = dma.hbm_to_vmem [thread:$0]  %s51, 512, %s238, [#allocation20], 64, 64, 4
    $region105: #{_forward_points.1} parent=1 // pred_fallthru
      _
    // Predicated region
    $region106: #{_forward_points.1} parent=1 // pred_check
      _
    $region107: #{_forward_points.1} parent=1 // pred_check_branch
      %245 = sbr.rel (0) target = $region109
    $region108: #{_forward_points.1} parent=1 // pred_region
      %s247 = ssub.s32 512, 512
      %248 = vsyncadd [#allocation20], %s247
      %s249 = sshll.u32 [#allocation21], 4
      %s250 = int_to_ptr.vmem [resolvable:$true] %s249
      %255 = dma.hbm_to_vmem [thread:$0]  %s53, 512, %s250, [#allocation20], 64, 64, 4
    $region109: #{_forward_points.1} parent=1 // pred_fallthru
      _
    // Predicated region
    $region110: #{_forward_points.1} parent=1 // pred_check
      _
    $region111: #{_forward_points.1} parent=1 // pred_check_branch
      %257 = sbr.rel (0) target = $region113
    $region112: #{_forward_points.1} parent=1 // pred_region
      %s259 = ssub.s32 16, 16
      %260 = vsyncadd [#allocation23], %s259
      %s262 = sshll.u32 [#allocation22], 4
      %s263 = int_to_ptr.vmem [resolvable:$true] %s262
      %265 = dma.hbm_to_vmem [thread:$0]  %s55, 16, %s263, [#allocation23]
    $region113: #{_forward_points.1} parent=1 // pred_fallthru
      _
    // Predicated region
    $region114: #{_forward_points.1} parent=1 // pred_check
      _
    $region115: #{_forward_points.1} parent=1 // pred_check_branch
      %267 = sbr.rel (0) target = $region117
    $region116: #{_forward_points.1} parent=1 // pred_region
      %s269 = ssub.s32 16, 16
      %270 = vsyncadd [#allocation23], %s269
      %s272 = sshll.u32 [#allocation24], 4
      %s273 = int_to_ptr.vmem [resolvable:$true] %s272
      %275 = dma.hbm_to_vmem [thread:$0]  %s57, 16, %s273, [#allocation23]
    $region117: #{_forward_points.1} parent=1 // pred_fallthru
      _
    // Predicated region
    $region118: #{_forward_points.1} parent=1 // pred_check
      _
    $region119: #{_forward_points.1} parent=1 // pred_check_branch
      %277 = sbr.rel (0) target = $region121
    $region120: #{_forward_points.1} parent=1 // pred_region
      %s279 = ssub.s32 16, 16
      %280 = vsyncadd [#allocation26], %s279
      %s282 = sshll.u32 [#allocation25], 4
      %s283 = int_to_ptr.vmem [resolvable:$true] %s282
      %285 = dma.hbm_to_vmem [thread:$0]  %s59, 16, %s283, [#allocation26]
    $region121: #{_forward_points.1} parent=1 // pred_fallthru
      _
    // Predicated region
    $region122: #{_forward_points.1} parent=1 // pred_check
      _
    $region123: #{_forward_points.1} parent=1 // pred_check_branch
      %287 = sbr.rel (0) target = $region125
    $region124: #{_forward_points.1} parent=1 // pred_region
      %s289 = ssub.s32 512, 512
      %290 = vsyncadd [#allocation26], %s289
      %s291 = sshll.u32 [#allocation27], 4
      %s292 = int_to_ptr.vmem [resolvable:$true] %s291
      %297 = dma.hbm_to_vmem [thread:$0]  %s61, 512, %s292, [#allocation26], 64, 64, 4
    $region125: #{_forward_points.1} parent=1 // pred_fallthru
      _
    // Predicated region
    $region126: #{_forward_points.1} parent=1 // pred_check
      _
    $region127: #{_forward_points.1} parent=1 // pred_check_branch
      %299 = sbr.rel (0) target = $region129
    $region128: #{_forward_points.1} parent=1 // pred_region
      %s301 = ssub.s32 16, 16
      %302 = vsyncadd [#allocation29], %s301
      %s304 = sshll.u32 [#allocation28], 4
      %s305 = int_to_ptr.vmem [resolvable:$true] %s304
      %307 = dma.hbm_to_vmem [thread:$0]  %s63, 16, %s305, [#allocation29]
    $region129: #{_forward_points.1} parent=1 // pred_fallthru
      _
    // Predicated region
    $region130: #{_forward_points.1} parent=1 // pred_check
      _
    $region131: #{_forward_points.1} parent=1 // pred_check_branch
      %309 = sbr.rel (0) target = $region133
    $region132: #{_forward_points.1} parent=1 // pred_region
      %310 = dma.done [#allocation3], 8192
    $region133: #{_forward_points.1} parent=1 // pred_fallthru
      _
    // Predicated region
    $region134: #{_forward_points.1} parent=1 // pred_check
      _
    $region135: #{_forward_points.1} parent=1 // pred_check_branch
      %312 = sbr.rel (0) target = $region137
    $region136: #{_forward_points.1} parent=1 // pred_region
      %313 = dma.done [#allocation5], 8192
    $region137: #{_forward_points.1} parent=1 // pred_fallthru
      _
    // Predicated region
    $region138: #{_forward_points.1} parent=1 // pred_check
      _
    $region139: #{_forward_points.1} parent=1 // pred_check_branch
      %315 = sbr.rel (0) target = $region141
    $region140: #{_forward_points.1} parent=1 // pred_region
      %316 = dma.done [#allocation5], 1024
    $region141: #{_forward_points.1} parent=1 // pred_fallthru
      _
    // Predicated region
    $region142: #{_forward_points.1} parent=1 // pred_check
      _
    $region143: #{_forward_points.1} parent=1 // pred_check_branch
      %318 = sbr.rel (0) target = $region145
    $region144: #{_forward_points.1} parent=1 // pred_region
      %319 = dma.done [#allocation8], 8192
    $region145: #{_forward_points.1} parent=1 // pred_fallthru
      _
    // Predicated region
    $region146: #{_forward_points.1} parent=1 // pred_check
      _
    $region147: #{_forward_points.1} parent=1 // pred_check_branch
      %321 = sbr.rel (0) target = $region149
    $region148: #{_forward_points.1} parent=1 // pred_region
      %322 = dma.done [#allocation8], 16
    $region149: #{_forward_points.1} parent=1 // pred_fallthru
      _
    // Predicated region
    $region150: #{_forward_points.1} parent=1 // pred_check
      _
    $region151: #{_forward_points.1} parent=1 // pred_check_branch
      %324 = sbr.rel (0) target = $region153
    $region152: #{_forward_points.1} parent=1 // pred_region
      %325 = dma.done [#allocation11], 16
    $region153: #{_forward_points.1} parent=1 // pred_fallthru
      _
    // Predicated region
    $region154: #{_forward_points.1} parent=1 // pred_check
      _
    $region155: #{_forward_points.1} parent=1 // pred_check_branch
      %327 = sbr.rel (0) target = $region157
    $region156: #{_forward_points.1} parent=1 // pred_region
      %328 = dma.done [#allocation11], 16
    $region157: #{_forward_points.1} parent=1 // pred_fallthru
      _
    // Predicated region
    $region158: #{_forward_points.1} parent=1 // pred_check
      _
    $region159: #{_forward_points.1} parent=1 // pred_check_branch
      %330 = sbr.rel (0) target = $region161
    $region160: #{_forward_points.1} parent=1 // pred_region
      %331 = dma.done [#allocation14], 16
    $region161: #{_forward_points.1} parent=1 // pred_fallthru
      _
    // Predicated region
    $region162: #{_forward_points.1} parent=1 // pred_check
      _
    $region163: #{_forward_points.1} parent=1 // pred_check_branch
      %333 = sbr.rel (0) target = $region165
    $region164: #{_forward_points.1} parent=1 // pred_region
      %334 = dma.done [#allocation14], 2048
    $region165: #{_forward_points.1} parent=1 // pred_fallthru
      _
    // Predicated region
    $region166: #{_forward_points.1} parent=1 // pred_check
      _
    $region167: #{_forward_points.1} parent=1 // pred_check_branch
      %336 = sbr.rel (0) target = $region169
    $region168: #{_forward_points.1} parent=1 // pred_region
      %337 = dma.done [#allocation17], 256
    $region169: #{_forward_points.1} parent=1 // pred_fallthru
      _
    // Predicated region
    $region170: #{_forward_points.1} parent=1 // pred_check
      _
    $region171: #{_forward_points.1} parent=1 // pred_check_branch
      %339 = sbr.rel (0) target = $region173
    $region172: #{_forward_points.1} parent=1 // pred_region
      %340 = dma.done [#allocation17], 256
    $region173: #{_forward_points.1} parent=1 // pred_fallthru
      _
    // Predicated region
    $region174: #{_forward_points.1} parent=1 // pred_check
      _
    $region175: #{_forward_points.1} parent=1 // pred_check_branch
      %342 = sbr.rel (0) target = $region177
    $region176: #{_forward_points.1} parent=1 // pred_region
      %343 = dma.done [#allocation20], 512
    $region177: #{_forward_points.1} parent=1 // pred_fallthru
      _
    // Predicated region
    $region178: #{_forward_points.1} parent=1 // pred_check
      _
    $region179: #{_forward_points.1} parent=1 // pred_check_branch
      %345 = sbr.rel (0) target = $region181
    $region180: #{_forward_points.1} parent=1 // pred_region
      %346 = dma.done [#allocation20], 512
    $region181: #{_forward_points.1} parent=1 // pred_fallthru
      _
    // Predicated region
    $region182: #{_forward_points.1} parent=1 // pred_check
      _
    $region183: #{_forward_points.1} parent=1 // pred_check_branch
      %348 = sbr.rel (0) target = $region185
    $region184: #{_forward_points.1} parent=1 // pred_region
      %349 = dma.done [#allocation23], 16
    $region185: #{_forward_points.1} parent=1 // pred_fallthru
      _
    // Predicated region
    $region186: #{_forward_points.1} parent=1 // pred_check
      _
    $region187: #{_forward_points.1} parent=1 // pred_check_branch
      %351 = sbr.rel (0) target = $region189
    $region188: #{_forward_points.1} parent=1 // pred_region
      %352 = dma.done [#allocation23], 16
    $region189: #{_forward_points.1} parent=1 // pred_fallthru
      _
    // Predicated region
    $region190: #{_forward_points.1} parent=1 // pred_check
      _
    $region191: #{_forward_points.1} parent=1 // pred_check_branch
      %354 = sbr.rel (0) target = $region193
    $region192: #{_forward_points.1} parent=1 // pred_region
      %355 = dma.done [#allocation26], 16
    $region193: #{_forward_points.1} parent=1 // pred_fallthru
      _
    // Predicated region
    $region194: #{_forward_points.1} parent=1 // pred_check
      _
    $region195: #{_forward_points.1} parent=1 // pred_check_branch
      %357 = sbr.rel (0) target = $region197
    $region196: #{_forward_points.1} parent=1 // pred_region
      %358 = dma.done [#allocation26], 512
    $region197: #{_forward_points.1} parent=1 // pred_fallthru
      _
    // Predicated region
    $region198: #{_forward_points.1} parent=1 // pred_check
      _
    $region199: #{_forward_points.1} parent=1 // pred_check_branch
      %360 = sbr.rel (0) target = $region201
    $region200: #{_forward_points.1} parent=1 // pred_region
      %361 = dma.done [#allocation29], 16
    $region201: #{_forward_points.1} parent=1 // pred_fallthru
      _
    %v363 = vld [vmem:[%s1] sm:$0xff]
    %v364 = vld [vmem:[%s1 + $0x8] sm:$0xff]
    %v365 = vld [vmem:[%s3] sm:$0xff]
    %v366 = vld [vmem:[%s3 + $0x8] sm:$0xff]
    %v367 = vld [vmem:[%s3 + $0x10] sm:$0xff]
    %v368 = vld [vmem:[%s3 + $0x18] sm:$0xff]
    %v369 = vld [vmem:[%s3 + $0x20] sm:$0xff]
    %v370 = vld [vmem:[%s3 + $0x28] sm:$0xff]
    %v371 = vld [vmem:[%s3 + $0x30] sm:$0xff]
    %v372 = vld [vmem:[%s3 + $0x38] sm:$0xff]
    %v373 = vld [vmem:[%s3 + $0x40] sm:$0xff]
    %v374 = vld [vmem:[%s3 + $0x48] sm:$0xff]
    %v375 = vld [vmem:[%s3 + $0x50] sm:$0xff]
    %v376 = vld [vmem:[%s3 + $0x58] sm:$0xff]
    %v377 = vld [vmem:[%s3 + $0x60] sm:$0xff]
    %v378 = vld [vmem:[%s3 + $0x68] sm:$0xff]
    %v379 = vld [vmem:[%s3 + $0x70] sm:$0xff]
    %v380 = vld [vmem:[%s3 + $0x78] sm:$0xff]
    %vm381 = vcmask 130048
    %v383 = vsel %vm381, %v365, 0
    %v386 = vsel %vm381, %v366, 0
    %v389 = vsel %vm381, %v367, 0
    %v392 = vsel %vm381, %v368, 0
    %v395 = vsel %vm381, %v369, 0
    %v398 = vsel %vm381, %v370, 0
    %v401 = vsel %vm381, %v371, 0
    %v404 = vsel %vm381, %v372, 0
    %v407 = vsel %vm381, %v373, 0
    %v410 = vsel %vm381, %v374, 0
    %v413 = vsel %vm381, %v375, 0
    %v416 = vsel %vm381, %v376, 0
    %v419 = vsel %vm381, %v377, 0
    %v422 = vsel %vm381, %v378, 0
    %v425 = vsel %vm381, %v379, 0
    %v428 = vsel %vm381, %v380, 0
    %430 = vmatprep.subr.mxu0 0.0
    %431 = vmatpush1.msra.mxu0 %v363
    %432 = vmatprep.subr.mxu0 0.0
    %433 = vmatpush1.msra.mxu0 %v364
    %434 = vmatprep.subr.mxu0 0.0
    %435 = vmatpush1.msra.mxu0 0.0
    %436 = vmatprep.subr.mxu0 0.0
    %437 = vmatpush1.msra.mxu0 0.0
    %438 = vmatprep.subr.mxu0 0.0
    %439 = vmatpush1.msra.mxu0 0.0
    %440 = vmatprep.subr.mxu0 0.0
    %441 = vmatpush1.msra.mxu0 0.0
    %442 = vmatprep.subr.mxu0 0.0
    %443 = vmatpush1.msra.mxu0 0.0
    %444 = vmatprep.subr.mxu0 0.0
    %445 = vmatpush1.msra.mxu0 0.0
    %446 = vmatprep.subr.mxu0 0.0
    %447 = vmatpush1.msra.mxu0 0.0
    %448 = vmatprep.subr.mxu0 0.0
    %449 = vmatpush1.msra.mxu0 0.0
    %450 = vmatprep.subr.mxu0 0.0
    %451 = vmatpush1.msra.mxu0 0.0
    %452 = vmatprep.subr.mxu0 0.0
    %453 = vmatpush1.msra.mxu0 0.0
    %454 = vmatprep.subr.mxu0 0.0
    %455 = vmatpush1.msra.mxu0 0.0
    %456 = vmatprep.subr.mxu0 0.0
    %457 = vmatpush1.msra.mxu0 0.0
    %458 = vmatprep.subr.mxu0 0.0
    %459 = vmatpush1.msra.mxu0 0.0
    %460 = vmatprep.subr.mxu0 0.0
    %461 = vmatpush1.msra.mxu0 0.0
    %462 = vmatprep.subr.mxu0 0.0
    %463 = vmatpush1.msra.mxu0 0.0
    %464 = vmatprep.subr.mxu0 0.0
    %465 = vmatpush1.msra.mxu0 0.0
    %466 = vmatprep.subr.mxu0 0.0
    %467 = vmatpush1.msra.mxu0 0.0
    %468 = vmatprep.subr.mxu0 0.0
    %469 = vmatpush1.msra.mxu0 0.0
    %470 = vmatprep.subr.mxu0 0.0
    %471 = vmatpush1.msra.mxu0 0.0
    %472 = vmatprep.subr.mxu0 0.0
    %473 = vmatpush1.msra.mxu0 0.0
    %474 = vmatprep.subr.mxu0 0.0
    %475 = vmatpush1.msra.mxu0 0.0
    %476 = vmatprep.subr.mxu0 0.0
    %477 = vmatpush1.msra.mxu0 0.0
    %478 = vmatprep.subr.mxu0 0.0
    %479 = vmatpush1.msra.mxu0 0.0
    %480 = vmatprep.subr.mxu0 0.0
    %481 = vmatpush1.msra.mxu0 0.0
    %482 = vmatprep.subr.mxu0 0.0
    %483 = vmatpush1.msra.mxu0 0.0
    %484 = vmatprep.subr.mxu0 0.0
    %485 = vmatpush1.msra.mxu0 0.0
    %486 = vmatprep.subr.mxu0 0.0
    %487 = vmatpush1.msra.mxu0 0.0
    %488 = vmatprep.subr.mxu0 0.0
    %489 = vmatpush1.msra.mxu0 0.0
    %490 = vmatprep.subr.mxu0 0.0
    %491 = vmatpush1.msra.mxu0 0.0
    %492 = vmatprep.subr.mxu0 0.0
    %493 = vmatpush1.msra.mxu0 0.0
    %494 = vmatprep.mubr.f32.mxu0 0.0
    %495 = vmatmul.mubr.f32.gmra.mrb[0].mxu0 %v383
    %v496 = vpop.f32.mrb[0].mxu0
    %v497 = vadd.f32 0.0, %v496
    %v498 = vpop.f32.mrb[0].mxu0
    %499 = vmatprep.mubr.f32.mxu0 0.0
    %500 = vmatmul.mubr.f32.gmra.mrb[0].mxu0 %v386
    %v501 = vpop.f32.mrb[0].mxu0
    %v502 = vadd.f32 0.0, %v501
    %v503 = vpop.f32.mrb[0].mxu0
    %504 = vmatprep.mubr.f32.mxu0 0.0
    %505 = vmatmul.mubr.f32.gmra.mrb[0].mxu0 %v389
    %v506 = vpop.f32.mrb[0].mxu0
    %v507 = vadd.f32 0.0, %v506
    %v508 = vpop.f32.mrb[0].mxu0
    %509 = vmatprep.mubr.f32.mxu0 0.0
    %510 = vmatmul.mubr.f32.gmra.mrb[0].mxu0 %v392
    %v511 = vpop.f32.mrb[0].mxu0
    %v512 = vadd.f32 0.0, %v511
    %v513 = vpop.f32.mrb[0].mxu0
    %514 = vmatprep.mubr.f32.mxu0 0.0
    %515 = vmatmul.mubr.f32.gmra.mrb[0].mxu0 %v395
    %v516 = vpop.f32.mrb[0].mxu0
    %v517 = vadd.f32 0.0, %v516
    %v518 = vpop.f32.mrb[0].mxu0
    %519 = vmatprep.mubr.f32.mxu0 0.0
    %520 = vmatmul.mubr.f32.gmra.mrb[0].mxu0 %v398
    %v521 = vpop.f32.mrb[0].mxu0
    %v522 = vadd.f32 0.0, %v521
    %v523 = vpop.f32.mrb[0].mxu0
    %524 = vmatprep.mubr.f32.mxu0 0.0
    %525 = vmatmul.mubr.f32.gmra.mrb[0].mxu0 %v401
    %v526 = vpop.f32.mrb[0].mxu0
    %v527 = vadd.f32 0.0, %v526
    %v528 = vpop.f32.mrb[0].mxu0
    %529 = vmatprep.mubr.f32.mxu0 0.0
    %530 = vmatmul.mubr.f32.gmra.mrb[0].mxu0 %v404
    %v531 = vpop.f32.mrb[0].mxu0
    %v532 = vadd.f32 0.0, %v531
    %v533 = vpop.f32.mrb[0].mxu0
    %534 = vmatprep.mubr.f32.mxu0 0.0
    %535 = vmatmul.mubr.f32.gmra.mrb[0].mxu0 %v407
    %v536 = vpop.f32.mrb[0].mxu0
    %v537 = vadd.f32 0.0, %v536
    %v538 = vpop.f32.mrb[0].mxu0
    %539 = vmatprep.mubr.f32.mxu0 0.0
    %540 = vmatmul.mubr.f32.gmra.mrb[0].mxu0 %v410
    %v541 = vpop.f32.mrb[0].mxu0
    %v542 = vadd.f32 0.0, %v541
    %v543 = vpop.f32.mrb[0].mxu0
    %544 = vmatprep.mubr.f32.mxu0 0.0
    %545 = vmatmul.mubr.f32.gmra.mrb[0].mxu0 %v413
    %v546 = vpop.f32.mrb[0].mxu0
    %v547 = vadd.f32 0.0, %v546
    %v548 = vpop.f32.mrb[0].mxu0
    %549 = vmatprep.mubr.f32.mxu0 0.0
    %550 = vmatmul.mubr.f32.gmra.mrb[0].mxu0 %v416
    %v551 = vpop.f32.mrb[0].mxu0
    %v552 = vadd.f32 0.0, %v551
    %v553 = vpop.f32.mrb[0].mxu0
    %554 = vmatprep.mubr.f32.mxu0 0.0
    %555 = vmatmul.mubr.f32.gmra.mrb[0].mxu0 %v419
    %v556 = vpop.f32.mrb[0].mxu0
    %v557 = vadd.f32 0.0, %v556
    %v558 = vpop.f32.mrb[0].mxu0
    %559 = vmatprep.mubr.f32.mxu0 0.0
    %560 = vmatmul.mubr.f32.gmra.mrb[0].mxu0 %v422
    %v561 = vpop.f32.mrb[0].mxu0
    %v562 = vadd.f32 0.0, %v561
    %v563 = vpop.f32.mrb[0].mxu0
    %564 = vmatprep.mubr.f32.mxu0 0.0
    %565 = vmatmul.mubr.f32.gmra.mrb[0].mxu0 %v425
    %v566 = vpop.f32.mrb[0].mxu0
    %v567 = vadd.f32 0.0, %v566
    %v568 = vpop.f32.mrb[0].mxu0
    %569 = vmatprep.mubr.f32.mxu0 0.0
    %570 = vmatmul.mubr.f32.gmra.mrb[0].mxu0 %v428
    %v571 = vpop.f32.mrb[0].mxu0
    %v572 = vadd.f32 0.0, %v571
    %v573 = vpop.f32.mrb[0].mxu0
    %574 = vdwg.mxu0
    %v575 = vld [vmem:[%s5] sm:$0xff]
    %v576 = vld [vmem:[%s5 + $0x8] sm:$0xff]
    %v577 = vld [vmem:[%s5 + $0x10] sm:$0xff]
    %v578 = vld [vmem:[%s5 + $0x18] sm:$0xff]
    %v579 = vld [vmem:[%s5 + $0x20] sm:$0xff]
    %v580 = vld [vmem:[%s5 + $0x28] sm:$0xff]
    %v581 = vld [vmem:[%s5 + $0x30] sm:$0xff]
    %v582 = vld [vmem:[%s5 + $0x38] sm:$0xff]
    %v583 = vld [vmem:[%s5 + $0x40] sm:$0xff]
    %v584 = vld [vmem:[%s5 + $0x48] sm:$0xff]
    %v585 = vld [vmem:[%s5 + $0x50] sm:$0xff]
    %v586 = vld [vmem:[%s5 + $0x58] sm:$0xff]
    %v587 = vld [vmem:[%s5 + $0x60] sm:$0xff]
    %v588 = vld [vmem:[%s5 + $0x68] sm:$0xff]
    %v589 = vld [vmem:[%s5 + $0x70] sm:$0xff]
    %v590 = vld [vmem:[%s5 + $0x78] sm:$0xff]
    %v591 = vmul.f32 %v497, %v575
    %v592 = vmul.f32 %v502, %v576
    %v593 = vmul.f32 %v507, %v577
    %v594 = vmul.f32 %v512, %v578
    %v595 = vmul.f32 %v517, %v579
    %v596 = vmul.f32 %v522, %v580
    %v597 = vmul.f32 %v527, %v581
    %v598 = vmul.f32 %v532, %v582
    %v599 = vmul.f32 %v537, %v583
    %v600 = vmul.f32 %v542, %v584
    %v601 = vmul.f32 %v547, %v585
    %v602 = vmul.f32 %v552, %v586
    %v603 = vmul.f32 %v557, %v587
    %v604 = vmul.f32 %v562, %v588
    %v605 = vmul.f32 %v567, %v589
    %v606 = vmul.f32 %v572, %v590
    %v607 = vld [vmem:[%s7] sm:$0xff]
    %v608 = vld [vmem:[%s7 + $0x8] sm:$0xff]
    %v609 = vld [vmem:[%s7 + $0x10] sm:$0xff]
    %v610 = vld [vmem:[%s7 + $0x18] sm:$0xff]
    %v611 = vld [vmem:[%s7 + $0x20] sm:$0xff]
    %v612 = vld [vmem:[%s7 + $0x28] sm:$0xff]
    %v613 = vld [vmem:[%s7 + $0x30] sm:$0xff]
    %v614 = vld [vmem:[%s7 + $0x38] sm:$0xff]
    %v615 = vld [vmem:[%s7 + $0x40] sm:$0xff]
    %v616 = vld [vmem:[%s7 + $0x48] sm:$0xff]
    %v617 = vld [vmem:[%s7 + $0x50] sm:$0xff]
    %v618 = vld [vmem:[%s7 + $0x58] sm:$0xff]
    %v619 = vld [vmem:[%s7 + $0x60] sm:$0xff]
    %v620 = vld [vmem:[%s7 + $0x68] sm:$0xff]
    %v621 = vld [vmem:[%s7 + $0x70] sm:$0xff]
    %v622 = vld [vmem:[%s7 + $0x78] sm:$0xff]
    %vm623 = vcmask 261120
    %v624 = vsel %vm623, %v591, 0.0
    %625 = vadd.xlane.f32.xlu0 %v624
    %v626 = vpop.xlane.xlu0 %625
    %v627 = vsel %vm623, %v592, 0.0
    %628 = vadd.xlane.f32.xlu0 %v627
    %v629 = vpop.xlane.xlu0 %628
    %v630 = vsel %vm623, %v593, 0.0
    %631 = vadd.xlane.f32.xlu0 %v630
    %v632 = vpop.xlane.xlu0 %631
    %v633 = vsel %vm623, %v594, 0.0
    %634 = vadd.xlane.f32.xlu0 %v633
    %v635 = vpop.xlane.xlu0 %634
    %v636 = vsel %vm623, %v595, 0.0
    %637 = vadd.xlane.f32.xlu0 %v636
    %v638 = vpop.xlane.xlu0 %637
    %v639 = vsel %vm623, %v596, 0.0
    %640 = vadd.xlane.f32.xlu0 %v639
    %v641 = vpop.xlane.xlu0 %640
    %v642 = vsel %vm623, %v597, 0.0
    %643 = vadd.xlane.f32.xlu0 %v642
    %v644 = vpop.xlane.xlu0 %643
    %v645 = vsel %vm623, %v598, 0.0
    %646 = vadd.xlane.f32.xlu0 %v645
    %v647 = vpop.xlane.xlu0 %646
    %v648 = vsel %vm623, %v599, 0.0
    %649 = vadd.xlane.f32.xlu0 %v648
    %v650 = vpop.xlane.xlu0 %649
    %v651 = vsel %vm623, %v600, 0.0
    %652 = vadd.xlane.f32.xlu0 %v651
    %v653 = vpop.xlane.xlu0 %652
    %v654 = vsel %vm623, %v601, 0.0
    %655 = vadd.xlane.f32.xlu0 %v654
    %v656 = vpop.xlane.xlu0 %655
    %v657 = vsel %vm623, %v602, 0.0
    %658 = vadd.xlane.f32.xlu0 %v657
    %v659 = vpop.xlane.xlu0 %658
    %v660 = vsel %vm623, %v603, 0.0
    %661 = vadd.xlane.f32.xlu0 %v660
    %v662 = vpop.xlane.xlu0 %661
    %v663 = vsel %vm623, %v604, 0.0
    %664 = vadd.xlane.f32.xlu0 %v663
    %v665 = vpop.xlane.xlu0 %664
    %v666 = vsel %vm623, %v605, 0.0
    %667 = vadd.xlane.f32.xlu0 %v666
    %v668 = vpop.xlane.xlu0 %667
    %v669 = vsel %vm623, %v606, 0.0
    %670 = vadd.xlane.f32.xlu0 %v669
    %v671 = vpop.xlane.xlu0 %670
    %v672 = vmul.f32 %v626, %v607
    %v673 = vmul.f32 %v629, %v608
    %v674 = vmul.f32 %v632, %v609
    %v675 = vmul.f32 %v635, %v610
    %v676 = vmul.f32 %v638, %v611
    %v677 = vmul.f32 %v641, %v612
    %v678 = vmul.f32 %v644, %v613
    %v679 = vmul.f32 %v647, %v614
    %v680 = vmul.f32 %v650, %v615
    %v681 = vmul.f32 %v653, %v616
    %v682 = vmul.f32 %v656, %v617
    %v683 = vmul.f32 %v659, %v618
    %v684 = vmul.f32 %v662, %v619
    %v685 = vmul.f32 %v665, %v620
    %v686 = vmul.f32 %v668, %v621
    %v687 = vmul.f32 %v671, %v622
    %v688 = vmul.f32 %v591, %v591
    %v689 = vmul.f32 %v592, %v592
    %v690 = vmul.f32 %v593, %v593
    %v691 = vmul.f32 %v594, %v594
    %v692 = vmul.f32 %v595, %v595
    %v693 = vmul.f32 %v596, %v596
    %v694 = vmul.f32 %v597, %v597
    %v695 = vmul.f32 %v598, %v598
    %v696 = vmul.f32 %v599, %v599
    %v697 = vmul.f32 %v600, %v600
    %v698 = vmul.f32 %v601, %v601
    %v699 = vmul.f32 %v602, %v602
    %v700 = vmul.f32 %v603, %v603
    %v701 = vmul.f32 %v604, %v604
    %v702 = vmul.f32 %v605, %v605
    %v703 = vmul.f32 %v606, %v606
    %v704 = vsel %vm623, %v688, 0.0
    %705 = vadd.xlane.f32.xlu0 %v704
    %v706 = vpop.xlane.xlu0 %705
    %v707 = vsel %vm623, %v689, 0.0
    %708 = vadd.xlane.f32.xlu0 %v707
    %v709 = vpop.xlane.xlu0 %708
    %v710 = vsel %vm623, %v690, 0.0
    %711 = vadd.xlane.f32.xlu0 %v710
    %v712 = vpop.xlane.xlu0 %711
    %v713 = vsel %vm623, %v691, 0.0
    %714 = vadd.xlane.f32.xlu0 %v713
    %v715 = vpop.xlane.xlu0 %714
    %v716 = vsel %vm623, %v692, 0.0
    %717 = vadd.xlane.f32.xlu0 %v716
    %v718 = vpop.xlane.xlu0 %717
    %v719 = vsel %vm623, %v693, 0.0
    %720 = vadd.xlane.f32.xlu0 %v719
    %v721 = vpop.xlane.xlu0 %720
    %v722 = vsel %vm623, %v694, 0.0
    %723 = vadd.xlane.f32.xlu0 %v722
    %v724 = vpop.xlane.xlu0 %723
    %v725 = vsel %vm623, %v695, 0.0
    %726 = vadd.xlane.f32.xlu0 %v725
    %v727 = vpop.xlane.xlu0 %726
    %v728 = vsel %vm623, %v696, 0.0
    %729 = vadd.xlane.f32.xlu0 %v728
    %v730 = vpop.xlane.xlu0 %729
    %v731 = vsel %vm623, %v697, 0.0
    %732 = vadd.xlane.f32.xlu0 %v731
    %v733 = vpop.xlane.xlu0 %732
    %v734 = vsel %vm623, %v698, 0.0
    %735 = vadd.xlane.f32.xlu0 %v734
    %v736 = vpop.xlane.xlu0 %735
    %v737 = vsel %vm623, %v699, 0.0
    %738 = vadd.xlane.f32.xlu0 %v737
    %v739 = vpop.xlane.xlu0 %738
    %v740 = vsel %vm623, %v700, 0.0
    %741 = vadd.xlane.f32.xlu0 %v740
    %v742 = vpop.xlane.xlu0 %741
    %v743 = vsel %vm623, %v701, 0.0
    %744 = vadd.xlane.f32.xlu0 %v743
    %v745 = vpop.xlane.xlu0 %744
    %v746 = vsel %vm623, %v702, 0.0
    %747 = vadd.xlane.f32.xlu0 %v746
    %v748 = vpop.xlane.xlu0 %747
    %v749 = vsel %vm623, %v703, 0.0
    %750 = vadd.xlane.f32.xlu0 %v749
    %v751 = vpop.xlane.xlu0 %750
    %v752 = vmul.f32 %v706, %v607
    %v753 = vmul.f32 %v709, %v608
    %v754 = vmul.f32 %v712, %v609
    %v755 = vmul.f32 %v715, %v610
    %v756 = vmul.f32 %v718, %v611
    %v757 = vmul.f32 %v721, %v612
    %v758 = vmul.f32 %v724, %v613
    %v759 = vmul.f32 %v727, %v614
    %v760 = vmul.f32 %v730, %v615
    %v761 = vmul.f32 %v733, %v616
    %v762 = vmul.f32 %v736, %v617
    %v763 = vmul.f32 %v739, %v618
    %v764 = vmul.f32 %v742, %v619
    %v765 = vmul.f32 %v745, %v620
    %v766 = vmul.f32 %v748, %v621
    %v767 = vmul.f32 %v751, %v622
    %v768 = vmul.f32 %v672, %v672
    %v769 = vmul.f32 %v673, %v673
    %v770 = vmul.f32 %v674, %v674
    %v771 = vmul.f32 %v675, %v675
    %v772 = vmul.f32 %v676, %v676
    %v773 = vmul.f32 %v677, %v677
    %v774 = vmul.f32 %v678, %v678
    %v775 = vmul.f32 %v679, %v679
    %v776 = vmul.f32 %v680, %v680
    %v777 = vmul.f32 %v681, %v681
    %v778 = vmul.f32 %v682, %v682
    %v779 = vmul.f32 %v683, %v683
    %v780 = vmul.f32 %v684, %v684
    %v781 = vmul.f32 %v685, %v685
    %v782 = vmul.f32 %v686, %v686
    %v783 = vmul.f32 %v687, %v687
    %v784 = vsub.f32 %v752, %v768
    %v785 = vsub.f32 %v753, %v769
    %v786 = vsub.f32 %v754, %v770
    %v787 = vsub.f32 %v755, %v771
    %v788 = vsub.f32 %v756, %v772
    %v789 = vsub.f32 %v757, %v773
    %v790 = vsub.f32 %v758, %v774
    %v791 = vsub.f32 %v759, %v775
    %v792 = vsub.f32 %v760, %v776
    %v793 = vsub.f32 %v761, %v777
    %v794 = vsub.f32 %v762, %v778
    %v795 = vsub.f32 %v763, %v779
    %v796 = vsub.f32 %v764, %v780
    %v797 = vsub.f32 %v765, %v781
    %v798 = vsub.f32 %v766, %v782
    %v799 = vsub.f32 %v767, %v783
    %v800 = vmax.f32 %v784, 0.0
    %v801 = vmax.f32 %v785, 0.0
    %v802 = vmax.f32 %v786, 0.0
    %v803 = vmax.f32 %v787, 0.0
    %v804 = vmax.f32 %v788, 0.0
    %v805 = vmax.f32 %v789, 0.0
    %v806 = vmax.f32 %v790, 0.0
    %v807 = vmax.f32 %v791, 0.0
    %v808 = vmax.f32 %v792, 0.0
    %v809 = vmax.f32 %v793, 0.0
    %v810 = vmax.f32 %v794, 0.0
    %v811 = vmax.f32 %v795, 0.0
    %v812 = vmax.f32 %v796, 0.0
    %v813 = vmax.f32 %v797, 0.0
    %v814 = vmax.f32 %v798, 0.0
    %v815 = vmax.f32 %v799, 0.0
    %817 = vset.pattern.permute.xlu0 0
    %818 = vperm.xlu0 %817, %v672
    %v819 = vpop.permute.xlu0 %818
    %822 = vset.pattern.permute.xlu0 0
    %823 = vperm.xlu0 %822, %v673
    %v824 = vpop.permute.xlu0 %823
    %827 = vset.pattern.permute.xlu0 0
    %828 = vperm.xlu0 %827, %v674
    %v829 = vpop.permute.xlu0 %828
    %832 = vset.pattern.permute.xlu0 0
    %833 = vperm.xlu0 %832, %v675
    %v834 = vpop.permute.xlu0 %833
    %837 = vset.pattern.permute.xlu0 0
    %838 = vperm.xlu0 %837, %v676
    %v839 = vpop.permute.xlu0 %838
    %842 = vset.pattern.permute.xlu0 0
    %843 = vperm.xlu0 %842, %v677
    %v844 = vpop.permute.xlu0 %843
    %847 = vset.pattern.permute.xlu0 0
    %848 = vperm.xlu0 %847, %v678
    %v849 = vpop.permute.xlu0 %848
    %852 = vset.pattern.permute.xlu0 0
    %853 = vperm.xlu0 %852, %v679
    %v854 = vpop.permute.xlu0 %853
    %857 = vset.pattern.permute.xlu0 0
    %858 = vperm.xlu0 %857, %v680
    %v859 = vpop.permute.xlu0 %858
    %862 = vset.pattern.permute.xlu0 0
    %863 = vperm.xlu0 %862, %v681
    %v864 = vpop.permute.xlu0 %863
    %867 = vset.pattern.permute.xlu0 0
    %868 = vperm.xlu0 %867, %v682
    %v869 = vpop.permute.xlu0 %868
    %872 = vset.pattern.permute.xlu0 0
    %873 = vperm.xlu0 %872, %v683
    %v874 = vpop.permute.xlu0 %873
    %877 = vset.pattern.permute.xlu0 0
    %878 = vperm.xlu0 %877, %v684
    %v879 = vpop.permute.xlu0 %878
    %882 = vset.pattern.permute.xlu0 0
    %883 = vperm.xlu0 %882, %v685
    %v884 = vpop.permute.xlu0 %883
    %887 = vset.pattern.permute.xlu0 0
    %888 = vperm.xlu0 %887, %v686
    %v889 = vpop.permute.xlu0 %888
    %892 = vset.pattern.permute.xlu0 0
    %893 = vperm.xlu0 %892, %v687
    %v894 = vpop.permute.xlu0 %893
    %v896 = vsub.f32 %v591, %v819
    %v897 = vsub.f32 %v592, %v824
    %v898 = vsub.f32 %v593, %v829
    %v899 = vsub.f32 %v594, %v834
    %v900 = vsub.f32 %v595, %v839
    %v901 = vsub.f32 %v596, %v844
    %v902 = vsub.f32 %v597, %v849
    %v903 = vsub.f32 %v598, %v854
    %v904 = vsub.f32 %v599, %v859
    %v905 = vsub.f32 %v600, %v864
    %v906 = vsub.f32 %v601, %v869
    %v907 = vsub.f32 %v602, %v874
    %v908 = vsub.f32 %v603, %v879
    %v909 = vsub.f32 %v604, %v884
    %v910 = vsub.f32 %v605, %v889
    %v911 = vsub.f32 %v606, %v894
    %v912 = vadd.f32 %v800, 1e-05
    %v913 = vadd.f32 %v801, 1e-05
    %v914 = vadd.f32 %v802, 1e-05
    %v915 = vadd.f32 %v803, 1e-05
    %v916 = vadd.f32 %v804, 1e-05
    %v917 = vadd.f32 %v805, 1e-05
    %v918 = vadd.f32 %v806, 1e-05
    %v919 = vadd.f32 %v807, 1e-05
    %v920 = vadd.f32 %v808, 1e-05
    %v921 = vadd.f32 %v809, 1e-05
    %v922 = vadd.f32 %v810, 1e-05
    %v923 = vadd.f32 %v811, 1e-05
    %v924 = vadd.f32 %v812, 1e-05
    %v925 = vadd.f32 %v813, 1e-05
    %v926 = vadd.f32 %v814, 1e-05
    %v927 = vadd.f32 %v815, 1e-05
    %v928 = vrsqrt.pop %v912
    %v929 = vrsqrt.pop %v913
    %v930 = vrsqrt.pop %v914
    %v931 = vrsqrt.pop %v915
    %v932 = vrsqrt.pop %v916
    %v933 = vrsqrt.pop %v917
    %v934 = vrsqrt.pop %v918
    %v935 = vrsqrt.pop %v919
    %v936 = vrsqrt.pop %v920
    %v937 = vrsqrt.pop %v921
    %v938 = vrsqrt.pop %v922
    %v939 = vrsqrt.pop %v923
    %v940 = vrsqrt.pop %v924
    %v941 = vrsqrt.pop %v925
    %v942 = vrsqrt.pop %v926
    %v943 = vrsqrt.pop %v927
    %945 = vset.pattern.permute.xlu0 0
    %946 = vperm.xlu0 %945, %v928
    %v947 = vpop.permute.xlu0 %946
    %950 = vset.pattern.permute.xlu0 0
    %951 = vperm.xlu0 %950, %v929
    %v952 = vpop.permute.xlu0 %951
    %955 = vset.pattern.permute.xlu0 0
    %956 = vperm.xlu0 %955, %v930
    %v957 = vpop.permute.xlu0 %956
    %960 = vset.pattern.permute.xlu0 0
    %961 = vperm.xlu0 %960, %v931
    %v962 = vpop.permute.xlu0 %961
    %965 = vset.pattern.permute.xlu0 0
    %966 = vperm.xlu0 %965, %v932
    %v967 = vpop.permute.xlu0 %966
    %970 = vset.pattern.permute.xlu0 0
    %971 = vperm.xlu0 %970, %v933
    %v972 = vpop.permute.xlu0 %971
    %975 = vset.pattern.permute.xlu0 0
    %976 = vperm.xlu0 %975, %v934
    %v977 = vpop.permute.xlu0 %976
    %980 = vset.pattern.permute.xlu0 0
    %981 = vperm.xlu0 %980, %v935
    %v982 = vpop.permute.xlu0 %981
    %985 = vset.pattern.permute.xlu0 0
    %986 = vperm.xlu0 %985, %v936
    %v987 = vpop.permute.xlu0 %986
    %990 = vset.pattern.permute.xlu0 0
    %991 = vperm.xlu0 %990, %v937
    %v992 = vpop.permute.xlu0 %991
    %995 = vset.pattern.permute.xlu0 0
    %996 = vperm.xlu0 %995, %v938
    %v997 = vpop.permute.xlu0 %996
    %1000 = vset.pattern.permute.xlu0 0
    %1001 = vperm.xlu0 %1000, %v939
    %v1002 = vpop.permute.xlu0 %1001
    %1005 = vset.pattern.permute.xlu0 0
    %1006 = vperm.xlu0 %1005, %v940
    %v1007 = vpop.permute.xlu0 %1006
    %1010 = vset.pattern.permute.xlu0 0
    %1011 = vperm.xlu0 %1010, %v941
    %v1012 = vpop.permute.xlu0 %1011
    %1015 = vset.pattern.permute.xlu0 0
    %1016 = vperm.xlu0 %1015, %v942
    %v1017 = vpop.permute.xlu0 %1016
    %1020 = vset.pattern.permute.xlu0 0
    %1021 = vperm.xlu0 %1020, %v943
    %v1022 = vpop.permute.xlu0 %1021
    %v1024 = vmul.f32 %v896, %v947
    %v1025 = vmul.f32 %v897, %v952
    %v1026 = vmul.f32 %v898, %v957
    %v1027 = vmul.f32 %v899, %v962
    %v1028 = vmul.f32 %v900, %v967
    %v1029 = vmul.f32 %v901, %v972
    %v1030 = vmul.f32 %v902, %v977
    %v1031 = vmul.f32 %v903, %v982
    %v1032 = vmul.f32 %v904, %v987
    %v1033 = vmul.f32 %v905, %v992
    %v1034 = vmul.f32 %v906, %v997
    %v1035 = vmul.f32 %v907, %v1002
    %v1036 = vmul.f32 %v908, %v1007
    %v1037 = vmul.f32 %v909, %v1012
    %v1038 = vmul.f32 %v910, %v1017
    %v1039 = vmul.f32 %v911, %v1022
    %v1040 = vld [vmem:[%s9] sm:$0xff]
    %v1041 = vld [vmem:[%s9 + $0x8] sm:$0xff]
    %v1042 = vld [vmem:[%s9 + $0x10] sm:$0xff]
    %v1043 = vld [vmem:[%s9 + $0x18] sm:$0xff]
    %v1044 = vld [vmem:[%s9 + $0x20] sm:$0xff]
    %v1045 = vld [vmem:[%s9 + $0x28] sm:$0xff]
    %v1046 = vld [vmem:[%s9 + $0x30] sm:$0xff]
    %v1047 = vld [vmem:[%s9 + $0x38] sm:$0xff]
    %v1048 = vld [vmem:[%s9 + $0x40] sm:$0xff]
    %v1049 = vld [vmem:[%s9 + $0x48] sm:$0xff]
    %v1050 = vld [vmem:[%s9 + $0x50] sm:$0xff]
    %v1051 = vld [vmem:[%s9 + $0x58] sm:$0xff]
    %v1052 = vld [vmem:[%s9 + $0x60] sm:$0xff]
    %v1053 = vld [vmem:[%s9 + $0x68] sm:$0xff]
    %v1054 = vld [vmem:[%s9 + $0x70] sm:$0xff]
    %v1055 = vld [vmem:[%s9 + $0x78] sm:$0xff]
    %v1056 = vmul.f32 %v1024, %v1040
    %v1057 = vmul.f32 %v1025, %v1041
    %v1058 = vmul.f32 %v1026, %v1042
    %v1059 = vmul.f32 %v1027, %v1043
    %v1060 = vmul.f32 %v1028, %v1044
    %v1061 = vmul.f32 %v1029, %v1045
    %v1062 = vmul.f32 %v1030, %v1046
    %v1063 = vmul.f32 %v1031, %v1047
    %v1064 = vmul.f32 %v1032, %v1048
    %v1065 = vmul.f32 %v1033, %v1049
    %v1066 = vmul.f32 %v1034, %v1050
    %v1067 = vmul.f32 %v1035, %v1051
    %v1068 = vmul.f32 %v1036, %v1052
    %v1069 = vmul.f32 %v1037, %v1053
    %v1070 = vmul.f32 %v1038, %v1054
    %v1071 = vmul.f32 %v1039, %v1055
    %v1072 = vld [vmem:[%s11] sm:$0xff]
    %v1073 = vld [vmem:[%s11 + $0x8] sm:$0xff]
    %v1074 = vld [vmem:[%s11 + $0x10] sm:$0xff]
    %v1075 = vld [vmem:[%s11 + $0x18] sm:$0xff]
    %v1076 = vld [vmem:[%s11 + $0x20] sm:$0xff]
    %v1077 = vld [vmem:[%s11 + $0x28] sm:$0xff]
    %v1078 = vld [vmem:[%s11 + $0x30] sm:$0xff]
    %v1079 = vld [vmem:[%s11 + $0x38] sm:$0xff]
    %v1080 = vld [vmem:[%s11 + $0x40] sm:$0xff]
    %v1081 = vld [vmem:[%s11 + $0x48] sm:$0xff]
    %v1082 = vld [vmem:[%s11 + $0x50] sm:$0xff]
    %v1083 = vld [vmem:[%s11 + $0x58] sm:$0xff]
    %v1084 = vld [vmem:[%s11 + $0x60] sm:$0xff]
    %v1085 = vld [vmem:[%s11 + $0x68] sm:$0xff]
    %v1086 = vld [vmem:[%s11 + $0x70] sm:$0xff]
    %v1087 = vld [vmem:[%s11 + $0x78] sm:$0xff]
    %v1088 = vadd.f32 %v1056, %v1072
    %v1089 = vadd.f32 %v1057, %v1073
    %v1090 = vadd.f32 %v1058, %v1074
    %v1091 = vadd.f32 %v1059, %v1075
    %v1092 = vadd.f32 %v1060, %v1076
    %v1093 = vadd.f32 %v1061, %v1077
    %v1094 = vadd.f32 %v1062, %v1078
    %v1095 = vadd.f32 %v1063, %v1079
    %v1096 = vadd.f32 %v1064, %v1080
    %v1097 = vadd.f32 %v1065, %v1081
    %v1098 = vadd.f32 %v1066, %v1082
    %v1099 = vadd.f32 %v1067, %v1083
    %v1100 = vadd.f32 %v1068, %v1084
    %v1101 = vadd.f32 %v1069, %v1085
    %v1102 = vadd.f32 %v1070, %v1086
    %v1103 = vadd.f32 %v1071, %v1087
    %v1104 = vpack.c.bf16 %v1089, %v1088
    %v1105 = vpack.c.bf16 %v1091, %v1090
    %v1106 = vpack.c.bf16 %v1093, %v1092
    %v1107 = vpack.c.bf16 %v1095, %v1094
    %v1108 = vpack.c.bf16 %v1097, %v1096
    %v1109 = vpack.c.bf16 %v1099, %v1098
    %v1110 = vpack.c.bf16 %v1101, %v1100
    %v1111 = vpack.c.bf16 %v1103, %v1102
    %v1112 = vld [vmem:[%s13] sm:$0xff]
    %v1113 = vld [vmem:[%s13 + $0x8] sm:$0xff]
    %v1114 = vld [vmem:[%s13 + $0x10] sm:$0xff]
    %v1115 = vld [vmem:[%s13 + $0x18] sm:$0xff]
    %v1116 = vld [vmem:[%s13 + $0x20] sm:$0xff]
    %v1117 = vld [vmem:[%s13 + $0x28] sm:$0xff]
    %v1118 = vld [vmem:[%s13 + $0x30] sm:$0xff]
    %v1119 = vld [vmem:[%s13 + $0x38] sm:$0xff]
    %v1120 = vld [vmem:[%s15] sm:$0xff]
    %v1121 = vld [vmem:[%s15 + $0x8] sm:$0xff]
    %v1122 = vld [vmem:[%s15 + $0x10] sm:$0xff]
    %v1123 = vld [vmem:[%s15 + $0x18] sm:$0xff]
    %v1124 = vld [vmem:[%s15 + $0x20] sm:$0xff]
    %v1125 = vld [vmem:[%s15 + $0x28] sm:$0xff]
    %v1126 = vld [vmem:[%s15 + $0x30] sm:$0xff]
    %v1127 = vld [vmem:[%s15 + $0x38] sm:$0xff]
    %v1128 = vld [vmem:[%s15 + $0x40] sm:$0xff]
    %v1129 = vld [vmem:[%s15 + $0x48] sm:$0xff]
    %v1130 = vld [vmem:[%s15 + $0x50] sm:$0xff]
    %v1131 = vld [vmem:[%s15 + $0x58] sm:$0xff]
    %v1132 = vld [vmem:[%s15 + $0x60] sm:$0xff]
    %v1133 = vld [vmem:[%s15 + $0x68] sm:$0xff]
    %v1134 = vld [vmem:[%s15 + $0x70] sm:$0xff]
    %v1135 = vld [vmem:[%s15 + $0x78] sm:$0xff]
    %v1136 = vld [vmem:[%s15 + $0x80] sm:$0xff]
    %v1137 = vld [vmem:[%s15 + $0x88] sm:$0xff]
    %v1138 = vld [vmem:[%s15 + $0x90] sm:$0xff]
    %v1139 = vld [vmem:[%s15 + $0x98] sm:$0xff]
    %v1140 = vld [vmem:[%s15 + $0xa0] sm:$0xff]
    %v1141 = vld [vmem:[%s15 + $0xa8] sm:$0xff]
    %v1142 = vld [vmem:[%s15 + $0xb0] sm:$0xff]
    %v1143 = vld [vmem:[%s15 + $0xb8] sm:$0xff]
    %v1144 = vld [vmem:[%s15 + $0xc0] sm:$0xff]
    %v1145 = vld [vmem:[%s15 + $0xc8] sm:$0xff]
    %v1146 = vld [vmem:[%s15 + $0xd0] sm:$0xff]
    %v1147 = vld [vmem:[%s15 + $0xd8] sm:$0xff]
    %v1148 = vld [vmem:[%s15 + $0xe0] sm:$0xff]
    %v1149 = vld [vmem:[%s15 + $0xe8] sm:$0xff]
    %v1150 = vld [vmem:[%s15 + $0xf0] sm:$0xff]
    %v1151 = vld [vmem:[%s15 + $0xf8] sm:$0xff]
    %v1152 = vld [vmem:[%s15 + $0x100] sm:$0xff]
    %v1153 = vld [vmem:[%s15 + $0x108] sm:$0xff]
    %v1154 = vld [vmem:[%s15 + $0x110] sm:$0xff]
    %v1155 = vld [vmem:[%s15 + $0x118] sm:$0xff]
    %v1156 = vld [vmem:[%s15 + $0x120] sm:$0xff]
    %v1157 = vld [vmem:[%s15 + $0x128] sm:$0xff]
    %v1158 = vld [vmem:[%s15 + $0x130] sm:$0xff]
    %v1159 = vld [vmem:[%s15 + $0x138] sm:$0xff]
    %v1160 = vld [vmem:[%s15 + $0x140] sm:$0xff]
    %v1161 = vld [vmem:[%s15 + $0x148] sm:$0xff]
    %v1162 = vld [vmem:[%s15 + $0x150] sm:$0xff]
    %v1163 = vld [vmem:[%s15 + $0x158] sm:$0xff]
    %v1164 = vld [vmem:[%s15 + $0x160] sm:$0xff]
    %v1165 = vld [vmem:[%s15 + $0x168] sm:$0xff]
    %v1166 = vld [vmem:[%s15 + $0x170] sm:$0xff]
    %v1167 = vld [vmem:[%s15 + $0x178] sm:$0xff]
    %v1168 = vld [vmem:[%s15 + $0x180] sm:$0xff]
    %v1169 = vld [vmem:[%s15 + $0x188] sm:$0xff]
    %v1170 = vld [vmem:[%s15 + $0x190] sm:$0xff]
    %v1171 = vld [vmem:[%s15 + $0x198] sm:$0xff]
    %v1172 = vld [vmem:[%s15 + $0x1a0] sm:$0xff]
    %v1173 = vld [vmem:[%s15 + $0x1a8] sm:$0xff]
    %v1174 = vld [vmem:[%s15 + $0x1b0] sm:$0xff]
    %v1175 = vld [vmem:[%s15 + $0x1b8] sm:$0xff]
    %v1176 = vld [vmem:[%s15 + $0x1c0] sm:$0xff]
    %v1177 = vld [vmem:[%s15 + $0x1c8] sm:$0xff]
    %v1178 = vld [vmem:[%s15 + $0x1d0] sm:$0xff]
    %v1179 = vld [vmem:[%s15 + $0x1d8] sm:$0xff]
    %v1180 = vld [vmem:[%s15 + $0x1e0] sm:$0xff]
    %v1181 = vld [vmem:[%s15 + $0x1e8] sm:$0xff]
    %v1182 = vld [vmem:[%s15 + $0x1f0] sm:$0xff]
    %v1183 = vld [vmem:[%s15 + $0x1f8] sm:$0xff]
    %v1192 = vunpack.c.l.b16 %v1112
    %v1193 = vunpack.c.h.b16 %v1112
    %v1194 = vunpack.c.l.b16 %v1113
    %v1195 = vunpack.c.h.b16 %v1113
    %v1196 = vunpack.c.l.b16 %v1114
    %v1197 = vunpack.c.h.b16 %v1114
    %v1198 = vunpack.c.l.b16 %v1115
    %v1199 = vunpack.c.h.b16 %v1115
    %v1200 = vunpack.c.l.b16 %v1116
    %v1201 = vunpack.c.h.b16 %v1116
    %v1202 = vunpack.c.l.b16 %v1117
    %v1203 = vunpack.c.h.b16 %v1117
    %v1204 = vunpack.c.l.b16 %v1118
    %v1205 = vunpack.c.h.b16 %v1118
    %v1206 = vunpack.c.l.b16 %v1119
    %v1207 = vunpack.c.h.b16 %v1119
    %v1208 = vpack.c.b16 %v1196, %v1192
    %v1209 = vpack.c.b16 %v1197, %v1193
    %v1210 = vpack.c.b16 %v1198, %v1194
    %v1211 = vpack.c.b16 %v1199, %v1195
    %v1212 = vpack.c.b16 %v1204, %v1200
    %v1213 = vpack.c.b16 %v1205, %v1201
    %v1214 = vpack.c.b16 %v1206, %v1202
    %v1215 = vpack.c.b16 %v1207, %v1203
    %v1225 = vsel %vm623, %v1104, 0
    %v1228 = vsel %vm623, %v1105, 0
    %v1231 = vsel %vm623, %v1106, 0
    %v1234 = vsel %vm623, %v1107, 0
    %v1237 = vsel %vm623, %v1108, 0
    %v1240 = vsel %vm623, %v1109, 0
    %v1243 = vsel %vm623, %v1110, 0
    %v1246 = vsel %vm623, %v1111, 0
    %1248 = vmatprep.subr.bf16.mxu0 %v1209
    %1249 = vmatpush1.bf16.msra.mxu0 %v1208
    %1250 = vmatprep.subr.bf16.mxu0 %v1213
    %1251 = vmatpush1.bf16.msra.mxu0 %v1212
    %1252 = vmatprep.subr.bf16.mxu0 0
    %1253 = vmatpush1.bf16.msra.mxu0 0
    %1254 = vmatprep.subr.bf16.mxu0 0
    %1255 = vmatpush1.bf16.msra.mxu0 0
    %1256 = vmatprep.subr.bf16.mxu0 0
    %1257 = vmatpush1.bf16.msra.mxu0 0
    %1258 = vmatprep.subr.bf16.mxu0 0
    %1259 = vmatpush1.bf16.msra.mxu0 0
    %1260 = vmatprep.subr.bf16.mxu0 0
    %1261 = vmatpush1.bf16.msra.mxu0 0
    %1262 = vmatprep.subr.bf16.mxu0 0
    %1263 = vmatpush1.bf16.msra.mxu0 0
    %1264 = vmatprep.subr.bf16.mxu0 0
    %1265 = vmatpush1.bf16.msra.mxu0 0
    %1266 = vmatprep.subr.bf16.mxu0 0
    %1267 = vmatpush1.bf16.msra.mxu0 0
    %1268 = vmatprep.subr.bf16.mxu0 0
    %1269 = vmatpush1.bf16.msra.mxu0 0
    %1270 = vmatprep.subr.bf16.mxu0 0
    %1271 = vmatpush1.bf16.msra.mxu0 0
    %1272 = vmatprep.subr.bf16.mxu0 0
    %1273 = vmatpush1.bf16.msra.mxu0 0
    %1274 = vmatprep.subr.bf16.mxu0 0
    %1275 = vmatpush1.bf16.msra.mxu0 0
    %1276 = vmatprep.subr.bf16.mxu0 0
    %1277 = vmatpush1.bf16.msra.mxu0 0
    %1278 = vmatprep.subr.bf16.mxu0 0
    %1279 = vmatpush1.bf16.msra.mxu0 0
    %1280 = vmatprep.mubr.bf16.mxu0 0
    %1281 = vmatmul.mubr.bf16.gmra.mrb[0].mxu0 %v1225
    %v1282 = vpop.f32.mrb[0].mxu0
    %v1283 = vadd.f32 %v1120, %v1282
    %v1284 = vpop.f32.mrb[0].mxu0
    %v1285 = vadd.f32 %v1121, %v1284
    %v1286 = vpop.f32.mrb[0].mxu0
    %v1287 = vadd.f32 %v1124, %v1286
    %v1288 = vpop.f32.mrb[0].mxu0
    %v1289 = vadd.f32 %v1125, %v1288
    %1290 = vmatprep.mubr.bf16.mxu0 0
    %1291 = vmatmul.mubr.bf16.gmra.mrb[0].mxu0 %v1228
    %v1292 = vpop.f32.mrb[0].mxu0
    %v1293 = vadd.f32 %v1128, %v1292
    %v1294 = vpop.f32.mrb[0].mxu0
    %v1295 = vadd.f32 %v1129, %v1294
    %v1296 = vpop.f32.mrb[0].mxu0
    %v1297 = vadd.f32 %v1132, %v1296
    %v1298 = vpop.f32.mrb[0].mxu0
    %v1299 = vadd.f32 %v1133, %v1298
    %1300 = vmatprep.mubr.bf16.mxu0 0
    %1301 = vmatmul.mubr.bf16.gmra.mrb[0].mxu0 %v1231
    %v1302 = vpop.f32.mrb[0].mxu0
    %v1303 = vadd.f32 %v1136, %v1302
    %v1304 = vpop.f32.mrb[0].mxu0
    %v1305 = vadd.f32 %v1137, %v1304
    %v1306 = vpop.f32.mrb[0].mxu0
    %v1307 = vadd.f32 %v1140, %v1306
    %v1308 = vpop.f32.mrb[0].mxu0
    %v1309 = vadd.f32 %v1141, %v1308
    %1310 = vmatprep.mubr.bf16.mxu0 0
    %1311 = vmatmul.mubr.bf16.gmra.mrb[0].mxu0 %v1234
    %v1312 = vpop.f32.mrb[0].mxu0
    %v1313 = vadd.f32 %v1144, %v1312
    %v1314 = vpop.f32.mrb[0].mxu0
    %v1315 = vadd.f32 %v1145, %v1314
    %v1316 = vpop.f32.mrb[0].mxu0
    %v1317 = vadd.f32 %v1148, %v1316
    %v1318 = vpop.f32.mrb[0].mxu0
    %v1319 = vadd.f32 %v1149, %v1318
    %1320 = vmatprep.mubr.bf16.mxu0 0
    %1321 = vmatmul.mubr.bf16.gmra.mrb[0].mxu0 %v1237
    %v1322 = vpop.f32.mrb[0].mxu0
    %v1323 = vadd.f32 %v1152, %v1322
    %v1324 = vpop.f32.mrb[0].mxu0
    %v1325 = vadd.f32 %v1153, %v1324
    %v1326 = vpop.f32.mrb[0].mxu0
    %v1327 = vadd.f32 %v1156, %v1326
    %v1328 = vpop.f32.mrb[0].mxu0
    %v1329 = vadd.f32 %v1157, %v1328
    %1330 = vmatprep.mubr.bf16.mxu0 0
    %1331 = vmatmul.mubr.bf16.gmra.mrb[0].mxu0 %v1240
    %v1332 = vpop.f32.mrb[0].mxu0
    %v1333 = vadd.f32 %v1160, %v1332
    %v1334 = vpop.f32.mrb[0].mxu0
    %v1335 = vadd.f32 %v1161, %v1334
    %v1336 = vpop.f32.mrb[0].mxu0
    %v1337 = vadd.f32 %v1164, %v1336
    %v1338 = vpop.f32.mrb[0].mxu0
    %v1339 = vadd.f32 %v1165, %v1338
    %1340 = vmatprep.mubr.bf16.mxu0 0
    %1341 = vmatmul.mubr.bf16.gmra.mrb[0].mxu0 %v1243
    %v1342 = vpop.f32.mrb[0].mxu0
    %v1343 = vadd.f32 %v1168, %v1342
    %v1344 = vpop.f32.mrb[0].mxu0
    %v1345 = vadd.f32 %v1169, %v1344
    %v1346 = vpop.f32.mrb[0].mxu0
    %v1347 = vadd.f32 %v1172, %v1346
    %v1348 = vpop.f32.mrb[0].mxu0
    %v1349 = vadd.f32 %v1173, %v1348
    %1350 = vmatprep.mubr.bf16.mxu0 0
    %1351 = vmatmul.mubr.bf16.gmra.mrb[0].mxu0 %v1246
    %v1352 = vpop.f32.mrb[0].mxu0
    %v1353 = vadd.f32 %v1176, %v1352
    %v1354 = vpop.f32.mrb[0].mxu0
    %v1355 = vadd.f32 %v1177, %v1354
    %v1356 = vpop.f32.mrb[0].mxu0
    %v1357 = vadd.f32 %v1180, %v1356
    %v1358 = vpop.f32.mrb[0].mxu0
    %v1359 = vadd.f32 %v1181, %v1358
    %1360 = vdwg.mxu0
    %1361 = vmatprep.subr.bf16.mxu0 %v1211
    %1362 = vmatpush1.bf16.msra.mxu0 %v1210
    %1363 = vmatprep.subr.bf16.mxu0 %v1215
    %1364 = vmatpush1.bf16.msra.mxu0 %v1214
    %1365 = vmatprep.subr.bf16.mxu0 0
    %1366 = vmatpush1.bf16.msra.mxu0 0
    %1367 = vmatprep.subr.bf16.mxu0 0
    %1368 = vmatpush1.bf16.msra.mxu0 0
    %1369 = vmatprep.subr.bf16.mxu0 0
    %1370 = vmatpush1.bf16.msra.mxu0 0
    %1371 = vmatprep.subr.bf16.mxu0 0
    %1372 = vmatpush1.bf16.msra.mxu0 0
    %1373 = vmatprep.subr.bf16.mxu0 0
    %1374 = vmatpush1.bf16.msra.mxu0 0
    %1375 = vmatprep.subr.bf16.mxu0 0
    %1376 = vmatpush1.bf16.msra.mxu0 0
    %1377 = vmatprep.subr.bf16.mxu0 0
    %1378 = vmatpush1.bf16.msra.mxu0 0
    %1379 = vmatprep.subr.bf16.mxu0 0
    %1380 = vmatpush1.bf16.msra.mxu0 0
    %1381 = vmatprep.subr.bf16.mxu0 0
    %1382 = vmatpush1.bf16.msra.mxu0 0
    %1383 = vmatprep.subr.bf16.mxu0 0
    %1384 = vmatpush1.bf16.msra.mxu0 0
    %1385 = vmatprep.subr.bf16.mxu0 0
    %1386 = vmatpush1.bf16.msra.mxu0 0
    %1387 = vmatprep.subr.bf16.mxu0 0
    %1388 = vmatpush1.bf16.msra.mxu0 0
    %1389 = vmatprep.subr.bf16.mxu0 0
    %1390 = vmatpush1.bf16.msra.mxu0 0
    %1391 = vmatprep.subr.bf16.mxu0 0
    %1392 = vmatpush1.bf16.msra.mxu0 0
    %1393 = vmatprep.mubr.bf16.mxu0 0
    %1394 = vmatmul.mubr.bf16.gmra.mrb[0].mxu0 %v1225
    %v1395 = vpop.f32.mrb[0].mxu0
    %v1396 = vadd.f32 %v1122, %v1395
    %v1397 = vpop.f32.mrb[0].mxu0
    %v1398 = vadd.f32 %v1123, %v1397
    %v1399 = vpop.f32.mrb[0].mxu0
    %v1400 = vadd.f32 %v1126, %v1399
    %v1401 = vpop.f32.mrb[0].mxu0
    %v1402 = vadd.f32 %v1127, %v1401
    %1403 = vmatprep.mubr.bf16.mxu0 0
    %1404 = vmatmul.mubr.bf16.gmra.mrb[0].mxu0 %v1228
    %v1405 = vpop.f32.mrb[0].mxu0
    %v1406 = vadd.f32 %v1130, %v1405
    %v1407 = vpop.f32.mrb[0].mxu0
    %v1408 = vadd.f32 %v1131, %v1407
    %v1409 = vpop.f32.mrb[0].mxu0
    %v1410 = vadd.f32 %v1134, %v1409
    %v1411 = vpop.f32.mrb[0].mxu0
    %v1412 = vadd.f32 %v1135, %v1411
    %1413 = vmatprep.mubr.bf16.mxu0 0
    %1414 = vmatmul.mubr.bf16.gmra.mrb[0].mxu0 %v1231
    %v1415 = vpop.f32.mrb[0].mxu0
    %v1416 = vadd.f32 %v1138, %v1415
    %v1417 = vpop.f32.mrb[0].mxu0
    %v1418 = vadd.f32 %v1139, %v1417
    %v1419 = vpop.f32.mrb[0].mxu0
    %v1420 = vadd.f32 %v1142, %v1419
    %v1421 = vpop.f32.mrb[0].mxu0
    %v1422 = vadd.f32 %v1143, %v1421
    %1423 = vmatprep.mubr.bf16.mxu0 0
    %1424 = vmatmul.mubr.bf16.gmra.mrb[0].mxu0 %v1234
    %v1425 = vpop.f32.mrb[0].mxu0
    %v1426 = vadd.f32 %v1146, %v1425
    %v1427 = vpop.f32.mrb[0].mxu0
    %v1428 = vadd.f32 %v1147, %v1427
    %v1429 = vpop.f32.mrb[0].mxu0
    %v1430 = vadd.f32 %v1150, %v1429
    %v1431 = vpop.f32.mrb[0].mxu0
    %v1432 = vadd.f32 %v1151, %v1431
    %1433 = vmatprep.mubr.bf16.mxu0 0
    %1434 = vmatmul.mubr.bf16.gmra.mrb[0].mxu0 %v1237
    %v1435 = vpop.f32.mrb[0].mxu0
    %v1436 = vadd.f32 %v1154, %v1435
    %v1437 = vpop.f32.mrb[0].mxu0
    %v1438 = vadd.f32 %v1155, %v1437
    %v1439 = vpop.f32.mrb[0].mxu0
    %v1440 = vadd.f32 %v1158, %v1439
    %v1441 = vpop.f32.mrb[0].mxu0
    %v1442 = vadd.f32 %v1159, %v1441
    %1443 = vmatprep.mubr.bf16.mxu0 0
    %1444 = vmatmul.mubr.bf16.gmra.mrb[0].mxu0 %v1240
    %v1445 = vpop.f32.mrb[0].mxu0
    %v1446 = vadd.f32 %v1162, %v1445
    %v1447 = vpop.f32.mrb[0].mxu0
    %v1448 = vadd.f32 %v1163, %v1447
    %v1449 = vpop.f32.mrb[0].mxu0
    %v1450 = vadd.f32 %v1166, %v1449
    %v1451 = vpop.f32.mrb[0].mxu0
    %v1452 = vadd.f32 %v1167, %v1451
    %1453 = vmatprep.mubr.bf16.mxu0 0
    %1454 = vmatmul.mubr.bf16.gmra.mrb[0].mxu0 %v1243
    %v1455 = vpop.f32.mrb[0].mxu0
    %v1456 = vadd.f32 %v1170, %v1455
    %v1457 = vpop.f32.mrb[0].mxu0
    %v1458 = vadd.f32 %v1171, %v1457
    %v1459 = vpop.f32.mrb[0].mxu0
    %v1460 = vadd.f32 %v1174, %v1459
    %v1461 = vpop.f32.mrb[0].mxu0
    %v1462 = vadd.f32 %v1175, %v1461
    %1463 = vmatprep.mubr.bf16.mxu0 0
    %1464 = vmatmul.mubr.bf16.gmra.mrb[0].mxu0 %v1246
    %v1465 = vpop.f32.mrb[0].mxu0
    %v1466 = vadd.f32 %v1178, %v1465
    %v1467 = vpop.f32.mrb[0].mxu0
    %v1468 = vadd.f32 %v1179, %v1467
    %v1469 = vpop.f32.mrb[0].mxu0
    %v1470 = vadd.f32 %v1182, %v1469
    %v1471 = vpop.f32.mrb[0].mxu0
    %v1472 = vadd.f32 %v1183, %v1471
    %1473 = vdwg.mxu0
    %v1474 = vmax.f32 %v1283, 0.0
    %v1475 = vmax.f32 %v1285, 0.0
    %v1476 = vmax.f32 %v1396, 0.0
    %v1477 = vmax.f32 %v1398, 0.0
    %v1478 = vmax.f32 %v1287, 0.0
    %v1479 = vmax.f32 %v1289, 0.0
    %v1480 = vmax.f32 %v1400, 0.0
    %v1481 = vmax.f32 %v1402, 0.0
    %v1482 = vmax.f32 %v1293, 0.0
    %v1483 = vmax.f32 %v1295, 0.0
    %v1484 = vmax.f32 %v1406, 0.0
    %v1485 = vmax.f32 %v1408, 0.0
    %v1486 = vmax.f32 %v1297, 0.0
    %v1487 = vmax.f32 %v1299, 0.0
    %v1488 = vmax.f32 %v1410, 0.0
    %v1489 = vmax.f32 %v1412, 0.0
    %v1490 = vmax.f32 %v1303, 0.0
    %v1491 = vmax.f32 %v1305, 0.0
    %v1492 = vmax.f32 %v1416, 0.0
    %v1493 = vmax.f32 %v1418, 0.0
    %v1494 = vmax.f32 %v1307, 0.0
    %v1495 = vmax.f32 %v1309, 0.0
    %v1496 = vmax.f32 %v1420, 0.0
    %v1497 = vmax.f32 %v1422, 0.0
    %v1498 = vmax.f32 %v1313, 0.0
    %v1499 = vmax.f32 %v1315, 0.0
    %v1500 = vmax.f32 %v1426, 0.0
    %v1501 = vmax.f32 %v1428, 0.0
    %v1502 = vmax.f32 %v1317, 0.0
    %v1503 = vmax.f32 %v1319, 0.0
    %v1504 = vmax.f32 %v1430, 0.0
    %v1505 = vmax.f32 %v1432, 0.0
    %v1506 = vmax.f32 %v1323, 0.0
    %v1507 = vmax.f32 %v1325, 0.0
    %v1508 = vmax.f32 %v1436, 0.0
    %v1509 = vmax.f32 %v1438, 0.0
    %v1510 = vmax.f32 %v1327, 0.0
    %v1511 = vmax.f32 %v1329, 0.0
    %v1512 = vmax.f32 %v1440, 0.0
    %v1513 = vmax.f32 %v1442, 0.0
    %v1514 = vmax.f32 %v1333, 0.0
    %v1515 = vmax.f32 %v1335, 0.0
    %v1516 = vmax.f32 %v1446, 0.0
    %v1517 = vmax.f32 %v1448, 0.0
    %v1518 = vmax.f32 %v1337, 0.0
    %v1519 = vmax.f32 %v1339, 0.0
    %v1520 = vmax.f32 %v1450, 0.0
    %v1521 = vmax.f32 %v1452, 0.0
    %v1522 = vmax.f32 %v1343, 0.0
    %v1523 = vmax.f32 %v1345, 0.0
    %v1524 = vmax.f32 %v1456, 0.0
    %v1525 = vmax.f32 %v1458, 0.0
    %v1526 = vmax.f32 %v1347, 0.0
    %v1527 = vmax.f32 %v1349, 0.0
    %v1528 = vmax.f32 %v1460, 0.0
    %v1529 = vmax.f32 %v1462, 0.0
    %v1530 = vmax.f32 %v1353, 0.0
    %v1531 = vmax.f32 %v1355, 0.0
    %v1532 = vmax.f32 %v1466, 0.0
    %v1533 = vmax.f32 %v1468, 0.0
    %v1534 = vmax.f32 %v1357, 0.0
    %v1535 = vmax.f32 %v1359, 0.0
    %v1536 = vmax.f32 %v1470, 0.0
    %v1537 = vmax.f32 %v1472, 0.0
    %v1538 = vpack.c.bf16 %v1478, %v1474
    %v1539 = vpack.c.bf16 %v1479, %v1475
    %v1540 = vpack.c.bf16 %v1480, %v1476
    %v1541 = vpack.c.bf16 %v1481, %v1477
    %v1542 = vpack.c.bf16 %v1486, %v1482
    %v1543 = vpack.c.bf16 %v1487, %v1483
    %v1544 = vpack.c.bf16 %v1488, %v1484
    %v1545 = vpack.c.bf16 %v1489, %v1485
    %v1546 = vpack.c.bf16 %v1494, %v1490
    %v1547 = vpack.c.bf16 %v1495, %v1491
    %v1548 = vpack.c.bf16 %v1496, %v1492
    %v1549 = vpack.c.bf16 %v1497, %v1493
    %v1550 = vpack.c.bf16 %v1502, %v1498
    %v1551 = vpack.c.bf16 %v1503, %v1499
    %v1552 = vpack.c.bf16 %v1504, %v1500
    %v1553 = vpack.c.bf16 %v1505, %v1501
    %v1554 = vpack.c.bf16 %v1510, %v1506
    %v1555 = vpack.c.bf16 %v1511, %v1507
    %v1556 = vpack.c.bf16 %v1512, %v1508
    %v1557 = vpack.c.bf16 %v1513, %v1509
    %v1558 = vpack.c.bf16 %v1518, %v1514
    %v1559 = vpack.c.bf16 %v1519, %v1515
    %v1560 = vpack.c.bf16 %v1520, %v1516
    %v1561 = vpack.c.bf16 %v1521, %v1517
    %v1562 = vpack.c.bf16 %v1526, %v1522
    %v1563 = vpack.c.bf16 %v1527, %v1523
    %v1564 = vpack.c.bf16 %v1528, %v1524
    %v1565 = vpack.c.bf16 %v1529, %v1525
    %v1566 = vpack.c.bf16 %v1534, %v1530
    %v1567 = vpack.c.bf16 %v1535, %v1531
    %v1568 = vpack.c.bf16 %v1536, %v1532
    %v1569 = vpack.c.bf16 %v1537, %v1533
    %v1570 = vld [vmem:[%s17] sm:$0xff]
    %v1571 = vld [vmem:[%s17 + $0x8] sm:$0xff]
    %v1572 = vld [vmem:[%s17 + $0x10] sm:$0xff]
    %v1573 = vld [vmem:[%s17 + $0x18] sm:$0xff]
    %v1574 = vld [vmem:[%s17 + $0x20] sm:$0xff]
    %v1575 = vld [vmem:[%s17 + $0x28] sm:$0xff]
    %v1576 = vld [vmem:[%s17 + $0x30] sm:$0xff]
    %v1577 = vld [vmem:[%s17 + $0x38] sm:$0xff]
    %v1578 = vld [vmem:[%s17 + $0x40] sm:$0xff]
    %v1579 = vld [vmem:[%s17 + $0x48] sm:$0xff]
    %v1580 = vld [vmem:[%s17 + $0x50] sm:$0xff]
    %v1581 = vld [vmem:[%s17 + $0x58] sm:$0xff]
    %v1582 = vld [vmem:[%s17 + $0x60] sm:$0xff]
    %v1583 = vld [vmem:[%s17 + $0x68] sm:$0xff]
    %v1584 = vld [vmem:[%s17 + $0x70] sm:$0xff]
    %v1585 = vld [vmem:[%s17 + $0x78] sm:$0xff]
    %v1586 = vld [vmem:[%s17 + $0x80] sm:$0xff]
    %v1587 = vld [vmem:[%s17 + $0x88] sm:$0xff]
    %v1588 = vld [vmem:[%s17 + $0x90] sm:$0xff]
    %v1589 = vld [vmem:[%s17 + $0x98] sm:$0xff]
    %v1590 = vld [vmem:[%s17 + $0xa0] sm:$0xff]
    %v1591 = vld [vmem:[%s17 + $0xa8] sm:$0xff]
    %v1592 = vld [vmem:[%s17 + $0xb0] sm:$0xff]
    %v1593 = vld [vmem:[%s17 + $0xb8] sm:$0xff]
    %v1594 = vld [vmem:[%s17 + $0xc0] sm:$0xff]
    %v1595 = vld [vmem:[%s17 + $0xc8] sm:$0xff]
    %v1596 = vld [vmem:[%s17 + $0xd0] sm:$0xff]
    %v1597 = vld [vmem:[%s17 + $0xd8] sm:$0xff]
    %v1598 = vld [vmem:[%s17 + $0xe0] sm:$0xff]
    %v1599 = vld [vmem:[%s17 + $0xe8] sm:$0xff]
    %v1600 = vld [vmem:[%s17 + $0xf0] sm:$0xff]
    %v1601 = vld [vmem:[%s17 + $0xf8] sm:$0xff]
    %v1602 = vld [vmem:[%s17 + $0x100] sm:$0xff]
    %v1603 = vld [vmem:[%s17 + $0x108] sm:$0xff]
    %v1604 = vld [vmem:[%s17 + $0x110] sm:$0xff]
    %v1605 = vld [vmem:[%s17 + $0x118] sm:$0xff]
    %v1606 = vld [vmem:[%s17 + $0x120] sm:$0xff]
    %v1607 = vld [vmem:[%s17 + $0x128] sm:$0xff]
    %v1608 = vld [vmem:[%s17 + $0x130] sm:$0xff]
    %v1609 = vld [vmem:[%s17 + $0x138] sm:$0xff]
    %v1610 = vld [vmem:[%s17 + $0x140] sm:$0xff]
    %v1611 = vld [vmem:[%s17 + $0x148] sm:$0xff]
    %v1612 = vld [vmem:[%s17 + $0x150] sm:$0xff]
    %v1613 = vld [vmem:[%s17 + $0x158] sm:$0xff]
    %v1614 = vld [vmem:[%s17 + $0x160] sm:$0xff]
    %v1615 = vld [vmem:[%s17 + $0x168] sm:$0xff]
    %v1616 = vld [vmem:[%s17 + $0x170] sm:$0xff]
    %v1617 = vld [vmem:[%s17 + $0x178] sm:$0xff]
    %v1618 = vld [vmem:[%s17 + $0x180] sm:$0xff]
    %v1619 = vld [vmem:[%s17 + $0x188] sm:$0xff]
    %v1620 = vld [vmem:[%s17 + $0x190] sm:$0xff]
    %v1621 = vld [vmem:[%s17 + $0x198] sm:$0xff]
    %v1622 = vld [vmem:[%s17 + $0x1a0] sm:$0xff]
    %v1623 = vld [vmem:[%s17 + $0x1a8] sm:$0xff]
    %v1624 = vld [vmem:[%s17 + $0x1b0] sm:$0xff]
    %v1625 = vld [vmem:[%s17 + $0x1b8] sm:$0xff]
    %v1626 = vld [vmem:[%s17 + $0x1c0] sm:$0xff]
    %v1627 = vld [vmem:[%s17 + $0x1c8] sm:$0xff]
    %v1628 = vld [vmem:[%s17 + $0x1d0] sm:$0xff]
    %v1629 = vld [vmem:[%s17 + $0x1d8] sm:$0xff]
    %v1630 = vld [vmem:[%s17 + $0x1e0] sm:$0xff]
    %v1631 = vld [vmem:[%s17 + $0x1e8] sm:$0xff]
    %v1632 = vld [vmem:[%s17 + $0x1f0] sm:$0xff]
    %v1633 = vld [vmem:[%s17 + $0x1f8] sm:$0xff]
    %v1634 = vld [vmem:[%s17 + $0x200] sm:$0xff]
    %v1635 = vld [vmem:[%s17 + $0x208] sm:$0xff]
    %v1636 = vld [vmem:[%s17 + $0x210] sm:$0xff]
    %v1637 = vld [vmem:[%s17 + $0x218] sm:$0xff]
    %v1638 = vld [vmem:[%s17 + $0x220] sm:$0xff]
    %v1639 = vld [vmem:[%s17 + $0x228] sm:$0xff]
    %v1640 = vld [vmem:[%s17 + $0x230] sm:$0xff]
    %v1641 = vld [vmem:[%s17 + $0x238] sm:$0xff]
    %v1642 = vld [vmem:[%s17 + $0x240] sm:$0xff]
    %v1643 = vld [vmem:[%s17 + $0x248] sm:$0xff]
    %v1644 = vld [vmem:[%s17 + $0x250] sm:$0xff]
    %v1645 = vld [vmem:[%s17 + $0x258] sm:$0xff]
    %v1646 = vld [vmem:[%s17 + $0x260] sm:$0xff]
    %v1647 = vld [vmem:[%s17 + $0x268] sm:$0xff]
    %v1648 = vld [vmem:[%s17 + $0x270] sm:$0xff]
    %v1649 = vld [vmem:[%s17 + $0x278] sm:$0xff]
    %v1650 = vld [vmem:[%s17 + $0x280] sm:$0xff]
    %v1651 = vld [vmem:[%s17 + $0x288] sm:$0xff]
    %v1652 = vld [vmem:[%s17 + $0x290] sm:$0xff]
    %v1653 = vld [vmem:[%s17 + $0x298] sm:$0xff]
    %v1654 = vld [vmem:[%s17 + $0x2a0] sm:$0xff]
    %v1655 = vld [vmem:[%s17 + $0x2a8] sm:$0xff]
    %v1656 = vld [vmem:[%s17 + $0x2b0] sm:$0xff]
    %v1657 = vld [vmem:[%s17 + $0x2b8] sm:$0xff]
    %v1658 = vld [vmem:[%s17 + $0x2c0] sm:$0xff]
    %v1659 = vld [vmem:[%s17 + $0x2c8] sm:$0xff]
    %v1660 = vld [vmem:[%s17 + $0x2d0] sm:$0xff]
    %v1661 = vld [vmem:[%s17 + $0x2d8] sm:$0xff]
    %v1662 = vld [vmem:[%s17 + $0x2e0] sm:$0xff]
    %v1663 = vld [vmem:[%s17 + $0x2e8] sm:$0xff]
    %v1664 = vld [vmem:[%s17 + $0x2f0] sm:$0xff]
    %v1665 = vld [vmem:[%s17 + $0x2f8] sm:$0xff]
    %v1666 = vld [vmem:[%s17 + $0x300] sm:$0xff]
    %v1667 = vld [vmem:[%s17 + $0x308] sm:$0xff]
    %v1668 = vld [vmem:[%s17 + $0x310] sm:$0xff]
    %v1669 = vld [vmem:[%s17 + $0x318] sm:$0xff]
    %v1670 = vld [vmem:[%s17 + $0x320] sm:$0xff]
    %v1671 = vld [vmem:[%s17 + $0x328] sm:$0xff]
    %v1672 = vld [vmem:[%s17 + $0x330] sm:$0xff]
    %v1673 = vld [vmem:[%s17 + $0x338] sm:$0xff]
    %v1674 = vld [vmem:[%s17 + $0x340] sm:$0xff]
    %v1675 = vld [vmem:[%s17 + $0x348] sm:$0xff]
    %v1676 = vld [vmem:[%s17 + $0x350] sm:$0xff]
    %v1677 = vld [vmem:[%s17 + $0x358] sm:$0xff]
    %v1678 = vld [vmem:[%s17 + $0x360] sm:$0xff]
    %v1679 = vld [vmem:[%s17 + $0x368] sm:$0xff]
    %v1680 = vld [vmem:[%s17 + $0x370] sm:$0xff]
    %v1681 = vld [vmem:[%s17 + $0x378] sm:$0xff]
    %v1682 = vld [vmem:[%s17 + $0x380] sm:$0xff]
    %v1683 = vld [vmem:[%s17 + $0x388] sm:$0xff]
    %v1684 = vld [vmem:[%s17 + $0x390] sm:$0xff]
    %v1685 = vld [vmem:[%s17 + $0x398] sm:$0xff]
    %v1686 = vld [vmem:[%s17 + $0x3a0] sm:$0xff]
    %v1687 = vld [vmem:[%s17 + $0x3a8] sm:$0xff]
    %v1688 = vld [vmem:[%s17 + $0x3b0] sm:$0xff]
    %v1689 = vld [vmem:[%s17 + $0x3b8] sm:$0xff]
    %v1690 = vld [vmem:[%s17 + $0x3c0] sm:$0xff]
    %v1691 = vld [vmem:[%s17 + $0x3c8] sm:$0xff]
    %v1692 = vld [vmem:[%s17 + $0x3d0] sm:$0xff]
    %v1693 = vld [vmem:[%s17 + $0x3d8] sm:$0xff]
    %v1694 = vld [vmem:[%s17 + $0x3e0] sm:$0xff]
    %v1695 = vld [vmem:[%s17 + $0x3e8] sm:$0xff]
    %v1696 = vld [vmem:[%s17 + $0x3f0] sm:$0xff]
    %v1697 = vld [vmem:[%s17 + $0x3f8] sm:$0xff]
    %v1698 = vld [vmem:[%s19] sm:$0xff]
    %v1699 = vld [vmem:[%s19 + $0x8] sm:$0xff]
    %v1700 = vld [vmem:[%s19 + $0x10] sm:$0xff]
    %v1701 = vld [vmem:[%s19 + $0x18] sm:$0xff]
    %v1702 = vld [vmem:[%s19 + $0x20] sm:$0xff]
    %v1703 = vld [vmem:[%s19 + $0x28] sm:$0xff]
    %v1704 = vld [vmem:[%s19 + $0x30] sm:$0xff]
    %v1705 = vld [vmem:[%s19 + $0x38] sm:$0xff]
    %v1706 = vld [vmem:[%s19 + $0x40] sm:$0xff]
    %v1707 = vld [vmem:[%s19 + $0x48] sm:$0xff]
    %v1708 = vld [vmem:[%s19 + $0x50] sm:$0xff]
    %v1709 = vld [vmem:[%s19 + $0x58] sm:$0xff]
    %v1710 = vld [vmem:[%s19 + $0x60] sm:$0xff]
    %v1711 = vld [vmem:[%s19 + $0x68] sm:$0xff]
    %v1712 = vld [vmem:[%s19 + $0x70] sm:$0xff]
    %v1713 = vld [vmem:[%s19 + $0x78] sm:$0xff]
    %v1714 = vld [vmem:[%s19 + $0x80] sm:$0xff]
    %v1715 = vld [vmem:[%s19 + $0x88] sm:$0xff]
    %v1716 = vld [vmem:[%s19 + $0x90] sm:$0xff]
    %v1717 = vld [vmem:[%s19 + $0x98] sm:$0xff]
    %v1718 = vld [vmem:[%s19 + $0xa0] sm:$0xff]
    %v1719 = vld [vmem:[%s19 + $0xa8] sm:$0xff]
    %v1720 = vld [vmem:[%s19 + $0xb0] sm:$0xff]
    %v1721 = vld [vmem:[%s19 + $0xb8] sm:$0xff]
    %v1722 = vld [vmem:[%s19 + $0xc0] sm:$0xff]
    %v1723 = vld [vmem:[%s19 + $0xc8] sm:$0xff]
    %v1724 = vld [vmem:[%s19 + $0xd0] sm:$0xff]
    %v1725 = vld [vmem:[%s19 + $0xd8] sm:$0xff]
    %v1726 = vld [vmem:[%s19 + $0xe0] sm:$0xff]
    %v1727 = vld [vmem:[%s19 + $0xe8] sm:$0xff]
    %v1728 = vld [vmem:[%s19 + $0xf0] sm:$0xff]
    %v1729 = vld [vmem:[%s19 + $0xf8] sm:$0xff]
    %v1730 = vld [vmem:[%s19 + $0x100] sm:$0xff]
    %v1731 = vld [vmem:[%s19 + $0x108] sm:$0xff]
    %v1732 = vld [vmem:[%s19 + $0x110] sm:$0xff]
    %v1733 = vld [vmem:[%s19 + $0x118] sm:$0xff]
    %v1734 = vld [vmem:[%s19 + $0x120] sm:$0xff]
    %v1735 = vld [vmem:[%s19 + $0x128] sm:$0xff]
    %v1736 = vld [vmem:[%s19 + $0x130] sm:$0xff]
    %v1737 = vld [vmem:[%s19 + $0x138] sm:$0xff]
    %v1738 = vld [vmem:[%s19 + $0x140] sm:$0xff]
    %v1739 = vld [vmem:[%s19 + $0x148] sm:$0xff]
    %v1740 = vld [vmem:[%s19 + $0x150] sm:$0xff]
    %v1741 = vld [vmem:[%s19 + $0x158] sm:$0xff]
    %v1742 = vld [vmem:[%s19 + $0x160] sm:$0xff]
    %v1743 = vld [vmem:[%s19 + $0x168] sm:$0xff]
    %v1744 = vld [vmem:[%s19 + $0x170] sm:$0xff]
    %v1745 = vld [vmem:[%s19 + $0x178] sm:$0xff]
    %v1746 = vld [vmem:[%s19 + $0x180] sm:$0xff]
    %v1747 = vld [vmem:[%s19 + $0x188] sm:$0xff]
    %v1748 = vld [vmem:[%s19 + $0x190] sm:$0xff]
    %v1749 = vld [vmem:[%s19 + $0x198] sm:$0xff]
    %v1750 = vld [vmem:[%s19 + $0x1a0] sm:$0xff]
    %v1751 = vld [vmem:[%s19 + $0x1a8] sm:$0xff]
    %v1752 = vld [vmem:[%s19 + $0x1b0] sm:$0xff]
    %v1753 = vld [vmem:[%s19 + $0x1b8] sm:$0xff]
    %v1754 = vld [vmem:[%s19 + $0x1c0] sm:$0xff]
    %v1755 = vld [vmem:[%s19 + $0x1c8] sm:$0xff]
    %v1756 = vld [vmem:[%s19 + $0x1d0] sm:$0xff]
    %v1757 = vld [vmem:[%s19 + $0x1d8] sm:$0xff]
    %v1758 = vld [vmem:[%s19 + $0x1e0] sm:$0xff]
    %v1759 = vld [vmem:[%s19 + $0x1e8] sm:$0xff]
    %v1760 = vld [vmem:[%s19 + $0x1f0] sm:$0xff]
    %v1761 = vld [vmem:[%s19 + $0x1f8] sm:$0xff]
    %v1890 = vunpack.c.l.b16 %v1570
    %v1891 = vunpack.c.h.b16 %v1570
    %v1892 = vunpack.c.l.b16 %v1571
    %v1893 = vunpack.c.h.b16 %v1571
    %v1894 = vunpack.c.l.b16 %v1572
    %v1895 = vunpack.c.h.b16 %v1572
    %v1896 = vunpack.c.l.b16 %v1573
    %v1897 = vunpack.c.h.b16 %v1573
    %v1898 = vunpack.c.l.b16 %v1574
    %v1899 = vunpack.c.h.b16 %v1574
    %v1900 = vunpack.c.l.b16 %v1575
    %v1901 = vunpack.c.h.b16 %v1575
    %v1902 = vunpack.c.l.b16 %v1576
    %v1903 = vunpack.c.h.b16 %v1576
    %v1904 = vunpack.c.l.b16 %v1577
    %v1905 = vunpack.c.h.b16 %v1577
    %v1906 = vunpack.c.l.b16 %v1578
    %v1907 = vunpack.c.h.b16 %v1578
    %v1908 = vunpack.c.l.b16 %v1579
    %v1909 = vunpack.c.h.b16 %v1579
    %v1910 = vunpack.c.l.b16 %v1580
    %v1911 = vunpack.c.h.b16 %v1580
    %v1912 = vunpack.c.l.b16 %v1581
    %v1913 = vunpack.c.h.b16 %v1581
    %v1914 = vunpack.c.l.b16 %v1582
    %v1915 = vunpack.c.h.b16 %v1582
    %v1916 = vunpack.c.l.b16 %v1583
    %v1917 = vunpack.c.h.b16 %v1583
    %v1918 = vunpack.c.l.b16 %v1584
    %v1919 = vunpack.c.h.b16 %v1584
    %v1920 = vunpack.c.l.b16 %v1585
    %v1921 = vunpack.c.h.b16 %v1585
    %v1922 = vunpack.c.l.b16 %v1586
    %v1923 = vunpack.c.h.b16 %v1586
    %v1924 = vunpack.c.l.b16 %v1587
    %v1925 = vunpack.c.h.b16 %v1587
    %v1926 = vunpack.c.l.b16 %v1588
    %v1927 = vunpack.c.h.b16 %v1588
    %v1928 = vunpack.c.l.b16 %v1589
    %v1929 = vunpack.c.h.b16 %v1589
    %v1930 = vunpack.c.l.b16 %v1590
    %v1931 = vunpack.c.h.b16 %v1590
    %v1932 = vunpack.c.l.b16 %v1591
    %v1933 = vunpack.c.h.b16 %v1591
    %v1934 = vunpack.c.l.b16 %v1592
    %v1935 = vunpack.c.h.b16 %v1592
    %v1936 = vunpack.c.l.b16 %v1593
    %v1937 = vunpack.c.h.b16 %v1593
    %v1938 = vunpack.c.l.b16 %v1594
    %v1939 = vunpack.c.h.b16 %v1594
    %v1940 = vunpack.c.l.b16 %v1595
    %v1941 = vunpack.c.h.b16 %v1595
    %v1942 = vunpack.c.l.b16 %v1596
    %v1943 = vunpack.c.h.b16 %v1596
    %v1944 = vunpack.c.l.b16 %v1597
    %v1945 = vunpack.c.h.b16 %v1597
    %v1946 = vunpack.c.l.b16 %v1598
    %v1947 = vunpack.c.h.b16 %v1598
    %v1948 = vunpack.c.l.b16 %v1599
    %v1949 = vunpack.c.h.b16 %v1599
    %v1950 = vunpack.c.l.b16 %v1600
    %v1951 = vunpack.c.h.b16 %v1600
    %v1952 = vunpack.c.l.b16 %v1601
    %v1953 = vunpack.c.h.b16 %v1601
    %v1954 = vunpack.c.l.b16 %v1602
    %v1955 = vunpack.c.h.b16 %v1602
    %v1956 = vunpack.c.l.b16 %v1603
    %v1957 = vunpack.c.h.b16 %v1603
    %v1958 = vunpack.c.l.b16 %v1604
    %v1959 = vunpack.c.h.b16 %v1604
    %v1960 = vunpack.c.l.b16 %v1605
    %v1961 = vunpack.c.h.b16 %v1605
    %v1962 = vunpack.c.l.b16 %v1606
    %v1963 = vunpack.c.h.b16 %v1606
    %v1964 = vunpack.c.l.b16 %v1607
    %v1965 = vunpack.c.h.b16 %v1607
    %v1966 = vunpack.c.l.b16 %v1608
    %v1967 = vunpack.c.h.b16 %v1608
    %v1968 = vunpack.c.l.b16 %v1609
    %v1969 = vunpack.c.h.b16 %v1609
    %v1970 = vunpack.c.l.b16 %v1610
    %v1971 = vunpack.c.h.b16 %v1610
    %v1972 = vunpack.c.l.b16 %v1611
    %v1973 = vunpack.c.h.b16 %v1611
    %v1974 = vunpack.c.l.b16 %v1612
    %v1975 = vunpack.c.h.b16 %v1612
    %v1976 = vunpack.c.l.b16 %v1613
    %v1977 = vunpack.c.h.b16 %v1613
    %v1978 = vunpack.c.l.b16 %v1614
    %v1979 = vunpack.c.h.b16 %v1614
    %v1980 = vunpack.c.l.b16 %v1615
    %v1981 = vunpack.c.h.b16 %v1615
    %v1982 = vunpack.c.l.b16 %v1616
    %v1983 = vunpack.c.h.b16 %v1616
    %v1984 = vunpack.c.l.b16 %v1617
    %v1985 = vunpack.c.h.b16 %v1617
    %v1986 = vunpack.c.l.b16 %v1618
    %v1987 = vunpack.c.h.b16 %v1618
    %v1988 = vunpack.c.l.b16 %v1619
    %v1989 = vunpack.c.h.b16 %v1619
    %v1990 = vunpack.c.l.b16 %v1620
    %v1991 = vunpack.c.h.b16 %v1620
    %v1992 = vunpack.c.l.b16 %v1621
    %v1993 = vunpack.c.h.b16 %v1621
    %v1994 = vunpack.c.l.b16 %v1622
    %v1995 = vunpack.c.h.b16 %v1622
    %v1996 = vunpack.c.l.b16 %v1623
    %v1997 = vunpack.c.h.b16 %v1623
    %v1998 = vunpack.c.l.b16 %v1624
    %v1999 = vunpack.c.h.b16 %v1624
    %v2000 = vunpack.c.l.b16 %v1625
    %v2001 = vunpack.c.h.b16 %v1625
    %v2002 = vunpack.c.l.b16 %v1626
    %v2003 = vunpack.c.h.b16 %v1626
    %v2004 = vunpack.c.l.b16 %v1627
    %v2005 = vunpack.c.h.b16 %v1627
    %v2006 = vunpack.c.l.b16 %v1628
    %v2007 = vunpack.c.h.b16 %v1628
    %v2008 = vunpack.c.l.b16 %v1629
    %v2009 = vunpack.c.h.b16 %v1629
    %v2010 = vunpack.c.l.b16 %v1630
    %v2011 = vunpack.c.h.b16 %v1630
    %v2012 = vunpack.c.l.b16 %v1631
    %v2013 = vunpack.c.h.b16 %v1631
    %v2014 = vunpack.c.l.b16 %v1632
    %v2015 = vunpack.c.h.b16 %v1632
    %v2016 = vunpack.c.l.b16 %v1633
    %v2017 = vunpack.c.h.b16 %v1633
    %v2018 = vunpack.c.l.b16 %v1634
    %v2019 = vunpack.c.h.b16 %v1634
    %v2020 = vunpack.c.l.b16 %v1635
    %v2021 = vunpack.c.h.b16 %v1635
    %v2022 = vunpack.c.l.b16 %v1636
    %v2023 = vunpack.c.h.b16 %v1636
    %v2024 = vunpack.c.l.b16 %v1637
    %v2025 = vunpack.c.h.b16 %v1637
    %v2026 = vunpack.c.l.b16 %v1638
    %v2027 = vunpack.c.h.b16 %v1638
    %v2028 = vunpack.c.l.b16 %v1639
    %v2029 = vunpack.c.h.b16 %v1639
    %v2030 = vunpack.c.l.b16 %v1640
    %v2031 = vunpack.c.h.b16 %v1640
    %v2032 = vunpack.c.l.b16 %v1641
    %v2033 = vunpack.c.h.b16 %v1641
    %v2034 = vunpack.c.l.b16 %v1642
    %v2035 = vunpack.c.h.b16 %v1642
    %v2036 = vunpack.c.l.b16 %v1643
    %v2037 = vunpack.c.h.b16 %v1643
    %v2038 = vunpack.c.l.b16 %v1644
    %v2039 = vunpack.c.h.b16 %v1644
    %v2040 = vunpack.c.l.b16 %v1645
    %v2041 = vunpack.c.h.b16 %v1645
    %v2042 = vunpack.c.l.b16 %v1646
    %v2043 = vunpack.c.h.b16 %v1646
    %v2044 = vunpack.c.l.b16 %v1647
    %v2045 = vunpack.c.h.b16 %v1647
    %v2046 = vunpack.c.l.b16 %v1648
    %v2047 = vunpack.c.h.b16 %v1648
    %v2048 = vunpack.c.l.b16 %v1649
    %v2049 = vunpack.c.h.b16 %v1649
    %v2050 = vunpack.c.l.b16 %v1650
    %v2051 = vunpack.c.h.b16 %v1650
    %v2052 = vunpack.c.l.b16 %v1651
    %v2053 = vunpack.c.h.b16 %v1651
    %v2054 = vunpack.c.l.b16 %v1652
    %v2055 = vunpack.c.h.b16 %v1652
    %v2056 = vunpack.c.l.b16 %v1653
    %v2057 = vunpack.c.h.b16 %v1653
    %v2058 = vunpack.c.l.b16 %v1654
    %v2059 = vunpack.c.h.b16 %v1654
    %v2060 = vunpack.c.l.b16 %v1655
    %v2061 = vunpack.c.h.b16 %v1655
    %v2062 = vunpack.c.l.b16 %v1656
    %v2063 = vunpack.c.h.b16 %v1656
    %v2064 = vunpack.c.l.b16 %v1657
    %v2065 = vunpack.c.h.b16 %v1657
    %v2066 = vunpack.c.l.b16 %v1658
    %v2067 = vunpack.c.h.b16 %v1658
    %v2068 = vunpack.c.l.b16 %v1659
    %v2069 = vunpack.c.h.b16 %v1659
    %v2070 = vunpack.c.l.b16 %v1660
    %v2071 = vunpack.c.h.b16 %v1660
    %v2072 = vunpack.c.l.b16 %v1661
    %v2073 = vunpack.c.h.b16 %v1661
    %v2074 = vunpack.c.l.b16 %v1662
    %v2075 = vunpack.c.h.b16 %v1662
    %v2076 = vunpack.c.l.b16 %v1663
    %v2077 = vunpack.c.h.b16 %v1663
    %v2078 = vunpack.c.l.b16 %v1664
    %v2079 = vunpack.c.h.b16 %v1664
    %v2080 = vunpack.c.l.b16 %v1665
    %v2081 = vunpack.c.h.b16 %v1665
    %v2082 = vunpack.c.l.b16 %v1666
    %v2083 = vunpack.c.h.b16 %v1666
    %v2084 = vunpack.c.l.b16 %v1667
    %v2085 = vunpack.c.h.b16 %v1667
    %v2086 = vunpack.c.l.b16 %v1668
    %v2087 = vunpack.c.h.b16 %v1668
    %v2088 = vunpack.c.l.b16 %v1669
    %v2089 = vunpack.c.h.b16 %v1669
    %v2090 = vunpack.c.l.b16 %v1670
    %v2091 = vunpack.c.h.b16 %v1670
    %v2092 = vunpack.c.l.b16 %v1671
    %v2093 = vunpack.c.h.b16 %v1671
    %v2094 = vunpack.c.l.b16 %v1672
    %v2095 = vunpack.c.h.b16 %v1672
    %v2096 = vunpack.c.l.b16 %v1673
    %v2097 = vunpack.c.h.b16 %v1673
    %v2098 = vunpack.c.l.b16 %v1674
    %v2099 = vunpack.c.h.b16 %v1674
    %v2100 = vunpack.c.l.b16 %v1675
    %v2101 = vunpack.c.h.b16 %v1675
    %v2102 = vunpack.c.l.b16 %v1676
    %v2103 = vunpack.c.h.b16 %v1676
    %v2104 = vunpack.c.l.b16 %v1677
    %v2105 = vunpack.c.h.b16 %v1677
    %v2106 = vunpack.c.l.b16 %v1678
    %v2107 = vunpack.c.h.b16 %v1678
    %v2108 = vunpack.c.l.b16 %v1679
    %v2109 = vunpack.c.h.b16 %v1679
    %v2110 = vunpack.c.l.b16 %v1680
    %v2111 = vunpack.c.h.b16 %v1680
    %v2112 = vunpack.c.l.b16 %v1681
    %v2113 = vunpack.c.h.b16 %v1681
    %v2114 = vunpack.c.l.b16 %v1682
    %v2115 = vunpack.c.h.b16 %v1682
    %v2116 = vunpack.c.l.b16 %v1683
    %v2117 = vunpack.c.h.b16 %v1683
    %v2118 = vunpack.c.l.b16 %v1684
    %v2119 = vunpack.c.h.b16 %v1684
    %v2120 = vunpack.c.l.b16 %v1685
    %v2121 = vunpack.c.h.b16 %v1685
    %v2122 = vunpack.c.l.b16 %v1686
    %v2123 = vunpack.c.h.b16 %v1686
    %v2124 = vunpack.c.l.b16 %v1687
    %v2125 = vunpack.c.h.b16 %v1687
    %v2126 = vunpack.c.l.b16 %v1688
    %v2127 = vunpack.c.h.b16 %v1688
    %v2128 = vunpack.c.l.b16 %v1689
    %v2129 = vunpack.c.h.b16 %v1689
    %v2130 = vunpack.c.l.b16 %v1690
    %v2131 = vunpack.c.h.b16 %v1690
    %v2132 = vunpack.c.l.b16 %v1691
    %v2133 = vunpack.c.h.b16 %v1691
    %v2134 = vunpack.c.l.b16 %v1692
    %v2135 = vunpack.c.h.b16 %v1692
    %v2136 = vunpack.c.l.b16 %v1693
    %v2137 = vunpack.c.h.b16 %v1693
    %v2138 = vunpack.c.l.b16 %v1694
    %v2139 = vunpack.c.h.b16 %v1694
    %v2140 = vunpack.c.l.b16 %v1695
    %v2141 = vunpack.c.h.b16 %v1695
    %v2142 = vunpack.c.l.b16 %v1696
    %v2143 = vunpack.c.h.b16 %v1696
    %v2144 = vunpack.c.l.b16 %v1697
    %v2145 = vunpack.c.h.b16 %v1697
    %v2146 = vpack.c.b16 %v1894, %v1890
    %v2147 = vpack.c.b16 %v1895, %v1891
    %v2148 = vpack.c.b16 %v1896, %v1892
    %v2149 = vpack.c.b16 %v1897, %v1893
    %v2150 = vpack.c.b16 %v1902, %v1898
    %v2151 = vpack.c.b16 %v1903, %v1899
    %v2152 = vpack.c.b16 %v1904, %v1900
    %v2153 = vpack.c.b16 %v1905, %v1901
    %v2154 = vpack.c.b16 %v1910, %v1906
    %v2155 = vpack.c.b16 %v1911, %v1907
    %v2156 = vpack.c.b16 %v1912, %v1908
    %v2157 = vpack.c.b16 %v1913, %v1909
    %v2158 = vpack.c.b16 %v1918, %v1914
    %v2159 = vpack.c.b16 %v1919, %v1915
    %v2160 = vpack.c.b16 %v1920, %v1916
    %v2161 = vpack.c.b16 %v1921, %v1917
    %v2162 = vpack.c.b16 %v1926, %v1922
    %v2163 = vpack.c.b16 %v1927, %v1923
    %v2164 = vpack.c.b16 %v1928, %v1924
    %v2165 = vpack.c.b16 %v1929, %v1925
    %v2166 = vpack.c.b16 %v1934, %v1930
    %v2167 = vpack.c.b16 %v1935, %v1931
    %v2168 = vpack.c.b16 %v1936, %v1932
    %v2169 = vpack.c.b16 %v1937, %v1933
    %v2170 = vpack.c.b16 %v1942, %v1938
    %v2171 = vpack.c.b16 %v1943, %v1939
    %v2172 = vpack.c.b16 %v1944, %v1940
    %v2173 = vpack.c.b16 %v1945, %v1941
    %v2174 = vpack.c.b16 %v1950, %v1946
    %v2175 = vpack.c.b16 %v1951, %v1947
    %v2176 = vpack.c.b16 %v1952, %v1948
    %v2177 = vpack.c.b16 %v1953, %v1949
    %v2178 = vpack.c.b16 %v1958, %v1954
    %v2179 = vpack.c.b16 %v1959, %v1955
    %v2180 = vpack.c.b16 %v1960, %v1956
    %v2181 = vpack.c.b16 %v1961, %v1957
    %v2182 = vpack.c.b16 %v1966, %v1962
    %v2183 = vpack.c.b16 %v1967, %v1963
    %v2184 = vpack.c.b16 %v1968, %v1964
    %v2185 = vpack.c.b16 %v1969, %v1965
    %v2186 = vpack.c.b16 %v1974, %v1970
    %v2187 = vpack.c.b16 %v1975, %v1971
    %v2188 = vpack.c.b16 %v1976, %v1972
    %v2189 = vpack.c.b16 %v1977, %v1973
    %v2190 = vpack.c.b16 %v1982, %v1978
    %v2191 = vpack.c.b16 %v1983, %v1979
    %v2192 = vpack.c.b16 %v1984, %v1980
    %v2193 = vpack.c.b16 %v1985, %v1981
    %v2194 = vpack.c.b16 %v1990, %v1986
    %v2195 = vpack.c.b16 %v1991, %v1987
    %v2196 = vpack.c.b16 %v1992, %v1988
    %v2197 = vpack.c.b16 %v1993, %v1989
    %v2198 = vpack.c.b16 %v1998, %v1994
    %v2199 = vpack.c.b16 %v1999, %v1995
    %v2200 = vpack.c.b16 %v2000, %v1996
    %v2201 = vpack.c.b16 %v2001, %v1997
    %v2202 = vpack.c.b16 %v2006, %v2002
    %v2203 = vpack.c.b16 %v2007, %v2003
    %v2204 = vpack.c.b16 %v2008, %v2004
    %v2205 = vpack.c.b16 %v2009, %v2005
    %v2206 = vpack.c.b16 %v2014, %v2010
    %v2207 = vpack.c.b16 %v2015, %v2011
    %v2208 = vpack.c.b16 %v2016, %v2012
    %v2209 = vpack.c.b16 %v2017, %v2013
    %v2210 = vpack.c.b16 %v2022, %v2018
    %v2211 = vpack.c.b16 %v2023, %v2019
    %v2212 = vpack.c.b16 %v2024, %v2020
    %v2213 = vpack.c.b16 %v2025, %v2021
    %v2214 = vpack.c.b16 %v2030, %v2026
    %v2215 = vpack.c.b16 %v2031, %v2027
    %v2216 = vpack.c.b16 %v2032, %v2028
    %v2217 = vpack.c.b16 %v2033, %v2029
    %v2218 = vpack.c.b16 %v2038, %v2034
    %v2219 = vpack.c.b16 %v2039, %v2035
    %v2220 = vpack.c.b16 %v2040, %v2036
    %v2221 = vpack.c.b16 %v2041, %v2037
    %v2222 = vpack.c.b16 %v2046, %v2042
    %v2223 = vpack.c.b16 %v2047, %v2043
    %v2224 = vpack.c.b16 %v2048, %v2044
    %v2225 = vpack.c.b16 %v2049, %v2045
    %v2226 = vpack.c.b16 %v2054, %v2050
    %v2227 = vpack.c.b16 %v2055, %v2051
    %v2228 = vpack.c.b16 %v2056, %v2052
    %v2229 = vpack.c.b16 %v2057, %v2053
    %v2230 = vpack.c.b16 %v2062, %v2058
    %v2231 = vpack.c.b16 %v2063, %v2059
    %v2232 = vpack.c.b16 %v2064, %v2060
    %v2233 = vpack.c.b16 %v2065, %v2061
    %v2234 = vpack.c.b16 %v2070, %v2066
    %v2235 = vpack.c.b16 %v2071, %v2067
    %v2236 = vpack.c.b16 %v2072, %v2068
    %v2237 = vpack.c.b16 %v2073, %v2069
    %v2238 = vpack.c.b16 %v2078, %v2074
    %v2239 = vpack.c.b16 %v2079, %v2075
    %v2240 = vpack.c.b16 %v2080, %v2076
    %v2241 = vpack.c.b16 %v2081, %v2077
    %v2242 = vpack.c.b16 %v2086, %v2082
    %v2243 = vpack.c.b16 %v2087, %v2083
    %v2244 = vpack.c.b16 %v2088, %v2084
    %v2245 = vpack.c.b16 %v2089, %v2085
    %v2246 = vpack.c.b16 %v2094, %v2090
    %v2247 = vpack.c.b16 %v2095, %v2091
    %v2248 = vpack.c.b16 %v2096, %v2092
    %v2249 = vpack.c.b16 %v2097, %v2093
    %v2250 = vpack.c.b16 %v2102, %v2098
    %v2251 = vpack.c.b16 %v2103, %v2099
    %v2252 = vpack.c.b16 %v2104, %v2100
    %v2253 = vpack.c.b16 %v2105, %v2101
    %v2254 = vpack.c.b16 %v2110, %v2106
    %v2255 = vpack.c.b16 %v2111, %v2107
    %v2256 = vpack.c.b16 %v2112, %v2108
    %v2257 = vpack.c.b16 %v2113, %v2109
    %v2258 = vpack.c.b16 %v2118, %v2114
    %v2259 = vpack.c.b16 %v2119, %v2115
    %v2260 = vpack.c.b16 %v2120, %v2116
    %v2261 = vpack.c.b16 %v2121, %v2117
    %v2262 = vpack.c.b16 %v2126, %v2122
    %v2263 = vpack.c.b16 %v2127, %v2123
    %v2264 = vpack.c.b16 %v2128, %v2124
    %v2265 = vpack.c.b16 %v2129, %v2125
    %v2266 = vpack.c.b16 %v2134, %v2130
    %v2267 = vpack.c.b16 %v2135, %v2131
    %v2268 = vpack.c.b16 %v2136, %v2132
    %v2269 = vpack.c.b16 %v2137, %v2133
    %v2270 = vpack.c.b16 %v2142, %v2138
    %v2271 = vpack.c.b16 %v2143, %v2139
    %v2272 = vpack.c.b16 %v2144, %v2140
    %v2273 = vpack.c.b16 %v2145, %v2141
    %2402 = vmatprep.subr.bf16.mxu0 %v2147
    %2403 = vmatpush1.bf16.msra.mxu0 %v2146
    %2404 = vmatprep.subr.bf16.mxu0 %v2151
    %2405 = vmatpush1.bf16.msra.mxu0 %v2150
    %2406 = vmatprep.subr.bf16.mxu0 %v2155
    %2407 = vmatpush1.bf16.msra.mxu0 %v2154
    %2408 = vmatprep.subr.bf16.mxu0 %v2159
    %2409 = vmatpush1.bf16.msra.mxu0 %v2158
    %2410 = vmatprep.subr.bf16.mxu0 %v2163
    %2411 = vmatpush1.bf16.msra.mxu0 %v2162
    %2412 = vmatprep.subr.bf16.mxu0 %v2167
    %2413 = vmatpush1.bf16.msra.mxu0 %v2166
    %2414 = vmatprep.subr.bf16.mxu0 %v2171
    %2415 = vmatpush1.bf16.msra.mxu0 %v2170
    %2416 = vmatprep.subr.bf16.mxu0 %v2175
    %2417 = vmatpush1.bf16.msra.mxu0 %v2174
    %2418 = vmatprep.subr.bf16.mxu0 %v2179
    %2419 = vmatpush1.bf16.msra.mxu0 %v2178
    %2420 = vmatprep.subr.bf16.mxu0 %v2183
    %2421 = vmatpush1.bf16.msra.mxu0 %v2182
    %2422 = vmatprep.subr.bf16.mxu0 %v2187
    %2423 = vmatpush1.bf16.msra.mxu0 %v2186
    %2424 = vmatprep.subr.bf16.mxu0 %v2191
    %2425 = vmatpush1.bf16.msra.mxu0 %v2190
    %2426 = vmatprep.subr.bf16.mxu0 %v2195
    %2427 = vmatpush1.bf16.msra.mxu0 %v2194
    %2428 = vmatprep.subr.bf16.mxu0 %v2199
    %2429 = vmatpush1.bf16.msra.mxu0 %v2198
    %2430 = vmatprep.subr.bf16.mxu0 %v2203
    %2431 = vmatpush1.bf16.msra.mxu0 %v2202
    %2432 = vmatprep.subr.bf16.mxu0 %v2207
    %2433 = vmatpush1.bf16.msra.mxu0 %v2206
    %2434 = vmatprep.mubr.bf16.mxu0 %v1539
    %2435 = vmatmul.mubr.bf16.gmra.mrb[0].mxu0 %v1538
    %v2436 = vpop.f32.mrb[0].mxu0
    %v2437 = vadd.f32 %v1698, %v2436
    %v2438 = vpop.f32.mrb[0].mxu0
    %v2439 = vadd.f32 %v1699, %v2438
    %v2440 = vpop.f32.mrb[0].mxu0
    %v2441 = vadd.f32 %v1702, %v2440
    %v2442 = vpop.f32.mrb[0].mxu0
    %v2443 = vadd.f32 %v1703, %v2442
    %2444 = vmatprep.mubr.bf16.mxu0 %v1543
    %2445 = vmatmul.mubr.bf16.gmra.mrb[0].mxu0 %v1542
    %v2446 = vpop.f32.mrb[0].mxu0
    %v2447 = vadd.f32 %v1706, %v2446
    %v2448 = vpop.f32.mrb[0].mxu0
    %v2449 = vadd.f32 %v1707, %v2448
    %v2450 = vpop.f32.mrb[0].mxu0
    %v2451 = vadd.f32 %v1710, %v2450
    %v2452 = vpop.f32.mrb[0].mxu0
    %v2453 = vadd.f32 %v1711, %v2452
    %2454 = vmatprep.mubr.bf16.mxu0 %v1547
    %2455 = vmatmul.mubr.bf16.gmra.mrb[0].mxu0 %v1546
    %v2456 = vpop.f32.mrb[0].mxu0
    %v2457 = vadd.f32 %v1714, %v2456
    %v2458 = vpop.f32.mrb[0].mxu0
    %v2459 = vadd.f32 %v1715, %v2458
    %v2460 = vpop.f32.mrb[0].mxu0
    %v2461 = vadd.f32 %v1718, %v2460
    %v2462 = vpop.f32.mrb[0].mxu0
    %v2463 = vadd.f32 %v1719, %v2462
    %2464 = vmatprep.mubr.bf16.mxu0 %v1551
    %2465 = vmatmul.mubr.bf16.gmra.mrb[0].mxu0 %v1550
    %v2466 = vpop.f32.mrb[0].mxu0
    %v2467 = vadd.f32 %v1722, %v2466
    %v2468 = vpop.f32.mrb[0].mxu0
    %v2469 = vadd.f32 %v1723, %v2468
    %v2470 = vpop.f32.mrb[0].mxu0
    %v2471 = vadd.f32 %v1726, %v2470
    %v2472 = vpop.f32.mrb[0].mxu0
    %v2473 = vadd.f32 %v1727, %v2472
    %2474 = vmatprep.mubr.bf16.mxu0 %v1555
    %2475 = vmatmul.mubr.bf16.gmra.mrb[0].mxu0 %v1554
    %v2476 = vpop.f32.mrb[0].mxu0
    %v2477 = vadd.f32 %v1730, %v2476
    %v2478 = vpop.f32.mrb[0].mxu0
    %v2479 = vadd.f32 %v1731, %v2478
    %v2480 = vpop.f32.mrb[0].mxu0
    %v2481 = vadd.f32 %v1734, %v2480
    %v2482 = vpop.f32.mrb[0].mxu0
    %v2483 = vadd.f32 %v1735, %v2482
    %2484 = vmatprep.mubr.bf16.mxu0 %v1559
    %2485 = vmatmul.mubr.bf16.gmra.mrb[0].mxu0 %v1558
    %v2486 = vpop.f32.mrb[0].mxu0
    %v2487 = vadd.f32 %v1738, %v2486
    %v2488 = vpop.f32.mrb[0].mxu0
    %v2489 = vadd.f32 %v1739, %v2488
    %v2490 = vpop.f32.mrb[0].mxu0
    %v2491 = vadd.f32 %v1742, %v2490
    %v2492 = vpop.f32.mrb[0].mxu0
    %v2493 = vadd.f32 %v1743, %v2492
    %2494 = vmatprep.mubr.bf16.mxu0 %v1563
    %2495 = vmatmul.mubr.bf16.gmra.mrb[0].mxu0 %v1562
    %v2496 = vpop.f32.mrb[0].mxu0
    %v2497 = vadd.f32 %v1746, %v2496
    %v2498 = vpop.f32.mrb[0].mxu0
    %v2499 = vadd.f32 %v1747, %v2498
    %v2500 = vpop.f32.mrb[0].mxu0
    %v2501 = vadd.f32 %v1750, %v2500
    %v2502 = vpop.f32.mrb[0].mxu0
    %v2503 = vadd.f32 %v1751, %v2502
    %2504 = vmatprep.mubr.bf16.mxu0 %v1567
    %2505 = vmatmul.mubr.bf16.gmra.mrb[0].mxu0 %v1566
    %v2506 = vpop.f32.mrb[0].mxu0
    %v2507 = vadd.f32 %v1754, %v2506
    %v2508 = vpop.f32.mrb[0].mxu0
    %v2509 = vadd.f32 %v1755, %v2508
    %v2510 = vpop.f32.mrb[0].mxu0
    %v2511 = vadd.f32 %v1758, %v2510
    %v2512 = vpop.f32.mrb[0].mxu0
    %v2513 = vadd.f32 %v1759, %v2512
    %2514 = vdwg.mxu0
    %2515 = vmatprep.subr.bf16.mxu0 %v2211
    %2516 = vmatpush1.bf16.msra.mxu0 %v2210
    %2517 = vmatprep.subr.bf16.mxu0 %v2215
    %2518 = vmatpush1.bf16.msra.mxu0 %v2214
    %2519 = vmatprep.subr.bf16.mxu0 %v2219
    %2520 = vmatpush1.bf16.msra.mxu0 %v2218
    %2521 = vmatprep.subr.bf16.mxu0 %v2223
    %2522 = vmatpush1.bf16.msra.mxu0 %v2222
    %2523 = vmatprep.subr.bf16.mxu0 %v2227
    %2524 = vmatpush1.bf16.msra.mxu0 %v2226
    %2525 = vmatprep.subr.bf16.mxu0 %v2231
    %2526 = vmatpush1.bf16.msra.mxu0 %v2230
    %2527 = vmatprep.subr.bf16.mxu0 %v2235
    %2528 = vmatpush1.bf16.msra.mxu0 %v2234
    %2529 = vmatprep.subr.bf16.mxu0 %v2239
    %2530 = vmatpush1.bf16.msra.mxu0 %v2238
    %2531 = vmatprep.subr.bf16.mxu0 %v2243
    %2532 = vmatpush1.bf16.msra.mxu0 %v2242
    %2533 = vmatprep.subr.bf16.mxu0 %v2247
    %2534 = vmatpush1.bf16.msra.mxu0 %v2246
    %2535 = vmatprep.subr.bf16.mxu0 %v2251
    %2536 = vmatpush1.bf16.msra.mxu0 %v2250
    %2537 = vmatprep.subr.bf16.mxu0 %v2255
    %2538 = vmatpush1.bf16.msra.mxu0 %v2254
    %2539 = vmatprep.subr.bf16.mxu0 %v2259
    %2540 = vmatpush1.bf16.msra.mxu0 %v2258
    %2541 = vmatprep.subr.bf16.mxu0 %v2263
    %2542 = vmatpush1.bf16.msra.mxu0 %v2262
    %2543 = vmatprep.subr.bf16.mxu0 %v2267
    %2544 = vmatpush1.bf16.msra.mxu0 %v2266
    %2545 = vmatprep.subr.bf16.mxu0 %v2271
    %2546 = vmatpush1.bf16.msra.mxu0 %v2270
    %2547 = vmatprep.mubr.bf16.mxu0 %v1541
    %2548 = vmatmul.mubr.bf16.gmra.mrb[0].mxu0 %v1540
    %v2549 = vpop.f32.mrb[0].mxu0
    %v2550 = vadd.f32 %v2437, %v2549
    %v2551 = vpop.f32.mrb[0].mxu0
    %v2552 = vadd.f32 %v2439, %v2551
    %v2553 = vpop.f32.mrb[0].mxu0
    %v2554 = vadd.f32 %v2441, %v2553
    %v2555 = vpop.f32.mrb[0].mxu0
    %v2556 = vadd.f32 %v2443, %v2555
    %2557 = vmatprep.mubr.bf16.mxu0 %v1545
    %2558 = vmatmul.mubr.bf16.gmra.mrb[0].mxu0 %v1544
    %v2559 = vpop.f32.mrb[0].mxu0
    %v2560 = vadd.f32 %v2447, %v2559
    %v2561 = vpop.f32.mrb[0].mxu0
    %v2562 = vadd.f32 %v2449, %v2561
    %v2563 = vpop.f32.mrb[0].mxu0
    %v2564 = vadd.f32 %v2451, %v2563
    %v2565 = vpop.f32.mrb[0].mxu0
    %v2566 = vadd.f32 %v2453, %v2565
    %2567 = vmatprep.mubr.bf16.mxu0 %v1549
    %2568 = vmatmul.mubr.bf16.gmra.mrb[0].mxu0 %v1548
    %v2569 = vpop.f32.mrb[0].mxu0
    %v2570 = vadd.f32 %v2457, %v2569
    %v2571 = vpop.f32.mrb[0].mxu0
    %v2572 = vadd.f32 %v2459, %v2571
    %v2573 = vpop.f32.mrb[0].mxu0
    %v2574 = vadd.f32 %v2461, %v2573
    %v2575 = vpop.f32.mrb[0].mxu0
    %v2576 = vadd.f32 %v2463, %v2575
    %2577 = vmatprep.mubr.bf16.mxu0 %v1553
    %2578 = vmatmul.mubr.bf16.gmra.mrb[0].mxu0 %v1552
    %v2579 = vpop.f32.mrb[0].mxu0
    %v2580 = vadd.f32 %v2467, %v2579
    %v2581 = vpop.f32.mrb[0].mxu0
    %v2582 = vadd.f32 %v2469, %v2581
    %v2583 = vpop.f32.mrb[0].mxu0
    %v2584 = vadd.f32 %v2471, %v2583
    %v2585 = vpop.f32.mrb[0].mxu0
    %v2586 = vadd.f32 %v2473, %v2585
    %2587 = vmatprep.mubr.bf16.mxu0 %v1557
    %2588 = vmatmul.mubr.bf16.gmra.mrb[0].mxu0 %v1556
    %v2589 = vpop.f32.mrb[0].mxu0
    %v2590 = vadd.f32 %v2477, %v2589
    %v2591 = vpop.f32.mrb[0].mxu0
    %v2592 = vadd.f32 %v2479, %v2591
    %v2593 = vpop.f32.mrb[0].mxu0
    %v2594 = vadd.f32 %v2481, %v2593
    %v2595 = vpop.f32.mrb[0].mxu0
    %v2596 = vadd.f32 %v2483, %v2595
    %2597 = vmatprep.mubr.bf16.mxu0 %v1561
    %2598 = vmatmul.mubr.bf16.gmra.mrb[0].mxu0 %v1560
    %v2599 = vpop.f32.mrb[0].mxu0
    %v2600 = vadd.f32 %v2487, %v2599
    %v2601 = vpop.f32.mrb[0].mxu0
    %v2602 = vadd.f32 %v2489, %v2601
    %v2603 = vpop.f32.mrb[0].mxu0
    %v2604 = vadd.f32 %v2491, %v2603
    %v2605 = vpop.f32.mrb[0].mxu0
    %v2606 = vadd.f32 %v2493, %v2605
    %2607 = vmatprep.mubr.bf16.mxu0 %v1565
    %2608 = vmatmul.mubr.bf16.gmra.mrb[0].mxu0 %v1564
    %v2609 = vpop.f32.mrb[0].mxu0
    %v2610 = vadd.f32 %v2497, %v2609
    %v2611 = vpop.f32.mrb[0].mxu0
    %v2612 = vadd.f32 %v2499, %v2611
    %v2613 = vpop.f32.mrb[0].mxu0
    %v2614 = vadd.f32 %v2501, %v2613
    %v2615 = vpop.f32.mrb[0].mxu0
    %v2616 = vadd.f32 %v2503, %v2615
    %2617 = vmatprep.mubr.bf16.mxu0 %v1569
    %2618 = vmatmul.mubr.bf16.gmra.mrb[0].mxu0 %v1568
    %v2619 = vpop.f32.mrb[0].mxu0
    %v2620 = vadd.f32 %v2507, %v2619
    %v2621 = vpop.f32.mrb[0].mxu0
    %v2622 = vadd.f32 %v2509, %v2621
    %v2623 = vpop.f32.mrb[0].mxu0
    %v2624 = vadd.f32 %v2511, %v2623
    %v2625 = vpop.f32.mrb[0].mxu0
    %v2626 = vadd.f32 %v2513, %v2625
    %2627 = vdwg.mxu0
    %2628 = vmatprep.subr.bf16.mxu0 %v2149
    %2629 = vmatpush1.bf16.msra.mxu0 %v2148
    %2630 = vmatprep.subr.bf16.mxu0 %v2153
    %2631 = vmatpush1.bf16.msra.mxu0 %v2152
    %2632 = vmatprep.subr.bf16.mxu0 %v2157
    %2633 = vmatpush1.bf16.msra.mxu0 %v2156
    %2634 = vmatprep.subr.bf16.mxu0 %v2161
    %2635 = vmatpush1.bf16.msra.mxu0 %v2160
    %2636 = vmatprep.subr.bf16.mxu0 %v2165
    %2637 = vmatpush1.bf16.msra.mxu0 %v2164
    %2638 = vmatprep.subr.bf16.mxu0 %v2169
    %2639 = vmatpush1.bf16.msra.mxu0 %v2168
    %2640 = vmatprep.subr.bf16.mxu0 %v2173
    %2641 = vmatpush1.bf16.msra.mxu0 %v2172
    %2642 = vmatprep.subr.bf16.mxu0 %v2177
    %2643 = vmatpush1.bf16.msra.mxu0 %v2176
    %2644 = vmatprep.subr.bf16.mxu0 %v2181
    %2645 = vmatpush1.bf16.msra.mxu0 %v2180
    %2646 = vmatprep.subr.bf16.mxu0 %v2185
    %2647 = vmatpush1.bf16.msra.mxu0 %v2184
    %2648 = vmatprep.subr.bf16.mxu0 %v2189
    %2649 = vmatpush1.bf16.msra.mxu0 %v2188
    %2650 = vmatprep.subr.bf16.mxu0 %v2193
    %2651 = vmatpush1.bf16.msra.mxu0 %v2192
    %2652 = vmatprep.subr.bf16.mxu0 %v2197
    %2653 = vmatpush1.bf16.msra.mxu0 %v2196
    %2654 = vmatprep.subr.bf16.mxu0 %v2201
    %2655 = vmatpush1.bf16.msra.mxu0 %v2200
    %2656 = vmatprep.subr.bf16.mxu0 %v2205
    %2657 = vmatpush1.bf16.msra.mxu0 %v2204
    %2658 = vmatprep.subr.bf16.mxu0 %v2209
    %2659 = vmatpush1.bf16.msra.mxu0 %v2208
    %2660 = vmatprep.mubr.bf16.mxu0 %v1539
    %2661 = vmatmul.mubr.bf16.gmra.mrb[0].mxu0 %v1538
    %v2662 = vpop.f32.mrb[0].mxu0
    %v2663 = vadd.f32 %v1700, %v2662
    %v2664 = vpop.f32.mrb[0].mxu0
    %v2665 = vadd.f32 %v1701, %v2664
    %v2666 = vpop.f32.mrb[0].mxu0
    %v2667 = vadd.f32 %v1704, %v2666
    %v2668 = vpop.f32.mrb[0].mxu0
    %v2669 = vadd.f32 %v1705, %v2668
    %2670 = vmatprep.mubr.bf16.mxu0 %v1543
    %2671 = vmatmul.mubr.bf16.gmra.mrb[0].mxu0 %v1542
    %v2672 = vpop.f32.mrb[0].mxu0
    %v2673 = vadd.f32 %v1708, %v2672
    %v2674 = vpop.f32.mrb[0].mxu0
    %v2675 = vadd.f32 %v1709, %v2674
    %v2676 = vpop.f32.mrb[0].mxu0
    %v2677 = vadd.f32 %v1712, %v2676
    %v2678 = vpop.f32.mrb[0].mxu0
    %v2679 = vadd.f32 %v1713, %v2678
    %2680 = vmatprep.mubr.bf16.mxu0 %v1547
    %2681 = vmatmul.mubr.bf16.gmra.mrb[0].mxu0 %v1546
    %v2682 = vpop.f32.mrb[0].mxu0
    %v2683 = vadd.f32 %v1716, %v2682
    %v2684 = vpop.f32.mrb[0].mxu0
    %v2685 = vadd.f32 %v1717, %v2684
    %v2686 = vpop.f32.mrb[0].mxu0
    %v2687 = vadd.f32 %v1720, %v2686
    %v2688 = vpop.f32.mrb[0].mxu0
    %v2689 = vadd.f32 %v1721, %v2688
    %2690 = vmatprep.mubr.bf16.mxu0 %v1551
    %2691 = vmatmul.mubr.bf16.gmra.mrb[0].mxu0 %v1550
    %v2692 = vpop.f32.mrb[0].mxu0
    %v2693 = vadd.f32 %v1724, %v2692
    %v2694 = vpop.f32.mrb[0].mxu0
    %v2695 = vadd.f32 %v1725, %v2694
    %v2696 = vpop.f32.mrb[0].mxu0
    %v2697 = vadd.f32 %v1728, %v2696
    %v2698 = vpop.f32.mrb[0].mxu0
    %v2699 = vadd.f32 %v1729, %v2698
    %2700 = vmatprep.mubr.bf16.mxu0 %v1555
    %2701 = vmatmul.mubr.bf16.gmra.mrb[0].mxu0 %v1554
    %v2702 = vpop.f32.mrb[0].mxu0
    %v2703 = vadd.f32 %v1732, %v2702
    %v2704 = vpop.f32.mrb[0].mxu0
    %v2705 = vadd.f32 %v1733, %v2704
    %v2706 = vpop.f32.mrb[0].mxu0
    %v2707 = vadd.f32 %v1736, %v2706
    %v2708 = vpop.f32.mrb[0].mxu0
    %v2709 = vadd.f32 %v1737, %v2708
    %2710 = vmatprep.mubr.bf16.mxu0 %v1559
    %2711 = vmatmul.mubr.bf16.gmra.mrb[0].mxu0 %v1558
    %v2712 = vpop.f32.mrb[0].mxu0
    %v2713 = vadd.f32 %v1740, %v2712
    %v2714 = vpop.f32.mrb[0].mxu0
    %v2715 = vadd.f32 %v1741, %v2714
    %v2716 = vpop.f32.mrb[0].mxu0
    %v2717 = vadd.f32 %v1744, %v2716
    %v2718 = vpop.f32.mrb[0].mxu0
    %v2719 = vadd.f32 %v1745, %v2718
    %2720 = vmatprep.mubr.bf16.mxu0 %v1563
    %2721 = vmatmul.mubr.bf16.gmra.mrb[0].mxu0 %v1562
    %v2722 = vpop.f32.mrb[0].mxu0
    %v2723 = vadd.f32 %v1748, %v2722
    %v2724 = vpop.f32.mrb[0].mxu0
    %v2725 = vadd.f32 %v1749, %v2724
    %v2726 = vpop.f32.mrb[0].mxu0
    %v2727 = vadd.f32 %v1752, %v2726
    %v2728 = vpop.f32.mrb[0].mxu0
    %v2729 = vadd.f32 %v1753, %v2728
    %2730 = vmatprep.mubr.bf16.mxu0 %v1567
    %2731 = vmatmul.mubr.bf16.gmra.mrb[0].mxu0 %v1566
    %v2732 = vpop.f32.mrb[0].mxu0
    %v2733 = vadd.f32 %v1756, %v2732
    %v2734 = vpop.f32.mrb[0].mxu0
    %v2735 = vadd.f32 %v1757, %v2734
    %v2736 = vpop.f32.mrb[0].mxu0
    %v2737 = vadd.f32 %v1760, %v2736
    %v2738 = vpop.f32.mrb[0].mxu0
    %v2739 = vadd.f32 %v1761, %v2738
    %2740 = vdwg.mxu0
    %2741 = vmatprep.subr.bf16.mxu0 %v2213
    %2742 = vmatpush1.bf16.msra.mxu0 %v2212
    %2743 = vmatprep.subr.bf16.mxu0 %v2217
    %2744 = vmatpush1.bf16.msra.mxu0 %v2216
    %2745 = vmatprep.subr.bf16.mxu0 %v2221
    %2746 = vmatpush1.bf16.msra.mxu0 %v2220
    %2747 = vmatprep.subr.bf16.mxu0 %v2225
    %2748 = vmatpush1.bf16.msra.mxu0 %v2224
    %2749 = vmatprep.subr.bf16.mxu0 %v2229
    %2750 = vmatpush1.bf16.msra.mxu0 %v2228
    %2751 = vmatprep.subr.bf16.mxu0 %v2233
    %2752 = vmatpush1.bf16.msra.mxu0 %v2232
    %2753 = vmatprep.subr.bf16.mxu0 %v2237
    %2754 = vmatpush1.bf16.msra.mxu0 %v2236
    %2755 = vmatprep.subr.bf16.mxu0 %v2241
    %2756 = vmatpush1.bf16.msra.mxu0 %v2240
    %2757 = vmatprep.subr.bf16.mxu0 %v2245
    %2758 = vmatpush1.bf16.msra.mxu0 %v2244
    %2759 = vmatprep.subr.bf16.mxu0 %v2249
    %2760 = vmatpush1.bf16.msra.mxu0 %v2248
    %2761 = vmatprep.subr.bf16.mxu0 %v2253
    %2762 = vmatpush1.bf16.msra.mxu0 %v2252
    %2763 = vmatprep.subr.bf16.mxu0 %v2257
    %2764 = vmatpush1.bf16.msra.mxu0 %v2256
    %2765 = vmatprep.subr.bf16.mxu0 %v2261
    %2766 = vmatpush1.bf16.msra.mxu0 %v2260
    %2767 = vmatprep.subr.bf16.mxu0 %v2265
    %2768 = vmatpush1.bf16.msra.mxu0 %v2264
    %2769 = vmatprep.subr.bf16.mxu0 %v2269
    %2770 = vmatpush1.bf16.msra.mxu0 %v2268
    %2771 = vmatprep.subr.bf16.mxu0 %v2273
    %2772 = vmatpush1.bf16.msra.mxu0 %v2272
    %2773 = vmatprep.mubr.bf16.mxu0 %v1541
    %2774 = vmatmul.mubr.bf16.gmra.mrb[0].mxu0 %v1540
    %v2775 = vpop.f32.mrb[0].mxu0
    %v2776 = vadd.f32 %v2663, %v2775
    %v2777 = vpop.f32.mrb[0].mxu0
    %v2778 = vadd.f32 %v2665, %v2777
    %v2779 = vpop.f32.mrb[0].mxu0
    %v2780 = vadd.f32 %v2667, %v2779
    %v2781 = vpop.f32.mrb[0].mxu0
    %v2782 = vadd.f32 %v2669, %v2781
    %2783 = vmatprep.mubr.bf16.mxu0 %v1545
    %2784 = vmatmul.mubr.bf16.gmra.mrb[0].mxu0 %v1544
    %v2785 = vpop.f32.mrb[0].mxu0
    %v2786 = vadd.f32 %v2673, %v2785
    %v2787 = vpop.f32.mrb[0].mxu0
    %v2788 = vadd.f32 %v2675, %v2787
    %v2789 = vpop.f32.mrb[0].mxu0
    %v2790 = vadd.f32 %v2677, %v2789
    %v2791 = vpop.f32.mrb[0].mxu0
    %v2792 = vadd.f32 %v2679, %v2791
    %2793 = vmatprep.mubr.bf16.mxu0 %v1549
    %2794 = vmatmul.mubr.bf16.gmra.mrb[0].mxu0 %v1548
    %v2795 = vpop.f32.mrb[0].mxu0
    %v2796 = vadd.f32 %v2683, %v2795
    %v2797 = vpop.f32.mrb[0].mxu0
    %v2798 = vadd.f32 %v2685, %v2797
    %v2799 = vpop.f32.mrb[0].mxu0
    %v2800 = vadd.f32 %v2687, %v2799
    %v2801 = vpop.f32.mrb[0].mxu0
    %v2802 = vadd.f32 %v2689, %v2801
    %2803 = vmatprep.mubr.bf16.mxu0 %v1553
    %2804 = vmatmul.mubr.bf16.gmra.mrb[0].mxu0 %v1552
    %v2805 = vpop.f32.mrb[0].mxu0
    %v2806 = vadd.f32 %v2693, %v2805
    %v2807 = vpop.f32.mrb[0].mxu0
    %v2808 = vadd.f32 %v2695, %v2807
    %v2809 = vpop.f32.mrb[0].mxu0
    %v2810 = vadd.f32 %v2697, %v2809
    %v2811 = vpop.f32.mrb[0].mxu0
    %v2812 = vadd.f32 %v2699, %v2811
    %2813 = vmatprep.mubr.bf16.mxu0 %v1557
    %2814 = vmatmul.mubr.bf16.gmra.mrb[0].mxu0 %v1556
    %v2815 = vpop.f32.mrb[0].mxu0
    %v2816 = vadd.f32 %v2703, %v2815
    %v2817 = vpop.f32.mrb[0].mxu0
    %v2818 = vadd.f32 %v2705, %v2817
    %v2819 = vpop.f32.mrb[0].mxu0
    %v2820 = vadd.f32 %v2707, %v2819
    %v2821 = vpop.f32.mrb[0].mxu0
    %v2822 = vadd.f32 %v2709, %v2821
    %2823 = vmatprep.mubr.bf16.mxu0 %v1561
    %2824 = vmatmul.mubr.bf16.gmra.mrb[0].mxu0 %v1560
    %v2825 = vpop.f32.mrb[0].mxu0
    %v2826 = vadd.f32 %v2713, %v2825
    %v2827 = vpop.f32.mrb[0].mxu0
    %v2828 = vadd.f32 %v2715, %v2827
    %v2829 = vpop.f32.mrb[0].mxu0
    %v2830 = vadd.f32 %v2717, %v2829
    %v2831 = vpop.f32.mrb[0].mxu0
    %v2832 = vadd.f32 %v2719, %v2831
    %2833 = vmatprep.mubr.bf16.mxu0 %v1565
    %2834 = vmatmul.mubr.bf16.gmra.mrb[0].mxu0 %v1564
    %v2835 = vpop.f32.mrb[0].mxu0
    %v2836 = vadd.f32 %v2723, %v2835
    %v2837 = vpop.f32.mrb[0].mxu0
    %v2838 = vadd.f32 %v2725, %v2837
    %v2839 = vpop.f32.mrb[0].mxu0
    %v2840 = vadd.f32 %v2727, %v2839
    %v2841 = vpop.f32.mrb[0].mxu0
    %v2842 = vadd.f32 %v2729, %v2841
    %2843 = vmatprep.mubr.bf16.mxu0 %v1569
    %2844 = vmatmul.mubr.bf16.gmra.mrb[0].mxu0 %v1568
    %v2845 = vpop.f32.mrb[0].mxu0
    %v2846 = vadd.f32 %v2733, %v2845
    %v2847 = vpop.f32.mrb[0].mxu0
    %v2848 = vadd.f32 %v2735, %v2847
    %v2849 = vpop.f32.mrb[0].mxu0
    %v2850 = vadd.f32 %v2737, %v2849
    %v2851 = vpop.f32.mrb[0].mxu0
    %v2852 = vadd.f32 %v2739, %v2851
    %2853 = vdwg.mxu0
    %v2854 = vadd.f32 %v2550, %v2552
    %v2855 = vadd.f32 %v2854, %v2776
    %v2856 = vadd.f32 %v2855, %v2778
    %2857 = vadd.xlane.f32.xlu0 %v2856
    %v2858 = vpop.xlane.xlu0 %2857
    %v2859 = vadd.f32 %v2554, %v2556
    %v2860 = vadd.f32 %v2859, %v2780
    %v2861 = vadd.f32 %v2860, %v2782
    %2862 = vadd.xlane.f32.xlu0 %v2861
    %v2863 = vpop.xlane.xlu0 %2862
    %v2864 = vadd.f32 %v2560, %v2562
    %v2865 = vadd.f32 %v2864, %v2786
    %v2866 = vadd.f32 %v2865, %v2788
    %2867 = vadd.xlane.f32.xlu0 %v2866
    %v2868 = vpop.xlane.xlu0 %2867
    %v2869 = vadd.f32 %v2564, %v2566
    %v2870 = vadd.f32 %v2869, %v2790
    %v2871 = vadd.f32 %v2870, %v2792
    %2872 = vadd.xlane.f32.xlu0 %v2871
    %v2873 = vpop.xlane.xlu0 %2872
    %v2874 = vadd.f32 %v2570, %v2572
    %v2875 = vadd.f32 %v2874, %v2796
    %v2876 = vadd.f32 %v2875, %v2798
    %2877 = vadd.xlane.f32.xlu0 %v2876
    %v2878 = vpop.xlane.xlu0 %2877
    %v2879 = vadd.f32 %v2574, %v2576
    %v2880 = vadd.f32 %v2879, %v2800
    %v2881 = vadd.f32 %v2880, %v2802
    %2882 = vadd.xlane.f32.xlu0 %v2881
    %v2883 = vpop.xlane.xlu0 %2882
    %v2884 = vadd.f32 %v2580, %v2582
    %v2885 = vadd.f32 %v2884, %v2806
    %v2886 = vadd.f32 %v2885, %v2808
    %2887 = vadd.xlane.f32.xlu0 %v2886
    %v2888 = vpop.xlane.xlu0 %2887
    %v2889 = vadd.f32 %v2584, %v2586
    %v2890 = vadd.f32 %v2889, %v2810
    %v2891 = vadd.f32 %v2890, %v2812
    %2892 = vadd.xlane.f32.xlu0 %v2891
    %v2893 = vpop.xlane.xlu0 %2892
    %v2894 = vadd.f32 %v2590, %v2592
    %v2895 = vadd.f32 %v2894, %v2816
    %v2896 = vadd.f32 %v2895, %v2818
    %2897 = vadd.xlane.f32.xlu0 %v2896
    %v2898 = vpop.xlane.xlu0 %2897
    %v2899 = vadd.f32 %v2594, %v2596
    %v2900 = vadd.f32 %v2899, %v2820
    %v2901 = vadd.f32 %v2900, %v2822
    %2902 = vadd.xlane.f32.xlu0 %v2901
    %v2903 = vpop.xlane.xlu0 %2902
    %v2904 = vadd.f32 %v2600, %v2602
    %v2905 = vadd.f32 %v2904, %v2826
    %v2906 = vadd.f32 %v2905, %v2828
    %2907 = vadd.xlane.f32.xlu0 %v2906
    %v2908 = vpop.xlane.xlu0 %2907
    %v2909 = vadd.f32 %v2604, %v2606
    %v2910 = vadd.f32 %v2909, %v2830
    %v2911 = vadd.f32 %v2910, %v2832
    %2912 = vadd.xlane.f32.xlu0 %v2911
    %v2913 = vpop.xlane.xlu0 %2912
    %v2914 = vadd.f32 %v2610, %v2612
    %v2915 = vadd.f32 %v2914, %v2836
    %v2916 = vadd.f32 %v2915, %v2838
    %2917 = vadd.xlane.f32.xlu0 %v2916
    %v2918 = vpop.xlane.xlu0 %2917
    %v2919 = vadd.f32 %v2614, %v2616
    %v2920 = vadd.f32 %v2919, %v2840
    %v2921 = vadd.f32 %v2920, %v2842
    %2922 = vadd.xlane.f32.xlu0 %v2921
    %v2923 = vpop.xlane.xlu0 %2922
    %v2924 = vadd.f32 %v2620, %v2622
    %v2925 = vadd.f32 %v2924, %v2846
    %v2926 = vadd.f32 %v2925, %v2848
    %2927 = vadd.xlane.f32.xlu0 %v2926
    %v2928 = vpop.xlane.xlu0 %2927
    %v2929 = vadd.f32 %v2624, %v2626
    %v2930 = vadd.f32 %v2929, %v2850
    %v2931 = vadd.f32 %v2930, %v2852
    %2932 = vadd.xlane.f32.xlu0 %v2931
    %v2933 = vpop.xlane.xlu0 %2932
    %v2934 = vmul.f32 %v2858, 0.015625
    %v2935 = vmul.f32 %v2863, 0.015625
    %v2936 = vmul.f32 %v2868, 0.015625
    %v2937 = vmul.f32 %v2873, 0.015625
    %v2938 = vmul.f32 %v2878, 0.015625
    %v2939 = vmul.f32 %v2883, 0.015625
    %v2940 = vmul.f32 %v2888, 0.015625
    %v2941 = vmul.f32 %v2893, 0.015625
    %v2942 = vmul.f32 %v2898, 0.015625
    %v2943 = vmul.f32 %v2903, 0.015625
    %v2944 = vmul.f32 %v2908, 0.015625
    %v2945 = vmul.f32 %v2913, 0.015625
    %v2946 = vmul.f32 %v2918, 0.015625
    %v2947 = vmul.f32 %v2923, 0.015625
    %v2948 = vmul.f32 %v2928, 0.015625
    %v2949 = vmul.f32 %v2933, 0.015625
    %v2950 = vmul.f32 %v2550, %v2550
    %v2951 = vmul.f32 %v2552, %v2552
    %v2952 = vmul.f32 %v2776, %v2776
    %v2953 = vmul.f32 %v2778, %v2778
    %v2954 = vmul.f32 %v2554, %v2554
    %v2955 = vmul.f32 %v2556, %v2556
    %v2956 = vmul.f32 %v2780, %v2780
    %v2957 = vmul.f32 %v2782, %v2782
    %v2958 = vmul.f32 %v2560, %v2560
    %v2959 = vmul.f32 %v2562, %v2562
    %v2960 = vmul.f32 %v2786, %v2786
    %v2961 = vmul.f32 %v2788, %v2788
    %v2962 = vmul.f32 %v2564, %v2564
    %v2963 = vmul.f32 %v2566, %v2566
    %v2964 = vmul.f32 %v2790, %v2790
    %v2965 = vmul.f32 %v2792, %v2792
    %v2966 = vmul.f32 %v2570, %v2570
    %v2967 = vmul.f32 %v2572, %v2572
    %v2968 = vmul.f32 %v2796, %v2796
    %v2969 = vmul.f32 %v2798, %v2798
    %v2970 = vmul.f32 %v2574, %v2574
    %v2971 = vmul.f32 %v2576, %v2576
    %v2972 = vmul.f32 %v2800, %v2800
    %v2973 = vmul.f32 %v2802, %v2802
    %v2974 = vmul.f32 %v2580, %v2580
    %v2975 = vmul.f32 %v2582, %v2582
    %v2976 = vmul.f32 %v2806, %v2806
    %v2977 = vmul.f32 %v2808, %v2808
    %v2978 = vmul.f32 %v2584, %v2584
    %v2979 = vmul.f32 %v2586, %v2586
    %v2980 = vmul.f32 %v2810, %v2810
    %v2981 = vmul.f32 %v2812, %v2812
    %v2982 = vmul.f32 %v2590, %v2590
    %v2983 = vmul.f32 %v2592, %v2592
    %v2984 = vmul.f32 %v2816, %v2816
    %v2985 = vmul.f32 %v2818, %v2818
    %v2986 = vmul.f32 %v2594, %v2594
    %v2987 = vmul.f32 %v2596, %v2596
    %v2988 = vmul.f32 %v2820, %v2820
    %v2989 = vmul.f32 %v2822, %v2822
    %v2990 = vmul.f32 %v2600, %v2600
    %v2991 = vmul.f32 %v2602, %v2602
    %v2992 = vmul.f32 %v2826, %v2826
    %v2993 = vmul.f32 %v2828, %v2828
    %v2994 = vmul.f32 %v2604, %v2604
    %v2995 = vmul.f32 %v2606, %v2606
    %v2996 = vmul.f32 %v2830, %v2830
    %v2997 = vmul.f32 %v2832, %v2832
    %v2998 = vmul.f32 %v2610, %v2610
    %v2999 = vmul.f32 %v2612, %v2612
    %v3000 = vmul.f32 %v2836, %v2836
    %v3001 = vmul.f32 %v2838, %v2838
    %v3002 = vmul.f32 %v2614, %v2614
    %v3003 = vmul.f32 %v2616, %v2616
    %v3004 = vmul.f32 %v2840, %v2840
    %v3005 = vmul.f32 %v2842, %v2842
    %v3006 = vmul.f32 %v2620, %v2620
    %v3007 = vmul.f32 %v2622, %v2622
    %v3008 = vmul.f32 %v2846, %v2846
    %v3009 = vmul.f32 %v2848, %v2848
    %v3010 = vmul.f32 %v2624, %v2624
    %v3011 = vmul.f32 %v2626, %v2626
    %v3012 = vmul.f32 %v2850, %v2850
    %v3013 = vmul.f32 %v2852, %v2852
    %v3014 = vadd.f32 %v2950, %v2951
    %v3015 = vadd.f32 %v3014, %v2952
    %v3016 = vadd.f32 %v3015, %v2953
    %3017 = vadd.xlane.f32.xlu0 %v3016
    %v3018 = vpop.xlane.xlu0 %3017
    %v3019 = vadd.f32 %v2954, %v2955
    %v3020 = vadd.f32 %v3019, %v2956
    %v3021 = vadd.f32 %v3020, %v2957
    %3022 = vadd.xlane.f32.xlu0 %v3021
    %v3023 = vpop.xlane.xlu0 %3022
    %v3024 = vadd.f32 %v2958, %v2959
    %v3025 = vadd.f32 %v3024, %v2960
    %v3026 = vadd.f32 %v3025, %v2961
    %3027 = vadd.xlane.f32.xlu0 %v3026
    %v3028 = vpop.xlane.xlu0 %3027
    %v3029 = vadd.f32 %v2962, %v2963
    %v3030 = vadd.f32 %v3029, %v2964
    %v3031 = vadd.f32 %v3030, %v2965
    %3032 = vadd.xlane.f32.xlu0 %v3031
    %v3033 = vpop.xlane.xlu0 %3032
    %v3034 = vadd.f32 %v2966, %v2967
    %v3035 = vadd.f32 %v3034, %v2968
    %v3036 = vadd.f32 %v3035, %v2969
    %3037 = vadd.xlane.f32.xlu0 %v3036
    %v3038 = vpop.xlane.xlu0 %3037
    %v3039 = vadd.f32 %v2970, %v2971
    %v3040 = vadd.f32 %v3039, %v2972
    %v3041 = vadd.f32 %v3040, %v2973
    %3042 = vadd.xlane.f32.xlu0 %v3041
    %v3043 = vpop.xlane.xlu0 %3042
    %v3044 = vadd.f32 %v2974, %v2975
    %v3045 = vadd.f32 %v3044, %v2976
    %v3046 = vadd.f32 %v3045, %v2977
    %3047 = vadd.xlane.f32.xlu0 %v3046
    %v3048 = vpop.xlane.xlu0 %3047
    %v3049 = vadd.f32 %v2978, %v2979
    %v3050 = vadd.f32 %v3049, %v2980
    %v3051 = vadd.f32 %v3050, %v2981
    %3052 = vadd.xlane.f32.xlu0 %v3051
    %v3053 = vpop.xlane.xlu0 %3052
    %v3054 = vadd.f32 %v2982, %v2983
    %v3055 = vadd.f32 %v3054, %v2984
    %v3056 = vadd.f32 %v3055, %v2985
    %3057 = vadd.xlane.f32.xlu0 %v3056
    %v3058 = vpop.xlane.xlu0 %3057
    %v3059 = vadd.f32 %v2986, %v2987
    %v3060 = vadd.f32 %v3059, %v2988
    %v3061 = vadd.f32 %v3060, %v2989
    %3062 = vadd.xlane.f32.xlu0 %v3061
    %v3063 = vpop.xlane.xlu0 %3062
    %v3064 = vadd.f32 %v2990, %v2991
    %v3065 = vadd.f32 %v3064, %v2992
    %v3066 = vadd.f32 %v3065, %v2993
    %3067 = vadd.xlane.f32.xlu0 %v3066
    %v3068 = vpop.xlane.xlu0 %3067
    %v3069 = vadd.f32 %v2994, %v2995
    %v3070 = vadd.f32 %v3069, %v2996
    %v3071 = vadd.f32 %v3070, %v2997
    %3072 = vadd.xlane.f32.xlu0 %v3071
    %v3073 = vpop.xlane.xlu0 %3072
    %v3074 = vadd.f32 %v2998, %v2999
    %v3075 = vadd.f32 %v3074, %v3000
    %v3076 = vadd.f32 %v3075, %v3001
    %3077 = vadd.xlane.f32.xlu0 %v3076
    %v3078 = vpop.xlane.xlu0 %3077
    %v3079 = vadd.f32 %v3002, %v3003
    %v3080 = vadd.f32 %v3079, %v3004
    %v3081 = vadd.f32 %v3080, %v3005
    %3082 = vadd.xlane.f32.xlu0 %v3081
    %v3083 = vpop.xlane.xlu0 %3082
    %v3084 = vadd.f32 %v3006, %v3007
    %v3085 = vadd.f32 %v3084, %v3008
    %v3086 = vadd.f32 %v3085, %v3009
    %3087 = vadd.xlane.f32.xlu0 %v3086
    %v3088 = vpop.xlane.xlu0 %3087
    %v3089 = vadd.f32 %v3010, %v3011
    %v3090 = vadd.f32 %v3089, %v3012
    %v3091 = vadd.f32 %v3090, %v3013
    %3092 = vadd.xlane.f32.xlu0 %v3091
    %v3093 = vpop.xlane.xlu0 %3092
    %v3094 = vmul.f32 %v3018, 0.015625
    %v3095 = vmul.f32 %v3023, 0.015625
    %v3096 = vmul.f32 %v3028, 0.015625
    %v3097 = vmul.f32 %v3033, 0.015625
    %v3098 = vmul.f32 %v3038, 0.015625
    %v3099 = vmul.f32 %v3043, 0.015625
    %v3100 = vmul.f32 %v3048, 0.015625
    %v3101 = vmul.f32 %v3053, 0.015625
    %v3102 = vmul.f32 %v3058, 0.015625
    %v3103 = vmul.f32 %v3063, 0.015625
    %v3104 = vmul.f32 %v3068, 0.015625
    %v3105 = vmul.f32 %v3073, 0.015625
    %v3106 = vmul.f32 %v3078, 0.015625
    %v3107 = vmul.f32 %v3083, 0.015625
    %v3108 = vmul.f32 %v3088, 0.015625
    %v3109 = vmul.f32 %v3093, 0.015625
    %v3110 = vmul.f32 %v2934, %v2934
    %v3111 = vmul.f32 %v2935, %v2935
    %v3112 = vmul.f32 %v2936, %v2936
    %v3113 = vmul.f32 %v2937, %v2937
    %v3114 = vmul.f32 %v2938, %v2938
    %v3115 = vmul.f32 %v2939, %v2939
    %v3116 = vmul.f32 %v2940, %v2940
    %v3117 = vmul.f32 %v2941, %v2941
    %v3118 = vmul.f32 %v2942, %v2942
    %v3119 = vmul.f32 %v2943, %v2943
    %v3120 = vmul.f32 %v2944, %v2944
    %v3121 = vmul.f32 %v2945, %v2945
    %v3122 = vmul.f32 %v2946, %v2946
    %v3123 = vmul.f32 %v2947, %v2947
    %v3124 = vmul.f32 %v2948, %v2948
    %v3125 = vmul.f32 %v2949, %v2949
    %v3126 = vsub.f32 %v3094, %v3110
    %v3127 = vsub.f32 %v3095, %v3111
    %v3128 = vsub.f32 %v3096, %v3112
    %v3129 = vsub.f32 %v3097, %v3113
    %v3130 = vsub.f32 %v3098, %v3114
    %v3131 = vsub.f32 %v3099, %v3115
    %v3132 = vsub.f32 %v3100, %v3116
    %v3133 = vsub.f32 %v3101, %v3117
    %v3134 = vsub.f32 %v3102, %v3118
    %v3135 = vsub.f32 %v3103, %v3119
    %v3136 = vsub.f32 %v3104, %v3120
    %v3137 = vsub.f32 %v3105, %v3121
    %v3138 = vsub.f32 %v3106, %v3122
    %v3139 = vsub.f32 %v3107, %v3123
    %v3140 = vsub.f32 %v3108, %v3124
    %v3141 = vsub.f32 %v3109, %v3125
    %v3142 = vmax.f32 %v3126, 0.0
    %v3143 = vmax.f32 %v3127, 0.0
    %v3144 = vmax.f32 %v3128, 0.0
    %v3145 = vmax.f32 %v3129, 0.0
    %v3146 = vmax.f32 %v3130, 0.0
    %v3147 = vmax.f32 %v3131, 0.0
    %v3148 = vmax.f32 %v3132, 0.0
    %v3149 = vmax.f32 %v3133, 0.0
    %v3150 = vmax.f32 %v3134, 0.0
    %v3151 = vmax.f32 %v3135, 0.0
    %v3152 = vmax.f32 %v3136, 0.0
    %v3153 = vmax.f32 %v3137, 0.0
    %v3154 = vmax.f32 %v3138, 0.0
    %v3155 = vmax.f32 %v3139, 0.0
    %v3156 = vmax.f32 %v3140, 0.0
    %v3157 = vmax.f32 %v3141, 0.0
    %v3158 = vsub.f32 %v2550, %v2934
    %v3159 = vsub.f32 %v2552, %v2934
    %v3160 = vsub.f32 %v2776, %v2934
    %v3161 = vsub.f32 %v2778, %v2934
    %v3162 = vsub.f32 %v2554, %v2935
    %v3163 = vsub.f32 %v2556, %v2935
    %v3164 = vsub.f32 %v2780, %v2935
    %v3165 = vsub.f32 %v2782, %v2935
    %v3166 = vsub.f32 %v2560, %v2936
    %v3167 = vsub.f32 %v2562, %v2936
    %v3168 = vsub.f32 %v2786, %v2936
    %v3169 = vsub.f32 %v2788, %v2936
    %v3170 = vsub.f32 %v2564, %v2937
    %v3171 = vsub.f32 %v2566, %v2937
    %v3172 = vsub.f32 %v2790, %v2937
    %v3173 = vsub.f32 %v2792, %v2937
    %v3174 = vsub.f32 %v2570, %v2938
    %v3175 = vsub.f32 %v2572, %v2938
    %v3176 = vsub.f32 %v2796, %v2938
    %v3177 = vsub.f32 %v2798, %v2938
    %v3178 = vsub.f32 %v2574, %v2939
    %v3179 = vsub.f32 %v2576, %v2939
    %v3180 = vsub.f32 %v2800, %v2939
    %v3181 = vsub.f32 %v2802, %v2939
    %v3182 = vsub.f32 %v2580, %v2940
    %v3183 = vsub.f32 %v2582, %v2940
    %v3184 = vsub.f32 %v2806, %v2940
    %v3185 = vsub.f32 %v2808, %v2940
    %v3186 = vsub.f32 %v2584, %v2941
    %v3187 = vsub.f32 %v2586, %v2941
    %v3188 = vsub.f32 %v2810, %v2941
    %v3189 = vsub.f32 %v2812, %v2941
    %v3190 = vsub.f32 %v2590, %v2942
    %v3191 = vsub.f32 %v2592, %v2942
    %v3192 = vsub.f32 %v2816, %v2942
    %v3193 = vsub.f32 %v2818, %v2942
    %v3194 = vsub.f32 %v2594, %v2943
    %v3195 = vsub.f32 %v2596, %v2943
    %v3196 = vsub.f32 %v2820, %v2943
    %v3197 = vsub.f32 %v2822, %v2943
    %v3198 = vsub.f32 %v2600, %v2944
    %v3199 = vsub.f32 %v2602, %v2944
    %v3200 = vsub.f32 %v2826, %v2944
    %v3201 = vsub.f32 %v2828, %v2944
    %v3202 = vsub.f32 %v2604, %v2945
    %v3203 = vsub.f32 %v2606, %v2945
    %v3204 = vsub.f32 %v2830, %v2945
    %v3205 = vsub.f32 %v2832, %v2945
    %v3206 = vsub.f32 %v2610, %v2946
    %v3207 = vsub.f32 %v2612, %v2946
    %v3208 = vsub.f32 %v2836, %v2946
    %v3209 = vsub.f32 %v2838, %v2946
    %v3210 = vsub.f32 %v2614, %v2947
    %v3211 = vsub.f32 %v2616, %v2947
    %v3212 = vsub.f32 %v2840, %v2947
    %v3213 = vsub.f32 %v2842, %v2947
    %v3214 = vsub.f32 %v2620, %v2948
    %v3215 = vsub.f32 %v2622, %v2948
    %v3216 = vsub.f32 %v2846, %v2948
    %v3217 = vsub.f32 %v2848, %v2948
    %v3218 = vsub.f32 %v2624, %v2949
    %v3219 = vsub.f32 %v2626, %v2949
    %v3220 = vsub.f32 %v2850, %v2949
    %v3221 = vsub.f32 %v2852, %v2949
    %v3222 = vadd.f32 %v3142, 1e-05
    %v3223 = vadd.f32 %v3143, 1e-05
    %v3224 = vadd.f32 %v3144, 1e-05
    %v3225 = vadd.f32 %v3145, 1e-05
    %v3226 = vadd.f32 %v3146, 1e-05
    %v3227 = vadd.f32 %v3147, 1e-05
    %v3228 = vadd.f32 %v3148, 1e-05
    %v3229 = vadd.f32 %v3149, 1e-05
    %v3230 = vadd.f32 %v3150, 1e-05
    %v3231 = vadd.f32 %v3151, 1e-05
    %v3232 = vadd.f32 %v3152, 1e-05
    %v3233 = vadd.f32 %v3153, 1e-05
    %v3234 = vadd.f32 %v3154, 1e-05
    %v3235 = vadd.f32 %v3155, 1e-05
    %v3236 = vadd.f32 %v3156, 1e-05
    %v3237 = vadd.f32 %v3157, 1e-05
    %v3238 = vrsqrt.pop %v3222
    %v3239 = vrsqrt.pop %v3223
    %v3240 = vrsqrt.pop %v3224
    %v3241 = vrsqrt.pop %v3225
    %v3242 = vrsqrt.pop %v3226
    %v3243 = vrsqrt.pop %v3227
    %v3244 = vrsqrt.pop %v3228
    %v3245 = vrsqrt.pop %v3229
    %v3246 = vrsqrt.pop %v3230
    %v3247 = vrsqrt.pop %v3231
    %v3248 = vrsqrt.pop %v3232
    %v3249 = vrsqrt.pop %v3233
    %v3250 = vrsqrt.pop %v3234
    %v3251 = vrsqrt.pop %v3235
    %v3252 = vrsqrt.pop %v3236
    %v3253 = vrsqrt.pop %v3237
    %v3254 = vmul.f32 %v3158, %v3238
    %v3255 = vmul.f32 %v3159, %v3238
    %v3256 = vmul.f32 %v3160, %v3238
    %v3257 = vmul.f32 %v3161, %v3238
    %v3258 = vmul.f32 %v3162, %v3239
    %v3259 = vmul.f32 %v3163, %v3239
    %v3260 = vmul.f32 %v3164, %v3239
    %v3261 = vmul.f32 %v3165, %v3239
    %v3262 = vmul.f32 %v3166, %v3240
    %v3263 = vmul.f32 %v3167, %v3240
    %v3264 = vmul.f32 %v3168, %v3240
    %v3265 = vmul.f32 %v3169, %v3240
    %v3266 = vmul.f32 %v3170, %v3241
    %v3267 = vmul.f32 %v3171, %v3241
    %v3268 = vmul.f32 %v3172, %v3241
    %v3269 = vmul.f32 %v3173, %v3241
    %v3270 = vmul.f32 %v3174, %v3242
    %v3271 = vmul.f32 %v3175, %v3242
    %v3272 = vmul.f32 %v3176, %v3242
    %v3273 = vmul.f32 %v3177, %v3242
    %v3274 = vmul.f32 %v3178, %v3243
    %v3275 = vmul.f32 %v3179, %v3243
    %v3276 = vmul.f32 %v3180, %v3243
    %v3277 = vmul.f32 %v3181, %v3243
    %v3278 = vmul.f32 %v3182, %v3244
    %v3279 = vmul.f32 %v3183, %v3244
    %v3280 = vmul.f32 %v3184, %v3244
    %v3281 = vmul.f32 %v3185, %v3244
    %v3282 = vmul.f32 %v3186, %v3245
    %v3283 = vmul.f32 %v3187, %v3245
    %v3284 = vmul.f32 %v3188, %v3245
    %v3285 = vmul.f32 %v3189, %v3245
    %v3286 = vmul.f32 %v3190, %v3246
    %v3287 = vmul.f32 %v3191, %v3246
    %v3288 = vmul.f32 %v3192, %v3246
    %v3289 = vmul.f32 %v3193, %v3246
    %v3290 = vmul.f32 %v3194, %v3247
    %v3291 = vmul.f32 %v3195, %v3247
    %v3292 = vmul.f32 %v3196, %v3247
    %v3293 = vmul.f32 %v3197, %v3247
    %v3294 = vmul.f32 %v3198, %v3248
    %v3295 = vmul.f32 %v3199, %v3248
    %v3296 = vmul.f32 %v3200, %v3248
    %v3297 = vmul.f32 %v3201, %v3248
    %v3298 = vmul.f32 %v3202, %v3249
    %v3299 = vmul.f32 %v3203, %v3249
    %v3300 = vmul.f32 %v3204, %v3249
    %v3301 = vmul.f32 %v3205, %v3249
    %v3302 = vmul.f32 %v3206, %v3250
    %v3303 = vmul.f32 %v3207, %v3250
    %v3304 = vmul.f32 %v3208, %v3250
    %v3305 = vmul.f32 %v3209, %v3250
    %v3306 = vmul.f32 %v3210, %v3251
    %v3307 = vmul.f32 %v3211, %v3251
    %v3308 = vmul.f32 %v3212, %v3251
    %v3309 = vmul.f32 %v3213, %v3251
    %v3310 = vmul.f32 %v3214, %v3252
    %v3311 = vmul.f32 %v3215, %v3252
    %v3312 = vmul.f32 %v3216, %v3252
    %v3313 = vmul.f32 %v3217, %v3252
    %v3314 = vmul.f32 %v3218, %v3253
    %v3315 = vmul.f32 %v3219, %v3253
    %v3316 = vmul.f32 %v3220, %v3253
    %v3317 = vmul.f32 %v3221, %v3253
    %v3318 = vld [vmem:[#allocation2] sm:$0xff]
    %v3319 = vld [vmem:[#allocation2 + $0x8] sm:$0xff]
    %v3320 = vld [vmem:[#allocation2 + $0x10] sm:$0xff]
    %v3321 = vld [vmem:[#allocation2 + $0x18] sm:$0xff]
    %v3322 = vld [vmem:[#allocation2 + $0x20] sm:$0xff]
    %v3323 = vld [vmem:[#allocation2 + $0x28] sm:$0xff]
    %v3324 = vld [vmem:[#allocation2 + $0x30] sm:$0xff]
    %v3325 = vld [vmem:[#allocation2 + $0x38] sm:$0xff]
    %v3326 = vld [vmem:[#allocation2 + $0x40] sm:$0xff]
    %v3327 = vld [vmem:[#allocation2 + $0x48] sm:$0xff]
    %v3328 = vld [vmem:[#allocation2 + $0x50] sm:$0xff]
    %v3329 = vld [vmem:[#allocation2 + $0x58] sm:$0xff]
    %v3330 = vld [vmem:[#allocation2 + $0x60] sm:$0xff]
    %v3331 = vld [vmem:[#allocation2 + $0x68] sm:$0xff]
    %v3332 = vld [vmem:[#allocation2 + $0x70] sm:$0xff]
    %v3333 = vld [vmem:[#allocation2 + $0x78] sm:$0xff]
    %v3334 = vld [vmem:[#allocation2 + $0x80] sm:$0xff]
    %v3335 = vld [vmem:[#allocation2 + $0x88] sm:$0xff]
    %v3336 = vld [vmem:[#allocation2 + $0x90] sm:$0xff]
    %v3337 = vld [vmem:[#allocation2 + $0x98] sm:$0xff]
    %v3338 = vld [vmem:[#allocation2 + $0xa0] sm:$0xff]
    %v3339 = vld [vmem:[#allocation2 + $0xa8] sm:$0xff]
    %v3340 = vld [vmem:[#allocation2 + $0xb0] sm:$0xff]
    %v3341 = vld [vmem:[#allocation2 + $0xb8] sm:$0xff]
    %v3342 = vld [vmem:[#allocation2 + $0xc0] sm:$0xff]
    %v3343 = vld [vmem:[#allocation2 + $0xc8] sm:$0xff]
    %v3344 = vld [vmem:[#allocation2 + $0xd0] sm:$0xff]
    %v3345 = vld [vmem:[#allocation2 + $0xd8] sm:$0xff]
    %v3346 = vld [vmem:[#allocation2 + $0xe0] sm:$0xff]
    %v3347 = vld [vmem:[#allocation2 + $0xe8] sm:$0xff]
    %v3348 = vld [vmem:[#allocation2 + $0xf0] sm:$0xff]
    %v3349 = vld [vmem:[#allocation2 + $0xf8] sm:$0xff]
    %v3350 = vld [vmem:[#allocation2 + $0x100] sm:$0xff]
    %v3351 = vld [vmem:[#allocation2 + $0x108] sm:$0xff]
    %v3352 = vld [vmem:[#allocation2 + $0x110] sm:$0xff]
    %v3353 = vld [vmem:[#allocation2 + $0x118] sm:$0xff]
    %v3354 = vld [vmem:[#allocation2 + $0x120] sm:$0xff]
    %v3355 = vld [vmem:[#allocation2 + $0x128] sm:$0xff]
    %v3356 = vld [vmem:[#allocation2 + $0x130] sm:$0xff]
    %v3357 = vld [vmem:[#allocation2 + $0x138] sm:$0xff]
    %v3358 = vld [vmem:[#allocation2 + $0x140] sm:$0xff]
    %v3359 = vld [vmem:[#allocation2 + $0x148] sm:$0xff]
    %v3360 = vld [vmem:[#allocation2 + $0x150] sm:$0xff]
    %v3361 = vld [vmem:[#allocation2 + $0x158] sm:$0xff]
    %v3362 = vld [vmem:[#allocation2 + $0x160] sm:$0xff]
    %v3363 = vld [vmem:[#allocation2 + $0x168] sm:$0xff]
    %v3364 = vld [vmem:[#allocation2 + $0x170] sm:$0xff]
    %v3365 = vld [vmem:[#allocation2 + $0x178] sm:$0xff]
    %v3366 = vld [vmem:[#allocation2 + $0x180] sm:$0xff]
    %v3367 = vld [vmem:[#allocation2 + $0x188] sm:$0xff]
    %v3368 = vld [vmem:[#allocation2 + $0x190] sm:$0xff]
    %v3369 = vld [vmem:[#allocation2 + $0x198] sm:$0xff]
    %v3370 = vld [vmem:[#allocation2 + $0x1a0] sm:$0xff]
    %v3371 = vld [vmem:[#allocation2 + $0x1a8] sm:$0xff]
    %v3372 = vld [vmem:[#allocation2 + $0x1b0] sm:$0xff]
    %v3373 = vld [vmem:[#allocation2 + $0x1b8] sm:$0xff]
    %v3374 = vld [vmem:[#allocation2 + $0x1c0] sm:$0xff]
    %v3375 = vld [vmem:[#allocation2 + $0x1c8] sm:$0xff]
    %v3376 = vld [vmem:[#allocation2 + $0x1d0] sm:$0xff]
    %v3377 = vld [vmem:[#allocation2 + $0x1d8] sm:$0xff]
    %v3378 = vld [vmem:[#allocation2 + $0x1e0] sm:$0xff]
    %v3379 = vld [vmem:[#allocation2 + $0x1e8] sm:$0xff]
    %v3380 = vld [vmem:[#allocation2 + $0x1f0] sm:$0xff]
    %v3381 = vld [vmem:[#allocation2 + $0x1f8] sm:$0xff]
    %v3382 = vmul.f32 %v3254, %v3318
    %v3383 = vmul.f32 %v3255, %v3319
    %v3384 = vmul.f32 %v3256, %v3320
    %v3385 = vmul.f32 %v3257, %v3321
    %v3386 = vmul.f32 %v3258, %v3322
    %v3387 = vmul.f32 %v3259, %v3323
    %v3388 = vmul.f32 %v3260, %v3324
    %v3389 = vmul.f32 %v3261, %v3325
    %v3390 = vmul.f32 %v3262, %v3326
    %v3391 = vmul.f32 %v3263, %v3327
    %v3392 = vmul.f32 %v3264, %v3328
    %v3393 = vmul.f32 %v3265, %v3329
    %v3394 = vmul.f32 %v3266, %v3330
    %v3395 = vmul.f32 %v3267, %v3331
    %v3396 = vmul.f32 %v3268, %v3332
    %v3397 = vmul.f32 %v3269, %v3333
    %v3398 = vmul.f32 %v3270, %v3334
    %v3399 = vmul.f32 %v3271, %v3335
    %v3400 = vmul.f32 %v3272, %v3336
    %v3401 = vmul.f32 %v3273, %v3337
    %v3402 = vmul.f32 %v3274, %v3338
    %v3403 = vmul.f32 %v3275, %v3339
    %v3404 = vmul.f32 %v3276, %v3340
    %v3405 = vmul.f32 %v3277, %v3341
    %v3406 = vmul.f32 %v3278, %v3342
    %v3407 = vmul.f32 %v3279, %v3343
    %v3408 = vmul.f32 %v3280, %v3344
    %v3409 = vmul.f32 %v3281, %v3345
    %v3410 = vmul.f32 %v3282, %v3346
    %v3411 = vmul.f32 %v3283, %v3347
    %v3412 = vmul.f32 %v3284, %v3348
    %v3413 = vmul.f32 %v3285, %v3349
    %v3414 = vmul.f32 %v3286, %v3350
    %v3415 = vmul.f32 %v3287, %v3351
    %v3416 = vmul.f32 %v3288, %v3352
    %v3417 = vmul.f32 %v3289, %v3353
    %v3418 = vmul.f32 %v3290, %v3354
    %v3419 = vmul.f32 %v3291, %v3355
    %v3420 = vmul.f32 %v3292, %v3356
    %v3421 = vmul.f32 %v3293, %v3357
    %v3422 = vmul.f32 %v3294, %v3358
    %v3423 = vmul.f32 %v3295, %v3359
    %v3424 = vmul.f32 %v3296, %v3360
    %v3425 = vmul.f32 %v3297, %v3361
    %v3426 = vmul.f32 %v3298, %v3362
    %v3427 = vmul.f32 %v3299, %v3363
    %v3428 = vmul.f32 %v3300, %v3364
    %v3429 = vmul.f32 %v3301, %v3365
    %v3430 = vmul.f32 %v3302, %v3366
    %v3431 = vmul.f32 %v3303, %v3367
    %v3432 = vmul.f32 %v3304, %v3368
    %v3433 = vmul.f32 %v3305, %v3369
    %v3434 = vmul.f32 %v3306, %v3370
    %v3435 = vmul.f32 %v3307, %v3371
    %v3436 = vmul.f32 %v3308, %v3372
    %v3437 = vmul.f32 %v3309, %v3373
    %v3438 = vmul.f32 %v3310, %v3374
    %v3439 = vmul.f32 %v3311, %v3375
    %v3440 = vmul.f32 %v3312, %v3376
    %v3441 = vmul.f32 %v3313, %v3377
    %v3442 = vmul.f32 %v3314, %v3378
    %v3443 = vmul.f32 %v3315, %v3379
    %v3444 = vmul.f32 %v3316, %v3380
    %v3445 = vmul.f32 %v3317, %v3381
    %v3446 = vld [vmem:[#allocation4] sm:$0xff]
    %v3447 = vld [vmem:[#allocation4 + $0x8] sm:$0xff]
    %v3448 = vld [vmem:[#allocation4 + $0x10] sm:$0xff]
    %v3449 = vld [vmem:[#allocation4 + $0x18] sm:$0xff]
    %v3450 = vld [vmem:[#allocation4 + $0x20] sm:$0xff]
    %v3451 = vld [vmem:[#allocation4 + $0x28] sm:$0xff]
    %v3452 = vld [vmem:[#allocation4 + $0x30] sm:$0xff]
    %v3453 = vld [vmem:[#allocation4 + $0x38] sm:$0xff]
    %v3454 = vld [vmem:[#allocation4 + $0x40] sm:$0xff]
    %v3455 = vld [vmem:[#allocation4 + $0x48] sm:$0xff]
    %v3456 = vld [vmem:[#allocation4 + $0x50] sm:$0xff]
    %v3457 = vld [vmem:[#allocation4 + $0x58] sm:$0xff]
    %v3458 = vld [vmem:[#allocation4 + $0x60] sm:$0xff]
    %v3459 = vld [vmem:[#allocation4 + $0x68] sm:$0xff]
    %v3460 = vld [vmem:[#allocation4 + $0x70] sm:$0xff]
    %v3461 = vld [vmem:[#allocation4 + $0x78] sm:$0xff]
    %v3462 = vld [vmem:[#allocation4 + $0x80] sm:$0xff]
    %v3463 = vld [vmem:[#allocation4 + $0x88] sm:$0xff]
    %v3464 = vld [vmem:[#allocation4 + $0x90] sm:$0xff]
    %v3465 = vld [vmem:[#allocation4 + $0x98] sm:$0xff]
    %v3466 = vld [vmem:[#allocation4 + $0xa0] sm:$0xff]
    %v3467 = vld [vmem:[#allocation4 + $0xa8] sm:$0xff]
    %v3468 = vld [vmem:[#allocation4 + $0xb0] sm:$0xff]
    %v3469 = vld [vmem:[#allocation4 + $0xb8] sm:$0xff]
    %v3470 = vld [vmem:[#allocation4 + $0xc0] sm:$0xff]
    %v3471 = vld [vmem:[#allocation4 + $0xc8] sm:$0xff]
    %v3472 = vld [vmem:[#allocation4 + $0xd0] sm:$0xff]
    %v3473 = vld [vmem:[#allocation4 + $0xd8] sm:$0xff]
    %v3474 = vld [vmem:[#allocation4 + $0xe0] sm:$0xff]
    %v3475 = vld [vmem:[#allocation4 + $0xe8] sm:$0xff]
    %v3476 = vld [vmem:[#allocation4 + $0xf0] sm:$0xff]
    %v3477 = vld [vmem:[#allocation4 + $0xf8] sm:$0xff]
    %v3478 = vld [vmem:[#allocation4 + $0x100] sm:$0xff]
    %v3479 = vld [vmem:[#allocation4 + $0x108] sm:$0xff]
    %v3480 = vld [vmem:[#allocation4 + $0x110] sm:$0xff]
    %v3481 = vld [vmem:[#allocation4 + $0x118] sm:$0xff]
    %v3482 = vld [vmem:[#allocation4 + $0x120] sm:$0xff]
    %v3483 = vld [vmem:[#allocation4 + $0x128] sm:$0xff]
    %v3484 = vld [vmem:[#allocation4 + $0x130] sm:$0xff]
    %v3485 = vld [vmem:[#allocation4 + $0x138] sm:$0xff]
    %v3486 = vld [vmem:[#allocation4 + $0x140] sm:$0xff]
    %v3487 = vld [vmem:[#allocation4 + $0x148] sm:$0xff]
    %v3488 = vld [vmem:[#allocation4 + $0x150] sm:$0xff]
    %v3489 = vld [vmem:[#allocation4 + $0x158] sm:$0xff]
    %v3490 = vld [vmem:[#allocation4 + $0x160] sm:$0xff]
    %v3491 = vld [vmem:[#allocation4 + $0x168] sm:$0xff]
    %v3492 = vld [vmem:[#allocation4 + $0x170] sm:$0xff]
    %v3493 = vld [vmem:[#allocation4 + $0x178] sm:$0xff]
    %v3494 = vld [vmem:[#allocation4 + $0x180] sm:$0xff]
    %v3495 = vld [vmem:[#allocation4 + $0x188] sm:$0xff]
    %v3496 = vld [vmem:[#allocation4 + $0x190] sm:$0xff]
    %v3497 = vld [vmem:[#allocation4 + $0x198] sm:$0xff]
    %v3498 = vld [vmem:[#allocation4 + $0x1a0] sm:$0xff]
    %v3499 = vld [vmem:[#allocation4 + $0x1a8] sm:$0xff]
    %v3500 = vld [vmem:[#allocation4 + $0x1b0] sm:$0xff]
    %v3501 = vld [vmem:[#allocation4 + $0x1b8] sm:$0xff]
    %v3502 = vld [vmem:[#allocation4 + $0x1c0] sm:$0xff]
    %v3503 = vld [vmem:[#allocation4 + $0x1c8] sm:$0xff]
    %v3504 = vld [vmem:[#allocation4 + $0x1d0] sm:$0xff]
    %v3505 = vld [vmem:[#allocation4 + $0x1d8] sm:$0xff]
    %v3506 = vld [vmem:[#allocation4 + $0x1e0] sm:$0xff]
    %v3507 = vld [vmem:[#allocation4 + $0x1e8] sm:$0xff]
    %v3508 = vld [vmem:[#allocation4 + $0x1f0] sm:$0xff]
    %v3509 = vld [vmem:[#allocation4 + $0x1f8] sm:$0xff]
    %v3510 = vadd.f32 %v3382, %v3446
    %v3511 = vadd.f32 %v3383, %v3447
    %v3512 = vadd.f32 %v3384, %v3448
    %v3513 = vadd.f32 %v3385, %v3449
    %v3514 = vadd.f32 %v3386, %v3450
    %v3515 = vadd.f32 %v3387, %v3451
    %v3516 = vadd.f32 %v3388, %v3452
    %v3517 = vadd.f32 %v3389, %v3453
    %v3518 = vadd.f32 %v3390, %v3454
    %v3519 = vadd.f32 %v3391, %v3455
    %v3520 = vadd.f32 %v3392, %v3456
    %v3521 = vadd.f32 %v3393, %v3457
    %v3522 = vadd.f32 %v3394, %v3458
    %v3523 = vadd.f32 %v3395, %v3459
    %v3524 = vadd.f32 %v3396, %v3460
    %v3525 = vadd.f32 %v3397, %v3461
    %v3526 = vadd.f32 %v3398, %v3462
    %v3527 = vadd.f32 %v3399, %v3463
    %v3528 = vadd.f32 %v3400, %v3464
    %v3529 = vadd.f32 %v3401, %v3465
    %v3530 = vadd.f32 %v3402, %v3466
    %v3531 = vadd.f32 %v3403, %v3467
    %v3532 = vadd.f32 %v3404, %v3468
    %v3533 = vadd.f32 %v3405, %v3469
    %v3534 = vadd.f32 %v3406, %v3470
    %v3535 = vadd.f32 %v3407, %v3471
    %v3536 = vadd.f32 %v3408, %v3472
    %v3537 = vadd.f32 %v3409, %v3473
    %v3538 = vadd.f32 %v3410, %v3474
    %v3539 = vadd.f32 %v3411, %v3475
    %v3540 = vadd.f32 %v3412, %v3476
    %v3541 = vadd.f32 %v3413, %v3477
    %v3542 = vadd.f32 %v3414, %v3478
    %v3543 = vadd.f32 %v3415, %v3479
    %v3544 = vadd.f32 %v3416, %v3480
    %v3545 = vadd.f32 %v3417, %v3481
    %v3546 = vadd.f32 %v3418, %v3482
    %v3547 = vadd.f32 %v3419, %v3483
    %v3548 = vadd.f32 %v3420, %v3484
    %v3549 = vadd.f32 %v3421, %v3485
    %v3550 = vadd.f32 %v3422, %v3486
    %v3551 = vadd.f32 %v3423, %v3487
    %v3552 = vadd.f32 %v3424, %v3488
    %v3553 = vadd.f32 %v3425, %v3489
    %v3554 = vadd.f32 %v3426, %v3490
    %v3555 = vadd.f32 %v3427, %v3491
    %v3556 = vadd.f32 %v3428, %v3492
    %v3557 = vadd.f32 %v3429, %v3493
    %v3558 = vadd.f32 %v3430, %v3494
    %v3559 = vadd.f32 %v3431, %v3495
    %v3560 = vadd.f32 %v3432, %v3496
    %v3561 = vadd.f32 %v3433, %v3497
    %v3562 = vadd.f32 %v3434, %v3498
    %v3563 = vadd.f32 %v3435, %v3499
    %v3564 = vadd.f32 %v3436, %v3500
    %v3565 = vadd.f32 %v3437, %v3501
    %v3566 = vadd.f32 %v3438, %v3502
    %v3567 = vadd.f32 %v3439, %v3503
    %v3568 = vadd.f32 %v3440, %v3504
    %v3569 = vadd.f32 %v3441, %v3505
    %v3570 = vadd.f32 %v3442, %v3506
    %v3571 = vadd.f32 %v3443, %v3507
    %v3572 = vadd.f32 %v3444, %v3508
    %v3573 = vadd.f32 %v3445, %v3509
    %v3574 = vpack.c.bf16 %v592, %v591
    %v3575 = vpack.c.bf16 %v594, %v593
    %v3576 = vpack.c.bf16 %v596, %v595
    %v3577 = vpack.c.bf16 %v598, %v597
    %v3578 = vpack.c.bf16 %v600, %v599
    %v3579 = vpack.c.bf16 %v602, %v601
    %v3580 = vpack.c.bf16 %v604, %v603
    %v3581 = vpack.c.bf16 %v606, %v605
    %v3582 = vld [vmem:[#allocation6] sm:$0xff]
    %v3583 = vld [vmem:[#allocation6 + $0x8] sm:$0xff]
    %v3584 = vld [vmem:[#allocation6 + $0x10] sm:$0xff]
    %v3585 = vld [vmem:[#allocation6 + $0x18] sm:$0xff]
    %v3586 = vld [vmem:[#allocation6 + $0x20] sm:$0xff]
    %v3587 = vld [vmem:[#allocation6 + $0x28] sm:$0xff]
    %v3588 = vld [vmem:[#allocation6 + $0x30] sm:$0xff]
    %v3589 = vld [vmem:[#allocation6 + $0x38] sm:$0xff]
    %v3590 = vld [vmem:[#allocation7] sm:$0xff]
    %v3591 = vld [vmem:[#allocation7 + $0x8] sm:$0xff]
    %v3592 = vld [vmem:[#allocation7 + $0x10] sm:$0xff]
    %v3593 = vld [vmem:[#allocation7 + $0x18] sm:$0xff]
    %v3594 = vld [vmem:[#allocation7 + $0x20] sm:$0xff]
    %v3595 = vld [vmem:[#allocation7 + $0x28] sm:$0xff]
    %v3596 = vld [vmem:[#allocation7 + $0x30] sm:$0xff]
    %v3597 = vld [vmem:[#allocation7 + $0x38] sm:$0xff]
    %v3598 = vld [vmem:[#allocation7 + $0x40] sm:$0xff]
    %v3599 = vld [vmem:[#allocation7 + $0x48] sm:$0xff]
    %v3600 = vld [vmem:[#allocation7 + $0x50] sm:$0xff]
    %v3601 = vld [vmem:[#allocation7 + $0x58] sm:$0xff]
    %v3602 = vld [vmem:[#allocation7 + $0x60] sm:$0xff]
    %v3603 = vld [vmem:[#allocation7 + $0x68] sm:$0xff]
    %v3604 = vld [vmem:[#allocation7 + $0x70] sm:$0xff]
    %v3605 = vld [vmem:[#allocation7 + $0x78] sm:$0xff]
    %v3606 = vld [vmem:[#allocation7 + $0x80] sm:$0xff]
    %v3607 = vld [vmem:[#allocation7 + $0x88] sm:$0xff]
    %v3608 = vld [vmem:[#allocation7 + $0x90] sm:$0xff]
    %v3609 = vld [vmem:[#allocation7 + $0x98] sm:$0xff]
    %v3610 = vld [vmem:[#allocation7 + $0xa0] sm:$0xff]
    %v3611 = vld [vmem:[#allocation7 + $0xa8] sm:$0xff]
    %v3612 = vld [vmem:[#allocation7 + $0xb0] sm:$0xff]
    %v3613 = vld [vmem:[#allocation7 + $0xb8] sm:$0xff]
    %v3614 = vld [vmem:[#allocation7 + $0xc0] sm:$0xff]
    %v3615 = vld [vmem:[#allocation7 + $0xc8] sm:$0xff]
    %v3616 = vld [vmem:[#allocation7 + $0xd0] sm:$0xff]
    %v3617 = vld [vmem:[#allocation7 + $0xd8] sm:$0xff]
    %v3618 = vld [vmem:[#allocation7 + $0xe0] sm:$0xff]
    %v3619 = vld [vmem:[#allocation7 + $0xe8] sm:$0xff]
    %v3620 = vld [vmem:[#allocation7 + $0xf0] sm:$0xff]
    %v3621 = vld [vmem:[#allocation7 + $0xf8] sm:$0xff]
    %v3622 = vld [vmem:[#allocation7 + $0x100] sm:$0xff]
    %v3623 = vld [vmem:[#allocation7 + $0x108] sm:$0xff]
    %v3624 = vld [vmem:[#allocation7 + $0x110] sm:$0xff]
    %v3625 = vld [vmem:[#allocation7 + $0x118] sm:$0xff]
    %v3626 = vld [vmem:[#allocation7 + $0x120] sm:$0xff]
    %v3627 = vld [vmem:[#allocation7 + $0x128] sm:$0xff]
    %v3628 = vld [vmem:[#allocation7 + $0x130] sm:$0xff]
    %v3629 = vld [vmem:[#allocation7 + $0x138] sm:$0xff]
    %v3630 = vld [vmem:[#allocation7 + $0x140] sm:$0xff]
    %v3631 = vld [vmem:[#allocation7 + $0x148] sm:$0xff]
    %v3632 = vld [vmem:[#allocation7 + $0x150] sm:$0xff]
    %v3633 = vld [vmem:[#allocation7 + $0x158] sm:$0xff]
    %v3634 = vld [vmem:[#allocation7 + $0x160] sm:$0xff]
    %v3635 = vld [vmem:[#allocation7 + $0x168] sm:$0xff]
    %v3636 = vld [vmem:[#allocation7 + $0x170] sm:$0xff]
    %v3637 = vld [vmem:[#allocation7 + $0x178] sm:$0xff]
    %v3638 = vld [vmem:[#allocation7 + $0x180] sm:$0xff]
    %v3639 = vld [vmem:[#allocation7 + $0x188] sm:$0xff]
    %v3640 = vld [vmem:[#allocation7 + $0x190] sm:$0xff]
    %v3641 = vld [vmem:[#allocation7 + $0x198] sm:$0xff]
    %v3642 = vld [vmem:[#allocation7 + $0x1a0] sm:$0xff]
    %v3643 = vld [vmem:[#allocation7 + $0x1a8] sm:$0xff]
    %v3644 = vld [vmem:[#allocation7 + $0x1b0] sm:$0xff]
    %v3645 = vld [vmem:[#allocation7 + $0x1b8] sm:$0xff]
    %v3646 = vld [vmem:[#allocation7 + $0x1c0] sm:$0xff]
    %v3647 = vld [vmem:[#allocation7 + $0x1c8] sm:$0xff]
    %v3648 = vld [vmem:[#allocation7 + $0x1d0] sm:$0xff]
    %v3649 = vld [vmem:[#allocation7 + $0x1d8] sm:$0xff]
    %v3650 = vld [vmem:[#allocation7 + $0x1e0] sm:$0xff]
    %v3651 = vld [vmem:[#allocation7 + $0x1e8] sm:$0xff]
    %v3652 = vld [vmem:[#allocation7 + $0x1f0] sm:$0xff]
    %v3653 = vld [vmem:[#allocation7 + $0x1f8] sm:$0xff]
    %v3662 = vunpack.c.l.b16 %v3582
    %v3663 = vunpack.c.h.b16 %v3582
    %v3664 = vunpack.c.l.b16 %v3583
    %v3665 = vunpack.c.h.b16 %v3583
    %v3666 = vunpack.c.l.b16 %v3584
    %v3667 = vunpack.c.h.b16 %v3584
    %v3668 = vunpack.c.l.b16 %v3585
    %v3669 = vunpack.c.h.b16 %v3585
    %v3670 = vunpack.c.l.b16 %v3586
    %v3671 = vunpack.c.h.b16 %v3586
    %v3672 = vunpack.c.l.b16 %v3587
    %v3673 = vunpack.c.h.b16 %v3587
    %v3674 = vunpack.c.l.b16 %v3588
    %v3675 = vunpack.c.h.b16 %v3588
    %v3676 = vunpack.c.l.b16 %v3589
    %v3677 = vunpack.c.h.b16 %v3589
    %v3678 = vpack.c.b16 %v3666, %v3662
    %v3679 = vpack.c.b16 %v3667, %v3663
    %v3680 = vpack.c.b16 %v3668, %v3664
    %v3681 = vpack.c.b16 %v3669, %v3665
    %v3682 = vpack.c.b16 %v3674, %v3670
    %v3683 = vpack.c.b16 %v3675, %v3671
    %v3684 = vpack.c.b16 %v3676, %v3672
    %v3685 = vpack.c.b16 %v3677, %v3673
    %v3695 = vsel %vm623, %v3574, 0
    %v3698 = vsel %vm623, %v3575, 0
    %v3701 = vsel %vm623, %v3576, 0
    %v3704 = vsel %vm623, %v3577, 0
    %v3707 = vsel %vm623, %v3578, 0
    %v3710 = vsel %vm623, %v3579, 0
    %v3713 = vsel %vm623, %v3580, 0
    %v3716 = vsel %vm623, %v3581, 0
    %3718 = vmatprep.subr.bf16.mxu0 %v3679
    %3719 = vmatpush1.bf16.msra.mxu0 %v3678
    %3720 = vmatprep.subr.bf16.mxu0 %v3683
    %3721 = vmatpush1.bf16.msra.mxu0 %v3682
    %3722 = vmatprep.subr.bf16.mxu0 0
    %3723 = vmatpush1.bf16.msra.mxu0 0
    %3724 = vmatprep.subr.bf16.mxu0 0
    %3725 = vmatpush1.bf16.msra.mxu0 0
    %3726 = vmatprep.subr.bf16.mxu0 0
    %3727 = vmatpush1.bf16.msra.mxu0 0
    %3728 = vmatprep.subr.bf16.mxu0 0
    %3729 = vmatpush1.bf16.msra.mxu0 0
    %3730 = vmatprep.subr.bf16.mxu0 0
    %3731 = vmatpush1.bf16.msra.mxu0 0
    %3732 = vmatprep.subr.bf16.mxu0 0
    %3733 = vmatpush1.bf16.msra.mxu0 0
    %3734 = vmatprep.subr.bf16.mxu0 0
    %3735 = vmatpush1.bf16.msra.mxu0 0
    %3736 = vmatprep.subr.bf16.mxu0 0
    %3737 = vmatpush1.bf16.msra.mxu0 0
    %3738 = vmatprep.subr.bf16.mxu0 0
    %3739 = vmatpush1.bf16.msra.mxu0 0
    %3740 = vmatprep.subr.bf16.mxu0 0
    %3741 = vmatpush1.bf16.msra.mxu0 0
    %3742 = vmatprep.subr.bf16.mxu0 0
    %3743 = vmatpush1.bf16.msra.mxu0 0
    %3744 = vmatprep.subr.bf16.mxu0 0
    %3745 = vmatpush1.bf16.msra.mxu0 0
    %3746 = vmatprep.subr.bf16.mxu0 0
    %3747 = vmatpush1.bf16.msra.mxu0 0
    %3748 = vmatprep.subr.bf16.mxu0 0
    %3749 = vmatpush1.bf16.msra.mxu0 0
    %3750 = vmatprep.mubr.bf16.mxu0 0
    %3751 = vmatmul.mubr.bf16.gmra.mrb[0].mxu0 %v3695
    %v3752 = vpop.f32.mrb[0].mxu0
    %v3753 = vadd.f32 %v3590, %v3752
    %v3754 = vpop.f32.mrb[0].mxu0
    %v3755 = vadd.f32 %v3591, %v3754
    %v3756 = vpop.f32.mrb[0].mxu0
    %v3757 = vadd.f32 %v3594, %v3756
    %v3758 = vpop.f32.mrb[0].mxu0
    %v3759 = vadd.f32 %v3595, %v3758
    %3760 = vmatprep.mubr.bf16.mxu0 0
    %3761 = vmatmul.mubr.bf16.gmra.mrb[0].mxu0 %v3698
    %v3762 = vpop.f32.mrb[0].mxu0
    %v3763 = vadd.f32 %v3598, %v3762
    %v3764 = vpop.f32.mrb[0].mxu0
    %v3765 = vadd.f32 %v3599, %v3764
    %v3766 = vpop.f32.mrb[0].mxu0
    %v3767 = vadd.f32 %v3602, %v3766
    %v3768 = vpop.f32.mrb[0].mxu0
    %v3769 = vadd.f32 %v3603, %v3768
    %3770 = vmatprep.mubr.bf16.mxu0 0
    %3771 = vmatmul.mubr.bf16.gmra.mrb[0].mxu0 %v3701
    %v3772 = vpop.f32.mrb[0].mxu0
    %v3773 = vadd.f32 %v3606, %v3772
    %v3774 = vpop.f32.mrb[0].mxu0
    %v3775 = vadd.f32 %v3607, %v3774
    %v3776 = vpop.f32.mrb[0].mxu0
    %v3777 = vadd.f32 %v3610, %v3776
    %v3778 = vpop.f32.mrb[0].mxu0
    %v3779 = vadd.f32 %v3611, %v3778
    %3780 = vmatprep.mubr.bf16.mxu0 0
    %3781 = vmatmul.mubr.bf16.gmra.mrb[0].mxu0 %v3704
    %v3782 = vpop.f32.mrb[0].mxu0
    %v3783 = vadd.f32 %v3614, %v3782
    %v3784 = vpop.f32.mrb[0].mxu0
    %v3785 = vadd.f32 %v3615, %v3784
    %v3786 = vpop.f32.mrb[0].mxu0
    %v3787 = vadd.f32 %v3618, %v3786
    %v3788 = vpop.f32.mrb[0].mxu0
    %v3789 = vadd.f32 %v3619, %v3788
    %3790 = vmatprep.mubr.bf16.mxu0 0
    %3791 = vmatmul.mubr.bf16.gmra.mrb[0].mxu0 %v3707
    %v3792 = vpop.f32.mrb[0].mxu0
    %v3793 = vadd.f32 %v3622, %v3792
    %v3794 = vpop.f32.mrb[0].mxu0
    %v3795 = vadd.f32 %v3623, %v3794
    %v3796 = vpop.f32.mrb[0].mxu0
    %v3797 = vadd.f32 %v3626, %v3796
    %v3798 = vpop.f32.mrb[0].mxu0
    %v3799 = vadd.f32 %v3627, %v3798
    %3800 = vmatprep.mubr.bf16.mxu0 0
    %3801 = vmatmul.mubr.bf16.gmra.mrb[0].mxu0 %v3710
    %v3802 = vpop.f32.mrb[0].mxu0
    %v3803 = vadd.f32 %v3630, %v3802
    %v3804 = vpop.f32.mrb[0].mxu0
    %v3805 = vadd.f32 %v3631, %v3804
    %v3806 = vpop.f32.mrb[0].mxu0
    %v3807 = vadd.f32 %v3634, %v3806
    %v3808 = vpop.f32.mrb[0].mxu0
    %v3809 = vadd.f32 %v3635, %v3808
    %3810 = vmatprep.mubr.bf16.mxu0 0
    %3811 = vmatmul.mubr.bf16.gmra.mrb[0].mxu0 %v3713
    %v3812 = vpop.f32.mrb[0].mxu0
    %v3813 = vadd.f32 %v3638, %v3812
    %v3814 = vpop.f32.mrb[0].mxu0
    %v3815 = vadd.f32 %v3639, %v3814
    %v3816 = vpop.f32.mrb[0].mxu0
    %v3817 = vadd.f32 %v3642, %v3816
    %v3818 = vpop.f32.mrb[0].mxu0
    %v3819 = vadd.f32 %v3643, %v3818
    %3820 = vmatprep.mubr.bf16.mxu0 0
    %3821 = vmatmul.mubr.bf16.gmra.mrb[0].mxu0 %v3716
    %v3822 = vpop.f32.mrb[0].mxu0
    %v3823 = vadd.f32 %v3646, %v3822
    %v3824 = vpop.f32.mrb[0].mxu0
    %v3825 = vadd.f32 %v3647, %v3824
    %v3826 = vpop.f32.mrb[0].mxu0
    %v3827 = vadd.f32 %v3650, %v3826
    %v3828 = vpop.f32.mrb[0].mxu0
    %v3829 = vadd.f32 %v3651, %v3828
    %3830 = vdwg.mxu0
    %3831 = vmatprep.subr.bf16.mxu0 %v3681
    %3832 = vmatpush1.bf16.msra.mxu0 %v3680
    %3833 = vmatprep.subr.bf16.mxu0 %v3685
    %3834 = vmatpush1.bf16.msra.mxu0 %v3684
    %3835 = vmatprep.subr.bf16.mxu0 0
    %3836 = vmatpush1.bf16.msra.mxu0 0
    %3837 = vmatprep.subr.bf16.mxu0 0
    %3838 = vmatpush1.bf16.msra.mxu0 0
    %3839 = vmatprep.subr.bf16.mxu0 0
    %3840 = vmatpush1.bf16.msra.mxu0 0
    %3841 = vmatprep.subr.bf16.mxu0 0
    %3842 = vmatpush1.bf16.msra.mxu0 0
    %3843 = vmatprep.subr.bf16.mxu0 0
    %3844 = vmatpush1.bf16.msra.mxu0 0
    %3845 = vmatprep.subr.bf16.mxu0 0
    %3846 = vmatpush1.bf16.msra.mxu0 0
    %3847 = vmatprep.subr.bf16.mxu0 0
    %3848 = vmatpush1.bf16.msra.mxu0 0
    %3849 = vmatprep.subr.bf16.mxu0 0
    %3850 = vmatpush1.bf16.msra.mxu0 0
    %3851 = vmatprep.subr.bf16.mxu0 0
    %3852 = vmatpush1.bf16.msra.mxu0 0
    %3853 = vmatprep.subr.bf16.mxu0 0
    %3854 = vmatpush1.bf16.msra.mxu0 0
    %3855 = vmatprep.subr.bf16.mxu0 0
    %3856 = vmatpush1.bf16.msra.mxu0 0
    %3857 = vmatprep.subr.bf16.mxu0 0
    %3858 = vmatpush1.bf16.msra.mxu0 0
    %3859 = vmatprep.subr.bf16.mxu0 0
    %3860 = vmatpush1.bf16.msra.mxu0 0
    %3861 = vmatprep.subr.bf16.mxu0 0
    %3862 = vmatpush1.bf16.msra.mxu0 0
    %3863 = vmatprep.mubr.bf16.mxu0 0
    %3864 = vmatmul.mubr.bf16.gmra.mrb[0].mxu0 %v3695
    %v3865 = vpop.f32.mrb[0].mxu0
    %v3866 = vadd.f32 %v3592, %v3865
    %v3867 = vpop.f32.mrb[0].mxu0
    %v3868 = vadd.f32 %v3593, %v3867
    %v3869 = vpop.f32.mrb[0].mxu0
    %v3870 = vadd.f32 %v3596, %v3869
    %v3871 = vpop.f32.mrb[0].mxu0
    %v3872 = vadd.f32 %v3597, %v3871
    %3873 = vmatprep.mubr.bf16.mxu0 0
    %3874 = vmatmul.mubr.bf16.gmra.mrb[0].mxu0 %v3698
    %v3875 = vpop.f32.mrb[0].mxu0
    %v3876 = vadd.f32 %v3600, %v3875
    %v3877 = vpop.f32.mrb[0].mxu0
    %v3878 = vadd.f32 %v3601, %v3877
    %v3879 = vpop.f32.mrb[0].mxu0
    %v3880 = vadd.f32 %v3604, %v3879
    %v3881 = vpop.f32.mrb[0].mxu0
    %v3882 = vadd.f32 %v3605, %v3881
    %3883 = vmatprep.mubr.bf16.mxu0 0
    %3884 = vmatmul.mubr.bf16.gmra.mrb[0].mxu0 %v3701
    %v3885 = vpop.f32.mrb[0].mxu0
    %v3886 = vadd.f32 %v3608, %v3885
    %v3887 = vpop.f32.mrb[0].mxu0
    %v3888 = vadd.f32 %v3609, %v3887
    %v3889 = vpop.f32.mrb[0].mxu0
    %v3890 = vadd.f32 %v3612, %v3889
    %v3891 = vpop.f32.mrb[0].mxu0
    %v3892 = vadd.f32 %v3613, %v3891
    %3893 = vmatprep.mubr.bf16.mxu0 0
    %3894 = vmatmul.mubr.bf16.gmra.mrb[0].mxu0 %v3704
    %v3895 = vpop.f32.mrb[0].mxu0
    %v3896 = vadd.f32 %v3616, %v3895
    %v3897 = vpop.f32.mrb[0].mxu0
    %v3898 = vadd.f32 %v3617, %v3897
    %v3899 = vpop.f32.mrb[0].mxu0
    %v3900 = vadd.f32 %v3620, %v3899
    %v3901 = vpop.f32.mrb[0].mxu0
    %v3902 = vadd.f32 %v3621, %v3901
    %3903 = vmatprep.mubr.bf16.mxu0 0
    %3904 = vmatmul.mubr.bf16.gmra.mrb[0].mxu0 %v3707
    %v3905 = vpop.f32.mrb[0].mxu0
    %v3906 = vadd.f32 %v3624, %v3905
    %v3907 = vpop.f32.mrb[0].mxu0
    %v3908 = vadd.f32 %v3625, %v3907
    %v3909 = vpop.f32.mrb[0].mxu0
    %v3910 = vadd.f32 %v3628, %v3909
    %v3911 = vpop.f32.mrb[0].mxu0
    %v3912 = vadd.f32 %v3629, %v3911
    %3913 = vmatprep.mubr.bf16.mxu0 0
    %3914 = vmatmul.mubr.bf16.gmra.mrb[0].mxu0 %v3710
    %v3915 = vpop.f32.mrb[0].mxu0
    %v3916 = vadd.f32 %v3632, %v3915
    %v3917 = vpop.f32.mrb[0].mxu0
    %v3918 = vadd.f32 %v3633, %v3917
    %v3919 = vpop.f32.mrb[0].mxu0
    %v3920 = vadd.f32 %v3636, %v3919
    %v3921 = vpop.f32.mrb[0].mxu0
    %v3922 = vadd.f32 %v3637, %v3921
    %3923 = vmatprep.mubr.bf16.mxu0 0
    %3924 = vmatmul.mubr.bf16.gmra.mrb[0].mxu0 %v3713
    %v3925 = vpop.f32.mrb[0].mxu0
    %v3926 = vadd.f32 %v3640, %v3925
    %v3927 = vpop.f32.mrb[0].mxu0
    %v3928 = vadd.f32 %v3641, %v3927
    %v3929 = vpop.f32.mrb[0].mxu0
    %v3930 = vadd.f32 %v3644, %v3929
    %v3931 = vpop.f32.mrb[0].mxu0
    %v3932 = vadd.f32 %v3645, %v3931
    %3933 = vmatprep.mubr.bf16.mxu0 0
    %3934 = vmatmul.mubr.bf16.gmra.mrb[0].mxu0 %v3716
    %v3935 = vpop.f32.mrb[0].mxu0
    %v3936 = vadd.f32 %v3648, %v3935
    %v3937 = vpop.f32.mrb[0].mxu0
    %v3938 = vadd.f32 %v3649, %v3937
    %v3939 = vpop.f32.mrb[0].mxu0
    %v3940 = vadd.f32 %v3652, %v3939
    %v3941 = vpop.f32.mrb[0].mxu0
    %v3942 = vadd.f32 %v3653, %v3941
    %3943 = vdwg.mxu0
    %v3944 = vadd.f32 %v3510, %v3753
    %v3945 = vadd.f32 %v3511, %v3755
    %v3946 = vadd.f32 %v3512, %v3866
    %v3947 = vadd.f32 %v3513, %v3868
    %v3948 = vadd.f32 %v3514, %v3757
    %v3949 = vadd.f32 %v3515, %v3759
    %v3950 = vadd.f32 %v3516, %v3870
    %v3951 = vadd.f32 %v3517, %v3872
    %v3952 = vadd.f32 %v3518, %v3763
    %v3953 = vadd.f32 %v3519, %v3765
    %v3954 = vadd.f32 %v3520, %v3876
    %v3955 = vadd.f32 %v3521, %v3878
    %v3956 = vadd.f32 %v3522, %v3767
    %v3957 = vadd.f32 %v3523, %v3769
    %v3958 = vadd.f32 %v3524, %v3880
    %v3959 = vadd.f32 %v3525, %v3882
    %v3960 = vadd.f32 %v3526, %v3773
    %v3961 = vadd.f32 %v3527, %v3775
    %v3962 = vadd.f32 %v3528, %v3886
    %v3963 = vadd.f32 %v3529, %v3888
    %v3964 = vadd.f32 %v3530, %v3777
    %v3965 = vadd.f32 %v3531, %v3779
    %v3966 = vadd.f32 %v3532, %v3890
    %v3967 = vadd.f32 %v3533, %v3892
    %v3968 = vadd.f32 %v3534, %v3783
    %v3969 = vadd.f32 %v3535, %v3785
    %v3970 = vadd.f32 %v3536, %v3896
    %v3971 = vadd.f32 %v3537, %v3898
    %v3972 = vadd.f32 %v3538, %v3787
    %v3973 = vadd.f32 %v3539, %v3789
    %v3974 = vadd.f32 %v3540, %v3900
    %v3975 = vadd.f32 %v3541, %v3902
    %v3976 = vadd.f32 %v3542, %v3793
    %v3977 = vadd.f32 %v3543, %v3795
    %v3978 = vadd.f32 %v3544, %v3906
    %v3979 = vadd.f32 %v3545, %v3908
    %v3980 = vadd.f32 %v3546, %v3797
    %v3981 = vadd.f32 %v3547, %v3799
    %v3982 = vadd.f32 %v3548, %v3910
    %v3983 = vadd.f32 %v3549, %v3912
    %v3984 = vadd.f32 %v3550, %v3803
    %v3985 = vadd.f32 %v3551, %v3805
    %v3986 = vadd.f32 %v3552, %v3916
    %v3987 = vadd.f32 %v3553, %v3918
    %v3988 = vadd.f32 %v3554, %v3807
    %v3989 = vadd.f32 %v3555, %v3809
    %v3990 = vadd.f32 %v3556, %v3920
    %v3991 = vadd.f32 %v3557, %v3922
    %v3992 = vadd.f32 %v3558, %v3813
    %v3993 = vadd.f32 %v3559, %v3815
    %v3994 = vadd.f32 %v3560, %v3926
    %v3995 = vadd.f32 %v3561, %v3928
    %v3996 = vadd.f32 %v3562, %v3817
    %v3997 = vadd.f32 %v3563, %v3819
    %v3998 = vadd.f32 %v3564, %v3930
    %v3999 = vadd.f32 %v3565, %v3932
    %v4000 = vadd.f32 %v3566, %v3823
    %v4001 = vadd.f32 %v3567, %v3825
    %v4002 = vadd.f32 %v3568, %v3936
    %v4003 = vadd.f32 %v3569, %v3938
    %v4004 = vadd.f32 %v3570, %v3827
    %v4005 = vadd.f32 %v3571, %v3829
    %v4006 = vadd.f32 %v3572, %v3940
    %v4007 = vadd.f32 %v3573, %v3942
    %v4008 = vpack.c.bf16 %v3948, %v3944
    %v4009 = vpack.c.bf16 %v3949, %v3945
    %v4010 = vpack.c.bf16 %v3950, %v3946
    %v4011 = vpack.c.bf16 %v3951, %v3947
    %v4012 = vpack.c.bf16 %v3956, %v3952
    %v4013 = vpack.c.bf16 %v3957, %v3953
    %v4014 = vpack.c.bf16 %v3958, %v3954
    %v4015 = vpack.c.bf16 %v3959, %v3955
    %v4016 = vpack.c.bf16 %v3964, %v3960
    %v4017 = vpack.c.bf16 %v3965, %v3961
    %v4018 = vpack.c.bf16 %v3966, %v3962
    %v4019 = vpack.c.bf16 %v3967, %v3963
    %v4020 = vpack.c.bf16 %v3972, %v3968
    %v4021 = vpack.c.bf16 %v3973, %v3969
    %v4022 = vpack.c.bf16 %v3974, %v3970
    %v4023 = vpack.c.bf16 %v3975, %v3971
    %v4024 = vpack.c.bf16 %v3980, %v3976
    %v4025 = vpack.c.bf16 %v3981, %v3977
    %v4026 = vpack.c.bf16 %v3982, %v3978
    %v4027 = vpack.c.bf16 %v3983, %v3979
    %v4028 = vpack.c.bf16 %v3988, %v3984
    %v4029 = vpack.c.bf16 %v3989, %v3985
    %v4030 = vpack.c.bf16 %v3990, %v3986
    %v4031 = vpack.c.bf16 %v3991, %v3987
    %v4032 = vpack.c.bf16 %v3996, %v3992
    %v4033 = vpack.c.bf16 %v3997, %v3993
    %v4034 = vpack.c.bf16 %v3998, %v3994
    %v4035 = vpack.c.bf16 %v3999, %v3995
    %v4036 = vpack.c.bf16 %v4004, %v4000
    %v4037 = vpack.c.bf16 %v4005, %v4001
    %v4038 = vpack.c.bf16 %v4006, %v4002
    %v4039 = vpack.c.bf16 %v4007, %v4003
    %v4040 = vld [vmem:[%s29] sm:$0xf]
    %v4041 = vld [vmem:[%s29 + $0x4] sm:$0xf]
    %v4042 = vld [vmem:[%s29 + $0x8] sm:$0xf]
    %v4043 = vld [vmem:[%s29 + $0xc] sm:$0xf]
    %v4044 = vld [vmem:[%s29 + $0x10] sm:$0xf]
    %v4045 = vld [vmem:[%s29 + $0x14] sm:$0xf]
    %v4046 = vld [vmem:[%s29 + $0x18] sm:$0xf]
    %v4047 = vld [vmem:[%s29 + $0x1c] sm:$0xf]
    %v4048 = vld [vmem:[%s29 + $0x20] sm:$0xf]
    %v4049 = vld [vmem:[%s29 + $0x24] sm:$0xf]
    %v4050 = vld [vmem:[%s29 + $0x28] sm:$0xf]
    %v4051 = vld [vmem:[%s29 + $0x2c] sm:$0xf]
    %v4052 = vld [vmem:[%s29 + $0x30] sm:$0xf]
    %v4053 = vld [vmem:[%s29 + $0x34] sm:$0xf]
    %v4054 = vld [vmem:[%s29 + $0x38] sm:$0xf]
    %v4055 = vld [vmem:[%s29 + $0x3c] sm:$0xf]
    %v4056 = vld [vmem:[%s29 + $0x40] sm:$0xf]
    %v4057 = vld [vmem:[%s29 + $0x44] sm:$0xf]
    %v4058 = vld [vmem:[%s29 + $0x48] sm:$0xf]
    %v4059 = vld [vmem:[%s29 + $0x4c] sm:$0xf]
    %v4060 = vld [vmem:[%s29 + $0x50] sm:$0xf]
    %v4061 = vld [vmem:[%s29 + $0x54] sm:$0xf]
    %v4062 = vld [vmem:[%s29 + $0x58] sm:$0xf]
    %v4063 = vld [vmem:[%s29 + $0x5c] sm:$0xf]
    %v4064 = vld [vmem:[%s29 + $0x60] sm:$0xf]
    %v4065 = vld [vmem:[%s29 + $0x64] sm:$0xf]
    %v4066 = vld [vmem:[%s29 + $0x68] sm:$0xf]
    %v4067 = vld [vmem:[%s29 + $0x6c] sm:$0xf]
    %v4068 = vld [vmem:[%s29 + $0x70] sm:$0xf]
    %v4069 = vld [vmem:[%s29 + $0x74] sm:$0xf]
    %v4070 = vld [vmem:[%s29 + $0x78] sm:$0xf]
    %v4071 = vld [vmem:[%s29 + $0x7c] sm:$0xf]
    %v4072 = vld [vmem:[%s29 + $0x80] sm:$0xf]
    %v4073 = vld [vmem:[%s29 + $0x84] sm:$0xf]
    %v4074 = vld [vmem:[%s29 + $0x88] sm:$0xf]
    %v4075 = vld [vmem:[%s29 + $0x8c] sm:$0xf]
    %v4076 = vld [vmem:[%s29 + $0x90] sm:$0xf]
    %v4077 = vld [vmem:[%s29 + $0x94] sm:$0xf]
    %v4078 = vld [vmem:[%s29 + $0x98] sm:$0xf]
    %v4079 = vld [vmem:[%s29 + $0x9c] sm:$0xf]
    %v4080 = vld [vmem:[%s29 + $0xa0] sm:$0xf]
    %v4081 = vld [vmem:[%s29 + $0xa4] sm:$0xf]
    %v4082 = vld [vmem:[%s29 + $0xa8] sm:$0xf]
    %v4083 = vld [vmem:[%s29 + $0xac] sm:$0xf]
    %v4084 = vld [vmem:[%s29 + $0xb0] sm:$0xf]
    %v4085 = vld [vmem:[%s29 + $0xb4] sm:$0xf]
    %v4086 = vld [vmem:[%s29 + $0xb8] sm:$0xf]
    %v4087 = vld [vmem:[%s29 + $0xbc] sm:$0xf]
    %v4088 = vld [vmem:[%s29 + $0xc0] sm:$0xf]
    %v4089 = vld [vmem:[%s29 + $0xc4] sm:$0xf]
    %v4090 = vld [vmem:[%s29 + $0xc8] sm:$0xf]
    %v4091 = vld [vmem:[%s29 + $0xcc] sm:$0xf]
    %v4092 = vld [vmem:[%s29 + $0xd0] sm:$0xf]
    %v4093 = vld [vmem:[%s29 + $0xd4] sm:$0xf]
    %v4094 = vld [vmem:[%s29 + $0xd8] sm:$0xf]
    %v4095 = vld [vmem:[%s29 + $0xdc] sm:$0xf]
    %v4096 = vld [vmem:[%s29 + $0xe0] sm:$0xf]
    %v4097 = vld [vmem:[%s29 + $0xe4] sm:$0xf]
    %v4098 = vld [vmem:[%s29 + $0xe8] sm:$0xf]
    %v4099 = vld [vmem:[%s29 + $0xec] sm:$0xf]
    %v4100 = vld [vmem:[%s29 + $0xf0] sm:$0xf]
    %v4101 = vld [vmem:[%s29 + $0xf4] sm:$0xf]
    %v4102 = vld [vmem:[%s29 + $0xf8] sm:$0xf]
    %v4103 = vld [vmem:[%s29 + $0xfc] sm:$0xf]
    %v4104 = vld [vmem:[#allocation9] sm:$0x1]
    %v4106 = vlaneseq
    %v4107 = vshrl.u32 %v4106, 7
    %v4108 = vsub.s32 0, %v4107
    %v4109 = vrot.slane %v4104, %v4108
    %v4175 = vunpack.c.l.b16 %v4040
    %v4176 = vunpack.c.l.b16 %v4041
    %v4177 = vunpack.c.l.b16 %v4042
    %v4178 = vunpack.c.l.b16 %v4043
    %v4179 = vunpack.c.l.b16 %v4044
    %v4180 = vunpack.c.l.b16 %v4045
    %v4181 = vunpack.c.l.b16 %v4046
    %v4182 = vunpack.c.l.b16 %v4047
    %v4183 = vunpack.c.l.b16 %v4048
    %v4184 = vunpack.c.l.b16 %v4049
    %v4185 = vunpack.c.l.b16 %v4050
    %v4186 = vunpack.c.l.b16 %v4051
    %v4187 = vunpack.c.l.b16 %v4052
    %v4188 = vunpack.c.l.b16 %v4053
    %v4189 = vunpack.c.l.b16 %v4054
    %v4190 = vunpack.c.l.b16 %v4055
    %v4191 = vunpack.c.l.b16 %v4056
    %v4192 = vunpack.c.l.b16 %v4057
    %v4193 = vunpack.c.l.b16 %v4058
    %v4194 = vunpack.c.l.b16 %v4059
    %v4195 = vunpack.c.l.b16 %v4060
    %v4196 = vunpack.c.l.b16 %v4061
    %v4197 = vunpack.c.l.b16 %v4062
    %v4198 = vunpack.c.l.b16 %v4063
    %v4199 = vunpack.c.l.b16 %v4064
    %v4200 = vunpack.c.l.b16 %v4065
    %v4201 = vunpack.c.l.b16 %v4066
    %v4202 = vunpack.c.l.b16 %v4067
    %v4203 = vunpack.c.l.b16 %v4068
    %v4204 = vunpack.c.l.b16 %v4069
    %v4205 = vunpack.c.l.b16 %v4070
    %v4206 = vunpack.c.l.b16 %v4071
    %v4207 = vunpack.c.l.b16 %v4072
    %v4208 = vunpack.c.l.b16 %v4073
    %v4209 = vunpack.c.l.b16 %v4074
    %v4210 = vunpack.c.l.b16 %v4075
    %v4211 = vunpack.c.l.b16 %v4076
    %v4212 = vunpack.c.l.b16 %v4077
    %v4213 = vunpack.c.l.b16 %v4078
    %v4214 = vunpack.c.l.b16 %v4079
    %v4215 = vunpack.c.l.b16 %v4080
    %v4216 = vunpack.c.l.b16 %v4081
    %v4217 = vunpack.c.l.b16 %v4082
    %v4218 = vunpack.c.l.b16 %v4083
    %v4219 = vunpack.c.l.b16 %v4084
    %v4220 = vunpack.c.l.b16 %v4085
    %v4221 = vunpack.c.l.b16 %v4086
    %v4222 = vunpack.c.l.b16 %v4087
    %v4223 = vunpack.c.l.b16 %v4088
    %v4224 = vunpack.c.l.b16 %v4089
    %v4225 = vunpack.c.l.b16 %v4090
    %v4226 = vunpack.c.l.b16 %v4091
    %v4227 = vunpack.c.l.b16 %v4092
    %v4228 = vunpack.c.l.b16 %v4093
    %v4229 = vunpack.c.l.b16 %v4094
    %v4230 = vunpack.c.l.b16 %v4095
    %v4231 = vunpack.c.l.b16 %v4096
    %v4232 = vunpack.c.l.b16 %v4097
    %v4233 = vunpack.c.l.b16 %v4098
    %v4234 = vunpack.c.l.b16 %v4099
    %v4235 = vunpack.c.l.b16 %v4100
    %v4236 = vunpack.c.l.b16 %v4101
    %v4237 = vunpack.c.l.b16 %v4102
    %v4238 = vunpack.c.l.b16 %v4103
    %v4239 = vpack.c.b16 %v4176, %v4175
    %v4240 = vpack.c.b16 %v4178, %v4177
    %v4241 = vpack.c.b16 %v4180, %v4179
    %v4242 = vpack.c.b16 %v4182, %v4181
    %v4243 = vpack.c.b16 %v4184, %v4183
    %v4244 = vpack.c.b16 %v4186, %v4185
    %v4245 = vpack.c.b16 %v4188, %v4187
    %v4246 = vpack.c.b16 %v4190, %v4189
    %v4247 = vpack.c.b16 %v4192, %v4191
    %v4248 = vpack.c.b16 %v4194, %v4193
    %v4249 = vpack.c.b16 %v4196, %v4195
    %v4250 = vpack.c.b16 %v4198, %v4197
    %v4251 = vpack.c.b16 %v4200, %v4199
    %v4252 = vpack.c.b16 %v4202, %v4201
    %v4253 = vpack.c.b16 %v4204, %v4203
    %v4254 = vpack.c.b16 %v4206, %v4205
    %v4255 = vpack.c.b16 %v4208, %v4207
    %v4256 = vpack.c.b16 %v4210, %v4209
    %v4257 = vpack.c.b16 %v4212, %v4211
    %v4258 = vpack.c.b16 %v4214, %v4213
    %v4259 = vpack.c.b16 %v4216, %v4215
    %v4260 = vpack.c.b16 %v4218, %v4217
    %v4261 = vpack.c.b16 %v4220, %v4219
    %v4262 = vpack.c.b16 %v4222, %v4221
    %v4263 = vpack.c.b16 %v4224, %v4223
    %v4264 = vpack.c.b16 %v4226, %v4225
    %v4265 = vpack.c.b16 %v4228, %v4227
    %v4266 = vpack.c.b16 %v4230, %v4229
    %v4267 = vpack.c.b16 %v4232, %v4231
    %v4268 = vpack.c.b16 %v4234, %v4233
    %v4269 = vpack.c.b16 %v4236, %v4235
    %v4270 = vpack.c.b16 %v4238, %v4237
    %4303 = vmatprep.subr.bf16.mxu0 0
    %4304 = vmatpush1.bf16.msra.mxu0 %v4239
    %4305 = vmatprep.subr.bf16.mxu0 0
    %4306 = vmatpush1.bf16.msra.mxu0 %v4240
    %4307 = vmatprep.subr.bf16.mxu0 0
    %4308 = vmatpush1.bf16.msra.mxu0 %v4241
    %4309 = vmatprep.subr.bf16.mxu0 0
    %4310 = vmatpush1.bf16.msra.mxu0 %v4242
    %4311 = vmatprep.subr.bf16.mxu0 0
    %4312 = vmatpush1.bf16.msra.mxu0 %v4243
    %4313 = vmatprep.subr.bf16.mxu0 0
    %4314 = vmatpush1.bf16.msra.mxu0 %v4244
    %4315 = vmatprep.subr.bf16.mxu0 0
    %4316 = vmatpush1.bf16.msra.mxu0 %v4245
    %4317 = vmatprep.subr.bf16.mxu0 0
    %4318 = vmatpush1.bf16.msra.mxu0 %v4246
    %4319 = vmatprep.subr.bf16.mxu0 0
    %4320 = vmatpush1.bf16.msra.mxu0 %v4247
    %4321 = vmatprep.subr.bf16.mxu0 0
    %4322 = vmatpush1.bf16.msra.mxu0 %v4248
    %4323 = vmatprep.subr.bf16.mxu0 0
    %4324 = vmatpush1.bf16.msra.mxu0 %v4249
    %4325 = vmatprep.subr.bf16.mxu0 0
    %4326 = vmatpush1.bf16.msra.mxu0 %v4250
    %4327 = vmatprep.subr.bf16.mxu0 0
    %4328 = vmatpush1.bf16.msra.mxu0 %v4251
    %4329 = vmatprep.subr.bf16.mxu0 0
    %4330 = vmatpush1.bf16.msra.mxu0 %v4252
    %4331 = vmatprep.subr.bf16.mxu0 0
    %4332 = vmatpush1.bf16.msra.mxu0 %v4253
    %4333 = vmatprep.subr.bf16.mxu0 0
    %4334 = vmatpush1.bf16.msra.mxu0 %v4254
    %4335 = vmatprep.mubr.bf16.mxu0 %v4009
    %4336 = vmatmul.mubr.bf16.gmra.mrb[0].mxu0 %v4008
    %v4337 = vpop.f32.mrb[0].mxu0
    %v4338 = vadd.f32 %v4109, %v4337
    %v4339 = vpop.f32.mrb[0].mxu0
    %v4340 = vpop.f32.mrb[0].mxu0
    %v4341 = vadd.f32 %v4109, %v4340
    %v4342 = vpop.f32.mrb[0].mxu0
    %4343 = vmatprep.mubr.bf16.mxu0 %v4013
    %4344 = vmatmul.mubr.bf16.gmra.mrb[0].mxu0 %v4012
    %v4345 = vpop.f32.mrb[0].mxu0
    %v4346 = vadd.f32 %v4109, %v4345
    %v4347 = vpop.f32.mrb[0].mxu0
    %v4348 = vpop.f32.mrb[0].mxu0
    %v4349 = vadd.f32 %v4109, %v4348
    %v4350 = vpop.f32.mrb[0].mxu0
    %4351 = vmatprep.mubr.bf16.mxu0 %v4017
    %4352 = vmatmul.mubr.bf16.gmra.mrb[0].mxu0 %v4016
    %v4353 = vpop.f32.mrb[0].mxu0
    %v4354 = vadd.f32 %v4109, %v4353
    %v4355 = vpop.f32.mrb[0].mxu0
    %v4356 = vpop.f32.mrb[0].mxu0
    %v4357 = vadd.f32 %v4109, %v4356
    %v4358 = vpop.f32.mrb[0].mxu0
    %4359 = vmatprep.mubr.bf16.mxu0 %v4021
    %4360 = vmatmul.mubr.bf16.gmra.mrb[0].mxu0 %v4020
    %v4361 = vpop.f32.mrb[0].mxu0
    %v4362 = vadd.f32 %v4109, %v4361
    %v4363 = vpop.f32.mrb[0].mxu0
    %v4364 = vpop.f32.mrb[0].mxu0
    %v4365 = vadd.f32 %v4109, %v4364
    %v4366 = vpop.f32.mrb[0].mxu0
    %4367 = vmatprep.mubr.bf16.mxu0 %v4025
    %4368 = vmatmul.mubr.bf16.gmra.mrb[0].mxu0 %v4024
    %v4369 = vpop.f32.mrb[0].mxu0
    %v4370 = vadd.f32 %v4109, %v4369
    %v4371 = vpop.f32.mrb[0].mxu0
    %v4372 = vpop.f32.mrb[0].mxu0
    %v4373 = vadd.f32 %v4109, %v4372
    %v4374 = vpop.f32.mrb[0].mxu0
    %4375 = vmatprep.mubr.bf16.mxu0 %v4029
    %4376 = vmatmul.mubr.bf16.gmra.mrb[0].mxu0 %v4028
    %v4377 = vpop.f32.mrb[0].mxu0
    %v4378 = vadd.f32 %v4109, %v4377
    %v4379 = vpop.f32.mrb[0].mxu0
    %v4380 = vpop.f32.mrb[0].mxu0
    %v4381 = vadd.f32 %v4109, %v4380
    %v4382 = vpop.f32.mrb[0].mxu0
    %4383 = vmatprep.mubr.bf16.mxu0 %v4033
    %4384 = vmatmul.mubr.bf16.gmra.mrb[0].mxu0 %v4032
    %v4385 = vpop.f32.mrb[0].mxu0
    %v4386 = vadd.f32 %v4109, %v4385
    %v4387 = vpop.f32.mrb[0].mxu0
    %v4388 = vpop.f32.mrb[0].mxu0
    %v4389 = vadd.f32 %v4109, %v4388
    %v4390 = vpop.f32.mrb[0].mxu0
    %4391 = vmatprep.mubr.bf16.mxu0 %v4037
    %4392 = vmatmul.mubr.bf16.gmra.mrb[0].mxu0 %v4036
    %v4393 = vpop.f32.mrb[0].mxu0
    %v4394 = vadd.f32 %v4109, %v4393
    %v4395 = vpop.f32.mrb[0].mxu0
    %v4396 = vpop.f32.mrb[0].mxu0
    %v4397 = vadd.f32 %v4109, %v4396
    %v4398 = vpop.f32.mrb[0].mxu0
    %4399 = vdwg.mxu0
    %4400 = vmatprep.subr.bf16.mxu0 0
    %4401 = vmatpush1.bf16.msra.mxu0 %v4255
    %4402 = vmatprep.subr.bf16.mxu0 0
    %4403 = vmatpush1.bf16.msra.mxu0 %v4256
    %4404 = vmatprep.subr.bf16.mxu0 0
    %4405 = vmatpush1.bf16.msra.mxu0 %v4257
    %4406 = vmatprep.subr.bf16.mxu0 0
    %4407 = vmatpush1.bf16.msra.mxu0 %v4258
    %4408 = vmatprep.subr.bf16.mxu0 0
    %4409 = vmatpush1.bf16.msra.mxu0 %v4259
    %4410 = vmatprep.subr.bf16.mxu0 0
    %4411 = vmatpush1.bf16.msra.mxu0 %v4260
    %4412 = vmatprep.subr.bf16.mxu0 0
    %4413 = vmatpush1.bf16.msra.mxu0 %v4261
    %4414 = vmatprep.subr.bf16.mxu0 0
    %4415 = vmatpush1.bf16.msra.mxu0 %v4262
    %4416 = vmatprep.subr.bf16.mxu0 0
    %4417 = vmatpush1.bf16.msra.mxu0 %v4263
    %4418 = vmatprep.subr.bf16.mxu0 0
    %4419 = vmatpush1.bf16.msra.mxu0 %v4264
    %4420 = vmatprep.subr.bf16.mxu0 0
    %4421 = vmatpush1.bf16.msra.mxu0 %v4265
    %4422 = vmatprep.subr.bf16.mxu0 0
    %4423 = vmatpush1.bf16.msra.mxu0 %v4266
    %4424 = vmatprep.subr.bf16.mxu0 0
    %4425 = vmatpush1.bf16.msra.mxu0 %v4267
    %4426 = vmatprep.subr.bf16.mxu0 0
    %4427 = vmatpush1.bf16.msra.mxu0 %v4268
    %4428 = vmatprep.subr.bf16.mxu0 0
    %4429 = vmatpush1.bf16.msra.mxu0 %v4269
    %4430 = vmatprep.subr.bf16.mxu0 0
    %4431 = vmatpush1.bf16.msra.mxu0 %v4270
    %4432 = vmatprep.mubr.bf16.mxu0 %v4011
    %4433 = vmatmul.mubr.bf16.gmra.mrb[0].mxu0 %v4010
    %v4434 = vpop.f32.mrb[0].mxu0
    %v4435 = vadd.f32 %v4338, %v4434
    %v4436 = vpop.f32.mrb[0].mxu0
    %v4437 = vpop.f32.mrb[0].mxu0
    %v4438 = vadd.f32 %v4341, %v4437
    %v4439 = vpop.f32.mrb[0].mxu0
    %4440 = vmatprep.mubr.bf16.mxu0 %v4015
    %4441 = vmatmul.mubr.bf16.gmra.mrb[0].mxu0 %v4014
    %v4442 = vpop.f32.mrb[0].mxu0
    %v4443 = vadd.f32 %v4346, %v4442
    %v4444 = vpop.f32.mrb[0].mxu0
    %v4445 = vpop.f32.mrb[0].mxu0
    %v4446 = vadd.f32 %v4349, %v4445
    %v4447 = vpop.f32.mrb[0].mxu0
    %4448 = vmatprep.mubr.bf16.mxu0 %v4019
    %4449 = vmatmul.mubr.bf16.gmra.mrb[0].mxu0 %v4018
    %v4450 = vpop.f32.mrb[0].mxu0
    %v4451 = vadd.f32 %v4354, %v4450
    %v4452 = vpop.f32.mrb[0].mxu0
    %v4453 = vpop.f32.mrb[0].mxu0
    %v4454 = vadd.f32 %v4357, %v4453
    %v4455 = vpop.f32.mrb[0].mxu0
    %4456 = vmatprep.mubr.bf16.mxu0 %v4023
    %4457 = vmatmul.mubr.bf16.gmra.mrb[0].mxu0 %v4022
    %v4458 = vpop.f32.mrb[0].mxu0
    %v4459 = vadd.f32 %v4362, %v4458
    %v4460 = vpop.f32.mrb[0].mxu0
    %v4461 = vpop.f32.mrb[0].mxu0
    %v4462 = vadd.f32 %v4365, %v4461
    %v4463 = vpop.f32.mrb[0].mxu0
    %4464 = vmatprep.mubr.bf16.mxu0 %v4027
    %4465 = vmatmul.mubr.bf16.gmra.mrb[0].mxu0 %v4026
    %v4466 = vpop.f32.mrb[0].mxu0
    %v4467 = vadd.f32 %v4370, %v4466
    %v4468 = vpop.f32.mrb[0].mxu0
    %v4469 = vpop.f32.mrb[0].mxu0
    %v4470 = vadd.f32 %v4373, %v4469
    %v4471 = vpop.f32.mrb[0].mxu0
    %4472 = vmatprep.mubr.bf16.mxu0 %v4031
    %4473 = vmatmul.mubr.bf16.gmra.mrb[0].mxu0 %v4030
    %v4474 = vpop.f32.mrb[0].mxu0
    %v4475 = vadd.f32 %v4378, %v4474
    %v4476 = vpop.f32.mrb[0].mxu0
    %v4477 = vpop.f32.mrb[0].mxu0
    %v4478 = vadd.f32 %v4381, %v4477
    %v4479 = vpop.f32.mrb[0].mxu0
    %4480 = vmatprep.mubr.bf16.mxu0 %v4035
    %4481 = vmatmul.mubr.bf16.gmra.mrb[0].mxu0 %v4034
    %v4482 = vpop.f32.mrb[0].mxu0
    %v4483 = vadd.f32 %v4386, %v4482
    %v4484 = vpop.f32.mrb[0].mxu0
    %v4485 = vpop.f32.mrb[0].mxu0
    %v4486 = vadd.f32 %v4389, %v4485
    %v4487 = vpop.f32.mrb[0].mxu0
    %4488 = vmatprep.mubr.bf16.mxu0 %v4039
    %4489 = vmatmul.mubr.bf16.gmra.mrb[0].mxu0 %v4038
    %v4490 = vpop.f32.mrb[0].mxu0
    %v4491 = vadd.f32 %v4394, %v4490
    %v4492 = vpop.f32.mrb[0].mxu0
    %v4493 = vpop.f32.mrb[0].mxu0
    %v4494 = vadd.f32 %v4397, %v4493
    %v4495 = vpop.f32.mrb[0].mxu0
    %4496 = vdwg.mxu0
    %v4497 = vld [vmem:[%s31] sm:$0xf]
    %v4498 = vld [vmem:[%s31 + $0x4] sm:$0xf]
    %v4499 = vld [vmem:[%s31 + $0x8] sm:$0xf]
    %v4500 = vld [vmem:[%s31 + $0xc] sm:$0xf]
    %v4501 = vld [vmem:[%s31 + $0x10] sm:$0xf]
    %v4502 = vld [vmem:[%s31 + $0x14] sm:$0xf]
    %v4503 = vld [vmem:[%s31 + $0x18] sm:$0xf]
    %v4504 = vld [vmem:[%s31 + $0x1c] sm:$0xf]
    %v4505 = vld [vmem:[%s31 + $0x20] sm:$0xf]
    %v4506 = vld [vmem:[%s31 + $0x24] sm:$0xf]
    %v4507 = vld [vmem:[%s31 + $0x28] sm:$0xf]
    %v4508 = vld [vmem:[%s31 + $0x2c] sm:$0xf]
    %v4509 = vld [vmem:[%s31 + $0x30] sm:$0xf]
    %v4510 = vld [vmem:[%s31 + $0x34] sm:$0xf]
    %v4511 = vld [vmem:[%s31 + $0x38] sm:$0xf]
    %v4512 = vld [vmem:[%s31 + $0x3c] sm:$0xf]
    %v4513 = vld [vmem:[%s31 + $0x40] sm:$0xf]
    %v4514 = vld [vmem:[%s31 + $0x44] sm:$0xf]
    %v4515 = vld [vmem:[%s31 + $0x48] sm:$0xf]
    %v4516 = vld [vmem:[%s31 + $0x4c] sm:$0xf]
    %v4517 = vld [vmem:[%s31 + $0x50] sm:$0xf]
    %v4518 = vld [vmem:[%s31 + $0x54] sm:$0xf]
    %v4519 = vld [vmem:[%s31 + $0x58] sm:$0xf]
    %v4520 = vld [vmem:[%s31 + $0x5c] sm:$0xf]
    %v4521 = vld [vmem:[%s31 + $0x60] sm:$0xf]
    %v4522 = vld [vmem:[%s31 + $0x64] sm:$0xf]
    %v4523 = vld [vmem:[%s31 + $0x68] sm:$0xf]
    %v4524 = vld [vmem:[%s31 + $0x6c] sm:$0xf]
    %v4525 = vld [vmem:[%s31 + $0x70] sm:$0xf]
    %v4526 = vld [vmem:[%s31 + $0x74] sm:$0xf]
    %v4527 = vld [vmem:[%s31 + $0x78] sm:$0xf]
    %v4528 = vld [vmem:[%s31 + $0x7c] sm:$0xf]
    %v4529 = vld [vmem:[%s31 + $0x80] sm:$0xf]
    %v4530 = vld [vmem:[%s31 + $0x84] sm:$0xf]
    %v4531 = vld [vmem:[%s31 + $0x88] sm:$0xf]
    %v4532 = vld [vmem:[%s31 + $0x8c] sm:$0xf]
    %v4533 = vld [vmem:[%s31 + $0x90] sm:$0xf]
    %v4534 = vld [vmem:[%s31 + $0x94] sm:$0xf]
    %v4535 = vld [vmem:[%s31 + $0x98] sm:$0xf]
    %v4536 = vld [vmem:[%s31 + $0x9c] sm:$0xf]
    %v4537 = vld [vmem:[%s31 + $0xa0] sm:$0xf]
    %v4538 = vld [vmem:[%s31 + $0xa4] sm:$0xf]
    %v4539 = vld [vmem:[%s31 + $0xa8] sm:$0xf]
    %v4540 = vld [vmem:[%s31 + $0xac] sm:$0xf]
    %v4541 = vld [vmem:[%s31 + $0xb0] sm:$0xf]
    %v4542 = vld [vmem:[%s31 + $0xb4] sm:$0xf]
    %v4543 = vld [vmem:[%s31 + $0xb8] sm:$0xf]
    %v4544 = vld [vmem:[%s31 + $0xbc] sm:$0xf]
    %v4545 = vld [vmem:[%s31 + $0xc0] sm:$0xf]
    %v4546 = vld [vmem:[%s31 + $0xc4] sm:$0xf]
    %v4547 = vld [vmem:[%s31 + $0xc8] sm:$0xf]
    %v4548 = vld [vmem:[%s31 + $0xcc] sm:$0xf]
    %v4549 = vld [vmem:[%s31 + $0xd0] sm:$0xf]
    %v4550 = vld [vmem:[%s31 + $0xd4] sm:$0xf]
    %v4551 = vld [vmem:[%s31 + $0xd8] sm:$0xf]
    %v4552 = vld [vmem:[%s31 + $0xdc] sm:$0xf]
    %v4553 = vld [vmem:[%s31 + $0xe0] sm:$0xf]
    %v4554 = vld [vmem:[%s31 + $0xe4] sm:$0xf]
    %v4555 = vld [vmem:[%s31 + $0xe8] sm:$0xf]
    %v4556 = vld [vmem:[%s31 + $0xec] sm:$0xf]
    %v4557 = vld [vmem:[%s31 + $0xf0] sm:$0xf]
    %v4558 = vld [vmem:[%s31 + $0xf4] sm:$0xf]
    %v4559 = vld [vmem:[%s31 + $0xf8] sm:$0xf]
    %v4560 = vld [vmem:[%s31 + $0xfc] sm:$0xf]
    %v4561 = vld [vmem:[#allocation10] sm:$0x1]
    %v4563 = vlaneseq
    %v4564 = vshrl.u32 %v4563, 7
    %v4565 = vsub.s32 0, %v4564
    %v4566 = vrot.slane %v4561, %v4565
    %v4632 = vunpack.c.l.b16 %v4497
    %v4633 = vunpack.c.l.b16 %v4498
    %v4634 = vunpack.c.l.b16 %v4499
    %v4635 = vunpack.c.l.b16 %v4500
    %v4636 = vunpack.c.l.b16 %v4501
    %v4637 = vunpack.c.l.b16 %v4502
    %v4638 = vunpack.c.l.b16 %v4503
    %v4639 = vunpack.c.l.b16 %v4504
    %v4640 = vunpack.c.l.b16 %v4505
    %v4641 = vunpack.c.l.b16 %v4506
    %v4642 = vunpack.c.l.b16 %v4507
    %v4643 = vunpack.c.l.b16 %v4508
    %v4644 = vunpack.c.l.b16 %v4509
    %v4645 = vunpack.c.l.b16 %v4510
    %v4646 = vunpack.c.l.b16 %v4511
    %v4647 = vunpack.c.l.b16 %v4512
    %v4648 = vunpack.c.l.b16 %v4513
    %v4649 = vunpack.c.l.b16 %v4514
    %v4650 = vunpack.c.l.b16 %v4515
    %v4651 = vunpack.c.l.b16 %v4516
    %v4652 = vunpack.c.l.b16 %v4517
    %v4653 = vunpack.c.l.b16 %v4518
    %v4654 = vunpack.c.l.b16 %v4519
    %v4655 = vunpack.c.l.b16 %v4520
    %v4656 = vunpack.c.l.b16 %v4521
    %v4657 = vunpack.c.l.b16 %v4522
    %v4658 = vunpack.c.l.b16 %v4523
    %v4659 = vunpack.c.l.b16 %v4524
    %v4660 = vunpack.c.l.b16 %v4525
    %v4661 = vunpack.c.l.b16 %v4526
    %v4662 = vunpack.c.l.b16 %v4527
    %v4663 = vunpack.c.l.b16 %v4528
    %v4664 = vunpack.c.l.b16 %v4529
    %v4665 = vunpack.c.l.b16 %v4530
    %v4666 = vunpack.c.l.b16 %v4531
    %v4667 = vunpack.c.l.b16 %v4532
    %v4668 = vunpack.c.l.b16 %v4533
    %v4669 = vunpack.c.l.b16 %v4534
    %v4670 = vunpack.c.l.b16 %v4535
    %v4671 = vunpack.c.l.b16 %v4536
    %v4672 = vunpack.c.l.b16 %v4537
    %v4673 = vunpack.c.l.b16 %v4538
    %v4674 = vunpack.c.l.b16 %v4539
    %v4675 = vunpack.c.l.b16 %v4540
    %v4676 = vunpack.c.l.b16 %v4541
    %v4677 = vunpack.c.l.b16 %v4542
    %v4678 = vunpack.c.l.b16 %v4543
    %v4679 = vunpack.c.l.b16 %v4544
    %v4680 = vunpack.c.l.b16 %v4545
    %v4681 = vunpack.c.l.b16 %v4546
    %v4682 = vunpack.c.l.b16 %v4547
    %v4683 = vunpack.c.l.b16 %v4548
    %v4684 = vunpack.c.l.b16 %v4549
    %v4685 = vunpack.c.l.b16 %v4550
    %v4686 = vunpack.c.l.b16 %v4551
    %v4687 = vunpack.c.l.b16 %v4552
    %v4688 = vunpack.c.l.b16 %v4553
    %v4689 = vunpack.c.l.b16 %v4554
    %v4690 = vunpack.c.l.b16 %v4555
    %v4691 = vunpack.c.l.b16 %v4556
    %v4692 = vunpack.c.l.b16 %v4557
    %v4693 = vunpack.c.l.b16 %v4558
    %v4694 = vunpack.c.l.b16 %v4559
    %v4695 = vunpack.c.l.b16 %v4560
    %v4696 = vpack.c.b16 %v4633, %v4632
    %v4697 = vpack.c.b16 %v4635, %v4634
    %v4698 = vpack.c.b16 %v4637, %v4636
    %v4699 = vpack.c.b16 %v4639, %v4638
    %v4700 = vpack.c.b16 %v4641, %v4640
    %v4701 = vpack.c.b16 %v4643, %v4642
    %v4702 = vpack.c.b16 %v4645, %v4644
    %v4703 = vpack.c.b16 %v4647, %v4646
    %v4704 = vpack.c.b16 %v4649, %v4648
    %v4705 = vpack.c.b16 %v4651, %v4650
    %v4706 = vpack.c.b16 %v4653, %v4652
    %v4707 = vpack.c.b16 %v4655, %v4654
    %v4708 = vpack.c.b16 %v4657, %v4656
    %v4709 = vpack.c.b16 %v4659, %v4658
    %v4710 = vpack.c.b16 %v4661, %v4660
    %v4711 = vpack.c.b16 %v4663, %v4662
    %v4712 = vpack.c.b16 %v4665, %v4664
    %v4713 = vpack.c.b16 %v4667, %v4666
    %v4714 = vpack.c.b16 %v4669, %v4668
    %v4715 = vpack.c.b16 %v4671, %v4670
    %v4716 = vpack.c.b16 %v4673, %v4672
    %v4717 = vpack.c.b16 %v4675, %v4674
    %v4718 = vpack.c.b16 %v4677, %v4676
    %v4719 = vpack.c.b16 %v4679, %v4678
    %v4720 = vpack.c.b16 %v4681, %v4680
    %v4721 = vpack.c.b16 %v4683, %v4682
    %v4722 = vpack.c.b16 %v4685, %v4684
    %v4723 = vpack.c.b16 %v4687, %v4686
    %v4724 = vpack.c.b16 %v4689, %v4688
    %v4725 = vpack.c.b16 %v4691, %v4690
    %v4726 = vpack.c.b16 %v4693, %v4692
    %v4727 = vpack.c.b16 %v4695, %v4694
    %4760 = vmatprep.subr.bf16.mxu0 0
    %4761 = vmatpush1.bf16.msra.mxu0 %v4696
    %4762 = vmatprep.subr.bf16.mxu0 0
    %4763 = vmatpush1.bf16.msra.mxu0 %v4697
    %4764 = vmatprep.subr.bf16.mxu0 0
    %4765 = vmatpush1.bf16.msra.mxu0 %v4698
    %4766 = vmatprep.subr.bf16.mxu0 0
    %4767 = vmatpush1.bf16.msra.mxu0 %v4699
    %4768 = vmatprep.subr.bf16.mxu0 0
    %4769 = vmatpush1.bf16.msra.mxu0 %v4700
    %4770 = vmatprep.subr.bf16.mxu0 0
    %4771 = vmatpush1.bf16.msra.mxu0 %v4701
    %4772 = vmatprep.subr.bf16.mxu0 0
    %4773 = vmatpush1.bf16.msra.mxu0 %v4702
    %4774 = vmatprep.subr.bf16.mxu0 0
    %4775 = vmatpush1.bf16.msra.mxu0 %v4703
    %4776 = vmatprep.subr.bf16.mxu0 0
    %4777 = vmatpush1.bf16.msra.mxu0 %v4704
    %4778 = vmatprep.subr.bf16.mxu0 0
    %4779 = vmatpush1.bf16.msra.mxu0 %v4705
    %4780 = vmatprep.subr.bf16.mxu0 0
    %4781 = vmatpush1.bf16.msra.mxu0 %v4706
    %4782 = vmatprep.subr.bf16.mxu0 0
    %4783 = vmatpush1.bf16.msra.mxu0 %v4707
    %4784 = vmatprep.subr.bf16.mxu0 0
    %4785 = vmatpush1.bf16.msra.mxu0 %v4708
    %4786 = vmatprep.subr.bf16.mxu0 0
    %4787 = vmatpush1.bf16.msra.mxu0 %v4709
    %4788 = vmatprep.subr.bf16.mxu0 0
    %4789 = vmatpush1.bf16.msra.mxu0 %v4710
    %4790 = vmatprep.subr.bf16.mxu0 0
    %4791 = vmatpush1.bf16.msra.mxu0 %v4711
    %4792 = vmatprep.mubr.bf16.mxu0 %v4009
    %4793 = vmatmul.mubr.bf16.gmra.mrb[0].mxu0 %v4008
    %v4794 = vpop.f32.mrb[0].mxu0
    %v4795 = vadd.f32 %v4566, %v4794
    %v4796 = vpop.f32.mrb[0].mxu0
    %v4797 = vpop.f32.mrb[0].mxu0
    %v4798 = vadd.f32 %v4566, %v4797
    %v4799 = vpop.f32.mrb[0].mxu0
    %4800 = vmatprep.mubr.bf16.mxu0 %v4013
    %4801 = vmatmul.mubr.bf16.gmra.mrb[0].mxu0 %v4012
    %v4802 = vpop.f32.mrb[0].mxu0
    %v4803 = vadd.f32 %v4566, %v4802
    %v4804 = vpop.f32.mrb[0].mxu0
    %v4805 = vpop.f32.mrb[0].mxu0
    %v4806 = vadd.f32 %v4566, %v4805
    %v4807 = vpop.f32.mrb[0].mxu0
    %4808 = vmatprep.mubr.bf16.mxu0 %v4017
    %4809 = vmatmul.mubr.bf16.gmra.mrb[0].mxu0 %v4016
    %v4810 = vpop.f32.mrb[0].mxu0
    %v4811 = vadd.f32 %v4566, %v4810
    %v4812 = vpop.f32.mrb[0].mxu0
    %v4813 = vpop.f32.mrb[0].mxu0
    %v4814 = vadd.f32 %v4566, %v4813
    %v4815 = vpop.f32.mrb[0].mxu0
    %4816 = vmatprep.mubr.bf16.mxu0 %v4021
    %4817 = vmatmul.mubr.bf16.gmra.mrb[0].mxu0 %v4020
    %v4818 = vpop.f32.mrb[0].mxu0
    %v4819 = vadd.f32 %v4566, %v4818
    %v4820 = vpop.f32.mrb[0].mxu0
    %v4821 = vpop.f32.mrb[0].mxu0
    %v4822 = vadd.f32 %v4566, %v4821
    %v4823 = vpop.f32.mrb[0].mxu0
    %4824 = vmatprep.mubr.bf16.mxu0 %v4025
    %4825 = vmatmul.mubr.bf16.gmra.mrb[0].mxu0 %v4024
    %v4826 = vpop.f32.mrb[0].mxu0
    %v4827 = vadd.f32 %v4566, %v4826
    %v4828 = vpop.f32.mrb[0].mxu0
    %v4829 = vpop.f32.mrb[0].mxu0
    %v4830 = vadd.f32 %v4566, %v4829
    %v4831 = vpop.f32.mrb[0].mxu0
    %4832 = vmatprep.mubr.bf16.mxu0 %v4029
    %4833 = vmatmul.mubr.bf16.gmra.mrb[0].mxu0 %v4028
    %v4834 = vpop.f32.mrb[0].mxu0
    %v4835 = vadd.f32 %v4566, %v4834
    %v4836 = vpop.f32.mrb[0].mxu0
    %v4837 = vpop.f32.mrb[0].mxu0
    %v4838 = vadd.f32 %v4566, %v4837
    %v4839 = vpop.f32.mrb[0].mxu0
    %4840 = vmatprep.mubr.bf16.mxu0 %v4033
    %4841 = vmatmul.mubr.bf16.gmra.mrb[0].mxu0 %v4032
    %v4842 = vpop.f32.mrb[0].mxu0
    %v4843 = vadd.f32 %v4566, %v4842
    %v4844 = vpop.f32.mrb[0].mxu0
    %v4845 = vpop.f32.mrb[0].mxu0
    %v4846 = vadd.f32 %v4566, %v4845
    %v4847 = vpop.f32.mrb[0].mxu0
    %4848 = vmatprep.mubr.bf16.mxu0 %v4037
    %4849 = vmatmul.mubr.bf16.gmra.mrb[0].mxu0 %v4036
    %v4850 = vpop.f32.mrb[0].mxu0
    %v4851 = vadd.f32 %v4566, %v4850
    %v4852 = vpop.f32.mrb[0].mxu0
    %v4853 = vpop.f32.mrb[0].mxu0
    %v4854 = vadd.f32 %v4566, %v4853
    %v4855 = vpop.f32.mrb[0].mxu0
    %4856 = vdwg.mxu0
    %4857 = vmatprep.subr.bf16.mxu0 0
    %4858 = vmatpush1.bf16.msra.mxu0 %v4712
    %4859 = vmatprep.subr.bf16.mxu0 0
    %4860 = vmatpush1.bf16.msra.mxu0 %v4713
    %4861 = vmatprep.subr.bf16.mxu0 0
    %4862 = vmatpush1.bf16.msra.mxu0 %v4714
    %4863 = vmatprep.subr.bf16.mxu0 0
    %4864 = vmatpush1.bf16.msra.mxu0 %v4715
    %4865 = vmatprep.subr.bf16.mxu0 0
    %4866 = vmatpush1.bf16.msra.mxu0 %v4716
    %4867 = vmatprep.subr.bf16.mxu0 0
    %4868 = vmatpush1.bf16.msra.mxu0 %v4717
    %4869 = vmatprep.subr.bf16.mxu0 0
    %4870 = vmatpush1.bf16.msra.mxu0 %v4718
    %4871 = vmatprep.subr.bf16.mxu0 0
    %4872 = vmatpush1.bf16.msra.mxu0 %v4719
    %4873 = vmatprep.subr.bf16.mxu0 0
    %4874 = vmatpush1.bf16.msra.mxu0 %v4720
    %4875 = vmatprep.subr.bf16.mxu0 0
    %4876 = vmatpush1.bf16.msra.mxu0 %v4721
    %4877 = vmatprep.subr.bf16.mxu0 0
    %4878 = vmatpush1.bf16.msra.mxu0 %v4722
    %4879 = vmatprep.subr.bf16.mxu0 0
    %4880 = vmatpush1.bf16.msra.mxu0 %v4723
    %4881 = vmatprep.subr.bf16.mxu0 0
    %4882 = vmatpush1.bf16.msra.mxu0 %v4724
    %4883 = vmatprep.subr.bf16.mxu0 0
    %4884 = vmatpush1.bf16.msra.mxu0 %v4725
    %4885 = vmatprep.subr.bf16.mxu0 0
    %4886 = vmatpush1.bf16.msra.mxu0 %v4726
    %4887 = vmatprep.subr.bf16.mxu0 0
    %4888 = vmatpush1.bf16.msra.mxu0 %v4727
    %4889 = vmatprep.mubr.bf16.mxu0 %v4011
    %4890 = vmatmul.mubr.bf16.gmra.mrb[0].mxu0 %v4010
    %v4891 = vpop.f32.mrb[0].mxu0
    %v4892 = vadd.f32 %v4795, %v4891
    %v4893 = vpop.f32.mrb[0].mxu0
    %v4894 = vpop.f32.mrb[0].mxu0
    %v4895 = vadd.f32 %v4798, %v4894
    %v4896 = vpop.f32.mrb[0].mxu0
    %4897 = vmatprep.mubr.bf16.mxu0 %v4015
    %4898 = vmatmul.mubr.bf16.gmra.mrb[0].mxu0 %v4014
    %v4899 = vpop.f32.mrb[0].mxu0
    %v4900 = vadd.f32 %v4803, %v4899
    %v4901 = vpop.f32.mrb[0].mxu0
    %v4902 = vpop.f32.mrb[0].mxu0
    %v4903 = vadd.f32 %v4806, %v4902
    %v4904 = vpop.f32.mrb[0].mxu0
    %4905 = vmatprep.mubr.bf16.mxu0 %v4019
    %4906 = vmatmul.mubr.bf16.gmra.mrb[0].mxu0 %v4018
    %v4907 = vpop.f32.mrb[0].mxu0
    %v4908 = vadd.f32 %v4811, %v4907
    %v4909 = vpop.f32.mrb[0].mxu0
    %v4910 = vpop.f32.mrb[0].mxu0
    %v4911 = vadd.f32 %v4814, %v4910
    %v4912 = vpop.f32.mrb[0].mxu0
    %4913 = vmatprep.mubr.bf16.mxu0 %v4023
    %4914 = vmatmul.mubr.bf16.gmra.mrb[0].mxu0 %v4022
    %v4915 = vpop.f32.mrb[0].mxu0
    %v4916 = vadd.f32 %v4819, %v4915
    %v4917 = vpop.f32.mrb[0].mxu0
    %v4918 = vpop.f32.mrb[0].mxu0
    %v4919 = vadd.f32 %v4822, %v4918
    %v4920 = vpop.f32.mrb[0].mxu0
    %4921 = vmatprep.mubr.bf16.mxu0 %v4027
    %4922 = vmatmul.mubr.bf16.gmra.mrb[0].mxu0 %v4026
    %v4923 = vpop.f32.mrb[0].mxu0
    %v4924 = vadd.f32 %v4827, %v4923
    %v4925 = vpop.f32.mrb[0].mxu0
    %v4926 = vpop.f32.mrb[0].mxu0
    %v4927 = vadd.f32 %v4830, %v4926
    %v4928 = vpop.f32.mrb[0].mxu0
    %4929 = vmatprep.mubr.bf16.mxu0 %v4031
    %4930 = vmatmul.mubr.bf16.gmra.mrb[0].mxu0 %v4030
    %v4931 = vpop.f32.mrb[0].mxu0
    %v4932 = vadd.f32 %v4835, %v4931
    %v4933 = vpop.f32.mrb[0].mxu0
    %v4934 = vpop.f32.mrb[0].mxu0
    %v4935 = vadd.f32 %v4838, %v4934
    %v4936 = vpop.f32.mrb[0].mxu0
    %4937 = vmatprep.mubr.bf16.mxu0 %v4035
    %4938 = vmatmul.mubr.bf16.gmra.mrb[0].mxu0 %v4034
    %v4939 = vpop.f32.mrb[0].mxu0
    %v4940 = vadd.f32 %v4843, %v4939
    %v4941 = vpop.f32.mrb[0].mxu0
    %v4942 = vpop.f32.mrb[0].mxu0
    %v4943 = vadd.f32 %v4846, %v4942
    %v4944 = vpop.f32.mrb[0].mxu0
    %4945 = vmatprep.mubr.bf16.mxu0 %v4039
    %4946 = vmatmul.mubr.bf16.gmra.mrb[0].mxu0 %v4038
    %v4947 = vpop.f32.mrb[0].mxu0
    %v4948 = vadd.f32 %v4851, %v4947
    %v4949 = vpop.f32.mrb[0].mxu0
    %v4950 = vpop.f32.mrb[0].mxu0
    %v4951 = vadd.f32 %v4854, %v4950
    %v4952 = vpop.f32.mrb[0].mxu0
    %4953 = vdwg.mxu0
    %v4954 = vld [vmem:[%s33] sm:$0xf]
    %v4955 = vld [vmem:[%s33 + $0x4] sm:$0xf]
    %v4956 = vld [vmem:[%s33 + $0x8] sm:$0xf]
    %v4957 = vld [vmem:[%s33 + $0xc] sm:$0xf]
    %v4958 = vld [vmem:[%s33 + $0x10] sm:$0xf]
    %v4959 = vld [vmem:[%s33 + $0x14] sm:$0xf]
    %v4960 = vld [vmem:[%s33 + $0x18] sm:$0xf]
    %v4961 = vld [vmem:[%s33 + $0x1c] sm:$0xf]
    %v4962 = vld [vmem:[%s33 + $0x20] sm:$0xf]
    %v4963 = vld [vmem:[%s33 + $0x24] sm:$0xf]
    %v4964 = vld [vmem:[%s33 + $0x28] sm:$0xf]
    %v4965 = vld [vmem:[%s33 + $0x2c] sm:$0xf]
    %v4966 = vld [vmem:[%s33 + $0x30] sm:$0xf]
    %v4967 = vld [vmem:[%s33 + $0x34] sm:$0xf]
    %v4968 = vld [vmem:[%s33 + $0x38] sm:$0xf]
    %v4969 = vld [vmem:[%s33 + $0x3c] sm:$0xf]
    %v4970 = vld [vmem:[%s33 + $0x40] sm:$0xf]
    %v4971 = vld [vmem:[%s33 + $0x44] sm:$0xf]
    %v4972 = vld [vmem:[%s33 + $0x48] sm:$0xf]
    %v4973 = vld [vmem:[%s33 + $0x4c] sm:$0xf]
    %v4974 = vld [vmem:[%s33 + $0x50] sm:$0xf]
    %v4975 = vld [vmem:[%s33 + $0x54] sm:$0xf]
    %v4976 = vld [vmem:[%s33 + $0x58] sm:$0xf]
    %v4977 = vld [vmem:[%s33 + $0x5c] sm:$0xf]
    %v4978 = vld [vmem:[%s33 + $0x60] sm:$0xf]
    %v4979 = vld [vmem:[%s33 + $0x64] sm:$0xf]
    %v4980 = vld [vmem:[%s33 + $0x68] sm:$0xf]
    %v4981 = vld [vmem:[%s33 + $0x6c] sm:$0xf]
    %v4982 = vld [vmem:[%s33 + $0x70] sm:$0xf]
    %v4983 = vld [vmem:[%s33 + $0x74] sm:$0xf]
    %v4984 = vld [vmem:[%s33 + $0x78] sm:$0xf]
    %v4985 = vld [vmem:[%s33 + $0x7c] sm:$0xf]
    %v4986 = vld [vmem:[%s33 + $0x80] sm:$0xf]
    %v4987 = vld [vmem:[%s33 + $0x84] sm:$0xf]
    %v4988 = vld [vmem:[%s33 + $0x88] sm:$0xf]
    %v4989 = vld [vmem:[%s33 + $0x8c] sm:$0xf]
    %v4990 = vld [vmem:[%s33 + $0x90] sm:$0xf]
    %v4991 = vld [vmem:[%s33 + $0x94] sm:$0xf]
    %v4992 = vld [vmem:[%s33 + $0x98] sm:$0xf]
    %v4993 = vld [vmem:[%s33 + $0x9c] sm:$0xf]
    %v4994 = vld [vmem:[%s33 + $0xa0] sm:$0xf]
    %v4995 = vld [vmem:[%s33 + $0xa4] sm:$0xf]
    %v4996 = vld [vmem:[%s33 + $0xa8] sm:$0xf]
    %v4997 = vld [vmem:[%s33 + $0xac] sm:$0xf]
    %v4998 = vld [vmem:[%s33 + $0xb0] sm:$0xf]
    %v4999 = vld [vmem:[%s33 + $0xb4] sm:$0xf]
    %v5000 = vld [vmem:[%s33 + $0xb8] sm:$0xf]
    %v5001 = vld [vmem:[%s33 + $0xbc] sm:$0xf]
    %v5002 = vld [vmem:[%s33 + $0xc0] sm:$0xf]
    %v5003 = vld [vmem:[%s33 + $0xc4] sm:$0xf]
    %v5004 = vld [vmem:[%s33 + $0xc8] sm:$0xf]
    %v5005 = vld [vmem:[%s33 + $0xcc] sm:$0xf]
    %v5006 = vld [vmem:[%s33 + $0xd0] sm:$0xf]
    %v5007 = vld [vmem:[%s33 + $0xd4] sm:$0xf]
    %v5008 = vld [vmem:[%s33 + $0xd8] sm:$0xf]
    %v5009 = vld [vmem:[%s33 + $0xdc] sm:$0xf]
    %v5010 = vld [vmem:[%s33 + $0xe0] sm:$0xf]
    %v5011 = vld [vmem:[%s33 + $0xe4] sm:$0xf]
    %v5012 = vld [vmem:[%s33 + $0xe8] sm:$0xf]
    %v5013 = vld [vmem:[%s33 + $0xec] sm:$0xf]
    %v5014 = vld [vmem:[%s33 + $0xf0] sm:$0xf]
    %v5015 = vld [vmem:[%s33 + $0xf4] sm:$0xf]
    %v5016 = vld [vmem:[%s33 + $0xf8] sm:$0xf]
    %v5017 = vld [vmem:[%s33 + $0xfc] sm:$0xf]
    %v5018 = vld [vmem:[#allocation12] sm:$0x1]
    %v5020 = vlaneseq
    %v5021 = vshrl.u32 %v5020, 7
    %v5022 = vsub.s32 0, %v5021
    %v5023 = vrot.slane %v5018, %v5022
    %v5089 = vunpack.c.l.b16 %v4954
    %v5090 = vunpack.c.l.b16 %v4955
    %v5091 = vunpack.c.l.b16 %v4956
    %v5092 = vunpack.c.l.b16 %v4957
    %v5093 = vunpack.c.l.b16 %v4958
    %v5094 = vunpack.c.l.b16 %v4959
    %v5095 = vunpack.c.l.b16 %v4960
    %v5096 = vunpack.c.l.b16 %v4961
    %v5097 = vunpack.c.l.b16 %v4962
    %v5098 = vunpack.c.l.b16 %v4963
    %v5099 = vunpack.c.l.b16 %v4964
    %v5100 = vunpack.c.l.b16 %v4965
    %v5101 = vunpack.c.l.b16 %v4966
    %v5102 = vunpack.c.l.b16 %v4967
    %v5103 = vunpack.c.l.b16 %v4968
    %v5104 = vunpack.c.l.b16 %v4969
    %v5105 = vunpack.c.l.b16 %v4970
    %v5106 = vunpack.c.l.b16 %v4971
    %v5107 = vunpack.c.l.b16 %v4972
    %v5108 = vunpack.c.l.b16 %v4973
    %v5109 = vunpack.c.l.b16 %v4974
    %v5110 = vunpack.c.l.b16 %v4975
    %v5111 = vunpack.c.l.b16 %v4976
    %v5112 = vunpack.c.l.b16 %v4977
    %v5113 = vunpack.c.l.b16 %v4978
    %v5114 = vunpack.c.l.b16 %v4979
    %v5115 = vunpack.c.l.b16 %v4980
    %v5116 = vunpack.c.l.b16 %v4981
    %v5117 = vunpack.c.l.b16 %v4982
    %v5118 = vunpack.c.l.b16 %v4983
    %v5119 = vunpack.c.l.b16 %v4984
    %v5120 = vunpack.c.l.b16 %v4985
    %v5121 = vunpack.c.l.b16 %v4986
    %v5122 = vunpack.c.l.b16 %v4987
    %v5123 = vunpack.c.l.b16 %v4988
    %v5124 = vunpack.c.l.b16 %v4989
    %v5125 = vunpack.c.l.b16 %v4990
    %v5126 = vunpack.c.l.b16 %v4991
    %v5127 = vunpack.c.l.b16 %v4992
    %v5128 = vunpack.c.l.b16 %v4993
    %v5129 = vunpack.c.l.b16 %v4994
    %v5130 = vunpack.c.l.b16 %v4995
    %v5131 = vunpack.c.l.b16 %v4996
    %v5132 = vunpack.c.l.b16 %v4997
    %v5133 = vunpack.c.l.b16 %v4998
    %v5134 = vunpack.c.l.b16 %v4999
    %v5135 = vunpack.c.l.b16 %v5000
    %v5136 = vunpack.c.l.b16 %v5001
    %v5137 = vunpack.c.l.b16 %v5002
    %v5138 = vunpack.c.l.b16 %v5003
    %v5139 = vunpack.c.l.b16 %v5004
    %v5140 = vunpack.c.l.b16 %v5005
    %v5141 = vunpack.c.l.b16 %v5006
    %v5142 = vunpack.c.l.b16 %v5007
    %v5143 = vunpack.c.l.b16 %v5008
    %v5144 = vunpack.c.l.b16 %v5009
    %v5145 = vunpack.c.l.b16 %v5010
    %v5146 = vunpack.c.l.b16 %v5011
    %v5147 = vunpack.c.l.b16 %v5012
    %v5148 = vunpack.c.l.b16 %v5013
    %v5149 = vunpack.c.l.b16 %v5014
    %v5150 = vunpack.c.l.b16 %v5015
    %v5151 = vunpack.c.l.b16 %v5016
    %v5152 = vunpack.c.l.b16 %v5017
    %v5153 = vpack.c.b16 %v5090, %v5089
    %v5154 = vpack.c.b16 %v5092, %v5091
    %v5155 = vpack.c.b16 %v5094, %v5093
    %v5156 = vpack.c.b16 %v5096, %v5095
    %v5157 = vpack.c.b16 %v5098, %v5097
    %v5158 = vpack.c.b16 %v5100, %v5099
    %v5159 = vpack.c.b16 %v5102, %v5101
    %v5160 = vpack.c.b16 %v5104, %v5103
    %v5161 = vpack.c.b16 %v5106, %v5105
    %v5162 = vpack.c.b16 %v5108, %v5107
    %v5163 = vpack.c.b16 %v5110, %v5109
    %v5164 = vpack.c.b16 %v5112, %v5111
    %v5165 = vpack.c.b16 %v5114, %v5113
    %v5166 = vpack.c.b16 %v5116, %v5115
    %v5167 = vpack.c.b16 %v5118, %v5117
    %v5168 = vpack.c.b16 %v5120, %v5119
    %v5169 = vpack.c.b16 %v5122, %v5121
    %v5170 = vpack.c.b16 %v5124, %v5123
    %v5171 = vpack.c.b16 %v5126, %v5125
    %v5172 = vpack.c.b16 %v5128, %v5127
    %v5173 = vpack.c.b16 %v5130, %v5129
    %v5174 = vpack.c.b16 %v5132, %v5131
    %v5175 = vpack.c.b16 %v5134, %v5133
    %v5176 = vpack.c.b16 %v5136, %v5135
    %v5177 = vpack.c.b16 %v5138, %v5137
    %v5178 = vpack.c.b16 %v5140, %v5139
    %v5179 = vpack.c.b16 %v5142, %v5141
    %v5180 = vpack.c.b16 %v5144, %v5143
    %v5181 = vpack.c.b16 %v5146, %v5145
    %v5182 = vpack.c.b16 %v5148, %v5147
    %v5183 = vpack.c.b16 %v5150, %v5149
    %v5184 = vpack.c.b16 %v5152, %v5151
    %5217 = vmatprep.subr.bf16.mxu0 0
    %5218 = vmatpush1.bf16.msra.mxu0 %v5153
    %5219 = vmatprep.subr.bf16.mxu0 0
    %5220 = vmatpush1.bf16.msra.mxu0 %v5154
    %5221 = vmatprep.subr.bf16.mxu0 0
    %5222 = vmatpush1.bf16.msra.mxu0 %v5155
    %5223 = vmatprep.subr.bf16.mxu0 0
    %5224 = vmatpush1.bf16.msra.mxu0 %v5156
    %5225 = vmatprep.subr.bf16.mxu0 0
    %5226 = vmatpush1.bf16.msra.mxu0 %v5157
    %5227 = vmatprep.subr.bf16.mxu0 0
    %5228 = vmatpush1.bf16.msra.mxu0 %v5158
    %5229 = vmatprep.subr.bf16.mxu0 0
    %5230 = vmatpush1.bf16.msra.mxu0 %v5159
    %5231 = vmatprep.subr.bf16.mxu0 0
    %5232 = vmatpush1.bf16.msra.mxu0 %v5160
    %5233 = vmatprep.subr.bf16.mxu0 0
    %5234 = vmatpush1.bf16.msra.mxu0 %v5161
    %5235 = vmatprep.subr.bf16.mxu0 0
    %5236 = vmatpush1.bf16.msra.mxu0 %v5162
    %5237 = vmatprep.subr.bf16.mxu0 0
    %5238 = vmatpush1.bf16.msra.mxu0 %v5163
    %5239 = vmatprep.subr.bf16.mxu0 0
    %5240 = vmatpush1.bf16.msra.mxu0 %v5164
    %5241 = vmatprep.subr.bf16.mxu0 0
    %5242 = vmatpush1.bf16.msra.mxu0 %v5165
    %5243 = vmatprep.subr.bf16.mxu0 0
    %5244 = vmatpush1.bf16.msra.mxu0 %v5166
    %5245 = vmatprep.subr.bf16.mxu0 0
    %5246 = vmatpush1.bf16.msra.mxu0 %v5167
    %5247 = vmatprep.subr.bf16.mxu0 0
    %5248 = vmatpush1.bf16.msra.mxu0 %v5168
    %5249 = vmatprep.mubr.bf16.mxu0 %v4009
    %5250 = vmatmul.mubr.bf16.gmra.mrb[0].mxu0 %v4008
    %v5251 = vpop.f32.mrb[0].mxu0
    %v5252 = vadd.f32 %v5023, %v5251
    %v5253 = vpop.f32.mrb[0].mxu0
    %v5254 = vpop.f32.mrb[0].mxu0
    %v5255 = vadd.f32 %v5023, %v5254
    %v5256 = vpop.f32.mrb[0].mxu0
    %5257 = vmatprep.mubr.bf16.mxu0 %v4013
    %5258 = vmatmul.mubr.bf16.gmra.mrb[0].mxu0 %v4012
    %v5259 = vpop.f32.mrb[0].mxu0
    %v5260 = vadd.f32 %v5023, %v5259
    %v5261 = vpop.f32.mrb[0].mxu0
    %v5262 = vpop.f32.mrb[0].mxu0
    %v5263 = vadd.f32 %v5023, %v5262
    %v5264 = vpop.f32.mrb[0].mxu0
    %5265 = vmatprep.mubr.bf16.mxu0 %v4017
    %5266 = vmatmul.mubr.bf16.gmra.mrb[0].mxu0 %v4016
    %v5267 = vpop.f32.mrb[0].mxu0
    %v5268 = vadd.f32 %v5023, %v5267
    %v5269 = vpop.f32.mrb[0].mxu0
    %v5270 = vpop.f32.mrb[0].mxu0
    %v5271 = vadd.f32 %v5023, %v5270
    %v5272 = vpop.f32.mrb[0].mxu0
    %5273 = vmatprep.mubr.bf16.mxu0 %v4021
    %5274 = vmatmul.mubr.bf16.gmra.mrb[0].mxu0 %v4020
    %v5275 = vpop.f32.mrb[0].mxu0
    %v5276 = vadd.f32 %v5023, %v5275
    %v5277 = vpop.f32.mrb[0].mxu0
    %v5278 = vpop.f32.mrb[0].mxu0
    %v5279 = vadd.f32 %v5023, %v5278
    %v5280 = vpop.f32.mrb[0].mxu0
    %5281 = vmatprep.mubr.bf16.mxu0 %v4025
    %5282 = vmatmul.mubr.bf16.gmra.mrb[0].mxu0 %v4024
    %v5283 = vpop.f32.mrb[0].mxu0
    %v5284 = vadd.f32 %v5023, %v5283
    %v5285 = vpop.f32.mrb[0].mxu0
    %v5286 = vpop.f32.mrb[0].mxu0
    %v5287 = vadd.f32 %v5023, %v5286
    %v5288 = vpop.f32.mrb[0].mxu0
    %5289 = vmatprep.mubr.bf16.mxu0 %v4029
    %5290 = vmatmul.mubr.bf16.gmra.mrb[0].mxu0 %v4028
    %v5291 = vpop.f32.mrb[0].mxu0
    %v5292 = vadd.f32 %v5023, %v5291
    %v5293 = vpop.f32.mrb[0].mxu0
    %v5294 = vpop.f32.mrb[0].mxu0
    %v5295 = vadd.f32 %v5023, %v5294
    %v5296 = vpop.f32.mrb[0].mxu0
    %5297 = vmatprep.mubr.bf16.mxu0 %v4033
    %5298 = vmatmul.mubr.bf16.gmra.mrb[0].mxu0 %v4032
    %v5299 = vpop.f32.mrb[0].mxu0
    %v5300 = vadd.f32 %v5023, %v5299
    %v5301 = vpop.f32.mrb[0].mxu0
    %v5302 = vpop.f32.mrb[0].mxu0
    %v5303 = vadd.f32 %v5023, %v5302
    %v5304 = vpop.f32.mrb[0].mxu0
    %5305 = vmatprep.mubr.bf16.mxu0 %v4037
    %5306 = vmatmul.mubr.bf16.gmra.mrb[0].mxu0 %v4036
    %v5307 = vpop.f32.mrb[0].mxu0
    %v5308 = vadd.f32 %v5023, %v5307
    %v5309 = vpop.f32.mrb[0].mxu0
    %v5310 = vpop.f32.mrb[0].mxu0
    %v5311 = vadd.f32 %v5023, %v5310
    %v5312 = vpop.f32.mrb[0].mxu0
    %5313 = vdwg.mxu0
    %5314 = vmatprep.subr.bf16.mxu0 0
    %5315 = vmatpush1.bf16.msra.mxu0 %v5169
    %5316 = vmatprep.subr.bf16.mxu0 0
    %5317 = vmatpush1.bf16.msra.mxu0 %v5170
    %5318 = vmatprep.subr.bf16.mxu0 0
    %5319 = vmatpush1.bf16.msra.mxu0 %v5171
    %5320 = vmatprep.subr.bf16.mxu0 0
    %5321 = vmatpush1.bf16.msra.mxu0 %v5172
    %5322 = vmatprep.subr.bf16.mxu0 0
    %5323 = vmatpush1.bf16.msra.mxu0 %v5173
    %5324 = vmatprep.subr.bf16.mxu0 0
    %5325 = vmatpush1.bf16.msra.mxu0 %v5174
    %5326 = vmatprep.subr.bf16.mxu0 0
    %5327 = vmatpush1.bf16.msra.mxu0 %v5175
    %5328 = vmatprep.subr.bf16.mxu0 0
    %5329 = vmatpush1.bf16.msra.mxu0 %v5176
    %5330 = vmatprep.subr.bf16.mxu0 0
    %5331 = vmatpush1.bf16.msra.mxu0 %v5177
    %5332 = vmatprep.subr.bf16.mxu0 0
    %5333 = vmatpush1.bf16.msra.mxu0 %v5178
    %5334 = vmatprep.subr.bf16.mxu0 0
    %5335 = vmatpush1.bf16.msra.mxu0 %v5179
    %5336 = vmatprep.subr.bf16.mxu0 0
    %5337 = vmatpush1.bf16.msra.mxu0 %v5180
    %5338 = vmatprep.subr.bf16.mxu0 0
    %5339 = vmatpush1.bf16.msra.mxu0 %v5181
    %5340 = vmatprep.subr.bf16.mxu0 0
    %5341 = vmatpush1.bf16.msra.mxu0 %v5182
    %5342 = vmatprep.subr.bf16.mxu0 0
    %5343 = vmatpush1.bf16.msra.mxu0 %v5183
    %5344 = vmatprep.subr.bf16.mxu0 0
    %5345 = vmatpush1.bf16.msra.mxu0 %v5184
    %5346 = vmatprep.mubr.bf16.mxu0 %v4011
    %5347 = vmatmul.mubr.bf16.gmra.mrb[0].mxu0 %v4010
    %v5348 = vpop.f32.mrb[0].mxu0
    %v5349 = vadd.f32 %v5252, %v5348
    %v5350 = vpop.f32.mrb[0].mxu0
    %v5351 = vpop.f32.mrb[0].mxu0
    %v5352 = vadd.f32 %v5255, %v5351
    %v5353 = vpop.f32.mrb[0].mxu0
    %5354 = vmatprep.mubr.bf16.mxu0 %v4015
    %5355 = vmatmul.mubr.bf16.gmra.mrb[0].mxu0 %v4014
    %v5356 = vpop.f32.mrb[0].mxu0
    %v5357 = vadd.f32 %v5260, %v5356
    %v5358 = vpop.f32.mrb[0].mxu0
    %v5359 = vpop.f32.mrb[0].mxu0
    %v5360 = vadd.f32 %v5263, %v5359
    %v5361 = vpop.f32.mrb[0].mxu0
    %5362 = vmatprep.mubr.bf16.mxu0 %v4019
    %5363 = vmatmul.mubr.bf16.gmra.mrb[0].mxu0 %v4018
    %v5364 = vpop.f32.mrb[0].mxu0
    %v5365 = vadd.f32 %v5268, %v5364
    %v5366 = vpop.f32.mrb[0].mxu0
    %v5367 = vpop.f32.mrb[0].mxu0
    %v5368 = vadd.f32 %v5271, %v5367
    %v5369 = vpop.f32.mrb[0].mxu0
    %5370 = vmatprep.mubr.bf16.mxu0 %v4023
    %5371 = vmatmul.mubr.bf16.gmra.mrb[0].mxu0 %v4022
    %v5372 = vpop.f32.mrb[0].mxu0
    %v5373 = vadd.f32 %v5276, %v5372
    %v5374 = vpop.f32.mrb[0].mxu0
    %v5375 = vpop.f32.mrb[0].mxu0
    %v5376 = vadd.f32 %v5279, %v5375
    %v5377 = vpop.f32.mrb[0].mxu0
    %5378 = vmatprep.mubr.bf16.mxu0 %v4027
    %5379 = vmatmul.mubr.bf16.gmra.mrb[0].mxu0 %v4026
    %v5380 = vpop.f32.mrb[0].mxu0
    %v5381 = vadd.f32 %v5284, %v5380
    %v5382 = vpop.f32.mrb[0].mxu0
    %v5383 = vpop.f32.mrb[0].mxu0
    %v5384 = vadd.f32 %v5287, %v5383
    %v5385 = vpop.f32.mrb[0].mxu0
    %5386 = vmatprep.mubr.bf16.mxu0 %v4031
    %5387 = vmatmul.mubr.bf16.gmra.mrb[0].mxu0 %v4030
    %v5388 = vpop.f32.mrb[0].mxu0
    %v5389 = vadd.f32 %v5292, %v5388
    %v5390 = vpop.f32.mrb[0].mxu0
    %v5391 = vpop.f32.mrb[0].mxu0
    %v5392 = vadd.f32 %v5295, %v5391
    %v5393 = vpop.f32.mrb[0].mxu0
    %5394 = vmatprep.mubr.bf16.mxu0 %v4035
    %5395 = vmatmul.mubr.bf16.gmra.mrb[0].mxu0 %v4034
    %v5396 = vpop.f32.mrb[0].mxu0
    %v5397 = vadd.f32 %v5300, %v5396
    %v5398 = vpop.f32.mrb[0].mxu0
    %v5399 = vpop.f32.mrb[0].mxu0
    %v5400 = vadd.f32 %v5303, %v5399
    %v5401 = vpop.f32.mrb[0].mxu0
    %5402 = vmatprep.mubr.bf16.mxu0 %v4039
    %5403 = vmatmul.mubr.bf16.gmra.mrb[0].mxu0 %v4038
    %v5404 = vpop.f32.mrb[0].mxu0
    %v5405 = vadd.f32 %v5308, %v5404
    %v5406 = vpop.f32.mrb[0].mxu0
    %v5407 = vpop.f32.mrb[0].mxu0
    %v5408 = vadd.f32 %v5311, %v5407
    %v5409 = vpop.f32.mrb[0].mxu0
    %5410 = vdwg.mxu0
    %v5411 = vld [vmem:[#allocation15] sm:$0xff]
    %v5412 = vld [vmem:[#allocation15 + $0x8] sm:$0xff]
    %v5413 = vld [vmem:[#allocation15 + $0x10] sm:$0xff]
    %v5414 = vld [vmem:[#allocation15 + $0x18] sm:$0xff]
    %v5415 = vld [vmem:[#allocation15 + $0x20] sm:$0xff]
    %v5416 = vld [vmem:[#allocation15 + $0x28] sm:$0xff]
    %v5417 = vld [vmem:[#allocation15 + $0x30] sm:$0xff]
    %v5418 = vld [vmem:[#allocation15 + $0x38] sm:$0xff]
    %v5419 = vld [vmem:[#allocation15 + $0x40] sm:$0xff]
    %v5420 = vld [vmem:[#allocation15 + $0x48] sm:$0xff]
    %v5421 = vld [vmem:[#allocation15 + $0x50] sm:$0xff]
    %v5422 = vld [vmem:[#allocation15 + $0x58] sm:$0xff]
    %v5423 = vld [vmem:[#allocation15 + $0x60] sm:$0xff]
    %v5424 = vld [vmem:[#allocation15 + $0x68] sm:$0xff]
    %v5425 = vld [vmem:[#allocation15 + $0x70] sm:$0xff]
    %v5426 = vld [vmem:[#allocation15 + $0x78] sm:$0xff]
    %v5427 = vld [vmem:[%s41] sm:$0xf]
    %v5428 = vld [vmem:[%s41 + $0x4] sm:$0xf]
    %v5429 = vld [vmem:[%s41 + $0x8] sm:$0xf]
    %v5430 = vld [vmem:[%s41 + $0xc] sm:$0xf]
    %v5431 = vld [vmem:[%s41 + $0x10] sm:$0xf]
    %v5432 = vld [vmem:[%s41 + $0x14] sm:$0xf]
    %v5433 = vld [vmem:[%s41 + $0x18] sm:$0xf]
    %v5434 = vld [vmem:[%s41 + $0x1c] sm:$0xf]
    %v5435 = vpack.c.bf16 %v4438, %v4435
    %v5436 = vpack.c.bf16 %v4446, %v4443
    %v5437 = vpack.c.bf16 %v4454, %v4451
    %v5438 = vpack.c.bf16 %v4462, %v4459
    %v5439 = vpack.c.bf16 %v4470, %v4467
    %v5440 = vpack.c.bf16 %v4478, %v4475
    %v5441 = vpack.c.bf16 %v4486, %v4483
    %v5442 = vpack.c.bf16 %v4494, %v4491
    %v5443 = vpack.c.bf16 %v4895, %v4892
    %v5444 = vpack.c.bf16 %v4903, %v4900
    %v5445 = vpack.c.bf16 %v4911, %v4908
    %v5446 = vpack.c.bf16 %v4919, %v4916
    %v5447 = vpack.c.bf16 %v4927, %v4924
    %v5448 = vpack.c.bf16 %v4935, %v4932
    %v5449 = vpack.c.bf16 %v4943, %v4940
    %v5450 = vpack.c.bf16 %v4951, %v4948
    %v5451 = vpack.c.bf16 %v5352, %v5349
    %v5452 = vpack.c.bf16 %v5360, %v5357
    %v5453 = vpack.c.bf16 %v5368, %v5365
    %v5454 = vpack.c.bf16 %v5376, %v5373
    %v5455 = vpack.c.bf16 %v5384, %v5381
    %v5456 = vpack.c.bf16 %v5392, %v5389
    %v5457 = vpack.c.bf16 %v5400, %v5397
    %v5458 = vpack.c.bf16 %v5408, %v5405
    %vm5459 = vcmask 64512
    %v5461 = vsel %vm5459, %v5435, 0
    %v5464 = vsel %vm5459, %v5436, 0
    %v5467 = vsel %vm5459, %v5437, 0
    %v5470 = vsel %vm5459, %v5438, 0
    %v5473 = vsel %vm5459, %v5439, 0
    %v5476 = vsel %vm5459, %v5440, 0
    %v5479 = vsel %vm5459, %v5441, 0
    %v5482 = vsel %vm5459, %v5442, 0
    %v5485 = vsel %vm5459, %v5443, 0
    %v5488 = vsel %vm5459, %v5444, 0
    %v5491 = vsel %vm5459, %v5445, 0
    %v5494 = vsel %vm5459, %v5446, 0
    %v5497 = vsel %vm5459, %v5447, 0
    %v5500 = vsel %vm5459, %v5448, 0
    %v5503 = vsel %vm5459, %v5449, 0
    %v5506 = vsel %vm5459, %v5450, 0
    %5508 = vmatprep.subr.bf16.mxu0 0
    %5509 = vmatpush1.bf16.xpose.msra.mxu0 %v5485
    %5510 = vmatprep.subr.bf16.mxu0 0
    %5511 = vmatpush1.bf16.xpose.msra.mxu0 %v5488
    %5512 = vmatprep.subr.bf16.mxu0 0
    %5513 = vmatpush1.bf16.xpose.msra.mxu0 %v5491
    %5514 = vmatprep.subr.bf16.mxu0 0
    %5515 = vmatpush1.bf16.xpose.msra.mxu0 %v5494
    %5516 = vmatprep.subr.bf16.mxu0 0
    %5517 = vmatpush1.bf16.xpose.msra.mxu0 %v5497
    %5518 = vmatprep.subr.bf16.mxu0 0
    %5519 = vmatpush1.bf16.xpose.msra.mxu0 %v5500
    %5520 = vmatprep.subr.bf16.mxu0 0
    %5521 = vmatpush1.bf16.xpose.msra.mxu0 %v5503
    %5522 = vmatprep.subr.bf16.mxu0 0
    %5523 = vmatpush1.bf16.xpose.msra.mxu0 %v5506
    %5524 = vmatprep.subr.bf16.mxu0 0
    %5525 = vmatpush1.bf16.xpose.msra.mxu0 0
    %5526 = vmatprep.subr.bf16.mxu0 0
    %5527 = vmatpush1.bf16.xpose.msra.mxu0 0
    %5528 = vmatprep.subr.bf16.mxu0 0
    %5529 = vmatpush1.bf16.xpose.msra.mxu0 0
    %5530 = vmatprep.subr.bf16.mxu0 0
    %5531 = vmatpush1.bf16.xpose.msra.mxu0 0
    %5532 = vmatprep.subr.bf16.mxu0 0
    %5533 = vmatpush1.bf16.xpose.msra.mxu0 0
    %5534 = vmatprep.subr.bf16.mxu0 0
    %5535 = vmatpush1.bf16.xpose.msra.mxu0 0
    %5536 = vmatprep.subr.bf16.mxu0 0
    %5537 = vmatpush1.bf16.xpose.msra.mxu0 0
    %5538 = vmatprep.subr.bf16.mxu0 0
    %5539 = vmatpush1.bf16.xpose.msra.mxu0 0
    %5540 = vmatprep.mubr.bf16.mxu0 0
    %5541 = vmatmul.mubr.bf16.gmra.mrb[0].mxu0 %v5461
    %v5542 = vpop.f32.mrb[0].mxu0
    %v5543 = vadd.f32 0.0, %v5542
    %v5544 = vpop.f32.mrb[0].mxu0
    %v5545 = vpop.f32.mrb[0].mxu0
    %v5546 = vadd.f32 0.0, %v5545
    %v5547 = vpop.f32.mrb[0].mxu0
    %5548 = vmatprep.mubr.bf16.mxu0 0
    %5549 = vmatmul.mubr.bf16.gmra.mrb[0].mxu0 %v5464
    %v5550 = vpop.f32.mrb[0].mxu0
    %v5551 = vadd.f32 0.0, %v5550
    %v5552 = vpop.f32.mrb[0].mxu0
    %v5553 = vpop.f32.mrb[0].mxu0
    %v5554 = vadd.f32 0.0, %v5553
    %v5555 = vpop.f32.mrb[0].mxu0
    %5556 = vmatprep.mubr.bf16.mxu0 0
    %5557 = vmatmul.mubr.bf16.gmra.mrb[0].mxu0 %v5467
    %v5558 = vpop.f32.mrb[0].mxu0
    %v5559 = vadd.f32 0.0, %v5558
    %v5560 = vpop.f32.mrb[0].mxu0
    %v5561 = vpop.f32.mrb[0].mxu0
    %v5562 = vadd.f32 0.0, %v5561
    %v5563 = vpop.f32.mrb[0].mxu0
    %5564 = vmatprep.mubr.bf16.mxu0 0
    %5565 = vmatmul.mubr.bf16.gmra.mrb[0].mxu0 %v5470
    %v5566 = vpop.f32.mrb[0].mxu0
    %v5567 = vadd.f32 0.0, %v5566
    %v5568 = vpop.f32.mrb[0].mxu0
    %v5569 = vpop.f32.mrb[0].mxu0
    %v5570 = vadd.f32 0.0, %v5569
    %v5571 = vpop.f32.mrb[0].mxu0
    %5572 = vmatprep.mubr.bf16.mxu0 0
    %5573 = vmatmul.mubr.bf16.gmra.mrb[0].mxu0 %v5473
    %v5574 = vpop.f32.mrb[0].mxu0
    %v5575 = vadd.f32 0.0, %v5574
    %v5576 = vpop.f32.mrb[0].mxu0
    %v5577 = vpop.f32.mrb[0].mxu0
    %v5578 = vadd.f32 0.0, %v5577
    %v5579 = vpop.f32.mrb[0].mxu0
    %5580 = vmatprep.mubr.bf16.mxu0 0
    %5581 = vmatmul.mubr.bf16.gmra.mrb[0].mxu0 %v5476
    %v5582 = vpop.f32.mrb[0].mxu0
    %v5583 = vadd.f32 0.0, %v5582
    %v5584 = vpop.f32.mrb[0].mxu0
    %v5585 = vpop.f32.mrb[0].mxu0
    %v5586 = vadd.f32 0.0, %v5585
    %v5587 = vpop.f32.mrb[0].mxu0
    %5588 = vmatprep.mubr.bf16.mxu0 0
    %5589 = vmatmul.mubr.bf16.gmra.mrb[0].mxu0 %v5479
    %v5590 = vpop.f32.mrb[0].mxu0
    %v5591 = vadd.f32 0.0, %v5590
    %v5592 = vpop.f32.mrb[0].mxu0
    %v5593 = vpop.f32.mrb[0].mxu0
    %v5594 = vadd.f32 0.0, %v5593
    %v5595 = vpop.f32.mrb[0].mxu0
    %5596 = vmatprep.mubr.bf16.mxu0 0
    %5597 = vmatmul.mubr.bf16.gmra.mrb[0].mxu0 %v5482
    %v5598 = vpop.f32.mrb[0].mxu0
    %v5599 = vadd.f32 0.0, %v5598
    %v5600 = vpop.f32.mrb[0].mxu0
    %v5601 = vpop.f32.mrb[0].mxu0
    %v5602 = vadd.f32 0.0, %v5601
    %v5603 = vpop.f32.mrb[0].mxu0
    %5604 = vdwg.mxu0
    %v5605 = vmul.f32 %v5543, 0.35355338
    %v5606 = vmul.f32 %v5546, 0.35355338
    %v5607 = vmul.f32 %v5551, 0.35355338
    %v5608 = vmul.f32 %v5554, 0.35355338
    %v5609 = vmul.f32 %v5559, 0.35355338
    %v5610 = vmul.f32 %v5562, 0.35355338
    %v5611 = vmul.f32 %v5567, 0.35355338
    %v5612 = vmul.f32 %v5570, 0.35355338
    %v5613 = vmul.f32 %v5575, 0.35355338
    %v5614 = vmul.f32 %v5578, 0.35355338
    %v5615 = vmul.f32 %v5583, 0.35355338
    %v5616 = vmul.f32 %v5586, 0.35355338
    %v5617 = vmul.f32 %v5591, 0.35355338
    %v5618 = vmul.f32 %v5594, 0.35355338
    %v5619 = vmul.f32 %v5599, 0.35355338
    %v5620 = vmul.f32 %v5602, 0.35355338
    %5621 = vmax.xlane.f32.xlu0 %v5605
    %v5622 = vpop.xlane.xlu0 %5621
    %5623 = vmax.xlane.f32.xlu0 %v5606
    %v5624 = vpop.xlane.xlu0 %5623
    %5625 = vmax.xlane.f32.xlu0 %v5607
    %v5626 = vpop.xlane.xlu0 %5625
    %5627 = vmax.xlane.f32.xlu0 %v5608
    %v5628 = vpop.xlane.xlu0 %5627
    %5629 = vmax.xlane.f32.xlu0 %v5609
    %v5630 = vpop.xlane.xlu0 %5629
    %5631 = vmax.xlane.f32.xlu0 %v5610
    %v5632 = vpop.xlane.xlu0 %5631
    %5633 = vmax.xlane.f32.xlu0 %v5611
    %v5634 = vpop.xlane.xlu0 %5633
    %5635 = vmax.xlane.f32.xlu0 %v5612
    %v5636 = vpop.xlane.xlu0 %5635
    %5637 = vmax.xlane.f32.xlu0 %v5613
    %v5638 = vpop.xlane.xlu0 %5637
    %5639 = vmax.xlane.f32.xlu0 %v5614
    %v5640 = vpop.xlane.xlu0 %5639
    %5641 = vmax.xlane.f32.xlu0 %v5615
    %v5642 = vpop.xlane.xlu0 %5641
    %5643 = vmax.xlane.f32.xlu0 %v5616
    %v5644 = vpop.xlane.xlu0 %5643
    %5645 = vmax.xlane.f32.xlu0 %v5617
    %v5646 = vpop.xlane.xlu0 %5645
    %5647 = vmax.xlane.f32.xlu0 %v5618
    %v5648 = vpop.xlane.xlu0 %5647
    %5649 = vmax.xlane.f32.xlu0 %v5619
    %v5650 = vpop.xlane.xlu0 %5649
    %5651 = vmax.xlane.f32.xlu0 %v5620
    %v5652 = vpop.xlane.xlu0 %5651
    %v5653 = vsub.f32 %v5605, %v5622
    %v5654 = vsub.f32 %v5606, %v5624
    %v5655 = vsub.f32 %v5607, %v5626
    %v5656 = vsub.f32 %v5608, %v5628
    %v5657 = vsub.f32 %v5609, %v5630
    %v5658 = vsub.f32 %v5610, %v5632
    %v5659 = vsub.f32 %v5611, %v5634
    %v5660 = vsub.f32 %v5612, %v5636
    %v5661 = vsub.f32 %v5613, %v5638
    %v5662 = vsub.f32 %v5614, %v5640
    %v5663 = vsub.f32 %v5615, %v5642
    %v5664 = vsub.f32 %v5616, %v5644
    %v5665 = vsub.f32 %v5617, %v5646
    %v5666 = vsub.f32 %v5618, %v5648
    %v5667 = vsub.f32 %v5619, %v5650
    %v5668 = vsub.f32 %v5620, %v5652
    %v5669 = vmul.f32 %v5653, 1.442695
    %v5670 = vpow.pop %v5669
    %v5671 = vmul.f32 %v5654, 1.442695
    %v5672 = vpow.pop %v5671
    %v5673 = vmul.f32 %v5655, 1.442695
    %v5674 = vpow.pop %v5673
    %v5675 = vmul.f32 %v5656, 1.442695
    %v5676 = vpow.pop %v5675
    %v5677 = vmul.f32 %v5657, 1.442695
    %v5678 = vpow.pop %v5677
    %v5679 = vmul.f32 %v5658, 1.442695
    %v5680 = vpow.pop %v5679
    %v5681 = vmul.f32 %v5659, 1.442695
    %v5682 = vpow.pop %v5681
    %v5683 = vmul.f32 %v5660, 1.442695
    %v5684 = vpow.pop %v5683
    %v5685 = vmul.f32 %v5661, 1.442695
    %v5686 = vpow.pop %v5685
    %v5687 = vmul.f32 %v5662, 1.442695
    %v5688 = vpow.pop %v5687
    %v5689 = vmul.f32 %v5663, 1.442695
    %v5690 = vpow.pop %v5689
    %v5691 = vmul.f32 %v5664, 1.442695
    %v5692 = vpow.pop %v5691
    %v5693 = vmul.f32 %v5665, 1.442695
    %v5694 = vpow.pop %v5693
    %v5695 = vmul.f32 %v5666, 1.442695
    %v5696 = vpow.pop %v5695
    %v5697 = vmul.f32 %v5667, 1.442695
    %v5698 = vpow.pop %v5697
    %v5699 = vmul.f32 %v5668, 1.442695
    %v5700 = vpow.pop %v5699
    %v5701 = vmul.f32 %v5670, %v5411
    %v5702 = vmul.f32 %v5672, %v5412
    %v5703 = vmul.f32 %v5674, %v5413
    %v5704 = vmul.f32 %v5676, %v5414
    %v5705 = vmul.f32 %v5678, %v5415
    %v5706 = vmul.f32 %v5680, %v5416
    %v5707 = vmul.f32 %v5682, %v5417
    %v5708 = vmul.f32 %v5684, %v5418
    %v5709 = vmul.f32 %v5686, %v5419
    %v5710 = vmul.f32 %v5688, %v5420
    %v5711 = vmul.f32 %v5690, %v5421
    %v5712 = vmul.f32 %v5692, %v5422
    %v5713 = vmul.f32 %v5694, %v5423
    %v5714 = vmul.f32 %v5696, %v5424
    %v5715 = vmul.f32 %v5698, %v5425
    %v5716 = vmul.f32 %v5700, %v5426
    %5717 = vadd.xlane.f32.xlu0 %v5701
    %v5718 = vpop.xlane.xlu0 %5717
    %5719 = vadd.xlane.f32.xlu0 %v5702
    %v5720 = vpop.xlane.xlu0 %5719
    %5721 = vadd.xlane.f32.xlu0 %v5703
    %v5722 = vpop.xlane.xlu0 %5721
    %5723 = vadd.xlane.f32.xlu0 %v5704
    %v5724 = vpop.xlane.xlu0 %5723
    %5725 = vadd.xlane.f32.xlu0 %v5705
    %v5726 = vpop.xlane.xlu0 %5725
    %5727 = vadd.xlane.f32.xlu0 %v5706
    %v5728 = vpop.xlane.xlu0 %5727
    %5729 = vadd.xlane.f32.xlu0 %v5707
    %v5730 = vpop.xlane.xlu0 %5729
    %5731 = vadd.xlane.f32.xlu0 %v5708
    %v5732 = vpop.xlane.xlu0 %5731
    %5733 = vadd.xlane.f32.xlu0 %v5709
    %v5734 = vpop.xlane.xlu0 %5733
    %5735 = vadd.xlane.f32.xlu0 %v5710
    %v5736 = vpop.xlane.xlu0 %5735
    %5737 = vadd.xlane.f32.xlu0 %v5711
    %v5738 = vpop.xlane.xlu0 %5737
    %5739 = vadd.xlane.f32.xlu0 %v5712
    %v5740 = vpop.xlane.xlu0 %5739
    %5741 = vadd.xlane.f32.xlu0 %v5713
    %v5742 = vpop.xlane.xlu0 %5741
    %5743 = vadd.xlane.f32.xlu0 %v5714
    %v5744 = vpop.xlane.xlu0 %5743
    %5745 = vadd.xlane.f32.xlu0 %v5715
    %v5746 = vpop.xlane.xlu0 %5745
    %5747 = vadd.xlane.f32.xlu0 %v5716
    %v5748 = vpop.xlane.xlu0 %5747
    %v5749 = vmax.f32 %v5718, 1e-30
    %v5750 = vmax.f32 %v5720, 1e-30
    %v5751 = vmax.f32 %v5722, 1e-30
    %v5752 = vmax.f32 %v5724, 1e-30
    %v5753 = vmax.f32 %v5726, 1e-30
    %v5754 = vmax.f32 %v5728, 1e-30
    %v5755 = vmax.f32 %v5730, 1e-30
    %v5756 = vmax.f32 %v5732, 1e-30
    %v5757 = vmax.f32 %v5734, 1e-30
    %v5758 = vmax.f32 %v5736, 1e-30
    %v5759 = vmax.f32 %v5738, 1e-30
    %v5760 = vmax.f32 %v5740, 1e-30
    %v5761 = vmax.f32 %v5742, 1e-30
    %v5762 = vmax.f32 %v5744, 1e-30
    %v5763 = vmax.f32 %v5746, 1e-30
    %v5764 = vmax.f32 %v5748, 1e-30
    %v5765 = vrcp.pop %v5749
    %v5766 = vrcp.pop %v5750
    %v5767 = vrcp.pop %v5751
    %v5768 = vrcp.pop %v5752
    %v5769 = vrcp.pop %v5753
    %v5770 = vrcp.pop %v5754
    %v5771 = vrcp.pop %v5755
    %v5772 = vrcp.pop %v5756
    %v5773 = vrcp.pop %v5757
    %v5774 = vrcp.pop %v5758
    %v5775 = vrcp.pop %v5759
    %v5776 = vrcp.pop %v5760
    %v5777 = vrcp.pop %v5761
    %v5778 = vrcp.pop %v5762
    %v5779 = vrcp.pop %v5763
    %v5780 = vrcp.pop %v5764
    %v5781 = vmul.f32 %v5701, %v5765
    %v5782 = vmul.f32 %v5702, %v5766
    %v5783 = vmul.f32 %v5703, %v5767
    %v5784 = vmul.f32 %v5704, %v5768
    %v5785 = vmul.f32 %v5705, %v5769
    %v5786 = vmul.f32 %v5706, %v5770
    %v5787 = vmul.f32 %v5707, %v5771
    %v5788 = vmul.f32 %v5708, %v5772
    %v5789 = vmul.f32 %v5709, %v5773
    %v5790 = vmul.f32 %v5710, %v5774
    %v5791 = vmul.f32 %v5711, %v5775
    %v5792 = vmul.f32 %v5712, %v5776
    %v5793 = vmul.f32 %v5713, %v5777
    %v5794 = vmul.f32 %v5714, %v5778
    %v5795 = vmul.f32 %v5715, %v5779
    %v5796 = vmul.f32 %v5716, %v5780
    %v5797 = vpack.c.bf16 %v5782, %v5781
    %v5798 = vpack.c.bf16 %v5784, %v5783
    %v5799 = vpack.c.bf16 %v5786, %v5785
    %v5800 = vpack.c.bf16 %v5788, %v5787
    %v5801 = vpack.c.bf16 %v5790, %v5789
    %v5802 = vpack.c.bf16 %v5792, %v5791
    %v5803 = vpack.c.bf16 %v5794, %v5793
    %v5804 = vpack.c.bf16 %v5796, %v5795
    %5805 = vmatprep.subr.bf16.mxu0 0
    %5806 = vmatpush1.bf16.msra.mxu0 %v5451
    %5807 = vmatprep.subr.bf16.mxu0 0
    %5808 = vmatpush1.bf16.msra.mxu0 %v5452
    %5809 = vmatprep.subr.bf16.mxu0 0
    %5810 = vmatpush1.bf16.msra.mxu0 %v5453
    %5811 = vmatprep.subr.bf16.mxu0 0
    %5812 = vmatpush1.bf16.msra.mxu0 %v5454
    %5813 = vmatprep.subr.bf16.mxu0 0
    %5814 = vmatpush1.bf16.msra.mxu0 %v5455
    %5815 = vmatprep.subr.bf16.mxu0 0
    %5816 = vmatpush1.bf16.msra.mxu0 %v5456
    %5817 = vmatprep.subr.bf16.mxu0 0
    %5818 = vmatpush1.bf16.msra.mxu0 %v5457
    %5819 = vmatprep.subr.bf16.mxu0 0
    %5820 = vmatpush1.bf16.msra.mxu0 %v5458
    %5821 = vmatprep.subr.bf16.mxu0 0
    %5822 = vmatpush1.bf16.msra.mxu0 0
    %5823 = vmatprep.subr.bf16.mxu0 0
    %5824 = vmatpush1.bf16.msra.mxu0 0
    %5825 = vmatprep.subr.bf16.mxu0 0
    %5826 = vmatpush1.bf16.msra.mxu0 0
    %5827 = vmatprep.subr.bf16.mxu0 0
    %5828 = vmatpush1.bf16.msra.mxu0 0
    %5829 = vmatprep.subr.bf16.mxu0 0
    %5830 = vmatpush1.bf16.msra.mxu0 0
    %5831 = vmatprep.subr.bf16.mxu0 0
    %5832 = vmatpush1.bf16.msra.mxu0 0
    %5833 = vmatprep.subr.bf16.mxu0 0
    %5834 = vmatpush1.bf16.msra.mxu0 0
    %5835 = vmatprep.subr.bf16.mxu0 0
    %5836 = vmatpush1.bf16.msra.mxu0 0
    %5837 = vmatprep.mubr.bf16.mxu0 0
    %5838 = vmatmul.mubr.bf16.gmra.mrb[0].mxu0 %v5797
    %v5839 = vpop.f32.mrb[0].mxu0
    %v5840 = vadd.f32 0.0, %v5839
    %v5841 = vpop.f32.mrb[0].mxu0
    %v5842 = vpop.f32.mrb[0].mxu0
    %v5843 = vadd.f32 0.0, %v5842
    %v5844 = vpop.f32.mrb[0].mxu0
    %5845 = vmatprep.mubr.bf16.mxu0 0
    %5846 = vmatmul.mubr.bf16.gmra.mrb[0].mxu0 %v5798
    %v5847 = vpop.f32.mrb[0].mxu0
    %v5848 = vadd.f32 0.0, %v5847
    %v5849 = vpop.f32.mrb[0].mxu0
    %v5850 = vpop.f32.mrb[0].mxu0
    %v5851 = vadd.f32 0.0, %v5850
    %v5852 = vpop.f32.mrb[0].mxu0
    %5853 = vmatprep.mubr.bf16.mxu0 0
    %5854 = vmatmul.mubr.bf16.gmra.mrb[0].mxu0 %v5799
    %v5855 = vpop.f32.mrb[0].mxu0
    %v5856 = vadd.f32 0.0, %v5855
    %v5857 = vpop.f32.mrb[0].mxu0
    %v5858 = vpop.f32.mrb[0].mxu0
    %v5859 = vadd.f32 0.0, %v5858
    %v5860 = vpop.f32.mrb[0].mxu0
    %5861 = vmatprep.mubr.bf16.mxu0 0
    %5862 = vmatmul.mubr.bf16.gmra.mrb[0].mxu0 %v5800
    %v5863 = vpop.f32.mrb[0].mxu0
    %v5864 = vadd.f32 0.0, %v5863
    %v5865 = vpop.f32.mrb[0].mxu0
    %v5866 = vpop.f32.mrb[0].mxu0
    %v5867 = vadd.f32 0.0, %v5866
    %v5868 = vpop.f32.mrb[0].mxu0
    %5869 = vmatprep.mubr.bf16.mxu0 0
    %5870 = vmatmul.mubr.bf16.gmra.mrb[0].mxu0 %v5801
    %v5871 = vpop.f32.mrb[0].mxu0
    %v5872 = vadd.f32 0.0, %v5871
    %v5873 = vpop.f32.mrb[0].mxu0
    %v5874 = vpop.f32.mrb[0].mxu0
    %v5875 = vadd.f32 0.0, %v5874
    %v5876 = vpop.f32.mrb[0].mxu0
    %5877 = vmatprep.mubr.bf16.mxu0 0
    %5878 = vmatmul.mubr.bf16.gmra.mrb[0].mxu0 %v5802
    %v5879 = vpop.f32.mrb[0].mxu0
    %v5880 = vadd.f32 0.0, %v5879
    %v5881 = vpop.f32.mrb[0].mxu0
    %v5882 = vpop.f32.mrb[0].mxu0
    %v5883 = vadd.f32 0.0, %v5882
    %v5884 = vpop.f32.mrb[0].mxu0
    %5885 = vmatprep.mubr.bf16.mxu0 0
    %5886 = vmatmul.mubr.bf16.gmra.mrb[0].mxu0 %v5803
    %v5887 = vpop.f32.mrb[0].mxu0
    %v5888 = vadd.f32 0.0, %v5887
    %v5889 = vpop.f32.mrb[0].mxu0
    %v5890 = vpop.f32.mrb[0].mxu0
    %v5891 = vadd.f32 0.0, %v5890
    %v5892 = vpop.f32.mrb[0].mxu0
    %5893 = vmatprep.mubr.bf16.mxu0 0
    %5894 = vmatmul.mubr.bf16.gmra.mrb[0].mxu0 %v5804
    %v5895 = vpop.f32.mrb[0].mxu0
    %v5896 = vadd.f32 0.0, %v5895
    %v5897 = vpop.f32.mrb[0].mxu0
    %v5898 = vpop.f32.mrb[0].mxu0
    %v5899 = vadd.f32 0.0, %v5898
    %v5900 = vpop.f32.mrb[0].mxu0
    %5901 = vdwg.mxu0
    %v5902 = vpack.c.bf16 %v5843, %v5840
    %v5903 = vpack.c.bf16 %v5851, %v5848
    %v5904 = vpack.c.bf16 %v5859, %v5856
    %v5905 = vpack.c.bf16 %v5867, %v5864
    %v5906 = vpack.c.bf16 %v5875, %v5872
    %v5907 = vpack.c.bf16 %v5883, %v5880
    %v5908 = vpack.c.bf16 %v5891, %v5888
    %v5909 = vpack.c.bf16 %v5899, %v5896
    %5918 = vrot.lane.b32.xlu0 %v5435, 120
    %v5919 = vpop.permute.xlu0 %5918
    %5920 = vrot.lane.b32.xlu0 %v5436, 120
    %v5921 = vpop.permute.xlu0 %5920
    %5922 = vrot.lane.b32.xlu0 %v5437, 120
    %v5923 = vpop.permute.xlu0 %5922
    %5924 = vrot.lane.b32.xlu0 %v5438, 120
    %v5925 = vpop.permute.xlu0 %5924
    %5926 = vrot.lane.b32.xlu0 %v5439, 120
    %v5927 = vpop.permute.xlu0 %5926
    %5928 = vrot.lane.b32.xlu0 %v5440, 120
    %v5929 = vpop.permute.xlu0 %5928
    %5930 = vrot.lane.b32.xlu0 %v5441, 120
    %v5931 = vpop.permute.xlu0 %5930
    %5932 = vrot.lane.b32.xlu0 %v5442, 120
    %v5933 = vpop.permute.xlu0 %5932
    %5942 = vrot.lane.b32.xlu0 %v5443, 120
    %v5943 = vpop.permute.xlu0 %5942
    %5944 = vrot.lane.b32.xlu0 %v5444, 120
    %v5945 = vpop.permute.xlu0 %5944
    %5946 = vrot.lane.b32.xlu0 %v5445, 120
    %v5947 = vpop.permute.xlu0 %5946
    %5948 = vrot.lane.b32.xlu0 %v5446, 120
    %v5949 = vpop.permute.xlu0 %5948
    %5950 = vrot.lane.b32.xlu0 %v5447, 120
    %v5951 = vpop.permute.xlu0 %5950
    %5952 = vrot.lane.b32.xlu0 %v5448, 120
    %v5953 = vpop.permute.xlu0 %5952
    %5954 = vrot.lane.b32.xlu0 %v5449, 120
    %v5955 = vpop.permute.xlu0 %5954
    %5956 = vrot.lane.b32.xlu0 %v5450, 120
    %v5957 = vpop.permute.xlu0 %5956
    %v5959 = vsel %vm5459, %v5919, 0
    %v5962 = vsel %vm5459, %v5921, 0
    %v5965 = vsel %vm5459, %v5923, 0
    %v5968 = vsel %vm5459, %v5925, 0
    %v5971 = vsel %vm5459, %v5927, 0
    %v5974 = vsel %vm5459, %v5929, 0
    %v5977 = vsel %vm5459, %v5931, 0
    %v5980 = vsel %vm5459, %v5933, 0
    %v5983 = vsel %vm5459, %v5943, 0
    %v5986 = vsel %vm5459, %v5945, 0
    %v5989 = vsel %vm5459, %v5947, 0
    %v5992 = vsel %vm5459, %v5949, 0
    %v5995 = vsel %vm5459, %v5951, 0
    %v5998 = vsel %vm5459, %v5953, 0
    %v6001 = vsel %vm5459, %v5955, 0
    %v6004 = vsel %vm5459, %v5957, 0
    %6006 = vmatprep.subr.bf16.mxu0 0
    %6007 = vmatpush1.bf16.xpose.msra.mxu0 %v5983
    %6008 = vmatprep.subr.bf16.mxu0 0
    %6009 = vmatpush1.bf16.xpose.msra.mxu0 %v5986
    %6010 = vmatprep.subr.bf16.mxu0 0
    %6011 = vmatpush1.bf16.xpose.msra.mxu0 %v5989
    %6012 = vmatprep.subr.bf16.mxu0 0
    %6013 = vmatpush1.bf16.xpose.msra.mxu0 %v5992
    %6014 = vmatprep.subr.bf16.mxu0 0
    %6015 = vmatpush1.bf16.xpose.msra.mxu0 %v5995
    %6016 = vmatprep.subr.bf16.mxu0 0
    %6017 = vmatpush1.bf16.xpose.msra.mxu0 %v5998
    %6018 = vmatprep.subr.bf16.mxu0 0
    %6019 = vmatpush1.bf16.xpose.msra.mxu0 %v6001
    %6020 = vmatprep.subr.bf16.mxu0 0
    %6021 = vmatpush1.bf16.xpose.msra.mxu0 %v6004
    %6022 = vmatprep.subr.bf16.mxu0 0
    %6023 = vmatpush1.bf16.xpose.msra.mxu0 0
    %6024 = vmatprep.subr.bf16.mxu0 0
    %6025 = vmatpush1.bf16.xpose.msra.mxu0 0
    %6026 = vmatprep.subr.bf16.mxu0 0
    %6027 = vmatpush1.bf16.xpose.msra.mxu0 0
    %6028 = vmatprep.subr.bf16.mxu0 0
    %6029 = vmatpush1.bf16.xpose.msra.mxu0 0
    %6030 = vmatprep.subr.bf16.mxu0 0
    %6031 = vmatpush1.bf16.xpose.msra.mxu0 0
    %6032 = vmatprep.subr.bf16.mxu0 0
    %6033 = vmatpush1.bf16.xpose.msra.mxu0 0
    %6034 = vmatprep.subr.bf16.mxu0 0
    %6035 = vmatpush1.bf16.xpose.msra.mxu0 0
    %6036 = vmatprep.subr.bf16.mxu0 0
    %6037 = vmatpush1.bf16.xpose.msra.mxu0 0
    %6038 = vmatprep.mubr.bf16.mxu0 0
    %6039 = vmatmul.mubr.bf16.gmra.mrb[0].mxu0 %v5959
    %v6040 = vpop.f32.mrb[0].mxu0
    %v6041 = vadd.f32 0.0, %v6040
    %v6042 = vpop.f32.mrb[0].mxu0
    %v6043 = vpop.f32.mrb[0].mxu0
    %v6044 = vadd.f32 0.0, %v6043
    %v6045 = vpop.f32.mrb[0].mxu0
    %6046 = vmatprep.mubr.bf16.mxu0 0
    %6047 = vmatmul.mubr.bf16.gmra.mrb[0].mxu0 %v5962
    %v6048 = vpop.f32.mrb[0].mxu0
    %v6049 = vadd.f32 0.0, %v6048
    %v6050 = vpop.f32.mrb[0].mxu0
    %v6051 = vpop.f32.mrb[0].mxu0
    %v6052 = vadd.f32 0.0, %v6051
    %v6053 = vpop.f32.mrb[0].mxu0
    %6054 = vmatprep.mubr.bf16.mxu0 0
    %6055 = vmatmul.mubr.bf16.gmra.mrb[0].mxu0 %v5965
    %v6056 = vpop.f32.mrb[0].mxu0
    %v6057 = vadd.f32 0.0, %v6056
    %v6058 = vpop.f32.mrb[0].mxu0
    %v6059 = vpop.f32.mrb[0].mxu0
    %v6060 = vadd.f32 0.0, %v6059
    %v6061 = vpop.f32.mrb[0].mxu0
    %6062 = vmatprep.mubr.bf16.mxu0 0
    %6063 = vmatmul.mubr.bf16.gmra.mrb[0].mxu0 %v5968
    %v6064 = vpop.f32.mrb[0].mxu0
    %v6065 = vadd.f32 0.0, %v6064
    %v6066 = vpop.f32.mrb[0].mxu0
    %v6067 = vpop.f32.mrb[0].mxu0
    %v6068 = vadd.f32 0.0, %v6067
    %v6069 = vpop.f32.mrb[0].mxu0
    %6070 = vmatprep.mubr.bf16.mxu0 0
    %6071 = vmatmul.mubr.bf16.gmra.mrb[0].mxu0 %v5971
    %v6072 = vpop.f32.mrb[0].mxu0
    %v6073 = vadd.f32 0.0, %v6072
    %v6074 = vpop.f32.mrb[0].mxu0
    %v6075 = vpop.f32.mrb[0].mxu0
    %v6076 = vadd.f32 0.0, %v6075
    %v6077 = vpop.f32.mrb[0].mxu0
    %6078 = vmatprep.mubr.bf16.mxu0 0
    %6079 = vmatmul.mubr.bf16.gmra.mrb[0].mxu0 %v5974
    %v6080 = vpop.f32.mrb[0].mxu0
    %v6081 = vadd.f32 0.0, %v6080
    %v6082 = vpop.f32.mrb[0].mxu0
    %v6083 = vpop.f32.mrb[0].mxu0
    %v6084 = vadd.f32 0.0, %v6083
    %v6085 = vpop.f32.mrb[0].mxu0
    %6086 = vmatprep.mubr.bf16.mxu0 0
    %6087 = vmatmul.mubr.bf16.gmra.mrb[0].mxu0 %v5977
    %v6088 = vpop.f32.mrb[0].mxu0
    %v6089 = vadd.f32 0.0, %v6088
    %v6090 = vpop.f32.mrb[0].mxu0
    %v6091 = vpop.f32.mrb[0].mxu0
    %v6092 = vadd.f32 0.0, %v6091
    %v6093 = vpop.f32.mrb[0].mxu0
    %6094 = vmatprep.mubr.bf16.mxu0 0
    %6095 = vmatmul.mubr.bf16.gmra.mrb[0].mxu0 %v5980
    %v6096 = vpop.f32.mrb[0].mxu0
    %v6097 = vadd.f32 0.0, %v6096
    %v6098 = vpop.f32.mrb[0].mxu0
    %v6099 = vpop.f32.mrb[0].mxu0
    %v6100 = vadd.f32 0.0, %v6099
    %v6101 = vpop.f32.mrb[0].mxu0
    %6102 = vdwg.mxu0
    %v6103 = vmul.f32 %v6041, 0.35355338
    %v6104 = vmul.f32 %v6044, 0.35355338
    %v6105 = vmul.f32 %v6049, 0.35355338
    %v6106 = vmul.f32 %v6052, 0.35355338
    %v6107 = vmul.f32 %v6057, 0.35355338
    %v6108 = vmul.f32 %v6060, 0.35355338
    %v6109 = vmul.f32 %v6065, 0.35355338
    %v6110 = vmul.f32 %v6068, 0.35355338
    %v6111 = vmul.f32 %v6073, 0.35355338
    %v6112 = vmul.f32 %v6076, 0.35355338
    %v6113 = vmul.f32 %v6081, 0.35355338
    %v6114 = vmul.f32 %v6084, 0.35355338
    %v6115 = vmul.f32 %v6089, 0.35355338
    %v6116 = vmul.f32 %v6092, 0.35355338
    %v6117 = vmul.f32 %v6097, 0.35355338
    %v6118 = vmul.f32 %v6100, 0.35355338
    %6119 = vmax.xlane.f32.xlu0 %v6103
    %v6120 = vpop.xlane.xlu0 %6119
    %6121 = vmax.xlane.f32.xlu0 %v6104
    %v6122 = vpop.xlane.xlu0 %6121
    %6123 = vmax.xlane.f32.xlu0 %v6105
    %v6124 = vpop.xlane.xlu0 %6123
    %6125 = vmax.xlane.f32.xlu0 %v6106
    %v6126 = vpop.xlane.xlu0 %6125
    %6127 = vmax.xlane.f32.xlu0 %v6107
    %v6128 = vpop.xlane.xlu0 %6127
    %6129 = vmax.xlane.f32.xlu0 %v6108
    %v6130 = vpop.xlane.xlu0 %6129
    %6131 = vmax.xlane.f32.xlu0 %v6109
    %v6132 = vpop.xlane.xlu0 %6131
    %6133 = vmax.xlane.f32.xlu0 %v6110
    %v6134 = vpop.xlane.xlu0 %6133
    %6135 = vmax.xlane.f32.xlu0 %v6111
    %v6136 = vpop.xlane.xlu0 %6135
    %6137 = vmax.xlane.f32.xlu0 %v6112
    %v6138 = vpop.xlane.xlu0 %6137
    %6139 = vmax.xlane.f32.xlu0 %v6113
    %v6140 = vpop.xlane.xlu0 %6139
    %6141 = vmax.xlane.f32.xlu0 %v6114
    %v6142 = vpop.xlane.xlu0 %6141
    %6143 = vmax.xlane.f32.xlu0 %v6115
    %v6144 = vpop.xlane.xlu0 %6143
    %6145 = vmax.xlane.f32.xlu0 %v6116
    %v6146 = vpop.xlane.xlu0 %6145
    %6147 = vmax.xlane.f32.xlu0 %v6117
    %v6148 = vpop.xlane.xlu0 %6147
    %6149 = vmax.xlane.f32.xlu0 %v6118
    %v6150 = vpop.xlane.xlu0 %6149
    %v6151 = vsub.f32 %v6103, %v6120
    %v6152 = vsub.f32 %v6104, %v6122
    %v6153 = vsub.f32 %v6105, %v6124
    %v6154 = vsub.f32 %v6106, %v6126
    %v6155 = vsub.f32 %v6107, %v6128
    %v6156 = vsub.f32 %v6108, %v6130
    %v6157 = vsub.f32 %v6109, %v6132
    %v6158 = vsub.f32 %v6110, %v6134
    %v6159 = vsub.f32 %v6111, %v6136
    %v6160 = vsub.f32 %v6112, %v6138
    %v6161 = vsub.f32 %v6113, %v6140
    %v6162 = vsub.f32 %v6114, %v6142
    %v6163 = vsub.f32 %v6115, %v6144
    %v6164 = vsub.f32 %v6116, %v6146
    %v6165 = vsub.f32 %v6117, %v6148
    %v6166 = vsub.f32 %v6118, %v6150
    %v6167 = vmul.f32 %v6151, 1.442695
    %v6168 = vpow.pop %v6167
    %v6169 = vmul.f32 %v6152, 1.442695
    %v6170 = vpow.pop %v6169
    %v6171 = vmul.f32 %v6153, 1.442695
    %v6172 = vpow.pop %v6171
    %v6173 = vmul.f32 %v6154, 1.442695
    %v6174 = vpow.pop %v6173
    %v6175 = vmul.f32 %v6155, 1.442695
    %v6176 = vpow.pop %v6175
    %v6177 = vmul.f32 %v6156, 1.442695
    %v6178 = vpow.pop %v6177
    %v6179 = vmul.f32 %v6157, 1.442695
    %v6180 = vpow.pop %v6179
    %v6181 = vmul.f32 %v6158, 1.442695
    %v6182 = vpow.pop %v6181
    %v6183 = vmul.f32 %v6159, 1.442695
    %v6184 = vpow.pop %v6183
    %v6185 = vmul.f32 %v6160, 1.442695
    %v6186 = vpow.pop %v6185
    %v6187 = vmul.f32 %v6161, 1.442695
    %v6188 = vpow.pop %v6187
    %v6189 = vmul.f32 %v6162, 1.442695
    %v6190 = vpow.pop %v6189
    %v6191 = vmul.f32 %v6163, 1.442695
    %v6192 = vpow.pop %v6191
    %v6193 = vmul.f32 %v6164, 1.442695
    %v6194 = vpow.pop %v6193
    %v6195 = vmul.f32 %v6165, 1.442695
    %v6196 = vpow.pop %v6195
    %v6197 = vmul.f32 %v6166, 1.442695
    %v6198 = vpow.pop %v6197
    %v6199 = vmul.f32 %v6168, %v5411
    %v6200 = vmul.f32 %v6170, %v5412
    %v6201 = vmul.f32 %v6172, %v5413
    %v6202 = vmul.f32 %v6174, %v5414
    %v6203 = vmul.f32 %v6176, %v5415
    %v6204 = vmul.f32 %v6178, %v5416
    %v6205 = vmul.f32 %v6180, %v5417
    %v6206 = vmul.f32 %v6182, %v5418
    %v6207 = vmul.f32 %v6184, %v5419
    %v6208 = vmul.f32 %v6186, %v5420
    %v6209 = vmul.f32 %v6188, %v5421
    %v6210 = vmul.f32 %v6190, %v5422
    %v6211 = vmul.f32 %v6192, %v5423
    %v6212 = vmul.f32 %v6194, %v5424
    %v6213 = vmul.f32 %v6196, %v5425
    %v6214 = vmul.f32 %v6198, %v5426
    %6215 = vadd.xlane.f32.xlu0 %v6199
    %v6216 = vpop.xlane.xlu0 %6215
    %6217 = vadd.xlane.f32.xlu0 %v6200
    %v6218 = vpop.xlane.xlu0 %6217
    %6219 = vadd.xlane.f32.xlu0 %v6201
    %v6220 = vpop.xlane.xlu0 %6219
    %6221 = vadd.xlane.f32.xlu0 %v6202
    %v6222 = vpop.xlane.xlu0 %6221
    %6223 = vadd.xlane.f32.xlu0 %v6203
    %v6224 = vpop.xlane.xlu0 %6223
    %6225 = vadd.xlane.f32.xlu0 %v6204
    %v6226 = vpop.xlane.xlu0 %6225
    %6227 = vadd.xlane.f32.xlu0 %v6205
    %v6228 = vpop.xlane.xlu0 %6227
    %6229 = vadd.xlane.f32.xlu0 %v6206
    %v6230 = vpop.xlane.xlu0 %6229
    %6231 = vadd.xlane.f32.xlu0 %v6207
    %v6232 = vpop.xlane.xlu0 %6231
    %6233 = vadd.xlane.f32.xlu0 %v6208
    %v6234 = vpop.xlane.xlu0 %6233
    %6235 = vadd.xlane.f32.xlu0 %v6209
    %v6236 = vpop.xlane.xlu0 %6235
    %6237 = vadd.xlane.f32.xlu0 %v6210
    %v6238 = vpop.xlane.xlu0 %6237
    %6239 = vadd.xlane.f32.xlu0 %v6211
    %v6240 = vpop.xlane.xlu0 %6239
    %6241 = vadd.xlane.f32.xlu0 %v6212
    %v6242 = vpop.xlane.xlu0 %6241
    %6243 = vadd.xlane.f32.xlu0 %v6213
    %v6244 = vpop.xlane.xlu0 %6243
    %6245 = vadd.xlane.f32.xlu0 %v6214
    %v6246 = vpop.xlane.xlu0 %6245
    %v6247 = vmax.f32 %v6216, 1e-30
    %v6248 = vmax.f32 %v6218, 1e-30
    %v6249 = vmax.f32 %v6220, 1e-30
    %v6250 = vmax.f32 %v6222, 1e-30
    %v6251 = vmax.f32 %v6224, 1e-30
    %v6252 = vmax.f32 %v6226, 1e-30
    %v6253 = vmax.f32 %v6228, 1e-30
    %v6254 = vmax.f32 %v6230, 1e-30
    %v6255 = vmax.f32 %v6232, 1e-30
    %v6256 = vmax.f32 %v6234, 1e-30
    %v6257 = vmax.f32 %v6236, 1e-30
    %v6258 = vmax.f32 %v6238, 1e-30
    %v6259 = vmax.f32 %v6240, 1e-30
    %v6260 = vmax.f32 %v6242, 1e-30
    %v6261 = vmax.f32 %v6244, 1e-30
    %v6262 = vmax.f32 %v6246, 1e-30
    %v6263 = vrcp.pop %v6247
    %v6264 = vrcp.pop %v6248
    %v6265 = vrcp.pop %v6249
    %v6266 = vrcp.pop %v6250
    %v6267 = vrcp.pop %v6251
    %v6268 = vrcp.pop %v6252
    %v6269 = vrcp.pop %v6253
    %v6270 = vrcp.pop %v6254
    %v6271 = vrcp.pop %v6255
    %v6272 = vrcp.pop %v6256
    %v6273 = vrcp.pop %v6257
    %v6274 = vrcp.pop %v6258
    %v6275 = vrcp.pop %v6259
    %v6276 = vrcp.pop %v6260
    %v6277 = vrcp.pop %v6261
    %v6278 = vrcp.pop %v6262
    %v6279 = vmul.f32 %v6199, %v6263
    %v6280 = vmul.f32 %v6200, %v6264
    %v6281 = vmul.f32 %v6201, %v6265
    %v6282 = vmul.f32 %v6202, %v6266
    %v6283 = vmul.f32 %v6203, %v6267
    %v6284 = vmul.f32 %v6204, %v6268
    %v6285 = vmul.f32 %v6205, %v6269
    %v6286 = vmul.f32 %v6206, %v6270
    %v6287 = vmul.f32 %v6207, %v6271
    %v6288 = vmul.f32 %v6208, %v6272
    %v6289 = vmul.f32 %v6209, %v6273
    %v6290 = vmul.f32 %v6210, %v6274
    %v6291 = vmul.f32 %v6211, %v6275
    %v6292 = vmul.f32 %v6212, %v6276
    %v6293 = vmul.f32 %v6213, %v6277
    %v6294 = vmul.f32 %v6214, %v6278
    %v6295 = vpack.c.bf16 %v6280, %v6279
    %v6296 = vpack.c.bf16 %v6282, %v6281
    %v6297 = vpack.c.bf16 %v6284, %v6283
    %v6298 = vpack.c.bf16 %v6286, %v6285
    %v6299 = vpack.c.bf16 %v6288, %v6287
    %v6300 = vpack.c.bf16 %v6290, %v6289
    %v6301 = vpack.c.bf16 %v6292, %v6291
    %v6302 = vpack.c.bf16 %v6294, %v6293
    %6311 = vrot.lane.b32.xlu0 %v5451, 120
    %v6312 = vpop.permute.xlu0 %6311
    %6313 = vrot.lane.b32.xlu0 %v5452, 120
    %v6314 = vpop.permute.xlu0 %6313
    %6315 = vrot.lane.b32.xlu0 %v5453, 120
    %v6316 = vpop.permute.xlu0 %6315
    %6317 = vrot.lane.b32.xlu0 %v5454, 120
    %v6318 = vpop.permute.xlu0 %6317
    %6319 = vrot.lane.b32.xlu0 %v5455, 120
    %v6320 = vpop.permute.xlu0 %6319
    %6321 = vrot.lane.b32.xlu0 %v5456, 120
    %v6322 = vpop.permute.xlu0 %6321
    %6323 = vrot.lane.b32.xlu0 %v5457, 120
    %v6324 = vpop.permute.xlu0 %6323
    %6325 = vrot.lane.b32.xlu0 %v5458, 120
    %v6326 = vpop.permute.xlu0 %6325
    %6335 = vmatprep.subr.bf16.mxu0 0
    %6336 = vmatpush1.bf16.msra.mxu0 %v6312
    %6337 = vmatprep.subr.bf16.mxu0 0
    %6338 = vmatpush1.bf16.msra.mxu0 %v6314
    %6339 = vmatprep.subr.bf16.mxu0 0
    %6340 = vmatpush1.bf16.msra.mxu0 %v6316
    %6341 = vmatprep.subr.bf16.mxu0 0
    %6342 = vmatpush1.bf16.msra.mxu0 %v6318
    %6343 = vmatprep.subr.bf16.mxu0 0
    %6344 = vmatpush1.bf16.msra.mxu0 %v6320
    %6345 = vmatprep.subr.bf16.mxu0 0
    %6346 = vmatpush1.bf16.msra.mxu0 %v6322
    %6347 = vmatprep.subr.bf16.mxu0 0
    %6348 = vmatpush1.bf16.msra.mxu0 %v6324
    %6349 = vmatprep.subr.bf16.mxu0 0
    %6350 = vmatpush1.bf16.msra.mxu0 %v6326
    %6351 = vmatprep.subr.bf16.mxu0 0
    %6352 = vmatpush1.bf16.msra.mxu0 0
    %6353 = vmatprep.subr.bf16.mxu0 0
    %6354 = vmatpush1.bf16.msra.mxu0 0
    %6355 = vmatprep.subr.bf16.mxu0 0
    %6356 = vmatpush1.bf16.msra.mxu0 0
    %6357 = vmatprep.subr.bf16.mxu0 0
    %6358 = vmatpush1.bf16.msra.mxu0 0
    %6359 = vmatprep.subr.bf16.mxu0 0
    %6360 = vmatpush1.bf16.msra.mxu0 0
    %6361 = vmatprep.subr.bf16.mxu0 0
    %6362 = vmatpush1.bf16.msra.mxu0 0
    %6363 = vmatprep.subr.bf16.mxu0 0
    %6364 = vmatpush1.bf16.msra.mxu0 0
    %6365 = vmatprep.subr.bf16.mxu0 0
    %6366 = vmatpush1.bf16.msra.mxu0 0
    %6367 = vmatprep.mubr.bf16.mxu0 0
    %6368 = vmatmul.mubr.bf16.gmra.mrb[0].mxu0 %v6295
    %v6369 = vpop.f32.mrb[0].mxu0
    %v6370 = vadd.f32 0.0, %v6369
    %v6371 = vpop.f32.mrb[0].mxu0
    %v6372 = vpop.f32.mrb[0].mxu0
    %v6373 = vadd.f32 0.0, %v6372
    %v6374 = vpop.f32.mrb[0].mxu0
    %6375 = vmatprep.mubr.bf16.mxu0 0
    %6376 = vmatmul.mubr.bf16.gmra.mrb[0].mxu0 %v6296
    %v6377 = vpop.f32.mrb[0].mxu0
    %v6378 = vadd.f32 0.0, %v6377
    %v6379 = vpop.f32.mrb[0].mxu0
    %v6380 = vpop.f32.mrb[0].mxu0
    %v6381 = vadd.f32 0.0, %v6380
    %v6382 = vpop.f32.mrb[0].mxu0
    %6383 = vmatprep.mubr.bf16.mxu0 0
    %6384 = vmatmul.mubr.bf16.gmra.mrb[0].mxu0 %v6297
    %v6385 = vpop.f32.mrb[0].mxu0
    %v6386 = vadd.f32 0.0, %v6385
    %v6387 = vpop.f32.mrb[0].mxu0
    %v6388 = vpop.f32.mrb[0].mxu0
    %v6389 = vadd.f32 0.0, %v6388
    %v6390 = vpop.f32.mrb[0].mxu0
    %6391 = vmatprep.mubr.bf16.mxu0 0
    %6392 = vmatmul.mubr.bf16.gmra.mrb[0].mxu0 %v6298
    %v6393 = vpop.f32.mrb[0].mxu0
    %v6394 = vadd.f32 0.0, %v6393
    %v6395 = vpop.f32.mrb[0].mxu0
    %v6396 = vpop.f32.mrb[0].mxu0
    %v6397 = vadd.f32 0.0, %v6396
    %v6398 = vpop.f32.mrb[0].mxu0
    %6399 = vmatprep.mubr.bf16.mxu0 0
    %6400 = vmatmul.mubr.bf16.gmra.mrb[0].mxu0 %v6299
    %v6401 = vpop.f32.mrb[0].mxu0
    %v6402 = vadd.f32 0.0, %v6401
    %v6403 = vpop.f32.mrb[0].mxu0
    %v6404 = vpop.f32.mrb[0].mxu0
    %v6405 = vadd.f32 0.0, %v6404
    %v6406 = vpop.f32.mrb[0].mxu0
    %6407 = vmatprep.mubr.bf16.mxu0 0
    %6408 = vmatmul.mubr.bf16.gmra.mrb[0].mxu0 %v6300
    %v6409 = vpop.f32.mrb[0].mxu0
    %v6410 = vadd.f32 0.0, %v6409
    %v6411 = vpop.f32.mrb[0].mxu0
    %v6412 = vpop.f32.mrb[0].mxu0
    %v6413 = vadd.f32 0.0, %v6412
    %v6414 = vpop.f32.mrb[0].mxu0
    %6415 = vmatprep.mubr.bf16.mxu0 0
    %6416 = vmatmul.mubr.bf16.gmra.mrb[0].mxu0 %v6301
    %v6417 = vpop.f32.mrb[0].mxu0
    %v6418 = vadd.f32 0.0, %v6417
    %v6419 = vpop.f32.mrb[0].mxu0
    %v6420 = vpop.f32.mrb[0].mxu0
    %v6421 = vadd.f32 0.0, %v6420
    %v6422 = vpop.f32.mrb[0].mxu0
    %6423 = vmatprep.mubr.bf16.mxu0 0
    %6424 = vmatmul.mubr.bf16.gmra.mrb[0].mxu0 %v6302
    %v6425 = vpop.f32.mrb[0].mxu0
    %v6426 = vadd.f32 0.0, %v6425
    %v6427 = vpop.f32.mrb[0].mxu0
    %v6428 = vpop.f32.mrb[0].mxu0
    %v6429 = vadd.f32 0.0, %v6428
    %v6430 = vpop.f32.mrb[0].mxu0
    %6431 = vdwg.mxu0
    %v6432 = vpack.c.bf16 %v6373, %v6370
    %v6433 = vpack.c.bf16 %v6381, %v6378
    %v6434 = vpack.c.bf16 %v6389, %v6386
    %v6435 = vpack.c.bf16 %v6397, %v6394
    %v6436 = vpack.c.bf16 %v6405, %v6402
    %v6437 = vpack.c.bf16 %v6413, %v6410
    %v6438 = vpack.c.bf16 %v6421, %v6418
    %v6439 = vpack.c.bf16 %v6429, %v6426
    %v6441 = vsel %vm5459, %v6432, 0
    %v6444 = vsel %vm5459, %v6433, 0
    %v6447 = vsel %vm5459, %v6434, 0
    %v6450 = vsel %vm5459, %v6435, 0
    %v6453 = vsel %vm5459, %v6436, 0
    %v6456 = vsel %vm5459, %v6437, 0
    %v6459 = vsel %vm5459, %v6438, 0
    %v6462 = vsel %vm5459, %v6439, 0
    %vm6464 = vcmask 1043456
    %v6466 = vsel %vm6464, %v5428, 0
    %6468 = vmatprep.subr.bf16.mxu0 0
    %6469 = vmatpush1.bf16.msra.mxu0 %v6466
    %6470 = vmatprep.subr.bf16.mxu0 0
    %6471 = vmatpush1.bf16.msra.mxu0 0
    %6472 = vmatprep.subr.bf16.mxu0 0
    %6473 = vmatpush1.bf16.msra.mxu0 0
    %6474 = vmatprep.subr.bf16.mxu0 0
    %6475 = vmatpush1.bf16.msra.mxu0 0
    %6476 = vmatprep.subr.bf16.mxu0 0
    %6477 = vmatpush1.bf16.msra.mxu0 0
    %6478 = vmatprep.subr.bf16.mxu0 0
    %6479 = vmatpush1.bf16.msra.mxu0 0
    %6480 = vmatprep.subr.bf16.mxu0 0
    %6481 = vmatpush1.bf16.msra.mxu0 0
    %6482 = vmatprep.subr.bf16.mxu0 0
    %6483 = vmatpush1.bf16.msra.mxu0 0
    %6484 = vmatprep.subr.bf16.mxu0 0
    %6485 = vmatpush1.bf16.msra.mxu0 0
    %6486 = vmatprep.subr.bf16.mxu0 0
    %6487 = vmatpush1.bf16.msra.mxu0 0
    %6488 = vmatprep.subr.bf16.mxu0 0
    %6489 = vmatpush1.bf16.msra.mxu0 0
    %6490 = vmatprep.subr.bf16.mxu0 0
    %6491 = vmatpush1.bf16.msra.mxu0 0
    %6492 = vmatprep.subr.bf16.mxu0 0
    %6493 = vmatpush1.bf16.msra.mxu0 0
    %6494 = vmatprep.subr.bf16.mxu0 0
    %6495 = vmatpush1.bf16.msra.mxu0 0
    %6496 = vmatprep.subr.bf16.mxu0 0
    %6497 = vmatpush1.bf16.msra.mxu0 0
    %6498 = vmatprep.subr.bf16.mxu0 0
    %6499 = vmatpush1.bf16.msra.mxu0 0
    %6500 = vmatprep.mubr.bf16.mxu0 0
    %6501 = vmatmul.mubr.bf16.gmra.mrb[0].mxu0 %v6441
    %v6502 = vpop.f32.mrb[0].mxu0
    %v6503 = vadd.f32 0.0, %v6502
    %v6504 = vpop.f32.mrb[0].mxu0
    %v6505 = vpop.f32.mrb[0].mxu0
    %v6506 = vadd.f32 0.0, %v6505
    %v6507 = vpop.f32.mrb[0].mxu0
    %6508 = vmatprep.mubr.bf16.mxu0 0
    %6509 = vmatmul.mubr.bf16.gmra.mrb[0].mxu0 %v6444
    %v6510 = vpop.f32.mrb[0].mxu0
    %v6511 = vadd.f32 0.0, %v6510
    %v6512 = vpop.f32.mrb[0].mxu0
    %v6513 = vpop.f32.mrb[0].mxu0
    %v6514 = vadd.f32 0.0, %v6513
    %v6515 = vpop.f32.mrb[0].mxu0
    %6516 = vmatprep.mubr.bf16.mxu0 0
    %6517 = vmatmul.mubr.bf16.gmra.mrb[0].mxu0 %v6447
    %v6518 = vpop.f32.mrb[0].mxu0
    %v6519 = vadd.f32 0.0, %v6518
    %v6520 = vpop.f32.mrb[0].mxu0
    %v6521 = vpop.f32.mrb[0].mxu0
    %v6522 = vadd.f32 0.0, %v6521
    %v6523 = vpop.f32.mrb[0].mxu0
    %6524 = vmatprep.mubr.bf16.mxu0 0
    %6525 = vmatmul.mubr.bf16.gmra.mrb[0].mxu0 %v6450
    %v6526 = vpop.f32.mrb[0].mxu0
    %v6527 = vadd.f32 0.0, %v6526
    %v6528 = vpop.f32.mrb[0].mxu0
    %v6529 = vpop.f32.mrb[0].mxu0
    %v6530 = vadd.f32 0.0, %v6529
    %v6531 = vpop.f32.mrb[0].mxu0
    %6532 = vmatprep.mubr.bf16.mxu0 0
    %6533 = vmatmul.mubr.bf16.gmra.mrb[0].mxu0 %v6453
    %v6534 = vpop.f32.mrb[0].mxu0
    %v6535 = vadd.f32 0.0, %v6534
    %v6536 = vpop.f32.mrb[0].mxu0
    %v6537 = vpop.f32.mrb[0].mxu0
    %v6538 = vadd.f32 0.0, %v6537
    %v6539 = vpop.f32.mrb[0].mxu0
    %6540 = vmatprep.mubr.bf16.mxu0 0
    %6541 = vmatmul.mubr.bf16.gmra.mrb[0].mxu0 %v6456
    %v6542 = vpop.f32.mrb[0].mxu0
    %v6543 = vadd.f32 0.0, %v6542
    %v6544 = vpop.f32.mrb[0].mxu0
    %v6545 = vpop.f32.mrb[0].mxu0
    %v6546 = vadd.f32 0.0, %v6545
    %v6547 = vpop.f32.mrb[0].mxu0
    %6548 = vmatprep.mubr.bf16.mxu0 0
    %6549 = vmatmul.mubr.bf16.gmra.mrb[0].mxu0 %v6459
    %v6550 = vpop.f32.mrb[0].mxu0
    %v6551 = vadd.f32 0.0, %v6550
    %v6552 = vpop.f32.mrb[0].mxu0
    %v6553 = vpop.f32.mrb[0].mxu0
    %v6554 = vadd.f32 0.0, %v6553
    %v6555 = vpop.f32.mrb[0].mxu0
    %6556 = vmatprep.mubr.bf16.mxu0 0
    %6557 = vmatmul.mubr.bf16.gmra.mrb[0].mxu0 %v6462
    %v6558 = vpop.f32.mrb[0].mxu0
    %v6559 = vadd.f32 0.0, %v6558
    %v6560 = vpop.f32.mrb[0].mxu0
    %v6561 = vpop.f32.mrb[0].mxu0
    %v6562 = vadd.f32 0.0, %v6561
    %v6563 = vpop.f32.mrb[0].mxu0
    %6564 = vdwg.mxu0
    %v6566 = vsel %vm5459, %v5902, 0
    %v6569 = vsel %vm5459, %v5903, 0
    %v6572 = vsel %vm5459, %v5904, 0
    %v6575 = vsel %vm5459, %v5905, 0
    %v6578 = vsel %vm5459, %v5906, 0
    %v6581 = vsel %vm5459, %v5907, 0
    %v6584 = vsel %vm5459, %v5908, 0
    %v6587 = vsel %vm5459, %v5909, 0
    %v6590 = vsel %vm6464, %v5427, 0
    %6592 = vmatprep.subr.bf16.mxu0 0
    %6593 = vmatpush1.bf16.msra.mxu0 %v6590
    %6594 = vmatprep.subr.bf16.mxu0 0
    %6595 = vmatpush1.bf16.msra.mxu0 0
    %6596 = vmatprep.subr.bf16.mxu0 0
    %6597 = vmatpush1.bf16.msra.mxu0 0
    %6598 = vmatprep.subr.bf16.mxu0 0
    %6599 = vmatpush1.bf16.msra.mxu0 0
    %6600 = vmatprep.subr.bf16.mxu0 0
    %6601 = vmatpush1.bf16.msra.mxu0 0
    %6602 = vmatprep.subr.bf16.mxu0 0
    %6603 = vmatpush1.bf16.msra.mxu0 0
    %6604 = vmatprep.subr.bf16.mxu0 0
    %6605 = vmatpush1.bf16.msra.mxu0 0
    %6606 = vmatprep.subr.bf16.mxu0 0
    %6607 = vmatpush1.bf16.msra.mxu0 0
    %6608 = vmatprep.subr.bf16.mxu0 0
    %6609 = vmatpush1.bf16.msra.mxu0 0
    %6610 = vmatprep.subr.bf16.mxu0 0
    %6611 = vmatpush1.bf16.msra.mxu0 0
    %6612 = vmatprep.subr.bf16.mxu0 0
    %6613 = vmatpush1.bf16.msra.mxu0 0
    %6614 = vmatprep.subr.bf16.mxu0 0
    %6615 = vmatpush1.bf16.msra.mxu0 0
    %6616 = vmatprep.subr.bf16.mxu0 0
    %6617 = vmatpush1.bf16.msra.mxu0 0
    %6618 = vmatprep.subr.bf16.mxu0 0
    %6619 = vmatpush1.bf16.msra.mxu0 0
    %6620 = vmatprep.subr.bf16.mxu0 0
    %6621 = vmatpush1.bf16.msra.mxu0 0
    %6622 = vmatprep.subr.bf16.mxu0 0
    %6623 = vmatpush1.bf16.msra.mxu0 0
    %6624 = vmatprep.mubr.bf16.mxu0 0
    %6625 = vmatmul.mubr.bf16.gmra.mrb[0].mxu0 %v6566
    %v6626 = vpop.f32.mrb[0].mxu0
    %v6627 = vadd.f32 %v6503, %v6626
    %v6628 = vpop.f32.mrb[0].mxu0
    %v6629 = vpop.f32.mrb[0].mxu0
    %v6630 = vadd.f32 %v6506, %v6629
    %v6631 = vpop.f32.mrb[0].mxu0
    %6632 = vmatprep.mubr.bf16.mxu0 0
    %6633 = vmatmul.mubr.bf16.gmra.mrb[0].mxu0 %v6569
    %v6634 = vpop.f32.mrb[0].mxu0
    %v6635 = vadd.f32 %v6511, %v6634
    %v6636 = vpop.f32.mrb[0].mxu0
    %v6637 = vpop.f32.mrb[0].mxu0
    %v6638 = vadd.f32 %v6514, %v6637
    %v6639 = vpop.f32.mrb[0].mxu0
    %6640 = vmatprep.mubr.bf16.mxu0 0
    %6641 = vmatmul.mubr.bf16.gmra.mrb[0].mxu0 %v6572
    %v6642 = vpop.f32.mrb[0].mxu0
    %v6643 = vadd.f32 %v6519, %v6642
    %v6644 = vpop.f32.mrb[0].mxu0
    %v6645 = vpop.f32.mrb[0].mxu0
    %v6646 = vadd.f32 %v6522, %v6645
    %v6647 = vpop.f32.mrb[0].mxu0
    %6648 = vmatprep.mubr.bf16.mxu0 0
    %6649 = vmatmul.mubr.bf16.gmra.mrb[0].mxu0 %v6575
    %v6650 = vpop.f32.mrb[0].mxu0
    %v6651 = vadd.f32 %v6527, %v6650
    %v6652 = vpop.f32.mrb[0].mxu0
    %v6653 = vpop.f32.mrb[0].mxu0
    %v6654 = vadd.f32 %v6530, %v6653
    %v6655 = vpop.f32.mrb[0].mxu0
    %6656 = vmatprep.mubr.bf16.mxu0 0
    %6657 = vmatmul.mubr.bf16.gmra.mrb[0].mxu0 %v6578
    %v6658 = vpop.f32.mrb[0].mxu0
    %v6659 = vadd.f32 %v6535, %v6658
    %v6660 = vpop.f32.mrb[0].mxu0
    %v6661 = vpop.f32.mrb[0].mxu0
    %v6662 = vadd.f32 %v6538, %v6661
    %v6663 = vpop.f32.mrb[0].mxu0
    %6664 = vmatprep.mubr.bf16.mxu0 0
    %6665 = vmatmul.mubr.bf16.gmra.mrb[0].mxu0 %v6581
    %v6666 = vpop.f32.mrb[0].mxu0
    %v6667 = vadd.f32 %v6543, %v6666
    %v6668 = vpop.f32.mrb[0].mxu0
    %v6669 = vpop.f32.mrb[0].mxu0
    %v6670 = vadd.f32 %v6546, %v6669
    %v6671 = vpop.f32.mrb[0].mxu0
    %6672 = vmatprep.mubr.bf16.mxu0 0
    %6673 = vmatmul.mubr.bf16.gmra.mrb[0].mxu0 %v6584
    %v6674 = vpop.f32.mrb[0].mxu0
    %v6675 = vadd.f32 %v6551, %v6674
    %v6676 = vpop.f32.mrb[0].mxu0
    %v6677 = vpop.f32.mrb[0].mxu0
    %v6678 = vadd.f32 %v6554, %v6677
    %v6679 = vpop.f32.mrb[0].mxu0
    %6680 = vmatprep.mubr.bf16.mxu0 0
    %6681 = vmatmul.mubr.bf16.gmra.mrb[0].mxu0 %v6587
    %v6682 = vpop.f32.mrb[0].mxu0
    %v6683 = vadd.f32 %v6559, %v6682
    %v6684 = vpop.f32.mrb[0].mxu0
    %v6685 = vpop.f32.mrb[0].mxu0
    %v6686 = vadd.f32 %v6562, %v6685
    %v6687 = vpop.f32.mrb[0].mxu0
    %6688 = vdwg.mxu0
    %6689 = vrot.lane.b32.xlu0 %v5435, 112
    %v6690 = vpop.permute.xlu0 %6689
    %6691 = vrot.lane.b32.xlu0 %v5436, 112
    %v6692 = vpop.permute.xlu0 %6691
    %6693 = vrot.lane.b32.xlu0 %v5437, 112
    %v6694 = vpop.permute.xlu0 %6693
    %6695 = vrot.lane.b32.xlu0 %v5438, 112
    %v6696 = vpop.permute.xlu0 %6695
    %6697 = vrot.lane.b32.xlu0 %v5439, 112
    %v6698 = vpop.permute.xlu0 %6697
    %6699 = vrot.lane.b32.xlu0 %v5440, 112
    %v6700 = vpop.permute.xlu0 %6699
    %6701 = vrot.lane.b32.xlu0 %v5441, 112
    %v6702 = vpop.permute.xlu0 %6701
    %6703 = vrot.lane.b32.xlu0 %v5442, 112
    %v6704 = vpop.permute.xlu0 %6703
    %6705 = vrot.lane.b32.xlu0 %v5443, 112
    %v6706 = vpop.permute.xlu0 %6705
    %6707 = vrot.lane.b32.xlu0 %v5444, 112
    %v6708 = vpop.permute.xlu0 %6707
    %6709 = vrot.lane.b32.xlu0 %v5445, 112
    %v6710 = vpop.permute.xlu0 %6709
    %6711 = vrot.lane.b32.xlu0 %v5446, 112
    %v6712 = vpop.permute.xlu0 %6711
    %6713 = vrot.lane.b32.xlu0 %v5447, 112
    %v6714 = vpop.permute.xlu0 %6713
    %6715 = vrot.lane.b32.xlu0 %v5448, 112
    %v6716 = vpop.permute.xlu0 %6715
    %6717 = vrot.lane.b32.xlu0 %v5449, 112
    %v6718 = vpop.permute.xlu0 %6717
    %6719 = vrot.lane.b32.xlu0 %v5450, 112
    %v6720 = vpop.permute.xlu0 %6719
    %v6722 = vsel %vm5459, %v6690, 0
    %v6725 = vsel %vm5459, %v6692, 0
    %v6728 = vsel %vm5459, %v6694, 0
    %v6731 = vsel %vm5459, %v6696, 0
    %v6734 = vsel %vm5459, %v6698, 0
    %v6737 = vsel %vm5459, %v6700, 0
    %v6740 = vsel %vm5459, %v6702, 0
    %v6743 = vsel %vm5459, %v6704, 0
    %v6746 = vsel %vm5459, %v6706, 0
    %v6749 = vsel %vm5459, %v6708, 0
    %v6752 = vsel %vm5459, %v6710, 0
    %v6755 = vsel %vm5459, %v6712, 0
    %v6758 = vsel %vm5459, %v6714, 0
    %v6761 = vsel %vm5459, %v6716, 0
    %v6764 = vsel %vm5459, %v6718, 0
    %v6767 = vsel %vm5459, %v6720, 0
    %6769 = vmatprep.subr.bf16.mxu0 0
    %6770 = vmatpush1.bf16.xpose.msra.mxu0 %v6746
    %6771 = vmatprep.subr.bf16.mxu0 0
    %6772 = vmatpush1.bf16.xpose.msra.mxu0 %v6749
    %6773 = vmatprep.subr.bf16.mxu0 0
    %6774 = vmatpush1.bf16.xpose.msra.mxu0 %v6752
    %6775 = vmatprep.subr.bf16.mxu0 0
    %6776 = vmatpush1.bf16.xpose.msra.mxu0 %v6755
    %6777 = vmatprep.subr.bf16.mxu0 0
    %6778 = vmatpush1.bf16.xpose.msra.mxu0 %v6758
    %6779 = vmatprep.subr.bf16.mxu0 0
    %6780 = vmatpush1.bf16.xpose.msra.mxu0 %v6761
    %6781 = vmatprep.subr.bf16.mxu0 0
    %6782 = vmatpush1.bf16.xpose.msra.mxu0 %v6764
    %6783 = vmatprep.subr.bf16.mxu0 0
    %6784 = vmatpush1.bf16.xpose.msra.mxu0 %v6767
    %6785 = vmatprep.subr.bf16.mxu0 0
    %6786 = vmatpush1.bf16.xpose.msra.mxu0 0
    %6787 = vmatprep.subr.bf16.mxu0 0
    %6788 = vmatpush1.bf16.xpose.msra.mxu0 0
    %6789 = vmatprep.subr.bf16.mxu0 0
    %6790 = vmatpush1.bf16.xpose.msra.mxu0 0
    %6791 = vmatprep.subr.bf16.mxu0 0
    %6792 = vmatpush1.bf16.xpose.msra.mxu0 0
    %6793 = vmatprep.subr.bf16.mxu0 0
    %6794 = vmatpush1.bf16.xpose.msra.mxu0 0
    %6795 = vmatprep.subr.bf16.mxu0 0
    %6796 = vmatpush1.bf16.xpose.msra.mxu0 0
    %6797 = vmatprep.subr.bf16.mxu0 0
    %6798 = vmatpush1.bf16.xpose.msra.mxu0 0
    %6799 = vmatprep.subr.bf16.mxu0 0
    %6800 = vmatpush1.bf16.xpose.msra.mxu0 0
    %6801 = vmatprep.mubr.bf16.mxu0 0
    %6802 = vmatmul.mubr.bf16.gmra.mrb[0].mxu0 %v6722
    %v6803 = vpop.f32.mrb[0].mxu0
    %v6804 = vadd.f32 0.0, %v6803
    %v6805 = vpop.f32.mrb[0].mxu0
    %v6806 = vpop.f32.mrb[0].mxu0
    %v6807 = vadd.f32 0.0, %v6806
    %v6808 = vpop.f32.mrb[0].mxu0
    %6809 = vmatprep.mubr.bf16.mxu0 0
    %6810 = vmatmul.mubr.bf16.gmra.mrb[0].mxu0 %v6725
    %v6811 = vpop.f32.mrb[0].mxu0
    %v6812 = vadd.f32 0.0, %v6811
    %v6813 = vpop.f32.mrb[0].mxu0
    %v6814 = vpop.f32.mrb[0].mxu0
    %v6815 = vadd.f32 0.0, %v6814
    %v6816 = vpop.f32.mrb[0].mxu0
    %6817 = vmatprep.mubr.bf16.mxu0 0
    %6818 = vmatmul.mubr.bf16.gmra.mrb[0].mxu0 %v6728
    %v6819 = vpop.f32.mrb[0].mxu0
    %v6820 = vadd.f32 0.0, %v6819
    %v6821 = vpop.f32.mrb[0].mxu0
    %v6822 = vpop.f32.mrb[0].mxu0
    %v6823 = vadd.f32 0.0, %v6822
    %v6824 = vpop.f32.mrb[0].mxu0
    %6825 = vmatprep.mubr.bf16.mxu0 0
    %6826 = vmatmul.mubr.bf16.gmra.mrb[0].mxu0 %v6731
    %v6827 = vpop.f32.mrb[0].mxu0
    %v6828 = vadd.f32 0.0, %v6827
    %v6829 = vpop.f32.mrb[0].mxu0
    %v6830 = vpop.f32.mrb[0].mxu0
    %v6831 = vadd.f32 0.0, %v6830
    %v6832 = vpop.f32.mrb[0].mxu0
    %6833 = vmatprep.mubr.bf16.mxu0 0
    %6834 = vmatmul.mubr.bf16.gmra.mrb[0].mxu0 %v6734
    %v6835 = vpop.f32.mrb[0].mxu0
    %v6836 = vadd.f32 0.0, %v6835
    %v6837 = vpop.f32.mrb[0].mxu0
    %v6838 = vpop.f32.mrb[0].mxu0
    %v6839 = vadd.f32 0.0, %v6838
    %v6840 = vpop.f32.mrb[0].mxu0
    %6841 = vmatprep.mubr.bf16.mxu0 0
    %6842 = vmatmul.mubr.bf16.gmra.mrb[0].mxu0 %v6737
    %v6843 = vpop.f32.mrb[0].mxu0
    %v6844 = vadd.f32 0.0, %v6843
    %v6845 = vpop.f32.mrb[0].mxu0
    %v6846 = vpop.f32.mrb[0].mxu0
    %v6847 = vadd.f32 0.0, %v6846
    %v6848 = vpop.f32.mrb[0].mxu0
    %6849 = vmatprep.mubr.bf16.mxu0 0
    %6850 = vmatmul.mubr.bf16.gmra.mrb[0].mxu0 %v6740
    %v6851 = vpop.f32.mrb[0].mxu0
    %v6852 = vadd.f32 0.0, %v6851
    %v6853 = vpop.f32.mrb[0].mxu0
    %v6854 = vpop.f32.mrb[0].mxu0
    %v6855 = vadd.f32 0.0, %v6854
    %v6856 = vpop.f32.mrb[0].mxu0
    %6857 = vmatprep.mubr.bf16.mxu0 0
    %6858 = vmatmul.mubr.bf16.gmra.mrb[0].mxu0 %v6743
    %v6859 = vpop.f32.mrb[0].mxu0
    %v6860 = vadd.f32 0.0, %v6859
    %v6861 = vpop.f32.mrb[0].mxu0
    %v6862 = vpop.f32.mrb[0].mxu0
    %v6863 = vadd.f32 0.0, %v6862
    %v6864 = vpop.f32.mrb[0].mxu0
    %6865 = vdwg.mxu0
    %v6866 = vmul.f32 %v6804, 0.35355338
    %v6867 = vmul.f32 %v6807, 0.35355338
    %v6868 = vmul.f32 %v6812, 0.35355338
    %v6869 = vmul.f32 %v6815, 0.35355338
    %v6870 = vmul.f32 %v6820, 0.35355338
    %v6871 = vmul.f32 %v6823, 0.35355338
    %v6872 = vmul.f32 %v6828, 0.35355338
    %v6873 = vmul.f32 %v6831, 0.35355338
    %v6874 = vmul.f32 %v6836, 0.35355338
    %v6875 = vmul.f32 %v6839, 0.35355338
    %v6876 = vmul.f32 %v6844, 0.35355338
    %v6877 = vmul.f32 %v6847, 0.35355338
    %v6878 = vmul.f32 %v6852, 0.35355338
    %v6879 = vmul.f32 %v6855, 0.35355338
    %v6880 = vmul.f32 %v6860, 0.35355338
    %v6881 = vmul.f32 %v6863, 0.35355338
    %6882 = vmax.xlane.f32.xlu0 %v6866
    %v6883 = vpop.xlane.xlu0 %6882
    %6884 = vmax.xlane.f32.xlu0 %v6867
    %v6885 = vpop.xlane.xlu0 %6884
    %6886 = vmax.xlane.f32.xlu0 %v6868
    %v6887 = vpop.xlane.xlu0 %6886
    %6888 = vmax.xlane.f32.xlu0 %v6869
    %v6889 = vpop.xlane.xlu0 %6888
    %6890 = vmax.xlane.f32.xlu0 %v6870
    %v6891 = vpop.xlane.xlu0 %6890
    %6892 = vmax.xlane.f32.xlu0 %v6871
    %v6893 = vpop.xlane.xlu0 %6892
    %6894 = vmax.xlane.f32.xlu0 %v6872
    %v6895 = vpop.xlane.xlu0 %6894
    %6896 = vmax.xlane.f32.xlu0 %v6873
    %v6897 = vpop.xlane.xlu0 %6896
    %6898 = vmax.xlane.f32.xlu0 %v6874
    %v6899 = vpop.xlane.xlu0 %6898
    %6900 = vmax.xlane.f32.xlu0 %v6875
    %v6901 = vpop.xlane.xlu0 %6900
    %6902 = vmax.xlane.f32.xlu0 %v6876
    %v6903 = vpop.xlane.xlu0 %6902
    %6904 = vmax.xlane.f32.xlu0 %v6877
    %v6905 = vpop.xlane.xlu0 %6904
    %6906 = vmax.xlane.f32.xlu0 %v6878
    %v6907 = vpop.xlane.xlu0 %6906
    %6908 = vmax.xlane.f32.xlu0 %v6879
    %v6909 = vpop.xlane.xlu0 %6908
    %6910 = vmax.xlane.f32.xlu0 %v6880
    %v6911 = vpop.xlane.xlu0 %6910
    %6912 = vmax.xlane.f32.xlu0 %v6881
    %v6913 = vpop.xlane.xlu0 %6912
    %v6914 = vsub.f32 %v6866, %v6883
    %v6915 = vsub.f32 %v6867, %v6885
    %v6916 = vsub.f32 %v6868, %v6887
    %v6917 = vsub.f32 %v6869, %v6889
    %v6918 = vsub.f32 %v6870, %v6891
    %v6919 = vsub.f32 %v6871, %v6893
    %v6920 = vsub.f32 %v6872, %v6895
    %v6921 = vsub.f32 %v6873, %v6897
    %v6922 = vsub.f32 %v6874, %v6899
    %v6923 = vsub.f32 %v6875, %v6901
    %v6924 = vsub.f32 %v6876, %v6903
    %v6925 = vsub.f32 %v6877, %v6905
    %v6926 = vsub.f32 %v6878, %v6907
    %v6927 = vsub.f32 %v6879, %v6909
    %v6928 = vsub.f32 %v6880, %v6911
    %v6929 = vsub.f32 %v6881, %v6913
    %v6930 = vmul.f32 %v6914, 1.442695
    %v6931 = vpow.pop %v6930
    %v6932 = vmul.f32 %v6915, 1.442695
    %v6933 = vpow.pop %v6932
    %v6934 = vmul.f32 %v6916, 1.442695
    %v6935 = vpow.pop %v6934
    %v6936 = vmul.f32 %v6917, 1.442695
    %v6937 = vpow.pop %v6936
    %v6938 = vmul.f32 %v6918, 1.442695
    %v6939 = vpow.pop %v6938
    %v6940 = vmul.f32 %v6919, 1.442695
    %v6941 = vpow.pop %v6940
    %v6942 = vmul.f32 %v6920, 1.442695
    %v6943 = vpow.pop %v6942
    %v6944 = vmul.f32 %v6921, 1.442695
    %v6945 = vpow.pop %v6944
    %v6946 = vmul.f32 %v6922, 1.442695
    %v6947 = vpow.pop %v6946
    %v6948 = vmul.f32 %v6923, 1.442695
    %v6949 = vpow.pop %v6948
    %v6950 = vmul.f32 %v6924, 1.442695
    %v6951 = vpow.pop %v6950
    %v6952 = vmul.f32 %v6925, 1.442695
    %v6953 = vpow.pop %v6952
    %v6954 = vmul.f32 %v6926, 1.442695
    %v6955 = vpow.pop %v6954
    %v6956 = vmul.f32 %v6927, 1.442695
    %v6957 = vpow.pop %v6956
    %v6958 = vmul.f32 %v6928, 1.442695
    %v6959 = vpow.pop %v6958
    %v6960 = vmul.f32 %v6929, 1.442695
    %v6961 = vpow.pop %v6960
    %v6962 = vmul.f32 %v6931, %v5411
    %v6963 = vmul.f32 %v6933, %v5412
    %v6964 = vmul.f32 %v6935, %v5413
    %v6965 = vmul.f32 %v6937, %v5414
    %v6966 = vmul.f32 %v6939, %v5415
    %v6967 = vmul.f32 %v6941, %v5416
    %v6968 = vmul.f32 %v6943, %v5417
    %v6969 = vmul.f32 %v6945, %v5418
    %v6970 = vmul.f32 %v6947, %v5419
    %v6971 = vmul.f32 %v6949, %v5420
    %v6972 = vmul.f32 %v6951, %v5421
    %v6973 = vmul.f32 %v6953, %v5422
    %v6974 = vmul.f32 %v6955, %v5423
    %v6975 = vmul.f32 %v6957, %v5424
    %v6976 = vmul.f32 %v6959, %v5425
    %v6977 = vmul.f32 %v6961, %v5426
    %6978 = vadd.xlane.f32.xlu0 %v6962
    %v6979 = vpop.xlane.xlu0 %6978
    %6980 = vadd.xlane.f32.xlu0 %v6963
    %v6981 = vpop.xlane.xlu0 %6980
    %6982 = vadd.xlane.f32.xlu0 %v6964
    %v6983 = vpop.xlane.xlu0 %6982
    %6984 = vadd.xlane.f32.xlu0 %v6965
    %v6985 = vpop.xlane.xlu0 %6984
    %6986 = vadd.xlane.f32.xlu0 %v6966
    %v6987 = vpop.xlane.xlu0 %6986
    %6988 = vadd.xlane.f32.xlu0 %v6967
    %v6989 = vpop.xlane.xlu0 %6988
    %6990 = vadd.xlane.f32.xlu0 %v6968
    %v6991 = vpop.xlane.xlu0 %6990
    %6992 = vadd.xlane.f32.xlu0 %v6969
    %v6993 = vpop.xlane.xlu0 %6992
    %6994 = vadd.xlane.f32.xlu0 %v6970
    %v6995 = vpop.xlane.xlu0 %6994
    %6996 = vadd.xlane.f32.xlu0 %v6971
    %v6997 = vpop.xlane.xlu0 %6996
    %6998 = vadd.xlane.f32.xlu0 %v6972
    %v6999 = vpop.xlane.xlu0 %6998
    %7000 = vadd.xlane.f32.xlu0 %v6973
    %v7001 = vpop.xlane.xlu0 %7000
    %7002 = vadd.xlane.f32.xlu0 %v6974
    %v7003 = vpop.xlane.xlu0 %7002
    %7004 = vadd.xlane.f32.xlu0 %v6975
    %v7005 = vpop.xlane.xlu0 %7004
    %7006 = vadd.xlane.f32.xlu0 %v6976
    %v7007 = vpop.xlane.xlu0 %7006
    %7008 = vadd.xlane.f32.xlu0 %v6977
    %v7009 = vpop.xlane.xlu0 %7008
    %v7010 = vmax.f32 %v6979, 1e-30
    %v7011 = vmax.f32 %v6981, 1e-30
    %v7012 = vmax.f32 %v6983, 1e-30
    %v7013 = vmax.f32 %v6985, 1e-30
    %v7014 = vmax.f32 %v6987, 1e-30
    %v7015 = vmax.f32 %v6989, 1e-30
    %v7016 = vmax.f32 %v6991, 1e-30
    %v7017 = vmax.f32 %v6993, 1e-30
    %v7018 = vmax.f32 %v6995, 1e-30
    %v7019 = vmax.f32 %v6997, 1e-30
    %v7020 = vmax.f32 %v6999, 1e-30
    %v7021 = vmax.f32 %v7001, 1e-30
    %v7022 = vmax.f32 %v7003, 1e-30
    %v7023 = vmax.f32 %v7005, 1e-30
    %v7024 = vmax.f32 %v7007, 1e-30
    %v7025 = vmax.f32 %v7009, 1e-30
    %v7026 = vrcp.pop %v7010
    %v7027 = vrcp.pop %v7011
    %v7028 = vrcp.pop %v7012
    %v7029 = vrcp.pop %v7013
    %v7030 = vrcp.pop %v7014
    %v7031 = vrcp.pop %v7015
    %v7032 = vrcp.pop %v7016
    %v7033 = vrcp.pop %v7017
    %v7034 = vrcp.pop %v7018
    %v7035 = vrcp.pop %v7019
    %v7036 = vrcp.pop %v7020
    %v7037 = vrcp.pop %v7021
    %v7038 = vrcp.pop %v7022
    %v7039 = vrcp.pop %v7023
    %v7040 = vrcp.pop %v7024
    %v7041 = vrcp.pop %v7025
    %v7042 = vmul.f32 %v6962, %v7026
    %v7043 = vmul.f32 %v6963, %v7027
    %v7044 = vmul.f32 %v6964, %v7028
    %v7045 = vmul.f32 %v6965, %v7029
    %v7046 = vmul.f32 %v6966, %v7030
    %v7047 = vmul.f32 %v6967, %v7031
    %v7048 = vmul.f32 %v6968, %v7032
    %v7049 = vmul.f32 %v6969, %v7033
    %v7050 = vmul.f32 %v6970, %v7034
    %v7051 = vmul.f32 %v6971, %v7035
    %v7052 = vmul.f32 %v6972, %v7036
    %v7053 = vmul.f32 %v6973, %v7037
    %v7054 = vmul.f32 %v6974, %v7038
    %v7055 = vmul.f32 %v6975, %v7039
    %v7056 = vmul.f32 %v6976, %v7040
    %v7057 = vmul.f32 %v6977, %v7041
    %v7058 = vpack.c.bf16 %v7043, %v7042
    %v7059 = vpack.c.bf16 %v7045, %v7044
    %v7060 = vpack.c.bf16 %v7047, %v7046
    %v7061 = vpack.c.bf16 %v7049, %v7048
    %v7062 = vpack.c.bf16 %v7051, %v7050
    %v7063 = vpack.c.bf16 %v7053, %v7052
    %v7064 = vpack.c.bf16 %v7055, %v7054
    %v7065 = vpack.c.bf16 %v7057, %v7056
    %7066 = vrot.lane.b32.xlu0 %v5451, 112
    %v7067 = vpop.permute.xlu0 %7066
    %7068 = vrot.lane.b32.xlu0 %v5452, 112
    %v7069 = vpop.permute.xlu0 %7068
    %7070 = vrot.lane.b32.xlu0 %v5453, 112
    %v7071 = vpop.permute.xlu0 %7070
    %7072 = vrot.lane.b32.xlu0 %v5454, 112
    %v7073 = vpop.permute.xlu0 %7072
    %7074 = vrot.lane.b32.xlu0 %v5455, 112
    %v7075 = vpop.permute.xlu0 %7074
    %7076 = vrot.lane.b32.xlu0 %v5456, 112
    %v7077 = vpop.permute.xlu0 %7076
    %7078 = vrot.lane.b32.xlu0 %v5457, 112
    %v7079 = vpop.permute.xlu0 %7078
    %7080 = vrot.lane.b32.xlu0 %v5458, 112
    %v7081 = vpop.permute.xlu0 %7080
    %7090 = vmatprep.subr.bf16.mxu0 0
    %7091 = vmatpush1.bf16.msra.mxu0 %v7067
    %7092 = vmatprep.subr.bf16.mxu0 0
    %7093 = vmatpush1.bf16.msra.mxu0 %v7069
    %7094 = vmatprep.subr.bf16.mxu0 0
    %7095 = vmatpush1.bf16.msra.mxu0 %v7071
    %7096 = vmatprep.subr.bf16.mxu0 0
    %7097 = vmatpush1.bf16.msra.mxu0 %v7073
    %7098 = vmatprep.subr.bf16.mxu0 0
    %7099 = vmatpush1.bf16.msra.mxu0 %v7075
    %7100 = vmatprep.subr.bf16.mxu0 0
    %7101 = vmatpush1.bf16.msra.mxu0 %v7077
    %7102 = vmatprep.subr.bf16.mxu0 0
    %7103 = vmatpush1.bf16.msra.mxu0 %v7079
    %7104 = vmatprep.subr.bf16.mxu0 0
    %7105 = vmatpush1.bf16.msra.mxu0 %v7081
    %7106 = vmatprep.subr.bf16.mxu0 0
    %7107 = vmatpush1.bf16.msra.mxu0 0
    %7108 = vmatprep.subr.bf16.mxu0 0
    %7109 = vmatpush1.bf16.msra.mxu0 0
    %7110 = vmatprep.subr.bf16.mxu0 0
    %7111 = vmatpush1.bf16.msra.mxu0 0
    %7112 = vmatprep.subr.bf16.mxu0 0
    %7113 = vmatpush1.bf16.msra.mxu0 0
    %7114 = vmatprep.subr.bf16.mxu0 0
    %7115 = vmatpush1.bf16.msra.mxu0 0
    %7116 = vmatprep.subr.bf16.mxu0 0
    %7117 = vmatpush1.bf16.msra.mxu0 0
    %7118 = vmatprep.subr.bf16.mxu0 0
    %7119 = vmatpush1.bf16.msra.mxu0 0
    %7120 = vmatprep.subr.bf16.mxu0 0
    %7121 = vmatpush1.bf16.msra.mxu0 0
    %7122 = vmatprep.mubr.bf16.mxu0 0
    %7123 = vmatmul.mubr.bf16.gmra.mrb[0].mxu0 %v7058
    %v7124 = vpop.f32.mrb[0].mxu0
    %v7125 = vadd.f32 0.0, %v7124
    %v7126 = vpop.f32.mrb[0].mxu0
    %v7127 = vpop.f32.mrb[0].mxu0
    %v7128 = vadd.f32 0.0, %v7127
    %v7129 = vpop.f32.mrb[0].mxu0
    %7130 = vmatprep.mubr.bf16.mxu0 0
    %7131 = vmatmul.mubr.bf16.gmra.mrb[0].mxu0 %v7059
    %v7132 = vpop.f32.mrb[0].mxu0
    %v7133 = vadd.f32 0.0, %v7132
    %v7134 = vpop.f32.mrb[0].mxu0
    %v7135 = vpop.f32.mrb[0].mxu0
    %v7136 = vadd.f32 0.0, %v7135
    %v7137 = vpop.f32.mrb[0].mxu0
    %7138 = vmatprep.mubr.bf16.mxu0 0
    %7139 = vmatmul.mubr.bf16.gmra.mrb[0].mxu0 %v7060
    %v7140 = vpop.f32.mrb[0].mxu0
    %v7141 = vadd.f32 0.0, %v7140
    %v7142 = vpop.f32.mrb[0].mxu0
    %v7143 = vpop.f32.mrb[0].mxu0
    %v7144 = vadd.f32 0.0, %v7143
    %v7145 = vpop.f32.mrb[0].mxu0
    %7146 = vmatprep.mubr.bf16.mxu0 0
    %7147 = vmatmul.mubr.bf16.gmra.mrb[0].mxu0 %v7061
    %v7148 = vpop.f32.mrb[0].mxu0
    %v7149 = vadd.f32 0.0, %v7148
    %v7150 = vpop.f32.mrb[0].mxu0
    %v7151 = vpop.f32.mrb[0].mxu0
    %v7152 = vadd.f32 0.0, %v7151
    %v7153 = vpop.f32.mrb[0].mxu0
    %7154 = vmatprep.mubr.bf16.mxu0 0
    %7155 = vmatmul.mubr.bf16.gmra.mrb[0].mxu0 %v7062
    %v7156 = vpop.f32.mrb[0].mxu0
    %v7157 = vadd.f32 0.0, %v7156
    %v7158 = vpop.f32.mrb[0].mxu0
    %v7159 = vpop.f32.mrb[0].mxu0
    %v7160 = vadd.f32 0.0, %v7159
    %v7161 = vpop.f32.mrb[0].mxu0
    %7162 = vmatprep.mubr.bf16.mxu0 0
    %7163 = vmatmul.mubr.bf16.gmra.mrb[0].mxu0 %v7063
    %v7164 = vpop.f32.mrb[0].mxu0
    %v7165 = vadd.f32 0.0, %v7164
    %v7166 = vpop.f32.mrb[0].mxu0
    %v7167 = vpop.f32.mrb[0].mxu0
    %v7168 = vadd.f32 0.0, %v7167
    %v7169 = vpop.f32.mrb[0].mxu0
    %7170 = vmatprep.mubr.bf16.mxu0 0
    %7171 = vmatmul.mubr.bf16.gmra.mrb[0].mxu0 %v7064
    %v7172 = vpop.f32.mrb[0].mxu0
    %v7173 = vadd.f32 0.0, %v7172
    %v7174 = vpop.f32.mrb[0].mxu0
    %v7175 = vpop.f32.mrb[0].mxu0
    %v7176 = vadd.f32 0.0, %v7175
    %v7177 = vpop.f32.mrb[0].mxu0
    %7178 = vmatprep.mubr.bf16.mxu0 0
    %7179 = vmatmul.mubr.bf16.gmra.mrb[0].mxu0 %v7065
    %v7180 = vpop.f32.mrb[0].mxu0
    %v7181 = vadd.f32 0.0, %v7180
    %v7182 = vpop.f32.mrb[0].mxu0
    %v7183 = vpop.f32.mrb[0].mxu0
    %v7184 = vadd.f32 0.0, %v7183
    %v7185 = vpop.f32.mrb[0].mxu0
    %7186 = vdwg.mxu0
    %v7187 = vpack.c.bf16 %v7128, %v7125
    %v7188 = vpack.c.bf16 %v7136, %v7133
    %v7189 = vpack.c.bf16 %v7144, %v7141
    %v7190 = vpack.c.bf16 %v7152, %v7149
    %v7191 = vpack.c.bf16 %v7160, %v7157
    %v7192 = vpack.c.bf16 %v7168, %v7165
    %v7193 = vpack.c.bf16 %v7176, %v7173
    %v7194 = vpack.c.bf16 %v7184, %v7181
    %v7196 = vsel %vm5459, %v7187, 0
    %v7199 = vsel %vm5459, %v7188, 0
    %v7202 = vsel %vm5459, %v7189, 0
    %v7205 = vsel %vm5459, %v7190, 0
    %v7208 = vsel %vm5459, %v7191, 0
    %v7211 = vsel %vm5459, %v7192, 0
    %v7214 = vsel %vm5459, %v7193, 0
    %v7217 = vsel %vm5459, %v7194, 0
    %v7220 = vsel %vm6464, %v5429, 0
    %7222 = vmatprep.subr.bf16.mxu0 0
    %7223 = vmatpush1.bf16.msra.mxu0 %v7220
    %7224 = vmatprep.subr.bf16.mxu0 0
    %7225 = vmatpush1.bf16.msra.mxu0 0
    %7226 = vmatprep.subr.bf16.mxu0 0
    %7227 = vmatpush1.bf16.msra.mxu0 0
    %7228 = vmatprep.subr.bf16.mxu0 0
    %7229 = vmatpush1.bf16.msra.mxu0 0
    %7230 = vmatprep.subr.bf16.mxu0 0
    %7231 = vmatpush1.bf16.msra.mxu0 0
    %7232 = vmatprep.subr.bf16.mxu0 0
    %7233 = vmatpush1.bf16.msra.mxu0 0
    %7234 = vmatprep.subr.bf16.mxu0 0
    %7235 = vmatpush1.bf16.msra.mxu0 0
    %7236 = vmatprep.subr.bf16.mxu0 0
    %7237 = vmatpush1.bf16.msra.mxu0 0
    %7238 = vmatprep.subr.bf16.mxu0 0
    %7239 = vmatpush1.bf16.msra.mxu0 0
    %7240 = vmatprep.subr.bf16.mxu0 0
    %7241 = vmatpush1.bf16.msra.mxu0 0
    %7242 = vmatprep.subr.bf16.mxu0 0
    %7243 = vmatpush1.bf16.msra.mxu0 0
    %7244 = vmatprep.subr.bf16.mxu0 0
    %7245 = vmatpush1.bf16.msra.mxu0 0
    %7246 = vmatprep.subr.bf16.mxu0 0
    %7247 = vmatpush1.bf16.msra.mxu0 0
    %7248 = vmatprep.subr.bf16.mxu0 0
    %7249 = vmatpush1.bf16.msra.mxu0 0
    %7250 = vmatprep.subr.bf16.mxu0 0
    %7251 = vmatpush1.bf16.msra.mxu0 0
    %7252 = vmatprep.subr.bf16.mxu0 0
    %7253 = vmatpush1.bf16.msra.mxu0 0
    %7254 = vmatprep.mubr.bf16.mxu0 0
    %7255 = vmatmul.mubr.bf16.gmra.mrb[0].mxu0 %v7196
    %v7256 = vpop.f32.mrb[0].mxu0
    %v7257 = vadd.f32 0.0, %v7256
    %v7258 = vpop.f32.mrb[0].mxu0
    %v7259 = vpop.f32.mrb[0].mxu0
    %v7260 = vadd.f32 0.0, %v7259
    %v7261 = vpop.f32.mrb[0].mxu0
    %7262 = vmatprep.mubr.bf16.mxu0 0
    %7263 = vmatmul.mubr.bf16.gmra.mrb[0].mxu0 %v7199
    %v7264 = vpop.f32.mrb[0].mxu0
    %v7265 = vadd.f32 0.0, %v7264
    %v7266 = vpop.f32.mrb[0].mxu0
    %v7267 = vpop.f32.mrb[0].mxu0
    %v7268 = vadd.f32 0.0, %v7267
    %v7269 = vpop.f32.mrb[0].mxu0
    %7270 = vmatprep.mubr.bf16.mxu0 0
    %7271 = vmatmul.mubr.bf16.gmra.mrb[0].mxu0 %v7202
    %v7272 = vpop.f32.mrb[0].mxu0
    %v7273 = vadd.f32 0.0, %v7272
    %v7274 = vpop.f32.mrb[0].mxu0
    %v7275 = vpop.f32.mrb[0].mxu0
    %v7276 = vadd.f32 0.0, %v7275
    %v7277 = vpop.f32.mrb[0].mxu0
    %7278 = vmatprep.mubr.bf16.mxu0 0
    %7279 = vmatmul.mubr.bf16.gmra.mrb[0].mxu0 %v7205
    %v7280 = vpop.f32.mrb[0].mxu0
    %v7281 = vadd.f32 0.0, %v7280
    %v7282 = vpop.f32.mrb[0].mxu0
    %v7283 = vpop.f32.mrb[0].mxu0
    %v7284 = vadd.f32 0.0, %v7283
    %v7285 = vpop.f32.mrb[0].mxu0
    %7286 = vmatprep.mubr.bf16.mxu0 0
    %7287 = vmatmul.mubr.bf16.gmra.mrb[0].mxu0 %v7208
    %v7288 = vpop.f32.mrb[0].mxu0
    %v7289 = vadd.f32 0.0, %v7288
    %v7290 = vpop.f32.mrb[0].mxu0
    %v7291 = vpop.f32.mrb[0].mxu0
    %v7292 = vadd.f32 0.0, %v7291
    %v7293 = vpop.f32.mrb[0].mxu0
    %7294 = vmatprep.mubr.bf16.mxu0 0
    %7295 = vmatmul.mubr.bf16.gmra.mrb[0].mxu0 %v7211
    %v7296 = vpop.f32.mrb[0].mxu0
    %v7297 = vadd.f32 0.0, %v7296
    %v7298 = vpop.f32.mrb[0].mxu0
    %v7299 = vpop.f32.mrb[0].mxu0
    %v7300 = vadd.f32 0.0, %v7299
    %v7301 = vpop.f32.mrb[0].mxu0
    %7302 = vmatprep.mubr.bf16.mxu0 0
    %7303 = vmatmul.mubr.bf16.gmra.mrb[0].mxu0 %v7214
    %v7304 = vpop.f32.mrb[0].mxu0
    %v7305 = vadd.f32 0.0, %v7304
    %v7306 = vpop.f32.mrb[0].mxu0
    %v7307 = vpop.f32.mrb[0].mxu0
    %v7308 = vadd.f32 0.0, %v7307
    %v7309 = vpop.f32.mrb[0].mxu0
    %7310 = vmatprep.mubr.bf16.mxu0 0
    %7311 = vmatmul.mubr.bf16.gmra.mrb[0].mxu0 %v7217
    %v7312 = vpop.f32.mrb[0].mxu0
    %v7313 = vadd.f32 0.0, %v7312
    %v7314 = vpop.f32.mrb[0].mxu0
    %v7315 = vpop.f32.mrb[0].mxu0
    %v7316 = vadd.f32 0.0, %v7315
    %v7317 = vpop.f32.mrb[0].mxu0
    %7318 = vdwg.mxu0
    %v7319 = vadd.f32 %v6627, %v7257
    %v7320 = vadd.f32 %v6630, %v7260
    %v7321 = vadd.f32 %v6635, %v7265
    %v7322 = vadd.f32 %v6638, %v7268
    %v7323 = vadd.f32 %v6643, %v7273
    %v7324 = vadd.f32 %v6646, %v7276
    %v7325 = vadd.f32 %v6651, %v7281
    %v7326 = vadd.f32 %v6654, %v7284
    %v7327 = vadd.f32 %v6659, %v7289
    %v7328 = vadd.f32 %v6662, %v7292
    %v7329 = vadd.f32 %v6667, %v7297
    %v7330 = vadd.f32 %v6670, %v7300
    %v7331 = vadd.f32 %v6675, %v7305
    %v7332 = vadd.f32 %v6678, %v7308
    %v7333 = vadd.f32 %v6683, %v7313
    %v7334 = vadd.f32 %v6686, %v7316
    %7335 = vrot.lane.b32.xlu0 %v5435, 104
    %v7336 = vpop.permute.xlu0 %7335
    %7337 = vrot.lane.b32.xlu0 %v5436, 104
    %v7338 = vpop.permute.xlu0 %7337
    %7339 = vrot.lane.b32.xlu0 %v5437, 104
    %v7340 = vpop.permute.xlu0 %7339
    %7341 = vrot.lane.b32.xlu0 %v5438, 104
    %v7342 = vpop.permute.xlu0 %7341
    %7343 = vrot.lane.b32.xlu0 %v5439, 104
    %v7344 = vpop.permute.xlu0 %7343
    %7345 = vrot.lane.b32.xlu0 %v5440, 104
    %v7346 = vpop.permute.xlu0 %7345
    %7347 = vrot.lane.b32.xlu0 %v5441, 104
    %v7348 = vpop.permute.xlu0 %7347
    %7349 = vrot.lane.b32.xlu0 %v5442, 104
    %v7350 = vpop.permute.xlu0 %7349
    %7351 = vrot.lane.b32.xlu0 %v5443, 104
    %v7352 = vpop.permute.xlu0 %7351
    %7353 = vrot.lane.b32.xlu0 %v5444, 104
    %v7354 = vpop.permute.xlu0 %7353
    %7355 = vrot.lane.b32.xlu0 %v5445, 104
    %v7356 = vpop.permute.xlu0 %7355
    %7357 = vrot.lane.b32.xlu0 %v5446, 104
    %v7358 = vpop.permute.xlu0 %7357
    %7359 = vrot.lane.b32.xlu0 %v5447, 104
    %v7360 = vpop.permute.xlu0 %7359
    %7361 = vrot.lane.b32.xlu0 %v5448, 104
    %v7362 = vpop.permute.xlu0 %7361
    %7363 = vrot.lane.b32.xlu0 %v5449, 104
    %v7364 = vpop.permute.xlu0 %7363
    %7365 = vrot.lane.b32.xlu0 %v5450, 104
    %v7366 = vpop.permute.xlu0 %7365
    %v7368 = vsel %vm5459, %v7336, 0
    %v7371 = vsel %vm5459, %v7338, 0
    %v7374 = vsel %vm5459, %v7340, 0
    %v7377 = vsel %vm5459, %v7342, 0
    %v7380 = vsel %vm5459, %v7344, 0
    %v7383 = vsel %vm5459, %v7346, 0
    %v7386 = vsel %vm5459, %v7348, 0
    %v7389 = vsel %vm5459, %v7350, 0
    %v7392 = vsel %vm5459, %v7352, 0
    %v7395 = vsel %vm5459, %v7354, 0
    %v7398 = vsel %vm5459, %v7356, 0
    %v7401 = vsel %vm5459, %v7358, 0
    %v7404 = vsel %vm5459, %v7360, 0
    %v7407 = vsel %vm5459, %v7362, 0
    %v7410 = vsel %vm5459, %v7364, 0
    %v7413 = vsel %vm5459, %v7366, 0
    %7415 = vmatprep.subr.bf16.mxu0 0
    %7416 = vmatpush1.bf16.xpose.msra.mxu0 %v7392
    %7417 = vmatprep.subr.bf16.mxu0 0
    %7418 = vmatpush1.bf16.xpose.msra.mxu0 %v7395
    %7419 = vmatprep.subr.bf16.mxu0 0
    %7420 = vmatpush1.bf16.xpose.msra.mxu0 %v7398
    %7421 = vmatprep.subr.bf16.mxu0 0
    %7422 = vmatpush1.bf16.xpose.msra.mxu0 %v7401
    %7423 = vmatprep.subr.bf16.mxu0 0
    %7424 = vmatpush1.bf16.xpose.msra.mxu0 %v7404
    %7425 = vmatprep.subr.bf16.mxu0 0
    %7426 = vmatpush1.bf16.xpose.msra.mxu0 %v7407
    %7427 = vmatprep.subr.bf16.mxu0 0
    %7428 = vmatpush1.bf16.xpose.msra.mxu0 %v7410
    %7429 = vmatprep.subr.bf16.mxu0 0
    %7430 = vmatpush1.bf16.xpose.msra.mxu0 %v7413
    %7431 = vmatprep.subr.bf16.mxu0 0
    %7432 = vmatpush1.bf16.xpose.msra.mxu0 0
    %7433 = vmatprep.subr.bf16.mxu0 0
    %7434 = vmatpush1.bf16.xpose.msra.mxu0 0
    %7435 = vmatprep.subr.bf16.mxu0 0
    %7436 = vmatpush1.bf16.xpose.msra.mxu0 0
    %7437 = vmatprep.subr.bf16.mxu0 0
    %7438 = vmatpush1.bf16.xpose.msra.mxu0 0
    %7439 = vmatprep.subr.bf16.mxu0 0
    %7440 = vmatpush1.bf16.xpose.msra.mxu0 0
    %7441 = vmatprep.subr.bf16.mxu0 0
    %7442 = vmatpush1.bf16.xpose.msra.mxu0 0
    %7443 = vmatprep.subr.bf16.mxu0 0
    %7444 = vmatpush1.bf16.xpose.msra.mxu0 0
    %7445 = vmatprep.subr.bf16.mxu0 0
    %7446 = vmatpush1.bf16.xpose.msra.mxu0 0
    %7447 = vmatprep.mubr.bf16.mxu0 0
    %7448 = vmatmul.mubr.bf16.gmra.mrb[0].mxu0 %v7368
    %v7449 = vpop.f32.mrb[0].mxu0
    %v7450 = vadd.f32 0.0, %v7449
    %v7451 = vpop.f32.mrb[0].mxu0
    %v7452 = vpop.f32.mrb[0].mxu0
    %v7453 = vadd.f32 0.0, %v7452
    %v7454 = vpop.f32.mrb[0].mxu0
    %7455 = vmatprep.mubr.bf16.mxu0 0
    %7456 = vmatmul.mubr.bf16.gmra.mrb[0].mxu0 %v7371
    %v7457 = vpop.f32.mrb[0].mxu0
    %v7458 = vadd.f32 0.0, %v7457
    %v7459 = vpop.f32.mrb[0].mxu0
    %v7460 = vpop.f32.mrb[0].mxu0
    %v7461 = vadd.f32 0.0, %v7460
    %v7462 = vpop.f32.mrb[0].mxu0
    %7463 = vmatprep.mubr.bf16.mxu0 0
    %7464 = vmatmul.mubr.bf16.gmra.mrb[0].mxu0 %v7374
    %v7465 = vpop.f32.mrb[0].mxu0
    %v7466 = vadd.f32 0.0, %v7465
    %v7467 = vpop.f32.mrb[0].mxu0
    %v7468 = vpop.f32.mrb[0].mxu0
    %v7469 = vadd.f32 0.0, %v7468
    %v7470 = vpop.f32.mrb[0].mxu0
    %7471 = vmatprep.mubr.bf16.mxu0 0
    %7472 = vmatmul.mubr.bf16.gmra.mrb[0].mxu0 %v7377
    %v7473 = vpop.f32.mrb[0].mxu0
    %v7474 = vadd.f32 0.0, %v7473
    %v7475 = vpop.f32.mrb[0].mxu0
    %v7476 = vpop.f32.mrb[0].mxu0
    %v7477 = vadd.f32 0.0, %v7476
    %v7478 = vpop.f32.mrb[0].mxu0
    %7479 = vmatprep.mubr.bf16.mxu0 0
    %7480 = vmatmul.mubr.bf16.gmra.mrb[0].mxu0 %v7380
    %v7481 = vpop.f32.mrb[0].mxu0
    %v7482 = vadd.f32 0.0, %v7481
    %v7483 = vpop.f32.mrb[0].mxu0
    %v7484 = vpop.f32.mrb[0].mxu0
    %v7485 = vadd.f32 0.0, %v7484
    %v7486 = vpop.f32.mrb[0].mxu0
    %7487 = vmatprep.mubr.bf16.mxu0 0
    %7488 = vmatmul.mubr.bf16.gmra.mrb[0].mxu0 %v7383
    %v7489 = vpop.f32.mrb[0].mxu0
    %v7490 = vadd.f32 0.0, %v7489
    %v7491 = vpop.f32.mrb[0].mxu0
    %v7492 = vpop.f32.mrb[0].mxu0
    %v7493 = vadd.f32 0.0, %v7492
    %v7494 = vpop.f32.mrb[0].mxu0
    %7495 = vmatprep.mubr.bf16.mxu0 0
    %7496 = vmatmul.mubr.bf16.gmra.mrb[0].mxu0 %v7386
    %v7497 = vpop.f32.mrb[0].mxu0
    %v7498 = vadd.f32 0.0, %v7497
    %v7499 = vpop.f32.mrb[0].mxu0
    %v7500 = vpop.f32.mrb[0].mxu0
    %v7501 = vadd.f32 0.0, %v7500
    %v7502 = vpop.f32.mrb[0].mxu0
    %7503 = vmatprep.mubr.bf16.mxu0 0
    %7504 = vmatmul.mubr.bf16.gmra.mrb[0].mxu0 %v7389
    %v7505 = vpop.f32.mrb[0].mxu0
    %v7506 = vadd.f32 0.0, %v7505
    %v7507 = vpop.f32.mrb[0].mxu0
    %v7508 = vpop.f32.mrb[0].mxu0
    %v7509 = vadd.f32 0.0, %v7508
    %v7510 = vpop.f32.mrb[0].mxu0
    %7511 = vdwg.mxu0
    %v7512 = vmul.f32 %v7450, 0.35355338
    %v7513 = vmul.f32 %v7453, 0.35355338
    %v7514 = vmul.f32 %v7458, 0.35355338
    %v7515 = vmul.f32 %v7461, 0.35355338
    %v7516 = vmul.f32 %v7466, 0.35355338
    %v7517 = vmul.f32 %v7469, 0.35355338
    %v7518 = vmul.f32 %v7474, 0.35355338
    %v7519 = vmul.f32 %v7477, 0.35355338
    %v7520 = vmul.f32 %v7482, 0.35355338
    %v7521 = vmul.f32 %v7485, 0.35355338
    %v7522 = vmul.f32 %v7490, 0.35355338
    %v7523 = vmul.f32 %v7493, 0.35355338
    %v7524 = vmul.f32 %v7498, 0.35355338
    %v7525 = vmul.f32 %v7501, 0.35355338
    %v7526 = vmul.f32 %v7506, 0.35355338
    %v7527 = vmul.f32 %v7509, 0.35355338
    %7528 = vmax.xlane.f32.xlu0 %v7512
    %v7529 = vpop.xlane.xlu0 %7528
    %7530 = vmax.xlane.f32.xlu0 %v7513
    %v7531 = vpop.xlane.xlu0 %7530
    %7532 = vmax.xlane.f32.xlu0 %v7514
    %v7533 = vpop.xlane.xlu0 %7532
    %7534 = vmax.xlane.f32.xlu0 %v7515
    %v7535 = vpop.xlane.xlu0 %7534
    %7536 = vmax.xlane.f32.xlu0 %v7516
    %v7537 = vpop.xlane.xlu0 %7536
    %7538 = vmax.xlane.f32.xlu0 %v7517
    %v7539 = vpop.xlane.xlu0 %7538
    %7540 = vmax.xlane.f32.xlu0 %v7518
    %v7541 = vpop.xlane.xlu0 %7540
    %7542 = vmax.xlane.f32.xlu0 %v7519
    %v7543 = vpop.xlane.xlu0 %7542
    %7544 = vmax.xlane.f32.xlu0 %v7520
    %v7545 = vpop.xlane.xlu0 %7544
    %7546 = vmax.xlane.f32.xlu0 %v7521
    %v7547 = vpop.xlane.xlu0 %7546
    %7548 = vmax.xlane.f32.xlu0 %v7522
    %v7549 = vpop.xlane.xlu0 %7548
    %7550 = vmax.xlane.f32.xlu0 %v7523
    %v7551 = vpop.xlane.xlu0 %7550
    %7552 = vmax.xlane.f32.xlu0 %v7524
    %v7553 = vpop.xlane.xlu0 %7552
    %7554 = vmax.xlane.f32.xlu0 %v7525
    %v7555 = vpop.xlane.xlu0 %7554
    %7556 = vmax.xlane.f32.xlu0 %v7526
    %v7557 = vpop.xlane.xlu0 %7556
    %7558 = vmax.xlane.f32.xlu0 %v7527
    %v7559 = vpop.xlane.xlu0 %7558
    %v7560 = vsub.f32 %v7512, %v7529
    %v7561 = vsub.f32 %v7513, %v7531
    %v7562 = vsub.f32 %v7514, %v7533
    %v7563 = vsub.f32 %v7515, %v7535
    %v7564 = vsub.f32 %v7516, %v7537
    %v7565 = vsub.f32 %v7517, %v7539
    %v7566 = vsub.f32 %v7518, %v7541
    %v7567 = vsub.f32 %v7519, %v7543
    %v7568 = vsub.f32 %v7520, %v7545
    %v7569 = vsub.f32 %v7521, %v7547
    %v7570 = vsub.f32 %v7522, %v7549
    %v7571 = vsub.f32 %v7523, %v7551
    %v7572 = vsub.f32 %v7524, %v7553
    %v7573 = vsub.f32 %v7525, %v7555
    %v7574 = vsub.f32 %v7526, %v7557
    %v7575 = vsub.f32 %v7527, %v7559
    %v7576 = vmul.f32 %v7560, 1.442695
    %v7577 = vpow.pop %v7576
    %v7578 = vmul.f32 %v7561, 1.442695
    %v7579 = vpow.pop %v7578
    %v7580 = vmul.f32 %v7562, 1.442695
    %v7581 = vpow.pop %v7580
    %v7582 = vmul.f32 %v7563, 1.442695
    %v7583 = vpow.pop %v7582
    %v7584 = vmul.f32 %v7564, 1.442695
    %v7585 = vpow.pop %v7584
    %v7586 = vmul.f32 %v7565, 1.442695
    %v7587 = vpow.pop %v7586
    %v7588 = vmul.f32 %v7566, 1.442695
    %v7589 = vpow.pop %v7588
    %v7590 = vmul.f32 %v7567, 1.442695
    %v7591 = vpow.pop %v7590
    %v7592 = vmul.f32 %v7568, 1.442695
    %v7593 = vpow.pop %v7592
    %v7594 = vmul.f32 %v7569, 1.442695
    %v7595 = vpow.pop %v7594
    %v7596 = vmul.f32 %v7570, 1.442695
    %v7597 = vpow.pop %v7596
    %v7598 = vmul.f32 %v7571, 1.442695
    %v7599 = vpow.pop %v7598
    %v7600 = vmul.f32 %v7572, 1.442695
    %v7601 = vpow.pop %v7600
    %v7602 = vmul.f32 %v7573, 1.442695
    %v7603 = vpow.pop %v7602
    %v7604 = vmul.f32 %v7574, 1.442695
    %v7605 = vpow.pop %v7604
    %v7606 = vmul.f32 %v7575, 1.442695
    %v7607 = vpow.pop %v7606
    %v7608 = vmul.f32 %v7577, %v5411
    %v7609 = vmul.f32 %v7579, %v5412
    %v7610 = vmul.f32 %v7581, %v5413
    %v7611 = vmul.f32 %v7583, %v5414
    %v7612 = vmul.f32 %v7585, %v5415
    %v7613 = vmul.f32 %v7587, %v5416
    %v7614 = vmul.f32 %v7589, %v5417
    %v7615 = vmul.f32 %v7591, %v5418
    %v7616 = vmul.f32 %v7593, %v5419
    %v7617 = vmul.f32 %v7595, %v5420
    %v7618 = vmul.f32 %v7597, %v5421
    %v7619 = vmul.f32 %v7599, %v5422
    %v7620 = vmul.f32 %v7601, %v5423
    %v7621 = vmul.f32 %v7603, %v5424
    %v7622 = vmul.f32 %v7605, %v5425
    %v7623 = vmul.f32 %v7607, %v5426
    %7624 = vadd.xlane.f32.xlu0 %v7608
    %v7625 = vpop.xlane.xlu0 %7624
    %7626 = vadd.xlane.f32.xlu0 %v7609
    %v7627 = vpop.xlane.xlu0 %7626
    %7628 = vadd.xlane.f32.xlu0 %v7610
    %v7629 = vpop.xlane.xlu0 %7628
    %7630 = vadd.xlane.f32.xlu0 %v7611
    %v7631 = vpop.xlane.xlu0 %7630
    %7632 = vadd.xlane.f32.xlu0 %v7612
    %v7633 = vpop.xlane.xlu0 %7632
    %7634 = vadd.xlane.f32.xlu0 %v7613
    %v7635 = vpop.xlane.xlu0 %7634
    %7636 = vadd.xlane.f32.xlu0 %v7614
    %v7637 = vpop.xlane.xlu0 %7636
    %7638 = vadd.xlane.f32.xlu0 %v7615
    %v7639 = vpop.xlane.xlu0 %7638
    %7640 = vadd.xlane.f32.xlu0 %v7616
    %v7641 = vpop.xlane.xlu0 %7640
    %7642 = vadd.xlane.f32.xlu0 %v7617
    %v7643 = vpop.xlane.xlu0 %7642
    %7644 = vadd.xlane.f32.xlu0 %v7618
    %v7645 = vpop.xlane.xlu0 %7644
    %7646 = vadd.xlane.f32.xlu0 %v7619
    %v7647 = vpop.xlane.xlu0 %7646
    %7648 = vadd.xlane.f32.xlu0 %v7620
    %v7649 = vpop.xlane.xlu0 %7648
    %7650 = vadd.xlane.f32.xlu0 %v7621
    %v7651 = vpop.xlane.xlu0 %7650
    %7652 = vadd.xlane.f32.xlu0 %v7622
    %v7653 = vpop.xlane.xlu0 %7652
    %7654 = vadd.xlane.f32.xlu0 %v7623
    %v7655 = vpop.xlane.xlu0 %7654
    %v7656 = vmax.f32 %v7625, 1e-30
    %v7657 = vmax.f32 %v7627, 1e-30
    %v7658 = vmax.f32 %v7629, 1e-30
    %v7659 = vmax.f32 %v7631, 1e-30
    %v7660 = vmax.f32 %v7633, 1e-30
    %v7661 = vmax.f32 %v7635, 1e-30
    %v7662 = vmax.f32 %v7637, 1e-30
    %v7663 = vmax.f32 %v7639, 1e-30
    %v7664 = vmax.f32 %v7641, 1e-30
    %v7665 = vmax.f32 %v7643, 1e-30
    %v7666 = vmax.f32 %v7645, 1e-30
    %v7667 = vmax.f32 %v7647, 1e-30
    %v7668 = vmax.f32 %v7649, 1e-30
    %v7669 = vmax.f32 %v7651, 1e-30
    %v7670 = vmax.f32 %v7653, 1e-30
    %v7671 = vmax.f32 %v7655, 1e-30
    %v7672 = vrcp.pop %v7656
    %v7673 = vrcp.pop %v7657
    %v7674 = vrcp.pop %v7658
    %v7675 = vrcp.pop %v7659
    %v7676 = vrcp.pop %v7660
    %v7677 = vrcp.pop %v7661
    %v7678 = vrcp.pop %v7662
    %v7679 = vrcp.pop %v7663
    %v7680 = vrcp.pop %v7664
    %v7681 = vrcp.pop %v7665
    %v7682 = vrcp.pop %v7666
    %v7683 = vrcp.pop %v7667
    %v7684 = vrcp.pop %v7668
    %v7685 = vrcp.pop %v7669
    %v7686 = vrcp.pop %v7670
    %v7687 = vrcp.pop %v7671
    %v7688 = vmul.f32 %v7608, %v7672
    %v7689 = vmul.f32 %v7609, %v7673
    %v7690 = vmul.f32 %v7610, %v7674
    %v7691 = vmul.f32 %v7611, %v7675
    %v7692 = vmul.f32 %v7612, %v7676
    %v7693 = vmul.f32 %v7613, %v7677
    %v7694 = vmul.f32 %v7614, %v7678
    %v7695 = vmul.f32 %v7615, %v7679
    %v7696 = vmul.f32 %v7616, %v7680
    %v7697 = vmul.f32 %v7617, %v7681
    %v7698 = vmul.f32 %v7618, %v7682
    %v7699 = vmul.f32 %v7619, %v7683
    %v7700 = vmul.f32 %v7620, %v7684
    %v7701 = vmul.f32 %v7621, %v7685
    %v7702 = vmul.f32 %v7622, %v7686
    %v7703 = vmul.f32 %v7623, %v7687
    %v7704 = vpack.c.bf16 %v7689, %v7688
    %v7705 = vpack.c.bf16 %v7691, %v7690
    %v7706 = vpack.c.bf16 %v7693, %v7692
    %v7707 = vpack.c.bf16 %v7695, %v7694
    %v7708 = vpack.c.bf16 %v7697, %v7696
    %v7709 = vpack.c.bf16 %v7699, %v7698
    %v7710 = vpack.c.bf16 %v7701, %v7700
    %v7711 = vpack.c.bf16 %v7703, %v7702
    %7712 = vrot.lane.b32.xlu0 %v5451, 104
    %v7713 = vpop.permute.xlu0 %7712
    %7714 = vrot.lane.b32.xlu0 %v5452, 104
    %v7715 = vpop.permute.xlu0 %7714
    %7716 = vrot.lane.b32.xlu0 %v5453, 104
    %v7717 = vpop.permute.xlu0 %7716
    %7718 = vrot.lane.b32.xlu0 %v5454, 104
    %v7719 = vpop.permute.xlu0 %7718
    %7720 = vrot.lane.b32.xlu0 %v5455, 104
    %v7721 = vpop.permute.xlu0 %7720
    %7722 = vrot.lane.b32.xlu0 %v5456, 104
    %v7723 = vpop.permute.xlu0 %7722
    %7724 = vrot.lane.b32.xlu0 %v5457, 104
    %v7725 = vpop.permute.xlu0 %7724
    %7726 = vrot.lane.b32.xlu0 %v5458, 104
    %v7727 = vpop.permute.xlu0 %7726
    %7736 = vmatprep.subr.bf16.mxu0 0
    %7737 = vmatpush1.bf16.msra.mxu0 %v7713
    %7738 = vmatprep.subr.bf16.mxu0 0
    %7739 = vmatpush1.bf16.msra.mxu0 %v7715
    %7740 = vmatprep.subr.bf16.mxu0 0
    %7741 = vmatpush1.bf16.msra.mxu0 %v7717
    %7742 = vmatprep.subr.bf16.mxu0 0
    %7743 = vmatpush1.bf16.msra.mxu0 %v7719
    %7744 = vmatprep.subr.bf16.mxu0 0
    %7745 = vmatpush1.bf16.msra.mxu0 %v7721
    %7746 = vmatprep.subr.bf16.mxu0 0
    %7747 = vmatpush1.bf16.msra.mxu0 %v7723
    %7748 = vmatprep.subr.bf16.mxu0 0
    %7749 = vmatpush1.bf16.msra.mxu0 %v7725
    %7750 = vmatprep.subr.bf16.mxu0 0
    %7751 = vmatpush1.bf16.msra.mxu0 %v7727
    %7752 = vmatprep.subr.bf16.mxu0 0
    %7753 = vmatpush1.bf16.msra.mxu0 0
    %7754 = vmatprep.subr.bf16.mxu0 0
    %7755 = vmatpush1.bf16.msra.mxu0 0
    %7756 = vmatprep.subr.bf16.mxu0 0
    %7757 = vmatpush1.bf16.msra.mxu0 0
    %7758 = vmatprep.subr.bf16.mxu0 0
    %7759 = vmatpush1.bf16.msra.mxu0 0
    %7760 = vmatprep.subr.bf16.mxu0 0
    %7761 = vmatpush1.bf16.msra.mxu0 0
    %7762 = vmatprep.subr.bf16.mxu0 0
    %7763 = vmatpush1.bf16.msra.mxu0 0
    %7764 = vmatprep.subr.bf16.mxu0 0
    %7765 = vmatpush1.bf16.msra.mxu0 0
    %7766 = vmatprep.subr.bf16.mxu0 0
    %7767 = vmatpush1.bf16.msra.mxu0 0
    %7768 = vmatprep.mubr.bf16.mxu0 0
    %7769 = vmatmul.mubr.bf16.gmra.mrb[0].mxu0 %v7704
    %v7770 = vpop.f32.mrb[0].mxu0
    %v7771 = vadd.f32 0.0, %v7770
    %v7772 = vpop.f32.mrb[0].mxu0
    %v7773 = vpop.f32.mrb[0].mxu0
    %v7774 = vadd.f32 0.0, %v7773
    %v7775 = vpop.f32.mrb[0].mxu0
    %7776 = vmatprep.mubr.bf16.mxu0 0
    %7777 = vmatmul.mubr.bf16.gmra.mrb[0].mxu0 %v7705
    %v7778 = vpop.f32.mrb[0].mxu0
    %v7779 = vadd.f32 0.0, %v7778
    %v7780 = vpop.f32.mrb[0].mxu0
    %v7781 = vpop.f32.mrb[0].mxu0
    %v7782 = vadd.f32 0.0, %v7781
    %v7783 = vpop.f32.mrb[0].mxu0
    %7784 = vmatprep.mubr.bf16.mxu0 0
    %7785 = vmatmul.mubr.bf16.gmra.mrb[0].mxu0 %v7706
    %v7786 = vpop.f32.mrb[0].mxu0
    %v7787 = vadd.f32 0.0, %v7786
    %v7788 = vpop.f32.mrb[0].mxu0
    %v7789 = vpop.f32.mrb[0].mxu0
    %v7790 = vadd.f32 0.0, %v7789
    %v7791 = vpop.f32.mrb[0].mxu0
    %7792 = vmatprep.mubr.bf16.mxu0 0
    %7793 = vmatmul.mubr.bf16.gmra.mrb[0].mxu0 %v7707
    %v7794 = vpop.f32.mrb[0].mxu0
    %v7795 = vadd.f32 0.0, %v7794
    %v7796 = vpop.f32.mrb[0].mxu0
    %v7797 = vpop.f32.mrb[0].mxu0
    %v7798 = vadd.f32 0.0, %v7797
    %v7799 = vpop.f32.mrb[0].mxu0
    %7800 = vmatprep.mubr.bf16.mxu0 0
    %7801 = vmatmul.mubr.bf16.gmra.mrb[0].mxu0 %v7708
    %v7802 = vpop.f32.mrb[0].mxu0
    %v7803 = vadd.f32 0.0, %v7802
    %v7804 = vpop.f32.mrb[0].mxu0
    %v7805 = vpop.f32.mrb[0].mxu0
    %v7806 = vadd.f32 0.0, %v7805
    %v7807 = vpop.f32.mrb[0].mxu0
    %7808 = vmatprep.mubr.bf16.mxu0 0
    %7809 = vmatmul.mubr.bf16.gmra.mrb[0].mxu0 %v7709
    %v7810 = vpop.f32.mrb[0].mxu0
    %v7811 = vadd.f32 0.0, %v7810
    %v7812 = vpop.f32.mrb[0].mxu0
    %v7813 = vpop.f32.mrb[0].mxu0
    %v7814 = vadd.f32 0.0, %v7813
    %v7815 = vpop.f32.mrb[0].mxu0
    %7816 = vmatprep.mubr.bf16.mxu0 0
    %7817 = vmatmul.mubr.bf16.gmra.mrb[0].mxu0 %v7710
    %v7818 = vpop.f32.mrb[0].mxu0
    %v7819 = vadd.f32 0.0, %v7818
    %v7820 = vpop.f32.mrb[0].mxu0
    %v7821 = vpop.f32.mrb[0].mxu0
    %v7822 = vadd.f32 0.0, %v7821
    %v7823 = vpop.f32.mrb[0].mxu0
    %7824 = vmatprep.mubr.bf16.mxu0 0
    %7825 = vmatmul.mubr.bf16.gmra.mrb[0].mxu0 %v7711
    %v7826 = vpop.f32.mrb[0].mxu0
    %v7827 = vadd.f32 0.0, %v7826
    %v7828 = vpop.f32.mrb[0].mxu0
    %v7829 = vpop.f32.mrb[0].mxu0
    %v7830 = vadd.f32 0.0, %v7829
    %v7831 = vpop.f32.mrb[0].mxu0
    %7832 = vdwg.mxu0
    %v7833 = vpack.c.bf16 %v7774, %v7771
    %v7834 = vpack.c.bf16 %v7782, %v7779
    %v7835 = vpack.c.bf16 %v7790, %v7787
    %v7836 = vpack.c.bf16 %v7798, %v7795
    %v7837 = vpack.c.bf16 %v7806, %v7803
    %v7838 = vpack.c.bf16 %v7814, %v7811
    %v7839 = vpack.c.bf16 %v7822, %v7819
    %v7840 = vpack.c.bf16 %v7830, %v7827
    %v7842 = vsel %vm5459, %v7833, 0
    %v7845 = vsel %vm5459, %v7834, 0
    %v7848 = vsel %vm5459, %v7835, 0
    %v7851 = vsel %vm5459, %v7836, 0
    %v7854 = vsel %vm5459, %v7837, 0
    %v7857 = vsel %vm5459, %v7838, 0
    %v7860 = vsel %vm5459, %v7839, 0
    %v7863 = vsel %vm5459, %v7840, 0
    %v7866 = vsel %vm6464, %v5430, 0
    %7868 = vmatprep.subr.bf16.mxu0 0
    %7869 = vmatpush1.bf16.msra.mxu0 %v7866
    %7870 = vmatprep.subr.bf16.mxu0 0
    %7871 = vmatpush1.bf16.msra.mxu0 0
    %7872 = vmatprep.subr.bf16.mxu0 0
    %7873 = vmatpush1.bf16.msra.mxu0 0
    %7874 = vmatprep.subr.bf16.mxu0 0
    %7875 = vmatpush1.bf16.msra.mxu0 0
    %7876 = vmatprep.subr.bf16.mxu0 0
    %7877 = vmatpush1.bf16.msra.mxu0 0
    %7878 = vmatprep.subr.bf16.mxu0 0
    %7879 = vmatpush1.bf16.msra.mxu0 0
    %7880 = vmatprep.subr.bf16.mxu0 0
    %7881 = vmatpush1.bf16.msra.mxu0 0
    %7882 = vmatprep.subr.bf16.mxu0 0
    %7883 = vmatpush1.bf16.msra.mxu0 0
    %7884 = vmatprep.subr.bf16.mxu0 0
    %7885 = vmatpush1.bf16.msra.mxu0 0
    %7886 = vmatprep.subr.bf16.mxu0 0
    %7887 = vmatpush1.bf16.msra.mxu0 0
    %7888 = vmatprep.subr.bf16.mxu0 0
    %7889 = vmatpush1.bf16.msra.mxu0 0
    %7890 = vmatprep.subr.bf16.mxu0 0
    %7891 = vmatpush1.bf16.msra.mxu0 0
    %7892 = vmatprep.subr.bf16.mxu0 0
    %7893 = vmatpush1.bf16.msra.mxu0 0
    %7894 = vmatprep.subr.bf16.mxu0 0
    %7895 = vmatpush1.bf16.msra.mxu0 0
    %7896 = vmatprep.subr.bf16.mxu0 0
    %7897 = vmatpush1.bf16.msra.mxu0 0
    %7898 = vmatprep.subr.bf16.mxu0 0
    %7899 = vmatpush1.bf16.msra.mxu0 0
    %7900 = vmatprep.mubr.bf16.mxu0 0
    %7901 = vmatmul.mubr.bf16.gmra.mrb[0].mxu0 %v7842
    %v7902 = vpop.f32.mrb[0].mxu0
    %v7903 = vadd.f32 0.0, %v7902
    %v7904 = vpop.f32.mrb[0].mxu0
    %v7905 = vpop.f32.mrb[0].mxu0
    %v7906 = vadd.f32 0.0, %v7905
    %v7907 = vpop.f32.mrb[0].mxu0
    %7908 = vmatprep.mubr.bf16.mxu0 0
    %7909 = vmatmul.mubr.bf16.gmra.mrb[0].mxu0 %v7845
    %v7910 = vpop.f32.mrb[0].mxu0
    %v7911 = vadd.f32 0.0, %v7910
    %v7912 = vpop.f32.mrb[0].mxu0
    %v7913 = vpop.f32.mrb[0].mxu0
    %v7914 = vadd.f32 0.0, %v7913
    %v7915 = vpop.f32.mrb[0].mxu0
    %7916 = vmatprep.mubr.bf16.mxu0 0
    %7917 = vmatmul.mubr.bf16.gmra.mrb[0].mxu0 %v7848
    %v7918 = vpop.f32.mrb[0].mxu0
    %v7919 = vadd.f32 0.0, %v7918
    %v7920 = vpop.f32.mrb[0].mxu0
    %v7921 = vpop.f32.mrb[0].mxu0
    %v7922 = vadd.f32 0.0, %v7921
    %v7923 = vpop.f32.mrb[0].mxu0
    %7924 = vmatprep.mubr.bf16.mxu0 0
    %7925 = vmatmul.mubr.bf16.gmra.mrb[0].mxu0 %v7851
    %v7926 = vpop.f32.mrb[0].mxu0
    %v7927 = vadd.f32 0.0, %v7926
    %v7928 = vpop.f32.mrb[0].mxu0
    %v7929 = vpop.f32.mrb[0].mxu0
    %v7930 = vadd.f32 0.0, %v7929
    %v7931 = vpop.f32.mrb[0].mxu0
    %7932 = vmatprep.mubr.bf16.mxu0 0
    %7933 = vmatmul.mubr.bf16.gmra.mrb[0].mxu0 %v7854
    %v7934 = vpop.f32.mrb[0].mxu0
    %v7935 = vadd.f32 0.0, %v7934
    %v7936 = vpop.f32.mrb[0].mxu0
    %v7937 = vpop.f32.mrb[0].mxu0
    %v7938 = vadd.f32 0.0, %v7937
    %v7939 = vpop.f32.mrb[0].mxu0
    %7940 = vmatprep.mubr.bf16.mxu0 0
    %7941 = vmatmul.mubr.bf16.gmra.mrb[0].mxu0 %v7857
    %v7942 = vpop.f32.mrb[0].mxu0
    %v7943 = vadd.f32 0.0, %v7942
    %v7944 = vpop.f32.mrb[0].mxu0
    %v7945 = vpop.f32.mrb[0].mxu0
    %v7946 = vadd.f32 0.0, %v7945
    %v7947 = vpop.f32.mrb[0].mxu0
    %7948 = vmatprep.mubr.bf16.mxu0 0
    %7949 = vmatmul.mubr.bf16.gmra.mrb[0].mxu0 %v7860
    %v7950 = vpop.f32.mrb[0].mxu0
    %v7951 = vadd.f32 0.0, %v7950
    %v7952 = vpop.f32.mrb[0].mxu0
    %v7953 = vpop.f32.mrb[0].mxu0
    %v7954 = vadd.f32 0.0, %v7953
    %v7955 = vpop.f32.mrb[0].mxu0
    %7956 = vmatprep.mubr.bf16.mxu0 0
    %7957 = vmatmul.mubr.bf16.gmra.mrb[0].mxu0 %v7863
    %v7958 = vpop.f32.mrb[0].mxu0
    %v7959 = vadd.f32 0.0, %v7958
    %v7960 = vpop.f32.mrb[0].mxu0
    %v7961 = vpop.f32.mrb[0].mxu0
    %v7962 = vadd.f32 0.0, %v7961
    %v7963 = vpop.f32.mrb[0].mxu0
    %7964 = vdwg.mxu0
    %v7965 = vadd.f32 %v7319, %v7903
    %v7966 = vadd.f32 %v7320, %v7906
    %v7967 = vadd.f32 %v7321, %v7911
    %v7968 = vadd.f32 %v7322, %v7914
    %v7969 = vadd.f32 %v7323, %v7919
    %v7970 = vadd.f32 %v7324, %v7922
    %v7971 = vadd.f32 %v7325, %v7927
    %v7972 = vadd.f32 %v7326, %v7930
    %v7973 = vadd.f32 %v7327, %v7935
    %v7974 = vadd.f32 %v7328, %v7938
    %v7975 = vadd.f32 %v7329, %v7943
    %v7976 = vadd.f32 %v7330, %v7946
    %v7977 = vadd.f32 %v7331, %v7951
    %v7978 = vadd.f32 %v7332, %v7954
    %v7979 = vadd.f32 %v7333, %v7959
    %v7980 = vadd.f32 %v7334, %v7962
    %7981 = vrot.lane.b32.xlu0 %v5435, 96
    %v7982 = vpop.permute.xlu0 %7981
    %7983 = vrot.lane.b32.xlu0 %v5436, 96
    %v7984 = vpop.permute.xlu0 %7983
    %7985 = vrot.lane.b32.xlu0 %v5437, 96
    %v7986 = vpop.permute.xlu0 %7985
    %7987 = vrot.lane.b32.xlu0 %v5438, 96
    %v7988 = vpop.permute.xlu0 %7987
    %7989 = vrot.lane.b32.xlu0 %v5439, 96
    %v7990 = vpop.permute.xlu0 %7989
    %7991 = vrot.lane.b32.xlu0 %v5440, 96
    %v7992 = vpop.permute.xlu0 %7991
    %7993 = vrot.lane.b32.xlu0 %v5441, 96
    %v7994 = vpop.permute.xlu0 %7993
    %7995 = vrot.lane.b32.xlu0 %v5442, 96
    %v7996 = vpop.permute.xlu0 %7995
    %7997 = vrot.lane.b32.xlu0 %v5443, 96
    %v7998 = vpop.permute.xlu0 %7997
    %7999 = vrot.lane.b32.xlu0 %v5444, 96
    %v8000 = vpop.permute.xlu0 %7999
    %8001 = vrot.lane.b32.xlu0 %v5445, 96
    %v8002 = vpop.permute.xlu0 %8001
    %8003 = vrot.lane.b32.xlu0 %v5446, 96
    %v8004 = vpop.permute.xlu0 %8003
    %8005 = vrot.lane.b32.xlu0 %v5447, 96
    %v8006 = vpop.permute.xlu0 %8005
    %8007 = vrot.lane.b32.xlu0 %v5448, 96
    %v8008 = vpop.permute.xlu0 %8007
    %8009 = vrot.lane.b32.xlu0 %v5449, 96
    %v8010 = vpop.permute.xlu0 %8009
    %8011 = vrot.lane.b32.xlu0 %v5450, 96
    %v8012 = vpop.permute.xlu0 %8011
    %v8014 = vsel %vm5459, %v7982, 0
    %v8017 = vsel %vm5459, %v7984, 0
    %v8020 = vsel %vm5459, %v7986, 0
    %v8023 = vsel %vm5459, %v7988, 0
    %v8026 = vsel %vm5459, %v7990, 0
    %v8029 = vsel %vm5459, %v7992, 0
    %v8032 = vsel %vm5459, %v7994, 0
    %v8035 = vsel %vm5459, %v7996, 0
    %v8038 = vsel %vm5459, %v7998, 0
    %v8041 = vsel %vm5459, %v8000, 0
    %v8044 = vsel %vm5459, %v8002, 0
    %v8047 = vsel %vm5459, %v8004, 0
    %v8050 = vsel %vm5459, %v8006, 0
    %v8053 = vsel %vm5459, %v8008, 0
    %v8056 = vsel %vm5459, %v8010, 0
    %v8059 = vsel %vm5459, %v8012, 0
    %8061 = vmatprep.subr.bf16.mxu0 0
    %8062 = vmatpush1.bf16.xpose.msra.mxu0 %v8038
    %8063 = vmatprep.subr.bf16.mxu0 0
    %8064 = vmatpush1.bf16.xpose.msra.mxu0 %v8041
    %8065 = vmatprep.subr.bf16.mxu0 0
    %8066 = vmatpush1.bf16.xpose.msra.mxu0 %v8044
    %8067 = vmatprep.subr.bf16.mxu0 0
    %8068 = vmatpush1.bf16.xpose.msra.mxu0 %v8047
    %8069 = vmatprep.subr.bf16.mxu0 0
    %8070 = vmatpush1.bf16.xpose.msra.mxu0 %v8050
    %8071 = vmatprep.subr.bf16.mxu0 0
    %8072 = vmatpush1.bf16.xpose.msra.mxu0 %v8053
    %8073 = vmatprep.subr.bf16.mxu0 0
    %8074 = vmatpush1.bf16.xpose.msra.mxu0 %v8056
    %8075 = vmatprep.subr.bf16.mxu0 0
    %8076 = vmatpush1.bf16.xpose.msra.mxu0 %v8059
    %8077 = vmatprep.subr.bf16.mxu0 0
    %8078 = vmatpush1.bf16.xpose.msra.mxu0 0
    %8079 = vmatprep.subr.bf16.mxu0 0
    %8080 = vmatpush1.bf16.xpose.msra.mxu0 0
    %8081 = vmatprep.subr.bf16.mxu0 0
    %8082 = vmatpush1.bf16.xpose.msra.mxu0 0
    %8083 = vmatprep.subr.bf16.mxu0 0
    %8084 = vmatpush1.bf16.xpose.msra.mxu0 0
    %8085 = vmatprep.subr.bf16.mxu0 0
    %8086 = vmatpush1.bf16.xpose.msra.mxu0 0
    %8087 = vmatprep.subr.bf16.mxu0 0
    %8088 = vmatpush1.bf16.xpose.msra.mxu0 0
    %8089 = vmatprep.subr.bf16.mxu0 0
    %8090 = vmatpush1.bf16.xpose.msra.mxu0 0
    %8091 = vmatprep.subr.bf16.mxu0 0
    %8092 = vmatpush1.bf16.xpose.msra.mxu0 0
    %8093 = vmatprep.mubr.bf16.mxu0 0
    %8094 = vmatmul.mubr.bf16.gmra.mrb[0].mxu0 %v8014
    %v8095 = vpop.f32.mrb[0].mxu0
    %v8096 = vadd.f32 0.0, %v8095
    %v8097 = vpop.f32.mrb[0].mxu0
    %v8098 = vpop.f32.mrb[0].mxu0
    %v8099 = vadd.f32 0.0, %v8098
    %v8100 = vpop.f32.mrb[0].mxu0
    %8101 = vmatprep.mubr.bf16.mxu0 0
    %8102 = vmatmul.mubr.bf16.gmra.mrb[0].mxu0 %v8017
    %v8103 = vpop.f32.mrb[0].mxu0
    %v8104 = vadd.f32 0.0, %v8103
    %v8105 = vpop.f32.mrb[0].mxu0
    %v8106 = vpop.f32.mrb[0].mxu0
    %v8107 = vadd.f32 0.0, %v8106
    %v8108 = vpop.f32.mrb[0].mxu0
    %8109 = vmatprep.mubr.bf16.mxu0 0
    %8110 = vmatmul.mubr.bf16.gmra.mrb[0].mxu0 %v8020
    %v8111 = vpop.f32.mrb[0].mxu0
    %v8112 = vadd.f32 0.0, %v8111
    %v8113 = vpop.f32.mrb[0].mxu0
    %v8114 = vpop.f32.mrb[0].mxu0
    %v8115 = vadd.f32 0.0, %v8114
    %v8116 = vpop.f32.mrb[0].mxu0
    %8117 = vmatprep.mubr.bf16.mxu0 0
    %8118 = vmatmul.mubr.bf16.gmra.mrb[0].mxu0 %v8023
    %v8119 = vpop.f32.mrb[0].mxu0
    %v8120 = vadd.f32 0.0, %v8119
    %v8121 = vpop.f32.mrb[0].mxu0
    %v8122 = vpop.f32.mrb[0].mxu0
    %v8123 = vadd.f32 0.0, %v8122
    %v8124 = vpop.f32.mrb[0].mxu0
    %8125 = vmatprep.mubr.bf16.mxu0 0
    %8126 = vmatmul.mubr.bf16.gmra.mrb[0].mxu0 %v8026
    %v8127 = vpop.f32.mrb[0].mxu0
    %v8128 = vadd.f32 0.0, %v8127
    %v8129 = vpop.f32.mrb[0].mxu0
    %v8130 = vpop.f32.mrb[0].mxu0
    %v8131 = vadd.f32 0.0, %v8130
    %v8132 = vpop.f32.mrb[0].mxu0
    %8133 = vmatprep.mubr.bf16.mxu0 0
    %8134 = vmatmul.mubr.bf16.gmra.mrb[0].mxu0 %v8029
    %v8135 = vpop.f32.mrb[0].mxu0
    %v8136 = vadd.f32 0.0, %v8135
    %v8137 = vpop.f32.mrb[0].mxu0
    %v8138 = vpop.f32.mrb[0].mxu0
    %v8139 = vadd.f32 0.0, %v8138
    %v8140 = vpop.f32.mrb[0].mxu0
    %8141 = vmatprep.mubr.bf16.mxu0 0
    %8142 = vmatmul.mubr.bf16.gmra.mrb[0].mxu0 %v8032
    %v8143 = vpop.f32.mrb[0].mxu0
    %v8144 = vadd.f32 0.0, %v8143
    %v8145 = vpop.f32.mrb[0].mxu0
    %v8146 = vpop.f32.mrb[0].mxu0
    %v8147 = vadd.f32 0.0, %v8146
    %v8148 = vpop.f32.mrb[0].mxu0
    %8149 = vmatprep.mubr.bf16.mxu0 0
    %8150 = vmatmul.mubr.bf16.gmra.mrb[0].mxu0 %v8035
    %v8151 = vpop.f32.mrb[0].mxu0
    %v8152 = vadd.f32 0.0, %v8151
    %v8153 = vpop.f32.mrb[0].mxu0
    %v8154 = vpop.f32.mrb[0].mxu0
    %v8155 = vadd.f32 0.0, %v8154
    %v8156 = vpop.f32.mrb[0].mxu0
    %8157 = vdwg.mxu0
    %v8158 = vmul.f32 %v8096, 0.35355338
    %v8159 = vmul.f32 %v8099, 0.35355338
    %v8160 = vmul.f32 %v8104, 0.35355338
    %v8161 = vmul.f32 %v8107, 0.35355338
    %v8162 = vmul.f32 %v8112, 0.35355338
    %v8163 = vmul.f32 %v8115, 0.35355338
    %v8164 = vmul.f32 %v8120, 0.35355338
    %v8165 = vmul.f32 %v8123, 0.35355338
    %v8166 = vmul.f32 %v8128, 0.35355338
    %v8167 = vmul.f32 %v8131, 0.35355338
    %v8168 = vmul.f32 %v8136, 0.35355338
    %v8169 = vmul.f32 %v8139, 0.35355338
    %v8170 = vmul.f32 %v8144, 0.35355338
    %v8171 = vmul.f32 %v8147, 0.35355338
    %v8172 = vmul.f32 %v8152, 0.35355338
    %v8173 = vmul.f32 %v8155, 0.35355338
    %8174 = vmax.xlane.f32.xlu0 %v8158
    %v8175 = vpop.xlane.xlu0 %8174
    %8176 = vmax.xlane.f32.xlu0 %v8159
    %v8177 = vpop.xlane.xlu0 %8176
    %8178 = vmax.xlane.f32.xlu0 %v8160
    %v8179 = vpop.xlane.xlu0 %8178
    %8180 = vmax.xlane.f32.xlu0 %v8161
    %v8181 = vpop.xlane.xlu0 %8180
    %8182 = vmax.xlane.f32.xlu0 %v8162
    %v8183 = vpop.xlane.xlu0 %8182
    %8184 = vmax.xlane.f32.xlu0 %v8163
    %v8185 = vpop.xlane.xlu0 %8184
    %8186 = vmax.xlane.f32.xlu0 %v8164
    %v8187 = vpop.xlane.xlu0 %8186
    %8188 = vmax.xlane.f32.xlu0 %v8165
    %v8189 = vpop.xlane.xlu0 %8188
    %8190 = vmax.xlane.f32.xlu0 %v8166
    %v8191 = vpop.xlane.xlu0 %8190
    %8192 = vmax.xlane.f32.xlu0 %v8167
    %v8193 = vpop.xlane.xlu0 %8192
    %8194 = vmax.xlane.f32.xlu0 %v8168
    %v8195 = vpop.xlane.xlu0 %8194
    %8196 = vmax.xlane.f32.xlu0 %v8169
    %v8197 = vpop.xlane.xlu0 %8196
    %8198 = vmax.xlane.f32.xlu0 %v8170
    %v8199 = vpop.xlane.xlu0 %8198
    %8200 = vmax.xlane.f32.xlu0 %v8171
    %v8201 = vpop.xlane.xlu0 %8200
    %8202 = vmax.xlane.f32.xlu0 %v8172
    %v8203 = vpop.xlane.xlu0 %8202
    %8204 = vmax.xlane.f32.xlu0 %v8173
    %v8205 = vpop.xlane.xlu0 %8204
    %v8206 = vsub.f32 %v8158, %v8175
    %v8207 = vsub.f32 %v8159, %v8177
    %v8208 = vsub.f32 %v8160, %v8179
    %v8209 = vsub.f32 %v8161, %v8181
    %v8210 = vsub.f32 %v8162, %v8183
    %v8211 = vsub.f32 %v8163, %v8185
    %v8212 = vsub.f32 %v8164, %v8187
    %v8213 = vsub.f32 %v8165, %v8189
    %v8214 = vsub.f32 %v8166, %v8191
    %v8215 = vsub.f32 %v8167, %v8193
    %v8216 = vsub.f32 %v8168, %v8195
    %v8217 = vsub.f32 %v8169, %v8197
    %v8218 = vsub.f32 %v8170, %v8199
    %v8219 = vsub.f32 %v8171, %v8201
    %v8220 = vsub.f32 %v8172, %v8203
    %v8221 = vsub.f32 %v8173, %v8205
    %v8222 = vmul.f32 %v8206, 1.442695
    %v8223 = vpow.pop %v8222
    %v8224 = vmul.f32 %v8207, 1.442695
    %v8225 = vpow.pop %v8224
    %v8226 = vmul.f32 %v8208, 1.442695
    %v8227 = vpow.pop %v8226
    %v8228 = vmul.f32 %v8209, 1.442695
    %v8229 = vpow.pop %v8228
    %v8230 = vmul.f32 %v8210, 1.442695
    %v8231 = vpow.pop %v8230
    %v8232 = vmul.f32 %v8211, 1.442695
    %v8233 = vpow.pop %v8232
    %v8234 = vmul.f32 %v8212, 1.442695
    %v8235 = vpow.pop %v8234
    %v8236 = vmul.f32 %v8213, 1.442695
    %v8237 = vpow.pop %v8236
    %v8238 = vmul.f32 %v8214, 1.442695
    %v8239 = vpow.pop %v8238
    %v8240 = vmul.f32 %v8215, 1.442695
    %v8241 = vpow.pop %v8240
    %v8242 = vmul.f32 %v8216, 1.442695
    %v8243 = vpow.pop %v8242
    %v8244 = vmul.f32 %v8217, 1.442695
    %v8245 = vpow.pop %v8244
    %v8246 = vmul.f32 %v8218, 1.442695
    %v8247 = vpow.pop %v8246
    %v8248 = vmul.f32 %v8219, 1.442695
    %v8249 = vpow.pop %v8248
    %v8250 = vmul.f32 %v8220, 1.442695
    %v8251 = vpow.pop %v8250
    %v8252 = vmul.f32 %v8221, 1.442695
    %v8253 = vpow.pop %v8252
    %v8254 = vmul.f32 %v8223, %v5411
    %v8255 = vmul.f32 %v8225, %v5412
    %v8256 = vmul.f32 %v8227, %v5413
    %v8257 = vmul.f32 %v8229, %v5414
    %v8258 = vmul.f32 %v8231, %v5415
    %v8259 = vmul.f32 %v8233, %v5416
    %v8260 = vmul.f32 %v8235, %v5417
    %v8261 = vmul.f32 %v8237, %v5418
    %v8262 = vmul.f32 %v8239, %v5419
    %v8263 = vmul.f32 %v8241, %v5420
    %v8264 = vmul.f32 %v8243, %v5421
    %v8265 = vmul.f32 %v8245, %v5422
    %v8266 = vmul.f32 %v8247, %v5423
    %v8267 = vmul.f32 %v8249, %v5424
    %v8268 = vmul.f32 %v8251, %v5425
    %v8269 = vmul.f32 %v8253, %v5426
    %8270 = vadd.xlane.f32.xlu0 %v8254
    %v8271 = vpop.xlane.xlu0 %8270
    %8272 = vadd.xlane.f32.xlu0 %v8255
    %v8273 = vpop.xlane.xlu0 %8272
    %8274 = vadd.xlane.f32.xlu0 %v8256
    %v8275 = vpop.xlane.xlu0 %8274
    %8276 = vadd.xlane.f32.xlu0 %v8257
    %v8277 = vpop.xlane.xlu0 %8276
    %8278 = vadd.xlane.f32.xlu0 %v8258
    %v8279 = vpop.xlane.xlu0 %8278
    %8280 = vadd.xlane.f32.xlu0 %v8259
    %v8281 = vpop.xlane.xlu0 %8280
    %8282 = vadd.xlane.f32.xlu0 %v8260
    %v8283 = vpop.xlane.xlu0 %8282
    %8284 = vadd.xlane.f32.xlu0 %v8261
    %v8285 = vpop.xlane.xlu0 %8284
    %8286 = vadd.xlane.f32.xlu0 %v8262
    %v8287 = vpop.xlane.xlu0 %8286
    %8288 = vadd.xlane.f32.xlu0 %v8263
    %v8289 = vpop.xlane.xlu0 %8288
    %8290 = vadd.xlane.f32.xlu0 %v8264
    %v8291 = vpop.xlane.xlu0 %8290
    %8292 = vadd.xlane.f32.xlu0 %v8265
    %v8293 = vpop.xlane.xlu0 %8292
    %8294 = vadd.xlane.f32.xlu0 %v8266
    %v8295 = vpop.xlane.xlu0 %8294
    %8296 = vadd.xlane.f32.xlu0 %v8267
    %v8297 = vpop.xlane.xlu0 %8296
    %8298 = vadd.xlane.f32.xlu0 %v8268
    %v8299 = vpop.xlane.xlu0 %8298
    %8300 = vadd.xlane.f32.xlu0 %v8269
    %v8301 = vpop.xlane.xlu0 %8300
    %v8302 = vmax.f32 %v8271, 1e-30
    %v8303 = vmax.f32 %v8273, 1e-30
    %v8304 = vmax.f32 %v8275, 1e-30
    %v8305 = vmax.f32 %v8277, 1e-30
    %v8306 = vmax.f32 %v8279, 1e-30
    %v8307 = vmax.f32 %v8281, 1e-30
    %v8308 = vmax.f32 %v8283, 1e-30
    %v8309 = vmax.f32 %v8285, 1e-30
    %v8310 = vmax.f32 %v8287, 1e-30
    %v8311 = vmax.f32 %v8289, 1e-30
    %v8312 = vmax.f32 %v8291, 1e-30
    %v8313 = vmax.f32 %v8293, 1e-30
    %v8314 = vmax.f32 %v8295, 1e-30
    %v8315 = vmax.f32 %v8297, 1e-30
    %v8316 = vmax.f32 %v8299, 1e-30
    %v8317 = vmax.f32 %v8301, 1e-30
    %v8318 = vrcp.pop %v8302
    %v8319 = vrcp.pop %v8303
    %v8320 = vrcp.pop %v8304
    %v8321 = vrcp.pop %v8305
    %v8322 = vrcp.pop %v8306
    %v8323 = vrcp.pop %v8307
    %v8324 = vrcp.pop %v8308
    %v8325 = vrcp.pop %v8309
    %v8326 = vrcp.pop %v8310
    %v8327 = vrcp.pop %v8311
    %v8328 = vrcp.pop %v8312
    %v8329 = vrcp.pop %v8313
    %v8330 = vrcp.pop %v8314
    %v8331 = vrcp.pop %v8315
    %v8332 = vrcp.pop %v8316
    %v8333 = vrcp.pop %v8317
    %v8334 = vmul.f32 %v8254, %v8318
    %v8335 = vmul.f32 %v8255, %v8319
    %v8336 = vmul.f32 %v8256, %v8320
    %v8337 = vmul.f32 %v8257, %v8321
    %v8338 = vmul.f32 %v8258, %v8322
    %v8339 = vmul.f32 %v8259, %v8323
    %v8340 = vmul.f32 %v8260, %v8324
    %v8341 = vmul.f32 %v8261, %v8325
    %v8342 = vmul.f32 %v8262, %v8326
    %v8343 = vmul.f32 %v8263, %v8327
    %v8344 = vmul.f32 %v8264, %v8328
    %v8345 = vmul.f32 %v8265, %v8329
    %v8346 = vmul.f32 %v8266, %v8330
    %v8347 = vmul.f32 %v8267, %v8331
    %v8348 = vmul.f32 %v8268, %v8332
    %v8349 = vmul.f32 %v8269, %v8333
    %v8350 = vpack.c.bf16 %v8335, %v8334
    %v8351 = vpack.c.bf16 %v8337, %v8336
    %v8352 = vpack.c.bf16 %v8339, %v8338
    %v8353 = vpack.c.bf16 %v8341, %v8340
    %v8354 = vpack.c.bf16 %v8343, %v8342
    %v8355 = vpack.c.bf16 %v8345, %v8344
    %v8356 = vpack.c.bf16 %v8347, %v8346
    %v8357 = vpack.c.bf16 %v8349, %v8348
    %8358 = vrot.lane.b32.xlu0 %v5451, 96
    %v8359 = vpop.permute.xlu0 %8358
    %8360 = vrot.lane.b32.xlu0 %v5452, 96
    %v8361 = vpop.permute.xlu0 %8360
    %8362 = vrot.lane.b32.xlu0 %v5453, 96
    %v8363 = vpop.permute.xlu0 %8362
    %8364 = vrot.lane.b32.xlu0 %v5454, 96
    %v8365 = vpop.permute.xlu0 %8364
    %8366 = vrot.lane.b32.xlu0 %v5455, 96
    %v8367 = vpop.permute.xlu0 %8366
    %8368 = vrot.lane.b32.xlu0 %v5456, 96
    %v8369 = vpop.permute.xlu0 %8368
    %8370 = vrot.lane.b32.xlu0 %v5457, 96
    %v8371 = vpop.permute.xlu0 %8370
    %8372 = vrot.lane.b32.xlu0 %v5458, 96
    %v8373 = vpop.permute.xlu0 %8372
    %8382 = vmatprep.subr.bf16.mxu0 0
    %8383 = vmatpush1.bf16.msra.mxu0 %v8359
    %8384 = vmatprep.subr.bf16.mxu0 0
    %8385 = vmatpush1.bf16.msra.mxu0 %v8361
    %8386 = vmatprep.subr.bf16.mxu0 0
    %8387 = vmatpush1.bf16.msra.mxu0 %v8363
    %8388 = vmatprep.subr.bf16.mxu0 0
    %8389 = vmatpush1.bf16.msra.mxu0 %v8365
    %8390 = vmatprep.subr.bf16.mxu0 0
    %8391 = vmatpush1.bf16.msra.mxu0 %v8367
    %8392 = vmatprep.subr.bf16.mxu0 0
    %8393 = vmatpush1.bf16.msra.mxu0 %v8369
    %8394 = vmatprep.subr.bf16.mxu0 0
    %8395 = vmatpush1.bf16.msra.mxu0 %v8371
    %8396 = vmatprep.subr.bf16.mxu0 0
    %8397 = vmatpush1.bf16.msra.mxu0 %v8373
    %8398 = vmatprep.subr.bf16.mxu0 0
    %8399 = vmatpush1.bf16.msra.mxu0 0
    %8400 = vmatprep.subr.bf16.mxu0 0
    %8401 = vmatpush1.bf16.msra.mxu0 0
    %8402 = vmatprep.subr.bf16.mxu0 0
    %8403 = vmatpush1.bf16.msra.mxu0 0
    %8404 = vmatprep.subr.bf16.mxu0 0
    %8405 = vmatpush1.bf16.msra.mxu0 0
    %8406 = vmatprep.subr.bf16.mxu0 0
    %8407 = vmatpush1.bf16.msra.mxu0 0
    %8408 = vmatprep.subr.bf16.mxu0 0
    %8409 = vmatpush1.bf16.msra.mxu0 0
    %8410 = vmatprep.subr.bf16.mxu0 0
    %8411 = vmatpush1.bf16.msra.mxu0 0
    %8412 = vmatprep.subr.bf16.mxu0 0
    %8413 = vmatpush1.bf16.msra.mxu0 0
    %8414 = vmatprep.mubr.bf16.mxu0 0
    %8415 = vmatmul.mubr.bf16.gmra.mrb[0].mxu0 %v8350
    %v8416 = vpop.f32.mrb[0].mxu0
    %v8417 = vadd.f32 0.0, %v8416
    %v8418 = vpop.f32.mrb[0].mxu0
    %v8419 = vpop.f32.mrb[0].mxu0
    %v8420 = vadd.f32 0.0, %v8419
    %v8421 = vpop.f32.mrb[0].mxu0
    %8422 = vmatprep.mubr.bf16.mxu0 0
    %8423 = vmatmul.mubr.bf16.gmra.mrb[0].mxu0 %v8351
    %v8424 = vpop.f32.mrb[0].mxu0
    %v8425 = vadd.f32 0.0, %v8424
    %v8426 = vpop.f32.mrb[0].mxu0
    %v8427 = vpop.f32.mrb[0].mxu0
    %v8428 = vadd.f32 0.0, %v8427
    %v8429 = vpop.f32.mrb[0].mxu0
    %8430 = vmatprep.mubr.bf16.mxu0 0
    %8431 = vmatmul.mubr.bf16.gmra.mrb[0].mxu0 %v8352
    %v8432 = vpop.f32.mrb[0].mxu0
    %v8433 = vadd.f32 0.0, %v8432
    %v8434 = vpop.f32.mrb[0].mxu0
    %v8435 = vpop.f32.mrb[0].mxu0
    %v8436 = vadd.f32 0.0, %v8435
    %v8437 = vpop.f32.mrb[0].mxu0
    %8438 = vmatprep.mubr.bf16.mxu0 0
    %8439 = vmatmul.mubr.bf16.gmra.mrb[0].mxu0 %v8353
    %v8440 = vpop.f32.mrb[0].mxu0
    %v8441 = vadd.f32 0.0, %v8440
    %v8442 = vpop.f32.mrb[0].mxu0
    %v8443 = vpop.f32.mrb[0].mxu0
    %v8444 = vadd.f32 0.0, %v8443
    %v8445 = vpop.f32.mrb[0].mxu0
    %8446 = vmatprep.mubr.bf16.mxu0 0
    %8447 = vmatmul.mubr.bf16.gmra.mrb[0].mxu0 %v8354
    %v8448 = vpop.f32.mrb[0].mxu0
    %v8449 = vadd.f32 0.0, %v8448
    %v8450 = vpop.f32.mrb[0].mxu0
    %v8451 = vpop.f32.mrb[0].mxu0
    %v8452 = vadd.f32 0.0, %v8451
    %v8453 = vpop.f32.mrb[0].mxu0
    %8454 = vmatprep.mubr.bf16.mxu0 0
    %8455 = vmatmul.mubr.bf16.gmra.mrb[0].mxu0 %v8355
    %v8456 = vpop.f32.mrb[0].mxu0
    %v8457 = vadd.f32 0.0, %v8456
    %v8458 = vpop.f32.mrb[0].mxu0
    %v8459 = vpop.f32.mrb[0].mxu0
    %v8460 = vadd.f32 0.0, %v8459
    %v8461 = vpop.f32.mrb[0].mxu0
    %8462 = vmatprep.mubr.bf16.mxu0 0
    %8463 = vmatmul.mubr.bf16.gmra.mrb[0].mxu0 %v8356
    %v8464 = vpop.f32.mrb[0].mxu0
    %v8465 = vadd.f32 0.0, %v8464
    %v8466 = vpop.f32.mrb[0].mxu0
    %v8467 = vpop.f32.mrb[0].mxu0
    %v8468 = vadd.f32 0.0, %v8467
    %v8469 = vpop.f32.mrb[0].mxu0
    %8470 = vmatprep.mubr.bf16.mxu0 0
    %8471 = vmatmul.mubr.bf16.gmra.mrb[0].mxu0 %v8357
    %v8472 = vpop.f32.mrb[0].mxu0
    %v8473 = vadd.f32 0.0, %v8472
    %v8474 = vpop.f32.mrb[0].mxu0
    %v8475 = vpop.f32.mrb[0].mxu0
    %v8476 = vadd.f32 0.0, %v8475
    %v8477 = vpop.f32.mrb[0].mxu0
    %8478 = vdwg.mxu0
    %v8479 = vpack.c.bf16 %v8420, %v8417
    %v8480 = vpack.c.bf16 %v8428, %v8425
    %v8481 = vpack.c.bf16 %v8436, %v8433
    %v8482 = vpack.c.bf16 %v8444, %v8441
    %v8483 = vpack.c.bf16 %v8452, %v8449
    %v8484 = vpack.c.bf16 %v8460, %v8457
    %v8485 = vpack.c.bf16 %v8468, %v8465
    %v8486 = vpack.c.bf16 %v8476, %v8473
    %v8488 = vsel %vm5459, %v8479, 0
    %v8491 = vsel %vm5459, %v8480, 0
    %v8494 = vsel %vm5459, %v8481, 0
    %v8497 = vsel %vm5459, %v8482, 0
    %v8500 = vsel %vm5459, %v8483, 0
    %v8503 = vsel %vm5459, %v8484, 0
    %v8506 = vsel %vm5459, %v8485, 0
    %v8509 = vsel %vm5459, %v8486, 0
    %v8512 = vsel %vm6464, %v5431, 0
    %8514 = vmatprep.subr.bf16.mxu0 0
    %8515 = vmatpush1.bf16.msra.mxu0 %v8512
    %8516 = vmatprep.subr.bf16.mxu0 0
    %8517 = vmatpush1.bf16.msra.mxu0 0
    %8518 = vmatprep.subr.bf16.mxu0 0
    %8519 = vmatpush1.bf16.msra.mxu0 0
    %8520 = vmatprep.subr.bf16.mxu0 0
    %8521 = vmatpush1.bf16.msra.mxu0 0
    %8522 = vmatprep.subr.bf16.mxu0 0
    %8523 = vmatpush1.bf16.msra.mxu0 0
    %8524 = vmatprep.subr.bf16.mxu0 0
    %8525 = vmatpush1.bf16.msra.mxu0 0
    %8526 = vmatprep.subr.bf16.mxu0 0
    %8527 = vmatpush1.bf16.msra.mxu0 0
    %8528 = vmatprep.subr.bf16.mxu0 0
    %8529 = vmatpush1.bf16.msra.mxu0 0
    %8530 = vmatprep.subr.bf16.mxu0 0
    %8531 = vmatpush1.bf16.msra.mxu0 0
    %8532 = vmatprep.subr.bf16.mxu0 0
    %8533 = vmatpush1.bf16.msra.mxu0 0
    %8534 = vmatprep.subr.bf16.mxu0 0
    %8535 = vmatpush1.bf16.msra.mxu0 0
    %8536 = vmatprep.subr.bf16.mxu0 0
    %8537 = vmatpush1.bf16.msra.mxu0 0
    %8538 = vmatprep.subr.bf16.mxu0 0
    %8539 = vmatpush1.bf16.msra.mxu0 0
    %8540 = vmatprep.subr.bf16.mxu0 0
    %8541 = vmatpush1.bf16.msra.mxu0 0
    %8542 = vmatprep.subr.bf16.mxu0 0
    %8543 = vmatpush1.bf16.msra.mxu0 0
    %8544 = vmatprep.subr.bf16.mxu0 0
    %8545 = vmatpush1.bf16.msra.mxu0 0
    %8546 = vmatprep.mubr.bf16.mxu0 0
    %8547 = vmatmul.mubr.bf16.gmra.mrb[0].mxu0 %v8488
    %v8548 = vpop.f32.mrb[0].mxu0
    %v8549 = vadd.f32 0.0, %v8548
    %v8550 = vpop.f32.mrb[0].mxu0
    %v8551 = vpop.f32.mrb[0].mxu0
    %v8552 = vadd.f32 0.0, %v8551
    %v8553 = vpop.f32.mrb[0].mxu0
    %8554 = vmatprep.mubr.bf16.mxu0 0
    %8555 = vmatmul.mubr.bf16.gmra.mrb[0].mxu0 %v8491
    %v8556 = vpop.f32.mrb[0].mxu0
    %v8557 = vadd.f32 0.0, %v8556
    %v8558 = vpop.f32.mrb[0].mxu0
    %v8559 = vpop.f32.mrb[0].mxu0
    %v8560 = vadd.f32 0.0, %v8559
    %v8561 = vpop.f32.mrb[0].mxu0
    %8562 = vmatprep.mubr.bf16.mxu0 0
    %8563 = vmatmul.mubr.bf16.gmra.mrb[0].mxu0 %v8494
    %v8564 = vpop.f32.mrb[0].mxu0
    %v8565 = vadd.f32 0.0, %v8564
    %v8566 = vpop.f32.mrb[0].mxu0
    %v8567 = vpop.f32.mrb[0].mxu0
    %v8568 = vadd.f32 0.0, %v8567
    %v8569 = vpop.f32.mrb[0].mxu0
    %8570 = vmatprep.mubr.bf16.mxu0 0
    %8571 = vmatmul.mubr.bf16.gmra.mrb[0].mxu0 %v8497
    %v8572 = vpop.f32.mrb[0].mxu0
    %v8573 = vadd.f32 0.0, %v8572
    %v8574 = vpop.f32.mrb[0].mxu0
    %v8575 = vpop.f32.mrb[0].mxu0
    %v8576 = vadd.f32 0.0, %v8575
    %v8577 = vpop.f32.mrb[0].mxu0
    %8578 = vmatprep.mubr.bf16.mxu0 0
    %8579 = vmatmul.mubr.bf16.gmra.mrb[0].mxu0 %v8500
    %v8580 = vpop.f32.mrb[0].mxu0
    %v8581 = vadd.f32 0.0, %v8580
    %v8582 = vpop.f32.mrb[0].mxu0
    %v8583 = vpop.f32.mrb[0].mxu0
    %v8584 = vadd.f32 0.0, %v8583
    %v8585 = vpop.f32.mrb[0].mxu0
    %8586 = vmatprep.mubr.bf16.mxu0 0
    %8587 = vmatmul.mubr.bf16.gmra.mrb[0].mxu0 %v8503
    %v8588 = vpop.f32.mrb[0].mxu0
    %v8589 = vadd.f32 0.0, %v8588
    %v8590 = vpop.f32.mrb[0].mxu0
    %v8591 = vpop.f32.mrb[0].mxu0
    %v8592 = vadd.f32 0.0, %v8591
    %v8593 = vpop.f32.mrb[0].mxu0
    %8594 = vmatprep.mubr.bf16.mxu0 0
    %8595 = vmatmul.mubr.bf16.gmra.mrb[0].mxu0 %v8506
    %v8596 = vpop.f32.mrb[0].mxu0
    %v8597 = vadd.f32 0.0, %v8596
    %v8598 = vpop.f32.mrb[0].mxu0
    %v8599 = vpop.f32.mrb[0].mxu0
    %v8600 = vadd.f32 0.0, %v8599
    %v8601 = vpop.f32.mrb[0].mxu0
    %8602 = vmatprep.mubr.bf16.mxu0 0
    %8603 = vmatmul.mubr.bf16.gmra.mrb[0].mxu0 %v8509
    %v8604 = vpop.f32.mrb[0].mxu0
    %v8605 = vadd.f32 0.0, %v8604
    %v8606 = vpop.f32.mrb[0].mxu0
    %v8607 = vpop.f32.mrb[0].mxu0
    %v8608 = vadd.f32 0.0, %v8607
    %v8609 = vpop.f32.mrb[0].mxu0
    %8610 = vdwg.mxu0
    %v8611 = vadd.f32 %v7965, %v8549
    %v8612 = vadd.f32 %v7966, %v8552
    %v8613 = vadd.f32 %v7967, %v8557
    %v8614 = vadd.f32 %v7968, %v8560
    %v8615 = vadd.f32 %v7969, %v8565
    %v8616 = vadd.f32 %v7970, %v8568
    %v8617 = vadd.f32 %v7971, %v8573
    %v8618 = vadd.f32 %v7972, %v8576
    %v8619 = vadd.f32 %v7973, %v8581
    %v8620 = vadd.f32 %v7974, %v8584
    %v8621 = vadd.f32 %v7975, %v8589
    %v8622 = vadd.f32 %v7976, %v8592
    %v8623 = vadd.f32 %v7977, %v8597
    %v8624 = vadd.f32 %v7978, %v8600
    %v8625 = vadd.f32 %v7979, %v8605
    %v8626 = vadd.f32 %v7980, %v8608
    %8627 = vrot.lane.b32.xlu0 %v5435, 88
    %v8628 = vpop.permute.xlu0 %8627
    %8629 = vrot.lane.b32.xlu0 %v5436, 88
    %v8630 = vpop.permute.xlu0 %8629
    %8631 = vrot.lane.b32.xlu0 %v5437, 88
    %v8632 = vpop.permute.xlu0 %8631
    %8633 = vrot.lane.b32.xlu0 %v5438, 88
    %v8634 = vpop.permute.xlu0 %8633
    %8635 = vrot.lane.b32.xlu0 %v5439, 88
    %v8636 = vpop.permute.xlu0 %8635
    %8637 = vrot.lane.b32.xlu0 %v5440, 88
    %v8638 = vpop.permute.xlu0 %8637
    %8639 = vrot.lane.b32.xlu0 %v5441, 88
    %v8640 = vpop.permute.xlu0 %8639
    %8641 = vrot.lane.b32.xlu0 %v5442, 88
    %v8642 = vpop.permute.xlu0 %8641
    %8643 = vrot.lane.b32.xlu0 %v5443, 88
    %v8644 = vpop.permute.xlu0 %8643
    %8645 = vrot.lane.b32.xlu0 %v5444, 88
    %v8646 = vpop.permute.xlu0 %8645
    %8647 = vrot.lane.b32.xlu0 %v5445, 88
    %v8648 = vpop.permute.xlu0 %8647
    %8649 = vrot.lane.b32.xlu0 %v5446, 88
    %v8650 = vpop.permute.xlu0 %8649
    %8651 = vrot.lane.b32.xlu0 %v5447, 88
    %v8652 = vpop.permute.xlu0 %8651
    %8653 = vrot.lane.b32.xlu0 %v5448, 88
    %v8654 = vpop.permute.xlu0 %8653
    %8655 = vrot.lane.b32.xlu0 %v5449, 88
    %v8656 = vpop.permute.xlu0 %8655
    %8657 = vrot.lane.b32.xlu0 %v5450, 88
    %v8658 = vpop.permute.xlu0 %8657
    %v8660 = vsel %vm5459, %v8628, 0
    %v8663 = vsel %vm5459, %v8630, 0
    %v8666 = vsel %vm5459, %v8632, 0
    %v8669 = vsel %vm5459, %v8634, 0
    %v8672 = vsel %vm5459, %v8636, 0
    %v8675 = vsel %vm5459, %v8638, 0
    %v8678 = vsel %vm5459, %v8640, 0
    %v8681 = vsel %vm5459, %v8642, 0
    %v8684 = vsel %vm5459, %v8644, 0
    %v8687 = vsel %vm5459, %v8646, 0
    %v8690 = vsel %vm5459, %v8648, 0
    %v8693 = vsel %vm5459, %v8650, 0
    %v8696 = vsel %vm5459, %v8652, 0
    %v8699 = vsel %vm5459, %v8654, 0
    %v8702 = vsel %vm5459, %v8656, 0
    %v8705 = vsel %vm5459, %v8658, 0
    %8707 = vmatprep.subr.bf16.mxu0 0
    %8708 = vmatpush1.bf16.xpose.msra.mxu0 %v8684
    %8709 = vmatprep.subr.bf16.mxu0 0
    %8710 = vmatpush1.bf16.xpose.msra.mxu0 %v8687
    %8711 = vmatprep.subr.bf16.mxu0 0
    %8712 = vmatpush1.bf16.xpose.msra.mxu0 %v8690
    %8713 = vmatprep.subr.bf16.mxu0 0
    %8714 = vmatpush1.bf16.xpose.msra.mxu0 %v8693
    %8715 = vmatprep.subr.bf16.mxu0 0
    %8716 = vmatpush1.bf16.xpose.msra.mxu0 %v8696
    %8717 = vmatprep.subr.bf16.mxu0 0
    %8718 = vmatpush1.bf16.xpose.msra.mxu0 %v8699
    %8719 = vmatprep.subr.bf16.mxu0 0
    %8720 = vmatpush1.bf16.xpose.msra.mxu0 %v8702
    %8721 = vmatprep.subr.bf16.mxu0 0
    %8722 = vmatpush1.bf16.xpose.msra.mxu0 %v8705
    %8723 = vmatprep.subr.bf16.mxu0 0
    %8724 = vmatpush1.bf16.xpose.msra.mxu0 0
    %8725 = vmatprep.subr.bf16.mxu0 0
    %8726 = vmatpush1.bf16.xpose.msra.mxu0 0
    %8727 = vmatprep.subr.bf16.mxu0 0
    %8728 = vmatpush1.bf16.xpose.msra.mxu0 0
    %8729 = vmatprep.subr.bf16.mxu0 0
    %8730 = vmatpush1.bf16.xpose.msra.mxu0 0
    %8731 = vmatprep.subr.bf16.mxu0 0
    %8732 = vmatpush1.bf16.xpose.msra.mxu0 0
    %8733 = vmatprep.subr.bf16.mxu0 0
    %8734 = vmatpush1.bf16.xpose.msra.mxu0 0
    %8735 = vmatprep.subr.bf16.mxu0 0
    %8736 = vmatpush1.bf16.xpose.msra.mxu0 0
    %8737 = vmatprep.subr.bf16.mxu0 0
    %8738 = vmatpush1.bf16.xpose.msra.mxu0 0
    %8739 = vmatprep.mubr.bf16.mxu0 0
    %8740 = vmatmul.mubr.bf16.gmra.mrb[0].mxu0 %v8660
    %v8741 = vpop.f32.mrb[0].mxu0
    %v8742 = vadd.f32 0.0, %v8741
    %v8743 = vpop.f32.mrb[0].mxu0
    %v8744 = vpop.f32.mrb[0].mxu0
    %v8745 = vadd.f32 0.0, %v8744
    %v8746 = vpop.f32.mrb[0].mxu0
    %8747 = vmatprep.mubr.bf16.mxu0 0
    %8748 = vmatmul.mubr.bf16.gmra.mrb[0].mxu0 %v8663
    %v8749 = vpop.f32.mrb[0].mxu0
    %v8750 = vadd.f32 0.0, %v8749
    %v8751 = vpop.f32.mrb[0].mxu0
    %v8752 = vpop.f32.mrb[0].mxu0
    %v8753 = vadd.f32 0.0, %v8752
    %v8754 = vpop.f32.mrb[0].mxu0
    %8755 = vmatprep.mubr.bf16.mxu0 0
    %8756 = vmatmul.mubr.bf16.gmra.mrb[0].mxu0 %v8666
    %v8757 = vpop.f32.mrb[0].mxu0
    %v8758 = vadd.f32 0.0, %v8757
    %v8759 = vpop.f32.mrb[0].mxu0
    %v8760 = vpop.f32.mrb[0].mxu0
    %v8761 = vadd.f32 0.0, %v8760
    %v8762 = vpop.f32.mrb[0].mxu0
    %8763 = vmatprep.mubr.bf16.mxu0 0
    %8764 = vmatmul.mubr.bf16.gmra.mrb[0].mxu0 %v8669
    %v8765 = vpop.f32.mrb[0].mxu0
    %v8766 = vadd.f32 0.0, %v8765
    %v8767 = vpop.f32.mrb[0].mxu0
    %v8768 = vpop.f32.mrb[0].mxu0
    %v8769 = vadd.f32 0.0, %v8768
    %v8770 = vpop.f32.mrb[0].mxu0
    %8771 = vmatprep.mubr.bf16.mxu0 0
    %8772 = vmatmul.mubr.bf16.gmra.mrb[0].mxu0 %v8672
    %v8773 = vpop.f32.mrb[0].mxu0
    %v8774 = vadd.f32 0.0, %v8773
    %v8775 = vpop.f32.mrb[0].mxu0
    %v8776 = vpop.f32.mrb[0].mxu0
    %v8777 = vadd.f32 0.0, %v8776
    %v8778 = vpop.f32.mrb[0].mxu0
    %8779 = vmatprep.mubr.bf16.mxu0 0
    %8780 = vmatmul.mubr.bf16.gmra.mrb[0].mxu0 %v8675
    %v8781 = vpop.f32.mrb[0].mxu0
    %v8782 = vadd.f32 0.0, %v8781
    %v8783 = vpop.f32.mrb[0].mxu0
    %v8784 = vpop.f32.mrb[0].mxu0
    %v8785 = vadd.f32 0.0, %v8784
    %v8786 = vpop.f32.mrb[0].mxu0
    %8787 = vmatprep.mubr.bf16.mxu0 0
    %8788 = vmatmul.mubr.bf16.gmra.mrb[0].mxu0 %v8678
    %v8789 = vpop.f32.mrb[0].mxu0
    %v8790 = vadd.f32 0.0, %v8789
    %v8791 = vpop.f32.mrb[0].mxu0
    %v8792 = vpop.f32.mrb[0].mxu0
    %v8793 = vadd.f32 0.0, %v8792
    %v8794 = vpop.f32.mrb[0].mxu0
    %8795 = vmatprep.mubr.bf16.mxu0 0
    %8796 = vmatmul.mubr.bf16.gmra.mrb[0].mxu0 %v8681
    %v8797 = vpop.f32.mrb[0].mxu0
    %v8798 = vadd.f32 0.0, %v8797
    %v8799 = vpop.f32.mrb[0].mxu0
    %v8800 = vpop.f32.mrb[0].mxu0
    %v8801 = vadd.f32 0.0, %v8800
    %v8802 = vpop.f32.mrb[0].mxu0
    %8803 = vdwg.mxu0
    %v8804 = vmul.f32 %v8742, 0.35355338
    %v8805 = vmul.f32 %v8745, 0.35355338
    %v8806 = vmul.f32 %v8750, 0.35355338
    %v8807 = vmul.f32 %v8753, 0.35355338
    %v8808 = vmul.f32 %v8758, 0.35355338
    %v8809 = vmul.f32 %v8761, 0.35355338
    %v8810 = vmul.f32 %v8766, 0.35355338
    %v8811 = vmul.f32 %v8769, 0.35355338
    %v8812 = vmul.f32 %v8774, 0.35355338
    %v8813 = vmul.f32 %v8777, 0.35355338
    %v8814 = vmul.f32 %v8782, 0.35355338
    %v8815 = vmul.f32 %v8785, 0.35355338
    %v8816 = vmul.f32 %v8790, 0.35355338
    %v8817 = vmul.f32 %v8793, 0.35355338
    %v8818 = vmul.f32 %v8798, 0.35355338
    %v8819 = vmul.f32 %v8801, 0.35355338
    %8820 = vmax.xlane.f32.xlu0 %v8804
    %v8821 = vpop.xlane.xlu0 %8820
    %8822 = vmax.xlane.f32.xlu0 %v8805
    %v8823 = vpop.xlane.xlu0 %8822
    %8824 = vmax.xlane.f32.xlu0 %v8806
    %v8825 = vpop.xlane.xlu0 %8824
    %8826 = vmax.xlane.f32.xlu0 %v8807
    %v8827 = vpop.xlane.xlu0 %8826
    %8828 = vmax.xlane.f32.xlu0 %v8808
    %v8829 = vpop.xlane.xlu0 %8828
    %8830 = vmax.xlane.f32.xlu0 %v8809
    %v8831 = vpop.xlane.xlu0 %8830
    %8832 = vmax.xlane.f32.xlu0 %v8810
    %v8833 = vpop.xlane.xlu0 %8832
    %8834 = vmax.xlane.f32.xlu0 %v8811
    %v8835 = vpop.xlane.xlu0 %8834
    %8836 = vmax.xlane.f32.xlu0 %v8812
    %v8837 = vpop.xlane.xlu0 %8836
    %8838 = vmax.xlane.f32.xlu0 %v8813
    %v8839 = vpop.xlane.xlu0 %8838
    %8840 = vmax.xlane.f32.xlu0 %v8814
    %v8841 = vpop.xlane.xlu0 %8840
    %8842 = vmax.xlane.f32.xlu0 %v8815
    %v8843 = vpop.xlane.xlu0 %8842
    %8844 = vmax.xlane.f32.xlu0 %v8816
    %v8845 = vpop.xlane.xlu0 %8844
    %8846 = vmax.xlane.f32.xlu0 %v8817
    %v8847 = vpop.xlane.xlu0 %8846
    %8848 = vmax.xlane.f32.xlu0 %v8818
    %v8849 = vpop.xlane.xlu0 %8848
    %8850 = vmax.xlane.f32.xlu0 %v8819
    %v8851 = vpop.xlane.xlu0 %8850
    %v8852 = vsub.f32 %v8804, %v8821
    %v8853 = vsub.f32 %v8805, %v8823
    %v8854 = vsub.f32 %v8806, %v8825
    %v8855 = vsub.f32 %v8807, %v8827
    %v8856 = vsub.f32 %v8808, %v8829
    %v8857 = vsub.f32 %v8809, %v8831
    %v8858 = vsub.f32 %v8810, %v8833
    %v8859 = vsub.f32 %v8811, %v8835
    %v8860 = vsub.f32 %v8812, %v8837
    %v8861 = vsub.f32 %v8813, %v8839
    %v8862 = vsub.f32 %v8814, %v8841
    %v8863 = vsub.f32 %v8815, %v8843
    %v8864 = vsub.f32 %v8816, %v8845
    %v8865 = vsub.f32 %v8817, %v8847
    %v8866 = vsub.f32 %v8818, %v8849
    %v8867 = vsub.f32 %v8819, %v8851
    %v8868 = vmul.f32 %v8852, 1.442695
    %v8869 = vpow.pop %v8868
    %v8870 = vmul.f32 %v8853, 1.442695
    %v8871 = vpow.pop %v8870
    %v8872 = vmul.f32 %v8854, 1.442695
    %v8873 = vpow.pop %v8872
    %v8874 = vmul.f32 %v8855, 1.442695
    %v8875 = vpow.pop %v8874
    %v8876 = vmul.f32 %v8856, 1.442695
    %v8877 = vpow.pop %v8876
    %v8878 = vmul.f32 %v8857, 1.442695
    %v8879 = vpow.pop %v8878
    %v8880 = vmul.f32 %v8858, 1.442695
    %v8881 = vpow.pop %v8880
    %v8882 = vmul.f32 %v8859, 1.442695
    %v8883 = vpow.pop %v8882
    %v8884 = vmul.f32 %v8860, 1.442695
    %v8885 = vpow.pop %v8884
    %v8886 = vmul.f32 %v8861, 1.442695
    %v8887 = vpow.pop %v8886
    %v8888 = vmul.f32 %v8862, 1.442695
    %v8889 = vpow.pop %v8888
    %v8890 = vmul.f32 %v8863, 1.442695
    %v8891 = vpow.pop %v8890
    %v8892 = vmul.f32 %v8864, 1.442695
    %v8893 = vpow.pop %v8892
    %v8894 = vmul.f32 %v8865, 1.442695
    %v8895 = vpow.pop %v8894
    %v8896 = vmul.f32 %v8866, 1.442695
    %v8897 = vpow.pop %v8896
    %v8898 = vmul.f32 %v8867, 1.442695
    %v8899 = vpow.pop %v8898
    %v8900 = vmul.f32 %v8869, %v5411
    %v8901 = vmul.f32 %v8871, %v5412
    %v8902 = vmul.f32 %v8873, %v5413
    %v8903 = vmul.f32 %v8875, %v5414
    %v8904 = vmul.f32 %v8877, %v5415
    %v8905 = vmul.f32 %v8879, %v5416
    %v8906 = vmul.f32 %v8881, %v5417
    %v8907 = vmul.f32 %v8883, %v5418
    %v8908 = vmul.f32 %v8885, %v5419
    %v8909 = vmul.f32 %v8887, %v5420
    %v8910 = vmul.f32 %v8889, %v5421
    %v8911 = vmul.f32 %v8891, %v5422
    %v8912 = vmul.f32 %v8893, %v5423
    %v8913 = vmul.f32 %v8895, %v5424
    %v8914 = vmul.f32 %v8897, %v5425
    %v8915 = vmul.f32 %v8899, %v5426
    %8916 = vadd.xlane.f32.xlu0 %v8900
    %v8917 = vpop.xlane.xlu0 %8916
    %8918 = vadd.xlane.f32.xlu0 %v8901
    %v8919 = vpop.xlane.xlu0 %8918
    %8920 = vadd.xlane.f32.xlu0 %v8902
    %v8921 = vpop.xlane.xlu0 %8920
    %8922 = vadd.xlane.f32.xlu0 %v8903
    %v8923 = vpop.xlane.xlu0 %8922
    %8924 = vadd.xlane.f32.xlu0 %v8904
    %v8925 = vpop.xlane.xlu0 %8924
    %8926 = vadd.xlane.f32.xlu0 %v8905
    %v8927 = vpop.xlane.xlu0 %8926
    %8928 = vadd.xlane.f32.xlu0 %v8906
    %v8929 = vpop.xlane.xlu0 %8928
    %8930 = vadd.xlane.f32.xlu0 %v8907
    %v8931 = vpop.xlane.xlu0 %8930
    %8932 = vadd.xlane.f32.xlu0 %v8908
    %v8933 = vpop.xlane.xlu0 %8932
    %8934 = vadd.xlane.f32.xlu0 %v8909
    %v8935 = vpop.xlane.xlu0 %8934
    %8936 = vadd.xlane.f32.xlu0 %v8910
    %v8937 = vpop.xlane.xlu0 %8936
    %8938 = vadd.xlane.f32.xlu0 %v8911
    %v8939 = vpop.xlane.xlu0 %8938
    %8940 = vadd.xlane.f32.xlu0 %v8912
    %v8941 = vpop.xlane.xlu0 %8940
    %8942 = vadd.xlane.f32.xlu0 %v8913
    %v8943 = vpop.xlane.xlu0 %8942
    %8944 = vadd.xlane.f32.xlu0 %v8914
    %v8945 = vpop.xlane.xlu0 %8944
    %8946 = vadd.xlane.f32.xlu0 %v8915
    %v8947 = vpop.xlane.xlu0 %8946
    %v8948 = vmax.f32 %v8917, 1e-30
    %v8949 = vmax.f32 %v8919, 1e-30
    %v8950 = vmax.f32 %v8921, 1e-30
    %v8951 = vmax.f32 %v8923, 1e-30
    %v8952 = vmax.f32 %v8925, 1e-30
    %v8953 = vmax.f32 %v8927, 1e-30
    %v8954 = vmax.f32 %v8929, 1e-30
    %v8955 = vmax.f32 %v8931, 1e-30
    %v8956 = vmax.f32 %v8933, 1e-30
    %v8957 = vmax.f32 %v8935, 1e-30
    %v8958 = vmax.f32 %v8937, 1e-30
    %v8959 = vmax.f32 %v8939, 1e-30
    %v8960 = vmax.f32 %v8941, 1e-30
    %v8961 = vmax.f32 %v8943, 1e-30
    %v8962 = vmax.f32 %v8945, 1e-30
    %v8963 = vmax.f32 %v8947, 1e-30
    %v8964 = vrcp.pop %v8948
    %v8965 = vrcp.pop %v8949
    %v8966 = vrcp.pop %v8950
    %v8967 = vrcp.pop %v8951
    %v8968 = vrcp.pop %v8952
    %v8969 = vrcp.pop %v8953
    %v8970 = vrcp.pop %v8954
    %v8971 = vrcp.pop %v8955
    %v8972 = vrcp.pop %v8956
    %v8973 = vrcp.pop %v8957
    %v8974 = vrcp.pop %v8958
    %v8975 = vrcp.pop %v8959
    %v8976 = vrcp.pop %v8960
    %v8977 = vrcp.pop %v8961
    %v8978 = vrcp.pop %v8962
    %v8979 = vrcp.pop %v8963
    %v8980 = vmul.f32 %v8900, %v8964
    %v8981 = vmul.f32 %v8901, %v8965
    %v8982 = vmul.f32 %v8902, %v8966
    %v8983 = vmul.f32 %v8903, %v8967
    %v8984 = vmul.f32 %v8904, %v8968
    %v8985 = vmul.f32 %v8905, %v8969
    %v8986 = vmul.f32 %v8906, %v8970
    %v8987 = vmul.f32 %v8907, %v8971
    %v8988 = vmul.f32 %v8908, %v8972
    %v8989 = vmul.f32 %v8909, %v8973
    %v8990 = vmul.f32 %v8910, %v8974
    %v8991 = vmul.f32 %v8911, %v8975
    %v8992 = vmul.f32 %v8912, %v8976
    %v8993 = vmul.f32 %v8913, %v8977
    %v8994 = vmul.f32 %v8914, %v8978
    %v8995 = vmul.f32 %v8915, %v8979
    %v8996 = vpack.c.bf16 %v8981, %v8980
    %v8997 = vpack.c.bf16 %v8983, %v8982
    %v8998 = vpack.c.bf16 %v8985, %v8984
    %v8999 = vpack.c.bf16 %v8987, %v8986
    %v9000 = vpack.c.bf16 %v8989, %v8988
    %v9001 = vpack.c.bf16 %v8991, %v8990
    %v9002 = vpack.c.bf16 %v8993, %v8992
    %v9003 = vpack.c.bf16 %v8995, %v8994
    %9004 = vrot.lane.b32.xlu0 %v5451, 88
    %v9005 = vpop.permute.xlu0 %9004
    %9006 = vrot.lane.b32.xlu0 %v5452, 88
    %v9007 = vpop.permute.xlu0 %9006
    %9008 = vrot.lane.b32.xlu0 %v5453, 88
    %v9009 = vpop.permute.xlu0 %9008
    %9010 = vrot.lane.b32.xlu0 %v5454, 88
    %v9011 = vpop.permute.xlu0 %9010
    %9012 = vrot.lane.b32.xlu0 %v5455, 88
    %v9013 = vpop.permute.xlu0 %9012
    %9014 = vrot.lane.b32.xlu0 %v5456, 88
    %v9015 = vpop.permute.xlu0 %9014
    %9016 = vrot.lane.b32.xlu0 %v5457, 88
    %v9017 = vpop.permute.xlu0 %9016
    %9018 = vrot.lane.b32.xlu0 %v5458, 88
    %v9019 = vpop.permute.xlu0 %9018
    %9028 = vmatprep.subr.bf16.mxu0 0
    %9029 = vmatpush1.bf16.msra.mxu0 %v9005
    %9030 = vmatprep.subr.bf16.mxu0 0
    %9031 = vmatpush1.bf16.msra.mxu0 %v9007
    %9032 = vmatprep.subr.bf16.mxu0 0
    %9033 = vmatpush1.bf16.msra.mxu0 %v9009
    %9034 = vmatprep.subr.bf16.mxu0 0
    %9035 = vmatpush1.bf16.msra.mxu0 %v9011
    %9036 = vmatprep.subr.bf16.mxu0 0
    %9037 = vmatpush1.bf16.msra.mxu0 %v9013
    %9038 = vmatprep.subr.bf16.mxu0 0
    %9039 = vmatpush1.bf16.msra.mxu0 %v9015
    %9040 = vmatprep.subr.bf16.mxu0 0
    %9041 = vmatpush1.bf16.msra.mxu0 %v9017
    %9042 = vmatprep.subr.bf16.mxu0 0
    %9043 = vmatpush1.bf16.msra.mxu0 %v9019
    %9044 = vmatprep.subr.bf16.mxu0 0
    %9045 = vmatpush1.bf16.msra.mxu0 0
    %9046 = vmatprep.subr.bf16.mxu0 0
    %9047 = vmatpush1.bf16.msra.mxu0 0
    %9048 = vmatprep.subr.bf16.mxu0 0
    %9049 = vmatpush1.bf16.msra.mxu0 0
    %9050 = vmatprep.subr.bf16.mxu0 0
    %9051 = vmatpush1.bf16.msra.mxu0 0
    %9052 = vmatprep.subr.bf16.mxu0 0
    %9053 = vmatpush1.bf16.msra.mxu0 0
    %9054 = vmatprep.subr.bf16.mxu0 0
    %9055 = vmatpush1.bf16.msra.mxu0 0
    %9056 = vmatprep.subr.bf16.mxu0 0
    %9057 = vmatpush1.bf16.msra.mxu0 0
    %9058 = vmatprep.subr.bf16.mxu0 0
    %9059 = vmatpush1.bf16.msra.mxu0 0
    %9060 = vmatprep.mubr.bf16.mxu0 0
    %9061 = vmatmul.mubr.bf16.gmra.mrb[0].mxu0 %v8996
    %v9062 = vpop.f32.mrb[0].mxu0
    %v9063 = vadd.f32 0.0, %v9062
    %v9064 = vpop.f32.mrb[0].mxu0
    %v9065 = vpop.f32.mrb[0].mxu0
    %v9066 = vadd.f32 0.0, %v9065
    %v9067 = vpop.f32.mrb[0].mxu0
    %9068 = vmatprep.mubr.bf16.mxu0 0
    %9069 = vmatmul.mubr.bf16.gmra.mrb[0].mxu0 %v8997
    %v9070 = vpop.f32.mrb[0].mxu0
    %v9071 = vadd.f32 0.0, %v9070
    %v9072 = vpop.f32.mrb[0].mxu0
    %v9073 = vpop.f32.mrb[0].mxu0
    %v9074 = vadd.f32 0.0, %v9073
    %v9075 = vpop.f32.mrb[0].mxu0
    %9076 = vmatprep.mubr.bf16.mxu0 0
    %9077 = vmatmul.mubr.bf16.gmra.mrb[0].mxu0 %v8998
    %v9078 = vpop.f32.mrb[0].mxu0
    %v9079 = vadd.f32 0.0, %v9078
    %v9080 = vpop.f32.mrb[0].mxu0
    %v9081 = vpop.f32.mrb[0].mxu0
    %v9082 = vadd.f32 0.0, %v9081
    %v9083 = vpop.f32.mrb[0].mxu0
    %9084 = vmatprep.mubr.bf16.mxu0 0
    %9085 = vmatmul.mubr.bf16.gmra.mrb[0].mxu0 %v8999
    %v9086 = vpop.f32.mrb[0].mxu0
    %v9087 = vadd.f32 0.0, %v9086
    %v9088 = vpop.f32.mrb[0].mxu0
    %v9089 = vpop.f32.mrb[0].mxu0
    %v9090 = vadd.f32 0.0, %v9089
    %v9091 = vpop.f32.mrb[0].mxu0
    %9092 = vmatprep.mubr.bf16.mxu0 0
    %9093 = vmatmul.mubr.bf16.gmra.mrb[0].mxu0 %v9000
    %v9094 = vpop.f32.mrb[0].mxu0
    %v9095 = vadd.f32 0.0, %v9094
    %v9096 = vpop.f32.mrb[0].mxu0
    %v9097 = vpop.f32.mrb[0].mxu0
    %v9098 = vadd.f32 0.0, %v9097
    %v9099 = vpop.f32.mrb[0].mxu0
    %9100 = vmatprep.mubr.bf16.mxu0 0
    %9101 = vmatmul.mubr.bf16.gmra.mrb[0].mxu0 %v9001
    %v9102 = vpop.f32.mrb[0].mxu0
    %v9103 = vadd.f32 0.0, %v9102
    %v9104 = vpop.f32.mrb[0].mxu0
    %v9105 = vpop.f32.mrb[0].mxu0
    %v9106 = vadd.f32 0.0, %v9105
    %v9107 = vpop.f32.mrb[0].mxu0
    %9108 = vmatprep.mubr.bf16.mxu0 0
    %9109 = vmatmul.mubr.bf16.gmra.mrb[0].mxu0 %v9002
    %v9110 = vpop.f32.mrb[0].mxu0
    %v9111 = vadd.f32 0.0, %v9110
    %v9112 = vpop.f32.mrb[0].mxu0
    %v9113 = vpop.f32.mrb[0].mxu0
    %v9114 = vadd.f32 0.0, %v9113
    %v9115 = vpop.f32.mrb[0].mxu0
    %9116 = vmatprep.mubr.bf16.mxu0 0
    %9117 = vmatmul.mubr.bf16.gmra.mrb[0].mxu0 %v9003
    %v9118 = vpop.f32.mrb[0].mxu0
    %v9119 = vadd.f32 0.0, %v9118
    %v9120 = vpop.f32.mrb[0].mxu0
    %v9121 = vpop.f32.mrb[0].mxu0
    %v9122 = vadd.f32 0.0, %v9121
    %v9123 = vpop.f32.mrb[0].mxu0
    %9124 = vdwg.mxu0
    %v9125 = vpack.c.bf16 %v9066, %v9063
    %v9126 = vpack.c.bf16 %v9074, %v9071
    %v9127 = vpack.c.bf16 %v9082, %v9079
    %v9128 = vpack.c.bf16 %v9090, %v9087
    %v9129 = vpack.c.bf16 %v9098, %v9095
    %v9130 = vpack.c.bf16 %v9106, %v9103
    %v9131 = vpack.c.bf16 %v9114, %v9111
    %v9132 = vpack.c.bf16 %v9122, %v9119
    %v9134 = vsel %vm5459, %v9125, 0
    %v9137 = vsel %vm5459, %v9126, 0
    %v9140 = vsel %vm5459, %v9127, 0
    %v9143 = vsel %vm5459, %v9128, 0
    %v9146 = vsel %vm5459, %v9129, 0
    %v9149 = vsel %vm5459, %v9130, 0
    %v9152 = vsel %vm5459, %v9131, 0
    %v9155 = vsel %vm5459, %v9132, 0
    %v9158 = vsel %vm6464, %v5432, 0
    %9160 = vmatprep.subr.bf16.mxu0 0
    %9161 = vmatpush1.bf16.msra.mxu0 %v9158
    %9162 = vmatprep.subr.bf16.mxu0 0
    %9163 = vmatpush1.bf16.msra.mxu0 0
    %9164 = vmatprep.subr.bf16.mxu0 0
    %9165 = vmatpush1.bf16.msra.mxu0 0
    %9166 = vmatprep.subr.bf16.mxu0 0
    %9167 = vmatpush1.bf16.msra.mxu0 0
    %9168 = vmatprep.subr.bf16.mxu0 0
    %9169 = vmatpush1.bf16.msra.mxu0 0
    %9170 = vmatprep.subr.bf16.mxu0 0
    %9171 = vmatpush1.bf16.msra.mxu0 0
    %9172 = vmatprep.subr.bf16.mxu0 0
    %9173 = vmatpush1.bf16.msra.mxu0 0
    %9174 = vmatprep.subr.bf16.mxu0 0
    %9175 = vmatpush1.bf16.msra.mxu0 0
    %9176 = vmatprep.subr.bf16.mxu0 0
    %9177 = vmatpush1.bf16.msra.mxu0 0
    %9178 = vmatprep.subr.bf16.mxu0 0
    %9179 = vmatpush1.bf16.msra.mxu0 0
    %9180 = vmatprep.subr.bf16.mxu0 0
    %9181 = vmatpush1.bf16.msra.mxu0 0
    %9182 = vmatprep.subr.bf16.mxu0 0
    %9183 = vmatpush1.bf16.msra.mxu0 0
    %9184 = vmatprep.subr.bf16.mxu0 0
    %9185 = vmatpush1.bf16.msra.mxu0 0
    %9186 = vmatprep.subr.bf16.mxu0 0
    %9187 = vmatpush1.bf16.msra.mxu0 0
    %9188 = vmatprep.subr.bf16.mxu0 0
    %9189 = vmatpush1.bf16.msra.mxu0 0
    %9190 = vmatprep.subr.bf16.mxu0 0
    %9191 = vmatpush1.bf16.msra.mxu0 0
    %9192 = vmatprep.mubr.bf16.mxu0 0
    %9193 = vmatmul.mubr.bf16.gmra.mrb[0].mxu0 %v9134
    %v9194 = vpop.f32.mrb[0].mxu0
    %v9195 = vadd.f32 0.0, %v9194
    %v9196 = vpop.f32.mrb[0].mxu0
    %v9197 = vpop.f32.mrb[0].mxu0
    %v9198 = vadd.f32 0.0, %v9197
    %v9199 = vpop.f32.mrb[0].mxu0
    %9200 = vmatprep.mubr.bf16.mxu0 0
    %9201 = vmatmul.mubr.bf16.gmra.mrb[0].mxu0 %v9137
    %v9202 = vpop.f32.mrb[0].mxu0
    %v9203 = vadd.f32 0.0, %v9202
    %v9204 = vpop.f32.mrb[0].mxu0
    %v9205 = vpop.f32.mrb[0].mxu0
    %v9206 = vadd.f32 0.0, %v9205
    %v9207 = vpop.f32.mrb[0].mxu0
    %9208 = vmatprep.mubr.bf16.mxu0 0
    %9209 = vmatmul.mubr.bf16.gmra.mrb[0].mxu0 %v9140
    %v9210 = vpop.f32.mrb[0].mxu0
    %v9211 = vadd.f32 0.0, %v9210
    %v9212 = vpop.f32.mrb[0].mxu0
    %v9213 = vpop.f32.mrb[0].mxu0
    %v9214 = vadd.f32 0.0, %v9213
    %v9215 = vpop.f32.mrb[0].mxu0
    %9216 = vmatprep.mubr.bf16.mxu0 0
    %9217 = vmatmul.mubr.bf16.gmra.mrb[0].mxu0 %v9143
    %v9218 = vpop.f32.mrb[0].mxu0
    %v9219 = vadd.f32 0.0, %v9218
    %v9220 = vpop.f32.mrb[0].mxu0
    %v9221 = vpop.f32.mrb[0].mxu0
    %v9222 = vadd.f32 0.0, %v9221
    %v9223 = vpop.f32.mrb[0].mxu0
    %9224 = vmatprep.mubr.bf16.mxu0 0
    %9225 = vmatmul.mubr.bf16.gmra.mrb[0].mxu0 %v9146
    %v9226 = vpop.f32.mrb[0].mxu0
    %v9227 = vadd.f32 0.0, %v9226
    %v9228 = vpop.f32.mrb[0].mxu0
    %v9229 = vpop.f32.mrb[0].mxu0
    %v9230 = vadd.f32 0.0, %v9229
    %v9231 = vpop.f32.mrb[0].mxu0
    %9232 = vmatprep.mubr.bf16.mxu0 0
    %9233 = vmatmul.mubr.bf16.gmra.mrb[0].mxu0 %v9149
    %v9234 = vpop.f32.mrb[0].mxu0
    %v9235 = vadd.f32 0.0, %v9234
    %v9236 = vpop.f32.mrb[0].mxu0
    %v9237 = vpop.f32.mrb[0].mxu0
    %v9238 = vadd.f32 0.0, %v9237
    %v9239 = vpop.f32.mrb[0].mxu0
    %9240 = vmatprep.mubr.bf16.mxu0 0
    %9241 = vmatmul.mubr.bf16.gmra.mrb[0].mxu0 %v9152
    %v9242 = vpop.f32.mrb[0].mxu0
    %v9243 = vadd.f32 0.0, %v9242
    %v9244 = vpop.f32.mrb[0].mxu0
    %v9245 = vpop.f32.mrb[0].mxu0
    %v9246 = vadd.f32 0.0, %v9245
    %v9247 = vpop.f32.mrb[0].mxu0
    %9248 = vmatprep.mubr.bf16.mxu0 0
    %9249 = vmatmul.mubr.bf16.gmra.mrb[0].mxu0 %v9155
    %v9250 = vpop.f32.mrb[0].mxu0
    %v9251 = vadd.f32 0.0, %v9250
    %v9252 = vpop.f32.mrb[0].mxu0
    %v9253 = vpop.f32.mrb[0].mxu0
    %v9254 = vadd.f32 0.0, %v9253
    %v9255 = vpop.f32.mrb[0].mxu0
    %9256 = vdwg.mxu0
    %v9257 = vadd.f32 %v8611, %v9195
    %v9258 = vadd.f32 %v8612, %v9198
    %v9259 = vadd.f32 %v8613, %v9203
    %v9260 = vadd.f32 %v8614, %v9206
    %v9261 = vadd.f32 %v8615, %v9211
    %v9262 = vadd.f32 %v8616, %v9214
    %v9263 = vadd.f32 %v8617, %v9219
    %v9264 = vadd.f32 %v8618, %v9222
    %v9265 = vadd.f32 %v8619, %v9227
    %v9266 = vadd.f32 %v8620, %v9230
    %v9267 = vadd.f32 %v8621, %v9235
    %v9268 = vadd.f32 %v8622, %v9238
    %v9269 = vadd.f32 %v8623, %v9243
    %v9270 = vadd.f32 %v8624, %v9246
    %v9271 = vadd.f32 %v8625, %v9251
    %v9272 = vadd.f32 %v8626, %v9254
    %9273 = vrot.lane.b32.xlu0 %v5435, 80
    %v9274 = vpop.permute.xlu0 %9273
    %9275 = vrot.lane.b32.xlu0 %v5436, 80
    %v9276 = vpop.permute.xlu0 %9275
    %9277 = vrot.lane.b32.xlu0 %v5437, 80
    %v9278 = vpop.permute.xlu0 %9277
    %9279 = vrot.lane.b32.xlu0 %v5438, 80
    %v9280 = vpop.permute.xlu0 %9279
    %9281 = vrot.lane.b32.xlu0 %v5439, 80
    %v9282 = vpop.permute.xlu0 %9281
    %9283 = vrot.lane.b32.xlu0 %v5440, 80
    %v9284 = vpop.permute.xlu0 %9283
    %9285 = vrot.lane.b32.xlu0 %v5441, 80
    %v9286 = vpop.permute.xlu0 %9285
    %9287 = vrot.lane.b32.xlu0 %v5442, 80
    %v9288 = vpop.permute.xlu0 %9287
    %9289 = vrot.lane.b32.xlu0 %v5443, 80
    %v9290 = vpop.permute.xlu0 %9289
    %9291 = vrot.lane.b32.xlu0 %v5444, 80
    %v9292 = vpop.permute.xlu0 %9291
    %9293 = vrot.lane.b32.xlu0 %v5445, 80
    %v9294 = vpop.permute.xlu0 %9293
    %9295 = vrot.lane.b32.xlu0 %v5446, 80
    %v9296 = vpop.permute.xlu0 %9295
    %9297 = vrot.lane.b32.xlu0 %v5447, 80
    %v9298 = vpop.permute.xlu0 %9297
    %9299 = vrot.lane.b32.xlu0 %v5448, 80
    %v9300 = vpop.permute.xlu0 %9299
    %9301 = vrot.lane.b32.xlu0 %v5449, 80
    %v9302 = vpop.permute.xlu0 %9301
    %9303 = vrot.lane.b32.xlu0 %v5450, 80
    %v9304 = vpop.permute.xlu0 %9303
    %v9306 = vsel %vm5459, %v9274, 0
    %v9309 = vsel %vm5459, %v9276, 0
    %v9312 = vsel %vm5459, %v9278, 0
    %v9315 = vsel %vm5459, %v9280, 0
    %v9318 = vsel %vm5459, %v9282, 0
    %v9321 = vsel %vm5459, %v9284, 0
    %v9324 = vsel %vm5459, %v9286, 0
    %v9327 = vsel %vm5459, %v9288, 0
    %v9330 = vsel %vm5459, %v9290, 0
    %v9333 = vsel %vm5459, %v9292, 0
    %v9336 = vsel %vm5459, %v9294, 0
    %v9339 = vsel %vm5459, %v9296, 0
    %v9342 = vsel %vm5459, %v9298, 0
    %v9345 = vsel %vm5459, %v9300, 0
    %v9348 = vsel %vm5459, %v9302, 0
    %v9351 = vsel %vm5459, %v9304, 0
    %9353 = vmatprep.subr.bf16.mxu0 0
    %9354 = vmatpush1.bf16.xpose.msra.mxu0 %v9330
    %9355 = vmatprep.subr.bf16.mxu0 0
    %9356 = vmatpush1.bf16.xpose.msra.mxu0 %v9333
    %9357 = vmatprep.subr.bf16.mxu0 0
    %9358 = vmatpush1.bf16.xpose.msra.mxu0 %v9336
    %9359 = vmatprep.subr.bf16.mxu0 0
    %9360 = vmatpush1.bf16.xpose.msra.mxu0 %v9339
    %9361 = vmatprep.subr.bf16.mxu0 0
    %9362 = vmatpush1.bf16.xpose.msra.mxu0 %v9342
    %9363 = vmatprep.subr.bf16.mxu0 0
    %9364 = vmatpush1.bf16.xpose.msra.mxu0 %v9345
    %9365 = vmatprep.subr.bf16.mxu0 0
    %9366 = vmatpush1.bf16.xpose.msra.mxu0 %v9348
    %9367 = vmatprep.subr.bf16.mxu0 0
    %9368 = vmatpush1.bf16.xpose.msra.mxu0 %v9351
    %9369 = vmatprep.subr.bf16.mxu0 0
    %9370 = vmatpush1.bf16.xpose.msra.mxu0 0
    %9371 = vmatprep.subr.bf16.mxu0 0
    %9372 = vmatpush1.bf16.xpose.msra.mxu0 0
    %9373 = vmatprep.subr.bf16.mxu0 0
    %9374 = vmatpush1.bf16.xpose.msra.mxu0 0
    %9375 = vmatprep.subr.bf16.mxu0 0
    %9376 = vmatpush1.bf16.xpose.msra.mxu0 0
    %9377 = vmatprep.subr.bf16.mxu0 0
    %9378 = vmatpush1.bf16.xpose.msra.mxu0 0
    %9379 = vmatprep.subr.bf16.mxu0 0
    %9380 = vmatpush1.bf16.xpose.msra.mxu0 0
    %9381 = vmatprep.subr.bf16.mxu0 0
    %9382 = vmatpush1.bf16.xpose.msra.mxu0 0
    %9383 = vmatprep.subr.bf16.mxu0 0
    %9384 = vmatpush1.bf16.xpose.msra.mxu0 0
    %9385 = vmatprep.mubr.bf16.mxu0 0
    %9386 = vmatmul.mubr.bf16.gmra.mrb[0].mxu0 %v9306
    %v9387 = vpop.f32.mrb[0].mxu0
    %v9388 = vadd.f32 0.0, %v9387
    %v9389 = vpop.f32.mrb[0].mxu0
    %v9390 = vpop.f32.mrb[0].mxu0
    %v9391 = vadd.f32 0.0, %v9390
    %v9392 = vpop.f32.mrb[0].mxu0
    %9393 = vmatprep.mubr.bf16.mxu0 0
    %9394 = vmatmul.mubr.bf16.gmra.mrb[0].mxu0 %v9309
    %v9395 = vpop.f32.mrb[0].mxu0
    %v9396 = vadd.f32 0.0, %v9395
    %v9397 = vpop.f32.mrb[0].mxu0
    %v9398 = vpop.f32.mrb[0].mxu0
    %v9399 = vadd.f32 0.0, %v9398
    %v9400 = vpop.f32.mrb[0].mxu0
    %9401 = vmatprep.mubr.bf16.mxu0 0
    %9402 = vmatmul.mubr.bf16.gmra.mrb[0].mxu0 %v9312
    %v9403 = vpop.f32.mrb[0].mxu0
    %v9404 = vadd.f32 0.0, %v9403
    %v9405 = vpop.f32.mrb[0].mxu0
    %v9406 = vpop.f32.mrb[0].mxu0
    %v9407 = vadd.f32 0.0, %v9406
    %v9408 = vpop.f32.mrb[0].mxu0
    %9409 = vmatprep.mubr.bf16.mxu0 0
    %9410 = vmatmul.mubr.bf16.gmra.mrb[0].mxu0 %v9315
    %v9411 = vpop.f32.mrb[0].mxu0
    %v9412 = vadd.f32 0.0, %v9411
    %v9413 = vpop.f32.mrb[0].mxu0
    %v9414 = vpop.f32.mrb[0].mxu0
    %v9415 = vadd.f32 0.0, %v9414
    %v9416 = vpop.f32.mrb[0].mxu0
    %9417 = vmatprep.mubr.bf16.mxu0 0
    %9418 = vmatmul.mubr.bf16.gmra.mrb[0].mxu0 %v9318
    %v9419 = vpop.f32.mrb[0].mxu0
    %v9420 = vadd.f32 0.0, %v9419
    %v9421 = vpop.f32.mrb[0].mxu0
    %v9422 = vpop.f32.mrb[0].mxu0
    %v9423 = vadd.f32 0.0, %v9422
    %v9424 = vpop.f32.mrb[0].mxu0
    %9425 = vmatprep.mubr.bf16.mxu0 0
    %9426 = vmatmul.mubr.bf16.gmra.mrb[0].mxu0 %v9321
    %v9427 = vpop.f32.mrb[0].mxu0
    %v9428 = vadd.f32 0.0, %v9427
    %v9429 = vpop.f32.mrb[0].mxu0
    %v9430 = vpop.f32.mrb[0].mxu0
    %v9431 = vadd.f32 0.0, %v9430
    %v9432 = vpop.f32.mrb[0].mxu0
    %9433 = vmatprep.mubr.bf16.mxu0 0
    %9434 = vmatmul.mubr.bf16.gmra.mrb[0].mxu0 %v9324
    %v9435 = vpop.f32.mrb[0].mxu0
    %v9436 = vadd.f32 0.0, %v9435
    %v9437 = vpop.f32.mrb[0].mxu0
    %v9438 = vpop.f32.mrb[0].mxu0
    %v9439 = vadd.f32 0.0, %v9438
    %v9440 = vpop.f32.mrb[0].mxu0
    %9441 = vmatprep.mubr.bf16.mxu0 0
    %9442 = vmatmul.mubr.bf16.gmra.mrb[0].mxu0 %v9327
    %v9443 = vpop.f32.mrb[0].mxu0
    %v9444 = vadd.f32 0.0, %v9443
    %v9445 = vpop.f32.mrb[0].mxu0
    %v9446 = vpop.f32.mrb[0].mxu0
    %v9447 = vadd.f32 0.0, %v9446
    %v9448 = vpop.f32.mrb[0].mxu0
    %9449 = vdwg.mxu0
    %v9450 = vmul.f32 %v9388, 0.35355338
    %v9451 = vmul.f32 %v9391, 0.35355338
    %v9452 = vmul.f32 %v9396, 0.35355338
    %v9453 = vmul.f32 %v9399, 0.35355338
    %v9454 = vmul.f32 %v9404, 0.35355338
    %v9455 = vmul.f32 %v9407, 0.35355338
    %v9456 = vmul.f32 %v9412, 0.35355338
    %v9457 = vmul.f32 %v9415, 0.35355338
    %v9458 = vmul.f32 %v9420, 0.35355338
    %v9459 = vmul.f32 %v9423, 0.35355338
    %v9460 = vmul.f32 %v9428, 0.35355338
    %v9461 = vmul.f32 %v9431, 0.35355338
    %v9462 = vmul.f32 %v9436, 0.35355338
    %v9463 = vmul.f32 %v9439, 0.35355338
    %v9464 = vmul.f32 %v9444, 0.35355338
    %v9465 = vmul.f32 %v9447, 0.35355338
    %9466 = vmax.xlane.f32.xlu0 %v9450
    %v9467 = vpop.xlane.xlu0 %9466
    %9468 = vmax.xlane.f32.xlu0 %v9451
    %v9469 = vpop.xlane.xlu0 %9468
    %9470 = vmax.xlane.f32.xlu0 %v9452
    %v9471 = vpop.xlane.xlu0 %9470
    %9472 = vmax.xlane.f32.xlu0 %v9453
    %v9473 = vpop.xlane.xlu0 %9472
    %9474 = vmax.xlane.f32.xlu0 %v9454
    %v9475 = vpop.xlane.xlu0 %9474
    %9476 = vmax.xlane.f32.xlu0 %v9455
    %v9477 = vpop.xlane.xlu0 %9476
    %9478 = vmax.xlane.f32.xlu0 %v9456
    %v9479 = vpop.xlane.xlu0 %9478
    %9480 = vmax.xlane.f32.xlu0 %v9457
    %v9481 = vpop.xlane.xlu0 %9480
    %9482 = vmax.xlane.f32.xlu0 %v9458
    %v9483 = vpop.xlane.xlu0 %9482
    %9484 = vmax.xlane.f32.xlu0 %v9459
    %v9485 = vpop.xlane.xlu0 %9484
    %9486 = vmax.xlane.f32.xlu0 %v9460
    %v9487 = vpop.xlane.xlu0 %9486
    %9488 = vmax.xlane.f32.xlu0 %v9461
    %v9489 = vpop.xlane.xlu0 %9488
    %9490 = vmax.xlane.f32.xlu0 %v9462
    %v9491 = vpop.xlane.xlu0 %9490
    %9492 = vmax.xlane.f32.xlu0 %v9463
    %v9493 = vpop.xlane.xlu0 %9492
    %9494 = vmax.xlane.f32.xlu0 %v9464
    %v9495 = vpop.xlane.xlu0 %9494
    %9496 = vmax.xlane.f32.xlu0 %v9465
    %v9497 = vpop.xlane.xlu0 %9496
    %v9498 = vsub.f32 %v9450, %v9467
    %v9499 = vsub.f32 %v9451, %v9469
    %v9500 = vsub.f32 %v9452, %v9471
    %v9501 = vsub.f32 %v9453, %v9473
    %v9502 = vsub.f32 %v9454, %v9475
    %v9503 = vsub.f32 %v9455, %v9477
    %v9504 = vsub.f32 %v9456, %v9479
    %v9505 = vsub.f32 %v9457, %v9481
    %v9506 = vsub.f32 %v9458, %v9483
    %v9507 = vsub.f32 %v9459, %v9485
    %v9508 = vsub.f32 %v9460, %v9487
    %v9509 = vsub.f32 %v9461, %v9489
    %v9510 = vsub.f32 %v9462, %v9491
    %v9511 = vsub.f32 %v9463, %v9493
    %v9512 = vsub.f32 %v9464, %v9495
    %v9513 = vsub.f32 %v9465, %v9497
    %v9514 = vmul.f32 %v9498, 1.442695
    %v9515 = vpow.pop %v9514
    %v9516 = vmul.f32 %v9499, 1.442695
    %v9517 = vpow.pop %v9516
    %v9518 = vmul.f32 %v9500, 1.442695
    %v9519 = vpow.pop %v9518
    %v9520 = vmul.f32 %v9501, 1.442695
    %v9521 = vpow.pop %v9520
    %v9522 = vmul.f32 %v9502, 1.442695
    %v9523 = vpow.pop %v9522
    %v9524 = vmul.f32 %v9503, 1.442695
    %v9525 = vpow.pop %v9524
    %v9526 = vmul.f32 %v9504, 1.442695
    %v9527 = vpow.pop %v9526
    %v9528 = vmul.f32 %v9505, 1.442695
    %v9529 = vpow.pop %v9528
    %v9530 = vmul.f32 %v9506, 1.442695
    %v9531 = vpow.pop %v9530
    %v9532 = vmul.f32 %v9507, 1.442695
    %v9533 = vpow.pop %v9532
    %v9534 = vmul.f32 %v9508, 1.442695
    %v9535 = vpow.pop %v9534
    %v9536 = vmul.f32 %v9509, 1.442695
    %v9537 = vpow.pop %v9536
    %v9538 = vmul.f32 %v9510, 1.442695
    %v9539 = vpow.pop %v9538
    %v9540 = vmul.f32 %v9511, 1.442695
    %v9541 = vpow.pop %v9540
    %v9542 = vmul.f32 %v9512, 1.442695
    %v9543 = vpow.pop %v9542
    %v9544 = vmul.f32 %v9513, 1.442695
    %v9545 = vpow.pop %v9544
    %v9546 = vmul.f32 %v9515, %v5411
    %v9547 = vmul.f32 %v9517, %v5412
    %v9548 = vmul.f32 %v9519, %v5413
    %v9549 = vmul.f32 %v9521, %v5414
    %v9550 = vmul.f32 %v9523, %v5415
    %v9551 = vmul.f32 %v9525, %v5416
    %v9552 = vmul.f32 %v9527, %v5417
    %v9553 = vmul.f32 %v9529, %v5418
    %v9554 = vmul.f32 %v9531, %v5419
    %v9555 = vmul.f32 %v9533, %v5420
    %v9556 = vmul.f32 %v9535, %v5421
    %v9557 = vmul.f32 %v9537, %v5422
    %v9558 = vmul.f32 %v9539, %v5423
    %v9559 = vmul.f32 %v9541, %v5424
    %v9560 = vmul.f32 %v9543, %v5425
    %v9561 = vmul.f32 %v9545, %v5426
    %9562 = vadd.xlane.f32.xlu0 %v9546
    %v9563 = vpop.xlane.xlu0 %9562
    %9564 = vadd.xlane.f32.xlu0 %v9547
    %v9565 = vpop.xlane.xlu0 %9564
    %9566 = vadd.xlane.f32.xlu0 %v9548
    %v9567 = vpop.xlane.xlu0 %9566
    %9568 = vadd.xlane.f32.xlu0 %v9549
    %v9569 = vpop.xlane.xlu0 %9568
    %9570 = vadd.xlane.f32.xlu0 %v9550
    %v9571 = vpop.xlane.xlu0 %9570
    %9572 = vadd.xlane.f32.xlu0 %v9551
    %v9573 = vpop.xlane.xlu0 %9572
    %9574 = vadd.xlane.f32.xlu0 %v9552
    %v9575 = vpop.xlane.xlu0 %9574
    %9576 = vadd.xlane.f32.xlu0 %v9553
    %v9577 = vpop.xlane.xlu0 %9576
    %9578 = vadd.xlane.f32.xlu0 %v9554
    %v9579 = vpop.xlane.xlu0 %9578
    %9580 = vadd.xlane.f32.xlu0 %v9555
    %v9581 = vpop.xlane.xlu0 %9580
    %9582 = vadd.xlane.f32.xlu0 %v9556
    %v9583 = vpop.xlane.xlu0 %9582
    %9584 = vadd.xlane.f32.xlu0 %v9557
    %v9585 = vpop.xlane.xlu0 %9584
    %9586 = vadd.xlane.f32.xlu0 %v9558
    %v9587 = vpop.xlane.xlu0 %9586
    %9588 = vadd.xlane.f32.xlu0 %v9559
    %v9589 = vpop.xlane.xlu0 %9588
    %9590 = vadd.xlane.f32.xlu0 %v9560
    %v9591 = vpop.xlane.xlu0 %9590
    %9592 = vadd.xlane.f32.xlu0 %v9561
    %v9593 = vpop.xlane.xlu0 %9592
    %v9594 = vmax.f32 %v9563, 1e-30
    %v9595 = vmax.f32 %v9565, 1e-30
    %v9596 = vmax.f32 %v9567, 1e-30
    %v9597 = vmax.f32 %v9569, 1e-30
    %v9598 = vmax.f32 %v9571, 1e-30
    %v9599 = vmax.f32 %v9573, 1e-30
    %v9600 = vmax.f32 %v9575, 1e-30
    %v9601 = vmax.f32 %v9577, 1e-30
    %v9602 = vmax.f32 %v9579, 1e-30
    %v9603 = vmax.f32 %v9581, 1e-30
    %v9604 = vmax.f32 %v9583, 1e-30
    %v9605 = vmax.f32 %v9585, 1e-30
    %v9606 = vmax.f32 %v9587, 1e-30
    %v9607 = vmax.f32 %v9589, 1e-30
    %v9608 = vmax.f32 %v9591, 1e-30
    %v9609 = vmax.f32 %v9593, 1e-30
    %v9610 = vrcp.pop %v9594
    %v9611 = vrcp.pop %v9595
    %v9612 = vrcp.pop %v9596
    %v9613 = vrcp.pop %v9597
    %v9614 = vrcp.pop %v9598
    %v9615 = vrcp.pop %v9599
    %v9616 = vrcp.pop %v9600
    %v9617 = vrcp.pop %v9601
    %v9618 = vrcp.pop %v9602
    %v9619 = vrcp.pop %v9603
    %v9620 = vrcp.pop %v9604
    %v9621 = vrcp.pop %v9605
    %v9622 = vrcp.pop %v9606
    %v9623 = vrcp.pop %v9607
    %v9624 = vrcp.pop %v9608
    %v9625 = vrcp.pop %v9609
    %v9626 = vmul.f32 %v9546, %v9610
    %v9627 = vmul.f32 %v9547, %v9611
    %v9628 = vmul.f32 %v9548, %v9612
    %v9629 = vmul.f32 %v9549, %v9613
    %v9630 = vmul.f32 %v9550, %v9614
    %v9631 = vmul.f32 %v9551, %v9615
    %v9632 = vmul.f32 %v9552, %v9616
    %v9633 = vmul.f32 %v9553, %v9617
    %v9634 = vmul.f32 %v9554, %v9618
    %v9635 = vmul.f32 %v9555, %v9619
    %v9636 = vmul.f32 %v9556, %v9620
    %v9637 = vmul.f32 %v9557, %v9621
    %v9638 = vmul.f32 %v9558, %v9622
    %v9639 = vmul.f32 %v9559, %v9623
    %v9640 = vmul.f32 %v9560, %v9624
    %v9641 = vmul.f32 %v9561, %v9625
    %v9642 = vpack.c.bf16 %v9627, %v9626
    %v9643 = vpack.c.bf16 %v9629, %v9628
    %v9644 = vpack.c.bf16 %v9631, %v9630
    %v9645 = vpack.c.bf16 %v9633, %v9632
    %v9646 = vpack.c.bf16 %v9635, %v9634
    %v9647 = vpack.c.bf16 %v9637, %v9636
    %v9648 = vpack.c.bf16 %v9639, %v9638
    %v9649 = vpack.c.bf16 %v9641, %v9640
    %9650 = vrot.lane.b32.xlu0 %v5451, 80
    %v9651 = vpop.permute.xlu0 %9650
    %9652 = vrot.lane.b32.xlu0 %v5452, 80
    %v9653 = vpop.permute.xlu0 %9652
    %9654 = vrot.lane.b32.xlu0 %v5453, 80
    %v9655 = vpop.permute.xlu0 %9654
    %9656 = vrot.lane.b32.xlu0 %v5454, 80
    %v9657 = vpop.permute.xlu0 %9656
    %9658 = vrot.lane.b32.xlu0 %v5455, 80
    %v9659 = vpop.permute.xlu0 %9658
    %9660 = vrot.lane.b32.xlu0 %v5456, 80
    %v9661 = vpop.permute.xlu0 %9660
    %9662 = vrot.lane.b32.xlu0 %v5457, 80
    %v9663 = vpop.permute.xlu0 %9662
    %9664 = vrot.lane.b32.xlu0 %v5458, 80
    %v9665 = vpop.permute.xlu0 %9664
    %9674 = vmatprep.subr.bf16.mxu0 0
    %9675 = vmatpush1.bf16.msra.mxu0 %v9651
    %9676 = vmatprep.subr.bf16.mxu0 0
    %9677 = vmatpush1.bf16.msra.mxu0 %v9653
    %9678 = vmatprep.subr.bf16.mxu0 0
    %9679 = vmatpush1.bf16.msra.mxu0 %v9655
    %9680 = vmatprep.subr.bf16.mxu0 0
    %9681 = vmatpush1.bf16.msra.mxu0 %v9657
    %9682 = vmatprep.subr.bf16.mxu0 0
    %9683 = vmatpush1.bf16.msra.mxu0 %v9659
    %9684 = vmatprep.subr.bf16.mxu0 0
    %9685 = vmatpush1.bf16.msra.mxu0 %v9661
    %9686 = vmatprep.subr.bf16.mxu0 0
    %9687 = vmatpush1.bf16.msra.mxu0 %v9663
    %9688 = vmatprep.subr.bf16.mxu0 0
    %9689 = vmatpush1.bf16.msra.mxu0 %v9665
    %9690 = vmatprep.subr.bf16.mxu0 0
    %9691 = vmatpush1.bf16.msra.mxu0 0
    %9692 = vmatprep.subr.bf16.mxu0 0
    %9693 = vmatpush1.bf16.msra.mxu0 0
    %9694 = vmatprep.subr.bf16.mxu0 0
    %9695 = vmatpush1.bf16.msra.mxu0 0
    %9696 = vmatprep.subr.bf16.mxu0 0
    %9697 = vmatpush1.bf16.msra.mxu0 0
    %9698 = vmatprep.subr.bf16.mxu0 0
    %9699 = vmatpush1.bf16.msra.mxu0 0
    %9700 = vmatprep.subr.bf16.mxu0 0
    %9701 = vmatpush1.bf16.msra.mxu0 0
    %9702 = vmatprep.subr.bf16.mxu0 0
    %9703 = vmatpush1.bf16.msra.mxu0 0
    %9704 = vmatprep.subr.bf16.mxu0 0
    %9705 = vmatpush1.bf16.msra.mxu0 0
    %9706 = vmatprep.mubr.bf16.mxu0 0
    %9707 = vmatmul.mubr.bf16.gmra.mrb[0].mxu0 %v9642
    %v9708 = vpop.f32.mrb[0].mxu0
    %v9709 = vadd.f32 0.0, %v9708
    %v9710 = vpop.f32.mrb[0].mxu0
    %v9711 = vpop.f32.mrb[0].mxu0
    %v9712 = vadd.f32 0.0, %v9711
    %v9713 = vpop.f32.mrb[0].mxu0
    %9714 = vmatprep.mubr.bf16.mxu0 0
    %9715 = vmatmul.mubr.bf16.gmra.mrb[0].mxu0 %v9643
    %v9716 = vpop.f32.mrb[0].mxu0
    %v9717 = vadd.f32 0.0, %v9716
    %v9718 = vpop.f32.mrb[0].mxu0
    %v9719 = vpop.f32.mrb[0].mxu0
    %v9720 = vadd.f32 0.0, %v9719
    %v9721 = vpop.f32.mrb[0].mxu0
    %9722 = vmatprep.mubr.bf16.mxu0 0
    %9723 = vmatmul.mubr.bf16.gmra.mrb[0].mxu0 %v9644
    %v9724 = vpop.f32.mrb[0].mxu0
    %v9725 = vadd.f32 0.0, %v9724
    %v9726 = vpop.f32.mrb[0].mxu0
    %v9727 = vpop.f32.mrb[0].mxu0
    %v9728 = vadd.f32 0.0, %v9727
    %v9729 = vpop.f32.mrb[0].mxu0
    %9730 = vmatprep.mubr.bf16.mxu0 0
    %9731 = vmatmul.mubr.bf16.gmra.mrb[0].mxu0 %v9645
    %v9732 = vpop.f32.mrb[0].mxu0
    %v9733 = vadd.f32 0.0, %v9732
    %v9734 = vpop.f32.mrb[0].mxu0
    %v9735 = vpop.f32.mrb[0].mxu0
    %v9736 = vadd.f32 0.0, %v9735
    %v9737 = vpop.f32.mrb[0].mxu0
    %9738 = vmatprep.mubr.bf16.mxu0 0
    %9739 = vmatmul.mubr.bf16.gmra.mrb[0].mxu0 %v9646
    %v9740 = vpop.f32.mrb[0].mxu0
    %v9741 = vadd.f32 0.0, %v9740
    %v9742 = vpop.f32.mrb[0].mxu0
    %v9743 = vpop.f32.mrb[0].mxu0
    %v9744 = vadd.f32 0.0, %v9743
    %v9745 = vpop.f32.mrb[0].mxu0
    %9746 = vmatprep.mubr.bf16.mxu0 0
    %9747 = vmatmul.mubr.bf16.gmra.mrb[0].mxu0 %v9647
    %v9748 = vpop.f32.mrb[0].mxu0
    %v9749 = vadd.f32 0.0, %v9748
    %v9750 = vpop.f32.mrb[0].mxu0
    %v9751 = vpop.f32.mrb[0].mxu0
    %v9752 = vadd.f32 0.0, %v9751
    %v9753 = vpop.f32.mrb[0].mxu0
    %9754 = vmatprep.mubr.bf16.mxu0 0
    %9755 = vmatmul.mubr.bf16.gmra.mrb[0].mxu0 %v9648
    %v9756 = vpop.f32.mrb[0].mxu0
    %v9757 = vadd.f32 0.0, %v9756
    %v9758 = vpop.f32.mrb[0].mxu0
    %v9759 = vpop.f32.mrb[0].mxu0
    %v9760 = vadd.f32 0.0, %v9759
    %v9761 = vpop.f32.mrb[0].mxu0
    %9762 = vmatprep.mubr.bf16.mxu0 0
    %9763 = vmatmul.mubr.bf16.gmra.mrb[0].mxu0 %v9649
    %v9764 = vpop.f32.mrb[0].mxu0
    %v9765 = vadd.f32 0.0, %v9764
    %v9766 = vpop.f32.mrb[0].mxu0
    %v9767 = vpop.f32.mrb[0].mxu0
    %v9768 = vadd.f32 0.0, %v9767
    %v9769 = vpop.f32.mrb[0].mxu0
    %9770 = vdwg.mxu0
    %v9771 = vpack.c.bf16 %v9712, %v9709
    %v9772 = vpack.c.bf16 %v9720, %v9717
    %v9773 = vpack.c.bf16 %v9728, %v9725
    %v9774 = vpack.c.bf16 %v9736, %v9733
    %v9775 = vpack.c.bf16 %v9744, %v9741
    %v9776 = vpack.c.bf16 %v9752, %v9749
    %v9777 = vpack.c.bf16 %v9760, %v9757
    %v9778 = vpack.c.bf16 %v9768, %v9765
    %v9780 = vsel %vm5459, %v9771, 0
    %v9783 = vsel %vm5459, %v9772, 0
    %v9786 = vsel %vm5459, %v9773, 0
    %v9789 = vsel %vm5459, %v9774, 0
    %v9792 = vsel %vm5459, %v9775, 0
    %v9795 = vsel %vm5459, %v9776, 0
    %v9798 = vsel %vm5459, %v9777, 0
    %v9801 = vsel %vm5459, %v9778, 0
    %v9804 = vsel %vm6464, %v5433, 0
    %9806 = vmatprep.subr.bf16.mxu0 0
    %9807 = vmatpush1.bf16.msra.mxu0 %v9804
    %9808 = vmatprep.subr.bf16.mxu0 0
    %9809 = vmatpush1.bf16.msra.mxu0 0
    %9810 = vmatprep.subr.bf16.mxu0 0
    %9811 = vmatpush1.bf16.msra.mxu0 0
    %9812 = vmatprep.subr.bf16.mxu0 0
    %9813 = vmatpush1.bf16.msra.mxu0 0
    %9814 = vmatprep.subr.bf16.mxu0 0
    %9815 = vmatpush1.bf16.msra.mxu0 0
    %9816 = vmatprep.subr.bf16.mxu0 0
    %9817 = vmatpush1.bf16.msra.mxu0 0
    %9818 = vmatprep.subr.bf16.mxu0 0
    %9819 = vmatpush1.bf16.msra.mxu0 0
    %9820 = vmatprep.subr.bf16.mxu0 0
    %9821 = vmatpush1.bf16.msra.mxu0 0
    %9822 = vmatprep.subr.bf16.mxu0 0
    %9823 = vmatpush1.bf16.msra.mxu0 0
    %9824 = vmatprep.subr.bf16.mxu0 0
    %9825 = vmatpush1.bf16.msra.mxu0 0
    %9826 = vmatprep.subr.bf16.mxu0 0
    %9827 = vmatpush1.bf16.msra.mxu0 0
    %9828 = vmatprep.subr.bf16.mxu0 0
    %9829 = vmatpush1.bf16.msra.mxu0 0
    %9830 = vmatprep.subr.bf16.mxu0 0
    %9831 = vmatpush1.bf16.msra.mxu0 0
    %9832 = vmatprep.subr.bf16.mxu0 0
    %9833 = vmatpush1.bf16.msra.mxu0 0
    %9834 = vmatprep.subr.bf16.mxu0 0
    %9835 = vmatpush1.bf16.msra.mxu0 0
    %9836 = vmatprep.subr.bf16.mxu0 0
    %9837 = vmatpush1.bf16.msra.mxu0 0
    %9838 = vmatprep.mubr.bf16.mxu0 0
    %9839 = vmatmul.mubr.bf16.gmra.mrb[0].mxu0 %v9780
    %v9840 = vpop.f32.mrb[0].mxu0
    %v9841 = vadd.f32 0.0, %v9840
    %v9842 = vpop.f32.mrb[0].mxu0
    %v9843 = vpop.f32.mrb[0].mxu0
    %v9844 = vadd.f32 0.0, %v9843
    %v9845 = vpop.f32.mrb[0].mxu0
    %9846 = vmatprep.mubr.bf16.mxu0 0
    %9847 = vmatmul.mubr.bf16.gmra.mrb[0].mxu0 %v9783
    %v9848 = vpop.f32.mrb[0].mxu0
    %v9849 = vadd.f32 0.0, %v9848
    %v9850 = vpop.f32.mrb[0].mxu0
    %v9851 = vpop.f32.mrb[0].mxu0
    %v9852 = vadd.f32 0.0, %v9851
    %v9853 = vpop.f32.mrb[0].mxu0
    %9854 = vmatprep.mubr.bf16.mxu0 0
    %9855 = vmatmul.mubr.bf16.gmra.mrb[0].mxu0 %v9786
    %v9856 = vpop.f32.mrb[0].mxu0
    %v9857 = vadd.f32 0.0, %v9856
    %v9858 = vpop.f32.mrb[0].mxu0
    %v9859 = vpop.f32.mrb[0].mxu0
    %v9860 = vadd.f32 0.0, %v9859
    %v9861 = vpop.f32.mrb[0].mxu0
    %9862 = vmatprep.mubr.bf16.mxu0 0
    %9863 = vmatmul.mubr.bf16.gmra.mrb[0].mxu0 %v9789
    %v9864 = vpop.f32.mrb[0].mxu0
    %v9865 = vadd.f32 0.0, %v9864
    %v9866 = vpop.f32.mrb[0].mxu0
    %v9867 = vpop.f32.mrb[0].mxu0
    %v9868 = vadd.f32 0.0, %v9867
    %v9869 = vpop.f32.mrb[0].mxu0
    %9870 = vmatprep.mubr.bf16.mxu0 0
    %9871 = vmatmul.mubr.bf16.gmra.mrb[0].mxu0 %v9792
    %v9872 = vpop.f32.mrb[0].mxu0
    %v9873 = vadd.f32 0.0, %v9872
    %v9874 = vpop.f32.mrb[0].mxu0
    %v9875 = vpop.f32.mrb[0].mxu0
    %v9876 = vadd.f32 0.0, %v9875
    %v9877 = vpop.f32.mrb[0].mxu0
    %9878 = vmatprep.mubr.bf16.mxu0 0
    %9879 = vmatmul.mubr.bf16.gmra.mrb[0].mxu0 %v9795
    %v9880 = vpop.f32.mrb[0].mxu0
    %v9881 = vadd.f32 0.0, %v9880
    %v9882 = vpop.f32.mrb[0].mxu0
    %v9883 = vpop.f32.mrb[0].mxu0
    %v9884 = vadd.f32 0.0, %v9883
    %v9885 = vpop.f32.mrb[0].mxu0
    %9886 = vmatprep.mubr.bf16.mxu0 0
    %9887 = vmatmul.mubr.bf16.gmra.mrb[0].mxu0 %v9798
    %v9888 = vpop.f32.mrb[0].mxu0
    %v9889 = vadd.f32 0.0, %v9888
    %v9890 = vpop.f32.mrb[0].mxu0
    %v9891 = vpop.f32.mrb[0].mxu0
    %v9892 = vadd.f32 0.0, %v9891
    %v9893 = vpop.f32.mrb[0].mxu0
    %9894 = vmatprep.mubr.bf16.mxu0 0
    %9895 = vmatmul.mubr.bf16.gmra.mrb[0].mxu0 %v9801
    %v9896 = vpop.f32.mrb[0].mxu0
    %v9897 = vadd.f32 0.0, %v9896
    %v9898 = vpop.f32.mrb[0].mxu0
    %v9899 = vpop.f32.mrb[0].mxu0
    %v9900 = vadd.f32 0.0, %v9899
    %v9901 = vpop.f32.mrb[0].mxu0
    %9902 = vdwg.mxu0
    %v9903 = vadd.f32 %v9257, %v9841
    %v9904 = vadd.f32 %v9258, %v9844
    %v9905 = vadd.f32 %v9259, %v9849
    %v9906 = vadd.f32 %v9260, %v9852
    %v9907 = vadd.f32 %v9261, %v9857
    %v9908 = vadd.f32 %v9262, %v9860
    %v9909 = vadd.f32 %v9263, %v9865
    %v9910 = vadd.f32 %v9264, %v9868
    %v9911 = vadd.f32 %v9265, %v9873
    %v9912 = vadd.f32 %v9266, %v9876
    %v9913 = vadd.f32 %v9267, %v9881
    %v9914 = vadd.f32 %v9268, %v9884
    %v9915 = vadd.f32 %v9269, %v9889
    %v9916 = vadd.f32 %v9270, %v9892
    %v9917 = vadd.f32 %v9271, %v9897
    %v9918 = vadd.f32 %v9272, %v9900
    %9919 = vrot.lane.b32.xlu0 %v5435, 72
    %v9920 = vpop.permute.xlu0 %9919
    %9921 = vrot.lane.b32.xlu0 %v5436, 72
    %v9922 = vpop.permute.xlu0 %9921
    %9923 = vrot.lane.b32.xlu0 %v5437, 72
    %v9924 = vpop.permute.xlu0 %9923
    %9925 = vrot.lane.b32.xlu0 %v5438, 72
    %v9926 = vpop.permute.xlu0 %9925
    %9927 = vrot.lane.b32.xlu0 %v5439, 72
    %v9928 = vpop.permute.xlu0 %9927
    %9929 = vrot.lane.b32.xlu0 %v5440, 72
    %v9930 = vpop.permute.xlu0 %9929
    %9931 = vrot.lane.b32.xlu0 %v5441, 72
    %v9932 = vpop.permute.xlu0 %9931
    %9933 = vrot.lane.b32.xlu0 %v5442, 72
    %v9934 = vpop.permute.xlu0 %9933
    %9935 = vrot.lane.b32.xlu0 %v5443, 72
    %v9936 = vpop.permute.xlu0 %9935
    %9937 = vrot.lane.b32.xlu0 %v5444, 72
    %v9938 = vpop.permute.xlu0 %9937
    %9939 = vrot.lane.b32.xlu0 %v5445, 72
    %v9940 = vpop.permute.xlu0 %9939
    %9941 = vrot.lane.b32.xlu0 %v5446, 72
    %v9942 = vpop.permute.xlu0 %9941
    %9943 = vrot.lane.b32.xlu0 %v5447, 72
    %v9944 = vpop.permute.xlu0 %9943
    %9945 = vrot.lane.b32.xlu0 %v5448, 72
    %v9946 = vpop.permute.xlu0 %9945
    %9947 = vrot.lane.b32.xlu0 %v5449, 72
    %v9948 = vpop.permute.xlu0 %9947
    %9949 = vrot.lane.b32.xlu0 %v5450, 72
    %v9950 = vpop.permute.xlu0 %9949
    %v9952 = vsel %vm5459, %v9920, 0
    %v9955 = vsel %vm5459, %v9922, 0
    %v9958 = vsel %vm5459, %v9924, 0
    %v9961 = vsel %vm5459, %v9926, 0
    %v9964 = vsel %vm5459, %v9928, 0
    %v9967 = vsel %vm5459, %v9930, 0
    %v9970 = vsel %vm5459, %v9932, 0
    %v9973 = vsel %vm5459, %v9934, 0
    %v9976 = vsel %vm5459, %v9936, 0
    %v9979 = vsel %vm5459, %v9938, 0
    %v9982 = vsel %vm5459, %v9940, 0
    %v9985 = vsel %vm5459, %v9942, 0
    %v9988 = vsel %vm5459, %v9944, 0
    %v9991 = vsel %vm5459, %v9946, 0
    %v9994 = vsel %vm5459, %v9948, 0
    %v9997 = vsel %vm5459, %v9950, 0
    %9999 = vmatprep.subr.bf16.mxu0 0
    %10000 = vmatpush1.bf16.xpose.msra.mxu0 %v9976
    %10001 = vmatprep.subr.bf16.mxu0 0
    %10002 = vmatpush1.bf16.xpose.msra.mxu0 %v9979
    %10003 = vmatprep.subr.bf16.mxu0 0
    %10004 = vmatpush1.bf16.xpose.msra.mxu0 %v9982
    %10005 = vmatprep.subr.bf16.mxu0 0
    %10006 = vmatpush1.bf16.xpose.msra.mxu0 %v9985
    %10007 = vmatprep.subr.bf16.mxu0 0
    %10008 = vmatpush1.bf16.xpose.msra.mxu0 %v9988
    %10009 = vmatprep.subr.bf16.mxu0 0
    %10010 = vmatpush1.bf16.xpose.msra.mxu0 %v9991
    %10011 = vmatprep.subr.bf16.mxu0 0
    %10012 = vmatpush1.bf16.xpose.msra.mxu0 %v9994
    %10013 = vmatprep.subr.bf16.mxu0 0
    %10014 = vmatpush1.bf16.xpose.msra.mxu0 %v9997
    %10015 = vmatprep.subr.bf16.mxu0 0
    %10016 = vmatpush1.bf16.xpose.msra.mxu0 0
    %10017 = vmatprep.subr.bf16.mxu0 0
    %10018 = vmatpush1.bf16.xpose.msra.mxu0 0
    %10019 = vmatprep.subr.bf16.mxu0 0
    %10020 = vmatpush1.bf16.xpose.msra.mxu0 0
    %10021 = vmatprep.subr.bf16.mxu0 0
    %10022 = vmatpush1.bf16.xpose.msra.mxu0 0
    %10023 = vmatprep.subr.bf16.mxu0 0
    %10024 = vmatpush1.bf16.xpose.msra.mxu0 0
    %10025 = vmatprep.subr.bf16.mxu0 0
    %10026 = vmatpush1.bf16.xpose.msra.mxu0 0
    %10027 = vmatprep.subr.bf16.mxu0 0
    %10028 = vmatpush1.bf16.xpose.msra.mxu0 0
    %10029 = vmatprep.subr.bf16.mxu0 0
    %10030 = vmatpush1.bf16.xpose.msra.mxu0 0
    %10031 = vmatprep.mubr.bf16.mxu0 0
    %10032 = vmatmul.mubr.bf16.gmra.mrb[0].mxu0 %v9952
    %v10033 = vpop.f32.mrb[0].mxu0
    %v10034 = vadd.f32 0.0, %v10033
    %v10035 = vpop.f32.mrb[0].mxu0
    %v10036 = vpop.f32.mrb[0].mxu0
    %v10037 = vadd.f32 0.0, %v10036
    %v10038 = vpop.f32.mrb[0].mxu0
    %10039 = vmatprep.mubr.bf16.mxu0 0
    %10040 = vmatmul.mubr.bf16.gmra.mrb[0].mxu0 %v9955
    %v10041 = vpop.f32.mrb[0].mxu0
    %v10042 = vadd.f32 0.0, %v10041
    %v10043 = vpop.f32.mrb[0].mxu0
    %v10044 = vpop.f32.mrb[0].mxu0
    %v10045 = vadd.f32 0.0, %v10044
    %v10046 = vpop.f32.mrb[0].mxu0
    %10047 = vmatprep.mubr.bf16.mxu0 0
    %10048 = vmatmul.mubr.bf16.gmra.mrb[0].mxu0 %v9958
    %v10049 = vpop.f32.mrb[0].mxu0
    %v10050 = vadd.f32 0.0, %v10049
    %v10051 = vpop.f32.mrb[0].mxu0
    %v10052 = vpop.f32.mrb[0].mxu0
    %v10053 = vadd.f32 0.0, %v10052
    %v10054 = vpop.f32.mrb[0].mxu0
    %10055 = vmatprep.mubr.bf16.mxu0 0
    %10056 = vmatmul.mubr.bf16.gmra.mrb[0].mxu0 %v9961
    %v10057 = vpop.f32.mrb[0].mxu0
    %v10058 = vadd.f32 0.0, %v10057
    %v10059 = vpop.f32.mrb[0].mxu0
    %v10060 = vpop.f32.mrb[0].mxu0
    %v10061 = vadd.f32 0.0, %v10060
    %v10062 = vpop.f32.mrb[0].mxu0
    %10063 = vmatprep.mubr.bf16.mxu0 0
    %10064 = vmatmul.mubr.bf16.gmra.mrb[0].mxu0 %v9964
    %v10065 = vpop.f32.mrb[0].mxu0
    %v10066 = vadd.f32 0.0, %v10065
    %v10067 = vpop.f32.mrb[0].mxu0
    %v10068 = vpop.f32.mrb[0].mxu0
    %v10069 = vadd.f32 0.0, %v10068
    %v10070 = vpop.f32.mrb[0].mxu0
    %10071 = vmatprep.mubr.bf16.mxu0 0
    %10072 = vmatmul.mubr.bf16.gmra.mrb[0].mxu0 %v9967
    %v10073 = vpop.f32.mrb[0].mxu0
    %v10074 = vadd.f32 0.0, %v10073
    %v10075 = vpop.f32.mrb[0].mxu0
    %v10076 = vpop.f32.mrb[0].mxu0
    %v10077 = vadd.f32 0.0, %v10076
    %v10078 = vpop.f32.mrb[0].mxu0
    %10079 = vmatprep.mubr.bf16.mxu0 0
    %10080 = vmatmul.mubr.bf16.gmra.mrb[0].mxu0 %v9970
    %v10081 = vpop.f32.mrb[0].mxu0
    %v10082 = vadd.f32 0.0, %v10081
    %v10083 = vpop.f32.mrb[0].mxu0
    %v10084 = vpop.f32.mrb[0].mxu0
    %v10085 = vadd.f32 0.0, %v10084
    %v10086 = vpop.f32.mrb[0].mxu0
    %10087 = vmatprep.mubr.bf16.mxu0 0
    %10088 = vmatmul.mubr.bf16.gmra.mrb[0].mxu0 %v9973
    %v10089 = vpop.f32.mrb[0].mxu0
    %v10090 = vadd.f32 0.0, %v10089
    %v10091 = vpop.f32.mrb[0].mxu0
    %v10092 = vpop.f32.mrb[0].mxu0
    %v10093 = vadd.f32 0.0, %v10092
    %v10094 = vpop.f32.mrb[0].mxu0
    %10095 = vdwg.mxu0
    %v10096 = vmul.f32 %v10034, 0.35355338
    %v10097 = vmul.f32 %v10037, 0.35355338
    %v10098 = vmul.f32 %v10042, 0.35355338
    %v10099 = vmul.f32 %v10045, 0.35355338
    %v10100 = vmul.f32 %v10050, 0.35355338
    %v10101 = vmul.f32 %v10053, 0.35355338
    %v10102 = vmul.f32 %v10058, 0.35355338
    %v10103 = vmul.f32 %v10061, 0.35355338
    %v10104 = vmul.f32 %v10066, 0.35355338
    %v10105 = vmul.f32 %v10069, 0.35355338
    %v10106 = vmul.f32 %v10074, 0.35355338
    %v10107 = vmul.f32 %v10077, 0.35355338
    %v10108 = vmul.f32 %v10082, 0.35355338
    %v10109 = vmul.f32 %v10085, 0.35355338
    %v10110 = vmul.f32 %v10090, 0.35355338
    %v10111 = vmul.f32 %v10093, 0.35355338
    %10112 = vmax.xlane.f32.xlu0 %v10096
    %v10113 = vpop.xlane.xlu0 %10112
    %10114 = vmax.xlane.f32.xlu0 %v10097
    %v10115 = vpop.xlane.xlu0 %10114
    %10116 = vmax.xlane.f32.xlu0 %v10098
    %v10117 = vpop.xlane.xlu0 %10116
    %10118 = vmax.xlane.f32.xlu0 %v10099
    %v10119 = vpop.xlane.xlu0 %10118
    %10120 = vmax.xlane.f32.xlu0 %v10100
    %v10121 = vpop.xlane.xlu0 %10120
    %10122 = vmax.xlane.f32.xlu0 %v10101
    %v10123 = vpop.xlane.xlu0 %10122
    %10124 = vmax.xlane.f32.xlu0 %v10102
    %v10125 = vpop.xlane.xlu0 %10124
    %10126 = vmax.xlane.f32.xlu0 %v10103
    %v10127 = vpop.xlane.xlu0 %10126
    %10128 = vmax.xlane.f32.xlu0 %v10104
    %v10129 = vpop.xlane.xlu0 %10128
    %10130 = vmax.xlane.f32.xlu0 %v10105
    %v10131 = vpop.xlane.xlu0 %10130
    %10132 = vmax.xlane.f32.xlu0 %v10106
    %v10133 = vpop.xlane.xlu0 %10132
    %10134 = vmax.xlane.f32.xlu0 %v10107
    %v10135 = vpop.xlane.xlu0 %10134
    %10136 = vmax.xlane.f32.xlu0 %v10108
    %v10137 = vpop.xlane.xlu0 %10136
    %10138 = vmax.xlane.f32.xlu0 %v10109
    %v10139 = vpop.xlane.xlu0 %10138
    %10140 = vmax.xlane.f32.xlu0 %v10110
    %v10141 = vpop.xlane.xlu0 %10140
    %10142 = vmax.xlane.f32.xlu0 %v10111
    %v10143 = vpop.xlane.xlu0 %10142
    %v10144 = vsub.f32 %v10096, %v10113
    %v10145 = vsub.f32 %v10097, %v10115
    %v10146 = vsub.f32 %v10098, %v10117
    %v10147 = vsub.f32 %v10099, %v10119
    %v10148 = vsub.f32 %v10100, %v10121
    %v10149 = vsub.f32 %v10101, %v10123
    %v10150 = vsub.f32 %v10102, %v10125
    %v10151 = vsub.f32 %v10103, %v10127
    %v10152 = vsub.f32 %v10104, %v10129
    %v10153 = vsub.f32 %v10105, %v10131
    %v10154 = vsub.f32 %v10106, %v10133
    %v10155 = vsub.f32 %v10107, %v10135
    %v10156 = vsub.f32 %v10108, %v10137
    %v10157 = vsub.f32 %v10109, %v10139
    %v10158 = vsub.f32 %v10110, %v10141
    %v10159 = vsub.f32 %v10111, %v10143
    %v10160 = vmul.f32 %v10144, 1.442695
    %v10161 = vpow.pop %v10160
    %v10162 = vmul.f32 %v10145, 1.442695
    %v10163 = vpow.pop %v10162
    %v10164 = vmul.f32 %v10146, 1.442695
    %v10165 = vpow.pop %v10164
    %v10166 = vmul.f32 %v10147, 1.442695
    %v10167 = vpow.pop %v10166
    %v10168 = vmul.f32 %v10148, 1.442695
    %v10169 = vpow.pop %v10168
    %v10170 = vmul.f32 %v10149, 1.442695
    %v10171 = vpow.pop %v10170
    %v10172 = vmul.f32 %v10150, 1.442695
    %v10173 = vpow.pop %v10172
    %v10174 = vmul.f32 %v10151, 1.442695
    %v10175 = vpow.pop %v10174
    %v10176 = vmul.f32 %v10152, 1.442695
    %v10177 = vpow.pop %v10176
    %v10178 = vmul.f32 %v10153, 1.442695
    %v10179 = vpow.pop %v10178
    %v10180 = vmul.f32 %v10154, 1.442695
    %v10181 = vpow.pop %v10180
    %v10182 = vmul.f32 %v10155, 1.442695
    %v10183 = vpow.pop %v10182
    %v10184 = vmul.f32 %v10156, 1.442695
    %v10185 = vpow.pop %v10184
    %v10186 = vmul.f32 %v10157, 1.442695
    %v10187 = vpow.pop %v10186
    %v10188 = vmul.f32 %v10158, 1.442695
    %v10189 = vpow.pop %v10188
    %v10190 = vmul.f32 %v10159, 1.442695
    %v10191 = vpow.pop %v10190
    %v10192 = vmul.f32 %v10161, %v5411
    %v10193 = vmul.f32 %v10163, %v5412
    %v10194 = vmul.f32 %v10165, %v5413
    %v10195 = vmul.f32 %v10167, %v5414
    %v10196 = vmul.f32 %v10169, %v5415
    %v10197 = vmul.f32 %v10171, %v5416
    %v10198 = vmul.f32 %v10173, %v5417
    %v10199 = vmul.f32 %v10175, %v5418
    %v10200 = vmul.f32 %v10177, %v5419
    %v10201 = vmul.f32 %v10179, %v5420
    %v10202 = vmul.f32 %v10181, %v5421
    %v10203 = vmul.f32 %v10183, %v5422
    %v10204 = vmul.f32 %v10185, %v5423
    %v10205 = vmul.f32 %v10187, %v5424
    %v10206 = vmul.f32 %v10189, %v5425
    %v10207 = vmul.f32 %v10191, %v5426
    %10208 = vadd.xlane.f32.xlu0 %v10192
    %v10209 = vpop.xlane.xlu0 %10208
    %10210 = vadd.xlane.f32.xlu0 %v10193
    %v10211 = vpop.xlane.xlu0 %10210
    %10212 = vadd.xlane.f32.xlu0 %v10194
    %v10213 = vpop.xlane.xlu0 %10212
    %10214 = vadd.xlane.f32.xlu0 %v10195
    %v10215 = vpop.xlane.xlu0 %10214
    %10216 = vadd.xlane.f32.xlu0 %v10196
    %v10217 = vpop.xlane.xlu0 %10216
    %10218 = vadd.xlane.f32.xlu0 %v10197
    %v10219 = vpop.xlane.xlu0 %10218
    %10220 = vadd.xlane.f32.xlu0 %v10198
    %v10221 = vpop.xlane.xlu0 %10220
    %10222 = vadd.xlane.f32.xlu0 %v10199
    %v10223 = vpop.xlane.xlu0 %10222
    %10224 = vadd.xlane.f32.xlu0 %v10200
    %v10225 = vpop.xlane.xlu0 %10224
    %10226 = vadd.xlane.f32.xlu0 %v10201
    %v10227 = vpop.xlane.xlu0 %10226
    %10228 = vadd.xlane.f32.xlu0 %v10202
    %v10229 = vpop.xlane.xlu0 %10228
    %10230 = vadd.xlane.f32.xlu0 %v10203
    %v10231 = vpop.xlane.xlu0 %10230
    %10232 = vadd.xlane.f32.xlu0 %v10204
    %v10233 = vpop.xlane.xlu0 %10232
    %10234 = vadd.xlane.f32.xlu0 %v10205
    %v10235 = vpop.xlane.xlu0 %10234
    %10236 = vadd.xlane.f32.xlu0 %v10206
    %v10237 = vpop.xlane.xlu0 %10236
    %10238 = vadd.xlane.f32.xlu0 %v10207
    %v10239 = vpop.xlane.xlu0 %10238
    %v10240 = vmax.f32 %v10209, 1e-30
    %v10241 = vmax.f32 %v10211, 1e-30
    %v10242 = vmax.f32 %v10213, 1e-30
    %v10243 = vmax.f32 %v10215, 1e-30
    %v10244 = vmax.f32 %v10217, 1e-30
    %v10245 = vmax.f32 %v10219, 1e-30
    %v10246 = vmax.f32 %v10221, 1e-30
    %v10247 = vmax.f32 %v10223, 1e-30
    %v10248 = vmax.f32 %v10225, 1e-30
    %v10249 = vmax.f32 %v10227, 1e-30
    %v10250 = vmax.f32 %v10229, 1e-30
    %v10251 = vmax.f32 %v10231, 1e-30
    %v10252 = vmax.f32 %v10233, 1e-30
    %v10253 = vmax.f32 %v10235, 1e-30
    %v10254 = vmax.f32 %v10237, 1e-30
    %v10255 = vmax.f32 %v10239, 1e-30
    %v10256 = vrcp.pop %v10240
    %v10257 = vrcp.pop %v10241
    %v10258 = vrcp.pop %v10242
    %v10259 = vrcp.pop %v10243
    %v10260 = vrcp.pop %v10244
    %v10261 = vrcp.pop %v10245
    %v10262 = vrcp.pop %v10246
    %v10263 = vrcp.pop %v10247
    %v10264 = vrcp.pop %v10248
    %v10265 = vrcp.pop %v10249
    %v10266 = vrcp.pop %v10250
    %v10267 = vrcp.pop %v10251
    %v10268 = vrcp.pop %v10252
    %v10269 = vrcp.pop %v10253
    %v10270 = vrcp.pop %v10254
    %v10271 = vrcp.pop %v10255
    %v10272 = vmul.f32 %v10192, %v10256
    %v10273 = vmul.f32 %v10193, %v10257
    %v10274 = vmul.f32 %v10194, %v10258
    %v10275 = vmul.f32 %v10195, %v10259
    %v10276 = vmul.f32 %v10196, %v10260
    %v10277 = vmul.f32 %v10197, %v10261
    %v10278 = vmul.f32 %v10198, %v10262
    %v10279 = vmul.f32 %v10199, %v10263
    %v10280 = vmul.f32 %v10200, %v10264
    %v10281 = vmul.f32 %v10201, %v10265
    %v10282 = vmul.f32 %v10202, %v10266
    %v10283 = vmul.f32 %v10203, %v10267
    %v10284 = vmul.f32 %v10204, %v10268
    %v10285 = vmul.f32 %v10205, %v10269
    %v10286 = vmul.f32 %v10206, %v10270
    %v10287 = vmul.f32 %v10207, %v10271
    %v10288 = vpack.c.bf16 %v10273, %v10272
    %v10289 = vpack.c.bf16 %v10275, %v10274
    %v10290 = vpack.c.bf16 %v10277, %v10276
    %v10291 = vpack.c.bf16 %v10279, %v10278
    %v10292 = vpack.c.bf16 %v10281, %v10280
    %v10293 = vpack.c.bf16 %v10283, %v10282
    %v10294 = vpack.c.bf16 %v10285, %v10284
    %v10295 = vpack.c.bf16 %v10287, %v10286
    %10296 = vrot.lane.b32.xlu0 %v5451, 72
    %v10297 = vpop.permute.xlu0 %10296
    %10298 = vrot.lane.b32.xlu0 %v5452, 72
    %v10299 = vpop.permute.xlu0 %10298
    %10300 = vrot.lane.b32.xlu0 %v5453, 72
    %v10301 = vpop.permute.xlu0 %10300
    %10302 = vrot.lane.b32.xlu0 %v5454, 72
    %v10303 = vpop.permute.xlu0 %10302
    %10304 = vrot.lane.b32.xlu0 %v5455, 72
    %v10305 = vpop.permute.xlu0 %10304
    %10306 = vrot.lane.b32.xlu0 %v5456, 72
    %v10307 = vpop.permute.xlu0 %10306
    %10308 = vrot.lane.b32.xlu0 %v5457, 72
    %v10309 = vpop.permute.xlu0 %10308
    %10310 = vrot.lane.b32.xlu0 %v5458, 72
    %v10311 = vpop.permute.xlu0 %10310
    %10320 = vmatprep.subr.bf16.mxu0 0
    %10321 = vmatpush1.bf16.msra.mxu0 %v10297
    %10322 = vmatprep.subr.bf16.mxu0 0
    %10323 = vmatpush1.bf16.msra.mxu0 %v10299
    %10324 = vmatprep.subr.bf16.mxu0 0
    %10325 = vmatpush1.bf16.msra.mxu0 %v10301
    %10326 = vmatprep.subr.bf16.mxu0 0
    %10327 = vmatpush1.bf16.msra.mxu0 %v10303
    %10328 = vmatprep.subr.bf16.mxu0 0
    %10329 = vmatpush1.bf16.msra.mxu0 %v10305
    %10330 = vmatprep.subr.bf16.mxu0 0
    %10331 = vmatpush1.bf16.msra.mxu0 %v10307
    %10332 = vmatprep.subr.bf16.mxu0 0
    %10333 = vmatpush1.bf16.msra.mxu0 %v10309
    %10334 = vmatprep.subr.bf16.mxu0 0
    %10335 = vmatpush1.bf16.msra.mxu0 %v10311
    %10336 = vmatprep.subr.bf16.mxu0 0
    %10337 = vmatpush1.bf16.msra.mxu0 0
    %10338 = vmatprep.subr.bf16.mxu0 0
    %10339 = vmatpush1.bf16.msra.mxu0 0
    %10340 = vmatprep.subr.bf16.mxu0 0
    %10341 = vmatpush1.bf16.msra.mxu0 0
    %10342 = vmatprep.subr.bf16.mxu0 0
    %10343 = vmatpush1.bf16.msra.mxu0 0
    %10344 = vmatprep.subr.bf16.mxu0 0
    %10345 = vmatpush1.bf16.msra.mxu0 0
    %10346 = vmatprep.subr.bf16.mxu0 0
    %10347 = vmatpush1.bf16.msra.mxu0 0
    %10348 = vmatprep.subr.bf16.mxu0 0
    %10349 = vmatpush1.bf16.msra.mxu0 0
    %10350 = vmatprep.subr.bf16.mxu0 0
    %10351 = vmatpush1.bf16.msra.mxu0 0
    %10352 = vmatprep.mubr.bf16.mxu0 0
    %10353 = vmatmul.mubr.bf16.gmra.mrb[0].mxu0 %v10288
    %v10354 = vpop.f32.mrb[0].mxu0
    %v10355 = vadd.f32 0.0, %v10354
    %v10356 = vpop.f32.mrb[0].mxu0
    %v10357 = vpop.f32.mrb[0].mxu0
    %v10358 = vadd.f32 0.0, %v10357
    %v10359 = vpop.f32.mrb[0].mxu0
    %10360 = vmatprep.mubr.bf16.mxu0 0
    %10361 = vmatmul.mubr.bf16.gmra.mrb[0].mxu0 %v10289
    %v10362 = vpop.f32.mrb[0].mxu0
    %v10363 = vadd.f32 0.0, %v10362
    %v10364 = vpop.f32.mrb[0].mxu0
    %v10365 = vpop.f32.mrb[0].mxu0
    %v10366 = vadd.f32 0.0, %v10365
    %v10367 = vpop.f32.mrb[0].mxu0
    %10368 = vmatprep.mubr.bf16.mxu0 0
    %10369 = vmatmul.mubr.bf16.gmra.mrb[0].mxu0 %v10290
    %v10370 = vpop.f32.mrb[0].mxu0
    %v10371 = vadd.f32 0.0, %v10370
    %v10372 = vpop.f32.mrb[0].mxu0
    %v10373 = vpop.f32.mrb[0].mxu0
    %v10374 = vadd.f32 0.0, %v10373
    %v10375 = vpop.f32.mrb[0].mxu0
    %10376 = vmatprep.mubr.bf16.mxu0 0
    %10377 = vmatmul.mubr.bf16.gmra.mrb[0].mxu0 %v10291
    %v10378 = vpop.f32.mrb[0].mxu0
    %v10379 = vadd.f32 0.0, %v10378
    %v10380 = vpop.f32.mrb[0].mxu0
    %v10381 = vpop.f32.mrb[0].mxu0
    %v10382 = vadd.f32 0.0, %v10381
    %v10383 = vpop.f32.mrb[0].mxu0
    %10384 = vmatprep.mubr.bf16.mxu0 0
    %10385 = vmatmul.mubr.bf16.gmra.mrb[0].mxu0 %v10292
    %v10386 = vpop.f32.mrb[0].mxu0
    %v10387 = vadd.f32 0.0, %v10386
    %v10388 = vpop.f32.mrb[0].mxu0
    %v10389 = vpop.f32.mrb[0].mxu0
    %v10390 = vadd.f32 0.0, %v10389
    %v10391 = vpop.f32.mrb[0].mxu0
    %10392 = vmatprep.mubr.bf16.mxu0 0
    %10393 = vmatmul.mubr.bf16.gmra.mrb[0].mxu0 %v10293
    %v10394 = vpop.f32.mrb[0].mxu0
    %v10395 = vadd.f32 0.0, %v10394
    %v10396 = vpop.f32.mrb[0].mxu0
    %v10397 = vpop.f32.mrb[0].mxu0
    %v10398 = vadd.f32 0.0, %v10397
    %v10399 = vpop.f32.mrb[0].mxu0
    %10400 = vmatprep.mubr.bf16.mxu0 0
    %10401 = vmatmul.mubr.bf16.gmra.mrb[0].mxu0 %v10294
    %v10402 = vpop.f32.mrb[0].mxu0
    %v10403 = vadd.f32 0.0, %v10402
    %v10404 = vpop.f32.mrb[0].mxu0
    %v10405 = vpop.f32.mrb[0].mxu0
    %v10406 = vadd.f32 0.0, %v10405
    %v10407 = vpop.f32.mrb[0].mxu0
    %10408 = vmatprep.mubr.bf16.mxu0 0
    %10409 = vmatmul.mubr.bf16.gmra.mrb[0].mxu0 %v10295
    %v10410 = vpop.f32.mrb[0].mxu0
    %v10411 = vadd.f32 0.0, %v10410
    %v10412 = vpop.f32.mrb[0].mxu0
    %v10413 = vpop.f32.mrb[0].mxu0
    %v10414 = vadd.f32 0.0, %v10413
    %v10415 = vpop.f32.mrb[0].mxu0
    %10416 = vdwg.mxu0
    %v10417 = vpack.c.bf16 %v10358, %v10355
    %v10418 = vpack.c.bf16 %v10366, %v10363
    %v10419 = vpack.c.bf16 %v10374, %v10371
    %v10420 = vpack.c.bf16 %v10382, %v10379
    %v10421 = vpack.c.bf16 %v10390, %v10387
    %v10422 = vpack.c.bf16 %v10398, %v10395
    %v10423 = vpack.c.bf16 %v10406, %v10403
    %v10424 = vpack.c.bf16 %v10414, %v10411
    %v10426 = vsel %vm5459, %v10417, 0
    %v10429 = vsel %vm5459, %v10418, 0
    %v10432 = vsel %vm5459, %v10419, 0
    %v10435 = vsel %vm5459, %v10420, 0
    %v10438 = vsel %vm5459, %v10421, 0
    %v10441 = vsel %vm5459, %v10422, 0
    %v10444 = vsel %vm5459, %v10423, 0
    %v10447 = vsel %vm5459, %v10424, 0
    %v10450 = vsel %vm6464, %v5434, 0
    %10452 = vmatprep.subr.bf16.mxu0 0
    %10453 = vmatpush1.bf16.msra.mxu0 %v10450
    %10454 = vmatprep.subr.bf16.mxu0 0
    %10455 = vmatpush1.bf16.msra.mxu0 0
    %10456 = vmatprep.subr.bf16.mxu0 0
    %10457 = vmatpush1.bf16.msra.mxu0 0
    %10458 = vmatprep.subr.bf16.mxu0 0
    %10459 = vmatpush1.bf16.msra.mxu0 0
    %10460 = vmatprep.subr.bf16.mxu0 0
    %10461 = vmatpush1.bf16.msra.mxu0 0
    %10462 = vmatprep.subr.bf16.mxu0 0
    %10463 = vmatpush1.bf16.msra.mxu0 0
    %10464 = vmatprep.subr.bf16.mxu0 0
    %10465 = vmatpush1.bf16.msra.mxu0 0
    %10466 = vmatprep.subr.bf16.mxu0 0
    %10467 = vmatpush1.bf16.msra.mxu0 0
    %10468 = vmatprep.subr.bf16.mxu0 0
    %10469 = vmatpush1.bf16.msra.mxu0 0
    %10470 = vmatprep.subr.bf16.mxu0 0
    %10471 = vmatpush1.bf16.msra.mxu0 0
    %10472 = vmatprep.subr.bf16.mxu0 0
    %10473 = vmatpush1.bf16.msra.mxu0 0
    %10474 = vmatprep.subr.bf16.mxu0 0
    %10475 = vmatpush1.bf16.msra.mxu0 0
    %10476 = vmatprep.subr.bf16.mxu0 0
    %10477 = vmatpush1.bf16.msra.mxu0 0
    %10478 = vmatprep.subr.bf16.mxu0 0
    %10479 = vmatpush1.bf16.msra.mxu0 0
    %10480 = vmatprep.subr.bf16.mxu0 0
    %10481 = vmatpush1.bf16.msra.mxu0 0
    %10482 = vmatprep.subr.bf16.mxu0 0
    %10483 = vmatpush1.bf16.msra.mxu0 0
    %10484 = vmatprep.mubr.bf16.mxu0 0
    %10485 = vmatmul.mubr.bf16.gmra.mrb[0].mxu0 %v10426
    %v10486 = vpop.f32.mrb[0].mxu0
    %v10487 = vadd.f32 0.0, %v10486
    %v10488 = vpop.f32.mrb[0].mxu0
    %v10489 = vpop.f32.mrb[0].mxu0
    %v10490 = vadd.f32 0.0, %v10489
    %v10491 = vpop.f32.mrb[0].mxu0
    %10492 = vmatprep.mubr.bf16.mxu0 0
    %10493 = vmatmul.mubr.bf16.gmra.mrb[0].mxu0 %v10429
    %v10494 = vpop.f32.mrb[0].mxu0
    %v10495 = vadd.f32 0.0, %v10494
    %v10496 = vpop.f32.mrb[0].mxu0
    %v10497 = vpop.f32.mrb[0].mxu0
    %v10498 = vadd.f32 0.0, %v10497
    %v10499 = vpop.f32.mrb[0].mxu0
    %10500 = vmatprep.mubr.bf16.mxu0 0
    %10501 = vmatmul.mubr.bf16.gmra.mrb[0].mxu0 %v10432
    %v10502 = vpop.f32.mrb[0].mxu0
    %v10503 = vadd.f32 0.0, %v10502
    %v10504 = vpop.f32.mrb[0].mxu0
    %v10505 = vpop.f32.mrb[0].mxu0
    %v10506 = vadd.f32 0.0, %v10505
    %v10507 = vpop.f32.mrb[0].mxu0
    %10508 = vmatprep.mubr.bf16.mxu0 0
    %10509 = vmatmul.mubr.bf16.gmra.mrb[0].mxu0 %v10435
    %v10510 = vpop.f32.mrb[0].mxu0
    %v10511 = vadd.f32 0.0, %v10510
    %v10512 = vpop.f32.mrb[0].mxu0
    %v10513 = vpop.f32.mrb[0].mxu0
    %v10514 = vadd.f32 0.0, %v10513
    %v10515 = vpop.f32.mrb[0].mxu0
    %10516 = vmatprep.mubr.bf16.mxu0 0
    %10517 = vmatmul.mubr.bf16.gmra.mrb[0].mxu0 %v10438
    %v10518 = vpop.f32.mrb[0].mxu0
    %v10519 = vadd.f32 0.0, %v10518
    %v10520 = vpop.f32.mrb[0].mxu0
    %v10521 = vpop.f32.mrb[0].mxu0
    %v10522 = vadd.f32 0.0, %v10521
    %v10523 = vpop.f32.mrb[0].mxu0
    %10524 = vmatprep.mubr.bf16.mxu0 0
    %10525 = vmatmul.mubr.bf16.gmra.mrb[0].mxu0 %v10441
    %v10526 = vpop.f32.mrb[0].mxu0
    %v10527 = vadd.f32 0.0, %v10526
    %v10528 = vpop.f32.mrb[0].mxu0
    %v10529 = vpop.f32.mrb[0].mxu0
    %v10530 = vadd.f32 0.0, %v10529
    %v10531 = vpop.f32.mrb[0].mxu0
    %10532 = vmatprep.mubr.bf16.mxu0 0
    %10533 = vmatmul.mubr.bf16.gmra.mrb[0].mxu0 %v10444
    %v10534 = vpop.f32.mrb[0].mxu0
    %v10535 = vadd.f32 0.0, %v10534
    %v10536 = vpop.f32.mrb[0].mxu0
    %v10537 = vpop.f32.mrb[0].mxu0
    %v10538 = vadd.f32 0.0, %v10537
    %v10539 = vpop.f32.mrb[0].mxu0
    %10540 = vmatprep.mubr.bf16.mxu0 0
    %10541 = vmatmul.mubr.bf16.gmra.mrb[0].mxu0 %v10447
    %v10542 = vpop.f32.mrb[0].mxu0
    %v10543 = vadd.f32 0.0, %v10542
    %v10544 = vpop.f32.mrb[0].mxu0
    %v10545 = vpop.f32.mrb[0].mxu0
    %v10546 = vadd.f32 0.0, %v10545
    %v10547 = vpop.f32.mrb[0].mxu0
    %10548 = vdwg.mxu0
    %v10549 = vadd.f32 %v9903, %v10487
    %v10550 = vadd.f32 %v9904, %v10490
    %v10551 = vadd.f32 %v9905, %v10495
    %v10552 = vadd.f32 %v9906, %v10498
    %v10553 = vadd.f32 %v9907, %v10503
    %v10554 = vadd.f32 %v9908, %v10506
    %v10555 = vadd.f32 %v9909, %v10511
    %v10556 = vadd.f32 %v9910, %v10514
    %v10557 = vadd.f32 %v9911, %v10519
    %v10558 = vadd.f32 %v9912, %v10522
    %v10559 = vadd.f32 %v9913, %v10527
    %v10560 = vadd.f32 %v9914, %v10530
    %v10561 = vadd.f32 %v9915, %v10535
    %v10562 = vadd.f32 %v9916, %v10538
    %v10563 = vadd.f32 %v9917, %v10543
    %v10564 = vadd.f32 %v9918, %v10546
    %v10565 = vld [vmem:[#allocation13] sm:$0x1]
    %v10567 = vlaneseq
    %v10568 = vshrl.u32 %v10567, 7
    %v10569 = vsub.s32 0, %v10568
    %v10570 = vrot.slane %v10565, %v10569
    %v10572 = vadd.f32 %v10549, %v10570
    %v10573 = vadd.f32 %v10550, %v10570
    %v10574 = vadd.f32 %v10551, %v10570
    %v10575 = vadd.f32 %v10552, %v10570
    %v10576 = vadd.f32 %v10553, %v10570
    %v10577 = vadd.f32 %v10554, %v10570
    %v10578 = vadd.f32 %v10555, %v10570
    %v10579 = vadd.f32 %v10556, %v10570
    %v10580 = vadd.f32 %v10557, %v10570
    %v10581 = vadd.f32 %v10558, %v10570
    %v10582 = vadd.f32 %v10559, %v10570
    %v10583 = vadd.f32 %v10560, %v10570
    %v10584 = vadd.f32 %v10561, %v10570
    %v10585 = vadd.f32 %v10562, %v10570
    %v10586 = vadd.f32 %v10563, %v10570
    %v10587 = vadd.f32 %v10564, %v10570
    %v10588 = vld [vmem:[#allocation16] sm:$0xff]
    %v10589 = vld [vmem:[#allocation16 + $0x8] sm:$0xff]
    %10590 = vmatprep.subr.mxu0 0.0
    %10591 = vmatpush1.msra.mxu0 %v10572
    %10592 = vmatprep.subr.mxu0 0.0
    %10593 = vmatpush1.msra.mxu0 %v10573
    %10594 = vmatprep.subr.mxu0 0.0
    %10595 = vmatpush1.msra.mxu0 %v10574
    %10596 = vmatprep.subr.mxu0 0.0
    %10597 = vmatpush1.msra.mxu0 %v10575
    %10598 = vmatprep.subr.mxu0 0.0
    %10599 = vmatpush1.msra.mxu0 %v10576
    %10600 = vmatprep.subr.mxu0 0.0
    %10601 = vmatpush1.msra.mxu0 %v10577
    %10602 = vmatprep.subr.mxu0 0.0
    %10603 = vmatpush1.msra.mxu0 %v10578
    %10604 = vmatprep.subr.mxu0 0.0
    %10605 = vmatpush1.msra.mxu0 %v10579
    %10606 = vmatprep.subr.mxu0 0.0
    %10607 = vmatpush1.msra.mxu0 %v10580
    %10608 = vmatprep.subr.mxu0 0.0
    %10609 = vmatpush1.msra.mxu0 %v10581
    %10610 = vmatprep.subr.mxu0 0.0
    %10611 = vmatpush1.msra.mxu0 %v10582
    %10612 = vmatprep.subr.mxu0 0.0
    %10613 = vmatpush1.msra.mxu0 %v10583
    %10614 = vmatprep.subr.mxu0 0.0
    %10615 = vmatpush1.msra.mxu0 %v10584
    %10616 = vmatprep.subr.mxu0 0.0
    %10617 = vmatpush1.msra.mxu0 %v10585
    %10618 = vmatprep.subr.mxu0 0.0
    %10619 = vmatpush1.msra.mxu0 %v10586
    %10620 = vmatprep.subr.mxu0 0.0
    %10621 = vmatpush1.msra.mxu0 %v10587
    %10622 = vmatprep.subr.mxu0 0.0
    %10623 = vmatpush1.msra.mxu0 0.0
    %10624 = vmatprep.subr.mxu0 0.0
    %10625 = vmatpush1.msra.mxu0 0.0
    %10626 = vmatprep.subr.mxu0 0.0
    %10627 = vmatpush1.msra.mxu0 0.0
    %10628 = vmatprep.subr.mxu0 0.0
    %10629 = vmatpush1.msra.mxu0 0.0
    %10630 = vmatprep.subr.mxu0 0.0
    %10631 = vmatpush1.msra.mxu0 0.0
    %10632 = vmatprep.subr.mxu0 0.0
    %10633 = vmatpush1.msra.mxu0 0.0
    %10634 = vmatprep.subr.mxu0 0.0
    %10635 = vmatpush1.msra.mxu0 0.0
    %10636 = vmatprep.subr.mxu0 0.0
    %10637 = vmatpush1.msra.mxu0 0.0
    %10638 = vmatprep.subr.mxu0 0.0
    %10639 = vmatpush1.msra.mxu0 0.0
    %10640 = vmatprep.subr.mxu0 0.0
    %10641 = vmatpush1.msra.mxu0 0.0
    %10642 = vmatprep.subr.mxu0 0.0
    %10643 = vmatpush1.msra.mxu0 0.0
    %10644 = vmatprep.subr.mxu0 0.0
    %10645 = vmatpush1.msra.mxu0 0.0
    %10646 = vmatprep.subr.mxu0 0.0
    %10647 = vmatpush1.msra.mxu0 0.0
    %10648 = vmatprep.subr.mxu0 0.0
    %10649 = vmatpush1.msra.mxu0 0.0
    %10650 = vmatprep.subr.mxu0 0.0
    %10651 = vmatpush1.msra.mxu0 0.0
    %10652 = vmatprep.subr.mxu0 0.0
    %10653 = vmatpush1.msra.mxu0 0.0
    %10654 = vmatprep.mubr.f32.mxu0 0.0
    %10655 = vmatmul.mubr.f32.gmra.mrb[0].mxu0 %v10588
    %v10656 = vpop.f32.mrb[0].mxu0
    %v10657 = vadd.f32 0.0, %v10656
    %v10658 = vpop.f32.mrb[0].mxu0
    %10659 = vmatprep.mubr.f32.mxu0 0.0
    %10660 = vmatmul.mubr.f32.gmra.mrb[0].mxu0 %v10589
    %v10661 = vpop.f32.mrb[0].mxu0
    %v10662 = vadd.f32 0.0, %v10661
    %v10663 = vpop.f32.mrb[0].mxu0
    %10664 = vdwg.mxu0
    %v10665 = vld [vmem:[#allocation18] sm:$0xff]
    %v10666 = vld [vmem:[#allocation18 + $0x8] sm:$0xff]
    %10667 = vmatprep.subr.mxu0 0.0
    %10668 = vmatpush1.msra.mxu0 %v10572
    %10669 = vmatprep.subr.mxu0 0.0
    %10670 = vmatpush1.msra.mxu0 %v10573
    %10671 = vmatprep.subr.mxu0 0.0
    %10672 = vmatpush1.msra.mxu0 %v10574
    %10673 = vmatprep.subr.mxu0 0.0
    %10674 = vmatpush1.msra.mxu0 %v10575
    %10675 = vmatprep.subr.mxu0 0.0
    %10676 = vmatpush1.msra.mxu0 %v10576
    %10677 = vmatprep.subr.mxu0 0.0
    %10678 = vmatpush1.msra.mxu0 %v10577
    %10679 = vmatprep.subr.mxu0 0.0
    %10680 = vmatpush1.msra.mxu0 %v10578
    %10681 = vmatprep.subr.mxu0 0.0
    %10682 = vmatpush1.msra.mxu0 %v10579
    %10683 = vmatprep.subr.mxu0 0.0
    %10684 = vmatpush1.msra.mxu0 %v10580
    %10685 = vmatprep.subr.mxu0 0.0
    %10686 = vmatpush1.msra.mxu0 %v10581
    %10687 = vmatprep.subr.mxu0 0.0
    %10688 = vmatpush1.msra.mxu0 %v10582
    %10689 = vmatprep.subr.mxu0 0.0
    %10690 = vmatpush1.msra.mxu0 %v10583
    %10691 = vmatprep.subr.mxu0 0.0
    %10692 = vmatpush1.msra.mxu0 %v10584
    %10693 = vmatprep.subr.mxu0 0.0
    %10694 = vmatpush1.msra.mxu0 %v10585
    %10695 = vmatprep.subr.mxu0 0.0
    %10696 = vmatpush1.msra.mxu0 %v10586
    %10697 = vmatprep.subr.mxu0 0.0
    %10698 = vmatpush1.msra.mxu0 %v10587
    %10699 = vmatprep.subr.mxu0 0.0
    %10700 = vmatpush1.msra.mxu0 0.0
    %10701 = vmatprep.subr.mxu0 0.0
    %10702 = vmatpush1.msra.mxu0 0.0
    %10703 = vmatprep.subr.mxu0 0.0
    %10704 = vmatpush1.msra.mxu0 0.0
    %10705 = vmatprep.subr.mxu0 0.0
    %10706 = vmatpush1.msra.mxu0 0.0
    %10707 = vmatprep.subr.mxu0 0.0
    %10708 = vmatpush1.msra.mxu0 0.0
    %10709 = vmatprep.subr.mxu0 0.0
    %10710 = vmatpush1.msra.mxu0 0.0
    %10711 = vmatprep.subr.mxu0 0.0
    %10712 = vmatpush1.msra.mxu0 0.0
    %10713 = vmatprep.subr.mxu0 0.0
    %10714 = vmatpush1.msra.mxu0 0.0
    %10715 = vmatprep.subr.mxu0 0.0
    %10716 = vmatpush1.msra.mxu0 0.0
    %10717 = vmatprep.subr.mxu0 0.0
    %10718 = vmatpush1.msra.mxu0 0.0
    %10719 = vmatprep.subr.mxu0 0.0
    %10720 = vmatpush1.msra.mxu0 0.0
    %10721 = vmatprep.subr.mxu0 0.0
    %10722 = vmatpush1.msra.mxu0 0.0
    %10723 = vmatprep.subr.mxu0 0.0
    %10724 = vmatpush1.msra.mxu0 0.0
    %10725 = vmatprep.subr.mxu0 0.0
    %10726 = vmatpush1.msra.mxu0 0.0
    %10727 = vmatprep.subr.mxu0 0.0
    %10728 = vmatpush1.msra.mxu0 0.0
    %10729 = vmatprep.subr.mxu0 0.0
    %10730 = vmatpush1.msra.mxu0 0.0
    %10731 = vmatprep.mubr.f32.mxu0 0.0
    %10732 = vmatmul.mubr.f32.gmra.mrb[0].mxu0 %v10665
    %v10733 = vpop.f32.mrb[0].mxu0
    %v10734 = vadd.f32 0.0, %v10733
    %v10735 = vpop.f32.mrb[0].mxu0
    %10736 = vmatprep.mubr.f32.mxu0 0.0
    %10737 = vmatmul.mubr.f32.gmra.mrb[0].mxu0 %v10666
    %v10738 = vpop.f32.mrb[0].mxu0
    %v10739 = vadd.f32 0.0, %v10738
    %v10740 = vpop.f32.mrb[0].mxu0
    %10741 = vdwg.mxu0
    %v10742 = vpack.c.bf16 %v10662, %v10657
    %v10743 = vld [vmem:[#allocation19] sm:$0xf]
    %v10744 = vld [vmem:[#allocation19 + $0x4] sm:$0xf]
    %v10745 = vld [vmem:[#allocation19 + $0x8] sm:$0xf]
    %v10746 = vld [vmem:[#allocation19 + $0xc] sm:$0xf]
    %v10747 = vld [vmem:[#allocation19 + $0x10] sm:$0xf]
    %v10748 = vld [vmem:[#allocation19 + $0x14] sm:$0xf]
    %v10749 = vld [vmem:[#allocation19 + $0x18] sm:$0xf]
    %v10750 = vld [vmem:[#allocation19 + $0x1c] sm:$0xf]
    %v10751 = vpack.c.bf16 %v10739, %v10734
    %v10752 = vld [vmem:[#allocation21] sm:$0xf]
    %v10753 = vld [vmem:[#allocation21 + $0x4] sm:$0xf]
    %v10754 = vld [vmem:[#allocation21 + $0x8] sm:$0xf]
    %v10755 = vld [vmem:[#allocation21 + $0xc] sm:$0xf]
    %v10756 = vld [vmem:[#allocation21 + $0x10] sm:$0xf]
    %v10757 = vld [vmem:[#allocation21 + $0x14] sm:$0xf]
    %v10758 = vld [vmem:[#allocation21 + $0x18] sm:$0xf]
    %v10759 = vld [vmem:[#allocation21 + $0x1c] sm:$0xf]
    %v10768 = vunpack.c.l.b16 %v10752
    %v10769 = vunpack.c.l.b16 %v10753
    %v10770 = vunpack.c.l.b16 %v10754
    %v10771 = vunpack.c.l.b16 %v10755
    %v10772 = vunpack.c.l.b16 %v10756
    %v10773 = vunpack.c.l.b16 %v10757
    %v10774 = vunpack.c.l.b16 %v10758
    %v10775 = vunpack.c.l.b16 %v10759
    %v10776 = vpack.c.b16 %v10769, %v10768
    %v10777 = vpack.c.b16 %v10771, %v10770
    %v10778 = vpack.c.b16 %v10773, %v10772
    %v10779 = vpack.c.b16 %v10775, %v10774
    %vm10784 = vcmask 523264
    %v10786 = vsel %vm10784, %v10751, 0
    %10788 = vmatprep.subr.bf16.mxu0 0
    %10789 = vmatpush1.bf16.msra.mxu0 %v10776
    %10790 = vmatprep.subr.bf16.mxu0 0
    %10791 = vmatpush1.bf16.msra.mxu0 %v10777
    %10792 = vmatprep.subr.bf16.mxu0 0
    %10793 = vmatpush1.bf16.msra.mxu0 %v10778
    %10794 = vmatprep.subr.bf16.mxu0 0
    %10795 = vmatpush1.bf16.msra.mxu0 %v10779
    %10796 = vmatprep.subr.bf16.mxu0 0
    %10797 = vmatpush1.bf16.msra.mxu0 0
    %10798 = vmatprep.subr.bf16.mxu0 0
    %10799 = vmatpush1.bf16.msra.mxu0 0
    %10800 = vmatprep.subr.bf16.mxu0 0
    %10801 = vmatpush1.bf16.msra.mxu0 0
    %10802 = vmatprep.subr.bf16.mxu0 0
    %10803 = vmatpush1.bf16.msra.mxu0 0
    %10804 = vmatprep.subr.bf16.mxu0 0
    %10805 = vmatpush1.bf16.msra.mxu0 0
    %10806 = vmatprep.subr.bf16.mxu0 0
    %10807 = vmatpush1.bf16.msra.mxu0 0
    %10808 = vmatprep.subr.bf16.mxu0 0
    %10809 = vmatpush1.bf16.msra.mxu0 0
    %10810 = vmatprep.subr.bf16.mxu0 0
    %10811 = vmatpush1.bf16.msra.mxu0 0
    %10812 = vmatprep.subr.bf16.mxu0 0
    %10813 = vmatpush1.bf16.msra.mxu0 0
    %10814 = vmatprep.subr.bf16.mxu0 0
    %10815 = vmatpush1.bf16.msra.mxu0 0
    %10816 = vmatprep.subr.bf16.mxu0 0
    %10817 = vmatpush1.bf16.msra.mxu0 0
    %10818 = vmatprep.subr.bf16.mxu0 0
    %10819 = vmatpush1.bf16.msra.mxu0 0
    %10820 = vmatprep.mubr.bf16.mxu0 0
    %10821 = vmatmul.mubr.bf16.gmra.mrb[0].mxu0 %v10786
    %v10822 = vpop.f32.mrb[0].mxu0
    %v10823 = vadd.f32 0.0, %v10822
    %v10824 = vpop.f32.mrb[0].mxu0
    %v10825 = vpop.f32.mrb[0].mxu0
    %v10826 = vadd.f32 0.0, %v10825
    %v10827 = vpop.f32.mrb[0].mxu0
    %10828 = vdwg.mxu0
    %v10837 = vunpack.c.l.b16 %v10743
    %v10838 = vunpack.c.l.b16 %v10744
    %v10839 = vunpack.c.l.b16 %v10745
    %v10840 = vunpack.c.l.b16 %v10746
    %v10841 = vunpack.c.l.b16 %v10747
    %v10842 = vunpack.c.l.b16 %v10748
    %v10843 = vunpack.c.l.b16 %v10749
    %v10844 = vunpack.c.l.b16 %v10750
    %v10845 = vpack.c.b16 %v10838, %v10837
    %v10846 = vpack.c.b16 %v10840, %v10839
    %v10847 = vpack.c.b16 %v10842, %v10841
    %v10848 = vpack.c.b16 %v10844, %v10843
    %v10854 = vsel %vm10784, %v10742, 0
    %10856 = vmatprep.subr.bf16.mxu0 0
    %10857 = vmatpush1.bf16.msra.mxu0 %v10845
    %10858 = vmatprep.subr.bf16.mxu0 0
    %10859 = vmatpush1.bf16.msra.mxu0 %v10846
    %10860 = vmatprep.subr.bf16.mxu0 0
    %10861 = vmatpush1.bf16.msra.mxu0 %v10847
    %10862 = vmatprep.subr.bf16.mxu0 0
    %10863 = vmatpush1.bf16.msra.mxu0 %v10848
    %10864 = vmatprep.subr.bf16.mxu0 0
    %10865 = vmatpush1.bf16.msra.mxu0 0
    %10866 = vmatprep.subr.bf16.mxu0 0
    %10867 = vmatpush1.bf16.msra.mxu0 0
    %10868 = vmatprep.subr.bf16.mxu0 0
    %10869 = vmatpush1.bf16.msra.mxu0 0
    %10870 = vmatprep.subr.bf16.mxu0 0
    %10871 = vmatpush1.bf16.msra.mxu0 0
    %10872 = vmatprep.subr.bf16.mxu0 0
    %10873 = vmatpush1.bf16.msra.mxu0 0
    %10874 = vmatprep.subr.bf16.mxu0 0
    %10875 = vmatpush1.bf16.msra.mxu0 0
    %10876 = vmatprep.subr.bf16.mxu0 0
    %10877 = vmatpush1.bf16.msra.mxu0 0
    %10878 = vmatprep.subr.bf16.mxu0 0
    %10879 = vmatpush1.bf16.msra.mxu0 0
    %10880 = vmatprep.subr.bf16.mxu0 0
    %10881 = vmatpush1.bf16.msra.mxu0 0
    %10882 = vmatprep.subr.bf16.mxu0 0
    %10883 = vmatpush1.bf16.msra.mxu0 0
    %10884 = vmatprep.subr.bf16.mxu0 0
    %10885 = vmatpush1.bf16.msra.mxu0 0
    %10886 = vmatprep.subr.bf16.mxu0 0
    %10887 = vmatpush1.bf16.msra.mxu0 0
    %10888 = vmatprep.mubr.bf16.mxu0 0
    %10889 = vmatmul.mubr.bf16.gmra.mrb[0].mxu0 %v10854
    %v10890 = vpop.f32.mrb[0].mxu0
    %v10891 = vadd.f32 %v10823, %v10890
    %v10892 = vpop.f32.mrb[0].mxu0
    %v10893 = vpop.f32.mrb[0].mxu0
    %v10894 = vadd.f32 %v10826, %v10893
    %v10895 = vpop.f32.mrb[0].mxu0
    %10896 = vdwg.mxu0
    %v10897 = vld [vmem:[#allocation22] sm:$0x1]
    %v10899 = vlaneseq
    %v10900 = vshrl.u32 %v10899, 7
    %v10901 = vsub.s32 0, %v10900
    %v10902 = vrot.slane %v10897, %v10901
    %v10904 = vadd.f32 %v10891, %v10902
    %v10905 = vadd.f32 %v10894, %v10902
    %v10906 = vsel %vm10784, %v10904, 0.0
    %10907 = vadd.xlane.f32.xlu0 %v10906
    %v10908 = vpop.xlane.xlu0 %10907
    %v10909 = vsel %vm10784, %v10905, 0.0
    %10910 = vadd.xlane.f32.xlu0 %v10909
    %v10911 = vpop.xlane.xlu0 %10910
    %v10912 = vrcp.pop 64.0
    %v10913 = vmul.f32 %v10908, %v10912
    %v10914 = vmul.f32 %v10911, %v10912
    %v10915 = vsub.f32 %v10904, %v10913
    %v10916 = vsub.f32 %v10905, %v10914
    %v10917 = vmul.f32 %v10915, %v10915
    %v10918 = vmul.f32 %v10916, %v10916
    %v10919 = vsel %vm10784, %v10917, 0.0
    %10920 = vadd.xlane.f32.xlu0 %v10919
    %v10921 = vpop.xlane.xlu0 %10920
    %v10922 = vsel %vm10784, %v10918, 0.0
    %10923 = vadd.xlane.f32.xlu0 %v10922
    %v10924 = vpop.xlane.xlu0 %10923
    %v10925 = vmul.f32 %v10921, %v10912
    %v10926 = vmul.f32 %v10924, %v10912
    %v10927 = vadd.f32 %v10925, 1e-05
    %v10928 = vadd.f32 %v10926, 1e-05
    %v10929 = vrsqrt.pop %v10927
    %v10930 = vrsqrt.pop %v10928
    %v10931 = vmul.f32 %v10915, %v10929
    %v10932 = vmul.f32 %v10916, %v10930
    %v10933 = vld [vmem:[#allocation24] sm:$0x1]
    %v10935 = vlaneseq
    %v10936 = vshrl.u32 %v10935, 7
    %v10937 = vsub.s32 0, %v10936
    %v10938 = vrot.slane %v10933, %v10937
    %v10940 = vmul.f32 %v10931, %v10938
    %v10941 = vmul.f32 %v10932, %v10938
    %v10942 = vld [vmem:[#allocation25] sm:$0x1]
    %v10944 = vlaneseq
    %v10945 = vshrl.u32 %v10944, 7
    %v10946 = vsub.s32 0, %v10945
    %v10947 = vrot.slane %v10942, %v10946
    %v10949 = vadd.f32 %v10940, %v10947
    %v10950 = vadd.f32 %v10941, %v10947
    %v10951 = vmax.f32 %v10949, 0.0
    %v10952 = vmax.f32 %v10950, 0.0
    %v10953 = vpack.c.bf16 %v10952, %v10951
    %v10954 = vld [vmem:[#allocation27] sm:$0xf]
    %v10955 = vld [vmem:[#allocation27 + $0x4] sm:$0xf]
    %v10956 = vld [vmem:[#allocation27 + $0x8] sm:$0xf]
    %v10957 = vld [vmem:[#allocation27 + $0xc] sm:$0xf]
    %v10958 = vld [vmem:[#allocation27 + $0x10] sm:$0xf]
    %v10959 = vld [vmem:[#allocation27 + $0x14] sm:$0xf]
    %v10960 = vld [vmem:[#allocation27 + $0x18] sm:$0xf]
    %v10961 = vld [vmem:[#allocation27 + $0x1c] sm:$0xf]
    %v10962 = vld [vmem:[#allocation28] sm:$0x1]
    %v10964 = vlaneseq
    %v10965 = vshrl.u32 %v10964, 7
    %v10966 = vsub.s32 0, %v10965
    %v10967 = vrot.slane %v10962, %v10966
    %v10977 = vunpack.c.l.b16 %v10954
    %v10978 = vunpack.c.l.b16 %v10955
    %v10979 = vunpack.c.l.b16 %v10956
    %v10980 = vunpack.c.l.b16 %v10957
    %v10981 = vunpack.c.l.b16 %v10958
    %v10982 = vunpack.c.l.b16 %v10959
    %v10983 = vunpack.c.l.b16 %v10960
    %v10984 = vunpack.c.l.b16 %v10961
    %v10985 = vpack.c.b16 %v10978, %v10977
    %v10986 = vpack.c.b16 %v10980, %v10979
    %v10987 = vpack.c.b16 %v10982, %v10981
    %v10988 = vpack.c.b16 %v10984, %v10983
    %v10994 = vsel %vm10784, %v10953, 0
    %10996 = vmatprep.subr.bf16.mxu0 0
    %10997 = vmatpush1.bf16.msra.mxu0 %v10985
    %10998 = vmatprep.subr.bf16.mxu0 0
    %10999 = vmatpush1.bf16.msra.mxu0 %v10986
    %11000 = vmatprep.subr.bf16.mxu0 0
    %11001 = vmatpush1.bf16.msra.mxu0 %v10987
    %11002 = vmatprep.subr.bf16.mxu0 0
    %11003 = vmatpush1.bf16.msra.mxu0 %v10988
    %11004 = vmatprep.subr.bf16.mxu0 0
    %11005 = vmatpush1.bf16.msra.mxu0 0
    %11006 = vmatprep.subr.bf16.mxu0 0
    %11007 = vmatpush1.bf16.msra.mxu0 0
    %11008 = vmatprep.subr.bf16.mxu0 0
    %11009 = vmatpush1.bf16.msra.mxu0 0
    %11010 = vmatprep.subr.bf16.mxu0 0
    %11011 = vmatpush1.bf16.msra.mxu0 0
    %11012 = vmatprep.subr.bf16.mxu0 0
    %11013 = vmatpush1.bf16.msra.mxu0 0
    %11014 = vmatprep.subr.bf16.mxu0 0
    %11015 = vmatpush1.bf16.msra.mxu0 0
    %11016 = vmatprep.subr.bf16.mxu0 0
    %11017 = vmatpush1.bf16.msra.mxu0 0
    %11018 = vmatprep.subr.bf16.mxu0 0
    %11019 = vmatpush1.bf16.msra.mxu0 0
    %11020 = vmatprep.subr.bf16.mxu0 0
    %11021 = vmatpush1.bf16.msra.mxu0 0
    %11022 = vmatprep.subr.bf16.mxu0 0
    %11023 = vmatpush1.bf16.msra.mxu0 0
    %11024 = vmatprep.subr.bf16.mxu0 0
    %11025 = vmatpush1.bf16.msra.mxu0 0
    %11026 = vmatprep.subr.bf16.mxu0 0
    %11027 = vmatpush1.bf16.msra.mxu0 0
    %11028 = vmatprep.mubr.bf16.mxu0 0
    %11029 = vmatmul.mubr.bf16.gmra.mrb[0].mxu0 %v10994
    %v11030 = vpop.f32.mrb[0].mxu0
    %v11031 = vadd.f32 %v10967, %v11030
    %v11032 = vpop.f32.mrb[0].mxu0
    %v11033 = vpop.f32.mrb[0].mxu0
    %v11034 = vadd.f32 %v10967, %v11033
    %v11035 = vpop.f32.mrb[0].mxu0
    %11036 = vdwg.mxu0
    %11037 = vst [vmem:[%s65] sm:$0xff] %v11031
    %11038 = vst [vmem:[%s65 + $0x8] sm:$0xff] %v11034
    // Predicated region
    $region202: #{_forward_points.1} parent=1 // pred_check
      _
    $region203: #{_forward_points.1} parent=1 // pred_check_branch
      %11040 = sbr.rel (0) target = $region205
    $region204: #{_forward_points.1} parent=1 // pred_region
      _
    $region205: #{_forward_points.1} parent=1 // pred_fallthru
      _
    // Predicated region
    $region206: #{_forward_points.1} parent=1 // pred_check
      _
    $region207: #{_forward_points.1} parent=1 // pred_check_branch
      %11042 = sbr.rel (0) target = $region209
    $region208: #{_forward_points.1} parent=1 // pred_region
      _
    $region209: #{_forward_points.1} parent=1 // pred_fallthru
      _
    %11043 = vsyncpa [#allocation3], 1
    %11044 = vsyncpa [#allocation5], 1
    %11045 = vsyncpa [#allocation8], 1
    %11046 = vsyncpa [#allocation11], 1
    %11047 = vsyncpa [#allocation14], 1
    %11048 = vsyncpa [#allocation17], 1
    %11049 = vsyncpa [#allocation20], 1
    %11050 = vsyncpa [#allocation23], 1
    %11051 = vsyncpa [#allocation26], 1
    %11052 = vsyncpa [#allocation29], 1

</llo_original>
